<compile_context>
chip_gen: v7x
topology: tpu7x:2x2x1
jax: 0.10.0
libtpu: 0.0.40
codegen_flags: <defaults>
</compile_context>

<pallas_src>
import functools
import math

import jax
import jax.numpy as jnp
from jax.experimental import pallas as pl
from jax.experimental.pallas import tpu as pltpu

BN_EPS = 0.8          # nn.BatchNorm1d(C, 0.8) -> eps = 0.8
LRELU_SLOPE = 0.2
LANE = 128


def _round_up(n, m):
    return ((n + m - 1) // m) * m


def _generator_bn_kernel(
    x_ref,            # (B, 128)   bf16, VMEM
    w1_ref,           # (128, 256) bf16, VMEM
    w2_ref,           # (256, 512) bf16, VMEM
    p_ref,            # (8, Wp)    f32,  VMEM   packed [g1,be1,g2,be2,g3,be3,b4,0]
    w3_hbm,           # (512, 1024)    bf16, HBM (pl.ANY)
    w4_hbm,           # (1024, out_pad) bf16, HBM (pl.ANY)
    out_ref,          # (B, out_pad) f32, VMEM
    w3_vmem,          # scratch (512, 1024)     bf16
    w4_vmem,          # scratch (1024, out_pad) bf16
    sem,              # scratch DMA semaphores (2,)
):
    # Kick off the layer-3/4 weight transfers immediately; they overlap the
    # layer-1/2 matmuls and BN statistics below.
    cp3 = pltpu.make_async_copy(w3_hbm, w3_vmem, sem.at[0])
    cp4 = pltpu.make_async_copy(w4_hbm, w4_vmem, sem.at[1])
    cp3.start()
    cp4.start()

    B = x_ref.shape[0]
    out_pad = out_ref.shape[1]
    inv_b = 1.0 / B

    # Static slices out of the packed small-parameter buffer (widths are
    # multiples of 128 -> lane-aligned views, no extra DMA descriptors).
    g1, be1 = p_ref[0:1, 0:256], p_ref[1:2, 0:256]
    g2, be2 = p_ref[2:3, 0:512], p_ref[3:4, 0:512]
    g3, be3 = p_ref[4:5, 0:1024], p_ref[5:6, 0:1024]
    b4 = p_ref[6:7, 0:out_pad]

    def matmul(h, w):
        # bf16 x bf16 on the MXU, f32 accumulation.
        return jnp.dot(h.astype(jnp.bfloat16), w,
                       preferred_element_type=jnp.float32)

    def bn_lrelu(h, g, be):
        # Training-mode BatchNorm1d folded to one scale/shift.  Batch stats in
        # a single pass: var = E[h^2] - mean^2, clamped at 0 against rounding
        # (eps = 0.8 keeps the rsqrt safe regardless).  Linear biases for
        # these layers cancel under the mean subtraction -> never loaded.
        mean = jnp.sum(h, axis=0, keepdims=True) * inv_b
        ex2 = jnp.sum(h * h, axis=0, keepdims=True) * inv_b
        var = jnp.maximum(ex2 - mean * mean, 0.0)
        s = g * jax.lax.rsqrt(var + BN_EPS)
        t = be - s * mean
        hn = s * h + t
        # LeakyReLU(0.2): one vmax instead of compare+select.
        return jnp.maximum(hn, LRELU_SLOPE * hn)

    # Layers 1-2 run while w3/w4 are still streaming in from HBM.
    h = bn_lrelu(matmul(x_ref[...], w1_ref[...]), g1, be1)
    h = bn_lrelu(matmul(h, w2_ref[...]), g2, be2)

    cp3.wait()
    h = bn_lrelu(matmul(h, w3_vmem[...]), g3, be3)

    cp4.wait()
    out_ref[...] = jnp.tanh(matmul(h, w4_vmem[...]) + b4)


def init_params(key, g_output_dim):
    """Deterministic synthetic f32 parameters with the module's shapes.
    Linear weights are stored transposed, i.e. (in, out)."""
    dims = [(100, 256), (256, 512), (512, 1024), (1024, g_output_dim)]
    params = {}
    for idx, (d_in, d_out) in enumerate(dims, start=1):
        key, kw, kb = jax.random.split(key, 3)
        scale = 1.0 / jnp.sqrt(jnp.float32(d_in))
        params[f"w{idx}"] = jax.random.uniform(
            kw, (d_in, d_out), jnp.float32, -scale, scale)
        params[f"b{idx}"] = jax.random.uniform(
            kb, (1, d_out), jnp.float32, -scale, scale)
    for idx, (_, d_out) in enumerate(dims[:3], start=1):
        key, kg, kbeta = jax.random.split(key, 3)
        params[f"g{idx}"] = 1.0 + 0.1 * jax.random.normal(kg, (1, d_out), jnp.float32)
        params[f"be{idx}"] = 0.1 * jax.random.normal(kbeta, (1, d_out), jnp.float32)
    return params


def prepare_params(params, g_output_dim):
    """Convert module params into the kernel layout:
       - weights cast to bf16 (halves the dominant weight DMA),
       - w1 zero-padded along K: 100 -> 128,
       - w4 / b4 zero-padded along out-features to a multiple of 128,
       - fc1..fc3 biases dropped (exactly cancelled by training-mode BN),
       - BN gammas/betas + b4 packed into one (8, Wp) f32 buffer (1 DMA)."""
    out_pad = _round_up(g_output_dim, LANE)
    p = {}
    w1 = params["w1"]
    p["w1"] = jnp.pad(w1, ((0, LANE - w1.shape[0]), (0, 0))).astype(jnp.bfloat16)
    p["w2"] = params["w2"].astype(jnp.bfloat16)
    p["w3"] = params["w3"].astype(jnp.bfloat16)
    w4 = params["w4"]
    p["w4"] = jnp.pad(w4, ((0, 0), (0, out_pad - g_output_dim))).astype(jnp.bfloat16)

    width = max(1024, out_pad)
    packed = jnp.zeros((8, width), jnp.float32)
    rows = [("g1", 256), ("be1", 256), ("g2", 512),
            ("be2", 512), ("g3", 1024), ("be3", 1024)]
    for r, (name, d) in enumerate(rows):
        packed = packed.at[r, :d].set(params[name][0])
    packed = packed.at[6, :g_output_dim].set(params["b4"][0])
    p["packed"] = packed
    return p


def generator_bn_forward(x, kparams, g_output_dim):
    """x: (B, 100) float32.  kparams: output of prepare_params()."""
    B, k_in = x.shape
    k_pad = kparams["w1"].shape[0]
    out_pad = kparams["w4"].shape[1]

    # VMEM footprint estimate (bytes): bf16 weights + w3/w4 VMEM scratch copies
    # + f32 activations with a 3x margin for temporaries (h, h*h, bf16 casts,
    # broadcast scale/shift) + packed params + output.  Keep well inside the
    # 32 MiB limit (v7x physical VMEM is 64 MiB).
    wbytes = sum(int(math.prod(kparams[k].shape)) * 2
                 for k in ("w1", "w2", "w3", "w4"))
    scratch_bytes = (512 * 1024 + 1024 * out_pad) * 2
    act_bytes = B * (k_pad + 256 + 512 + 1024 + out_pad) * 4 * 3
    misc_bytes = int(kparams["packed"].size) * 4 + B * out_pad * 4
    total_bytes = wbytes + scratch_bytes + act_bytes + misc_bytes
    assert total_bytes < (24 << 20), (
        "batch too large for the single-block kernel; use a batch-tiled grid "
        "with two-pass BN instead")

    # Zero-pad noise K: 100 -> 128 (aligned MXU K tiles) and pre-cast to bf16
    # (halves the input DMA; the matmul was already bf16).
    x_pad = jnp.pad(x, ((0, 0), (0, k_pad - k_in))).astype(jnp.bfloat16)

    vmem = pl.BlockSpec(memory_space=pltpu.MemorySpace.VMEM)
    hbm = pl.BlockSpec(memory_space=pl.ANY)

    out = pl.pallas_call(
        _generator_bn_kernel,
        out_shape=jax.ShapeDtypeStruct((B, out_pad), jnp.float32),
        in_specs=[vmem, vmem, vmem, vmem, hbm, hbm],
        out_specs=vmem,
        scratch_shapes=[
            pltpu.VMEM((512, 1024), jnp.bfloat16),      # w3 landing buffer
            pltpu.VMEM((1024, out_pad), jnp.bfloat16),  # w4 landing buffer
            pltpu.SemaphoreType.DMA((2,)),
        ],
        compiler_params=pltpu.CompilerParams(vmem_limit_bytes=32 << 20),
    )(x_pad, kparams["w1"], kparams["w2"], kparams["packed"],
      kparams["w3"], kparams["w4"])
    return out[:, :g_output_dim]


def generator_bn_reference(x, params):
    """Pure-JAX mirror of the PyTorch forward (training-mode BN, biases kept,
    standard BN formula), using the same bf16 matmul quantization as the
    kernel so the comparison isolates structural differences."""
    def linear(h, i):
        w = params[f"w{i}"].astype(jnp.bfloat16)
        y = jnp.dot(h.astype(jnp.bfloat16), w, preferred_element_type=jnp.float32)
        return y + params[f"b{i}"]

    def bn_lrelu(h, i):
        mean = jnp.mean(h, axis=0, keepdims=True)
        var = jnp.mean(jnp.square(h - mean), axis=0, keepdims=True)
        h = (h - mean) / jnp.sqrt(var + BN_EPS)
        h = h * params[f"g{i}"] + params[f"be{i}"]
        return jnp.where(h >= 0, h, LRELU_SLOPE * h)

    h = bn_lrelu(linear(x, 1), 1)
    h = bn_lrelu(linear(h, 2), 2)
    h = bn_lrelu(linear(h, 3), 3)
    return jnp.tanh(linear(h, 4))


if __name__ == "__main__":
    key = jax.random.PRNGKey(0)
    k_params, k_x = jax.random.split(key)

    batch = 8              # BatchNorm1d training mode needs batch > 1
    g_output_dim = 128     # small synthetic output dim (multiple of 128)

    params = init_params(k_params, g_output_dim)
    kparams = prepare_params(params, g_output_dim)
    x = jax.random.normal(k_x, (batch, 100), jnp.float32)

    fwd = jax.jit(functools.partial(
        generator_bn_forward, kparams=kparams, g_output_dim=g_output_dim))
    out = fwd(x)
    jax.block_until_ready(out)

    ref = generator_bn_reference(x, params)
    assert out.shape == (batch, g_output_dim)
    max_err = float(jnp.max(jnp.abs(out - ref)))
    # bf16 weight/activation quantization at the matmuls -> loose-but-meaningful
    # tolerance on the tanh-bounded output.
    assert max_err < 3e-2, max_err

    print("KERNEL_OK")
</pallas_src>

<mosaic_0001>
module attributes {stable_mosaic.version = 11 : i64} {
  func.func @_generator_bn_kernel(%arg0: memref<8x128xbf16, #tpu.memory_space<vmem>>, %arg1: memref<128x256xbf16, #tpu.memory_space<vmem>>, %arg2: memref<256x512xbf16, #tpu.memory_space<vmem>>, %arg3: memref<8x1024xf32, #tpu.memory_space<vmem>>, %arg4: memref<512x1024xbf16, #tpu.memory_space<any>>, %arg5: memref<1024x128xbf16, #tpu.memory_space<any>>, %arg6: memref<8x128xf32, #tpu.memory_space<vmem>>, %arg7: memref<512x1024xbf16, #tpu.memory_space<vmem>>, %arg8: memref<1024x128xbf16, #tpu.memory_space<vmem>>, %arg9: memref<2x!tpu.dma_semaphore, #tpu.memory_space<semaphore_mem>>) attributes {dimension_semantics = [], scalar_prefetch = 0 : i64, scratch_operands = 3 : i64, tpu.core_type = #tpu.core_type<tc>} {
    %c0_i32 = arith.constant 0 : i32
    %0 = tpu.memref_slice %arg9[%c0_i32] : memref<2x!tpu.dma_semaphore, #tpu.memory_space<semaphore_mem>> -> memref<1x!tpu.dma_semaphore, #tpu.memory_space<semaphore_mem>>
    %1 = tpu.memref_squeeze %0 : memref<1x!tpu.dma_semaphore, #tpu.memory_space<semaphore_mem>> -> memref<!tpu.dma_semaphore, #tpu.memory_space<semaphore_mem>>
    tpu.enqueue_dma source(%arg4 : memref<512x1024xbf16, #tpu.memory_space<any>>) target(%arg7 : memref<512x1024xbf16, #tpu.memory_space<vmem>>) target_semaphore(%1 : memref<!tpu.dma_semaphore, #tpu.memory_space<semaphore_mem>>)
    %c1_i32 = arith.constant 1 : i32
    %2 = tpu.memref_slice %arg9[%c1_i32] : memref<2x!tpu.dma_semaphore, #tpu.memory_space<semaphore_mem>> -> memref<1x!tpu.dma_semaphore, #tpu.memory_space<semaphore_mem>>
    %3 = tpu.memref_squeeze %2 : memref<1x!tpu.dma_semaphore, #tpu.memory_space<semaphore_mem>> -> memref<!tpu.dma_semaphore, #tpu.memory_space<semaphore_mem>>
    tpu.enqueue_dma source(%arg5 : memref<1024x128xbf16, #tpu.memory_space<any>>) target(%arg8 : memref<1024x128xbf16, #tpu.memory_space<vmem>>) target_semaphore(%3 : memref<!tpu.dma_semaphore, #tpu.memory_space<semaphore_mem>>)
    %c0 = arith.constant 0 : index
    %c0_0 = arith.constant 0 : index
    %4 = vector.load %arg3[%c0, %c0_0] : memref<8x1024xf32, #tpu.memory_space<vmem>>, vector<1x256xf32>
    %c1 = arith.constant 1 : index
    %c0_1 = arith.constant 0 : index
    %5 = vector.load %arg3[%c1, %c0_1] : memref<8x1024xf32, #tpu.memory_space<vmem>>, vector<1x256xf32>
    %c2 = arith.constant 2 : index
    %c0_2 = arith.constant 0 : index
    %6 = vector.load %arg3[%c2, %c0_2] : memref<8x1024xf32, #tpu.memory_space<vmem>>, vector<1x512xf32>
    %c3 = arith.constant 3 : index
    %c0_3 = arith.constant 0 : index
    %7 = vector.load %arg3[%c3, %c0_3] : memref<8x1024xf32, #tpu.memory_space<vmem>>, vector<1x512xf32>
    %c4 = arith.constant 4 : index
    %c0_4 = arith.constant 0 : index
    %8 = vector.load %arg3[%c4, %c0_4] : memref<8x1024xf32, #tpu.memory_space<vmem>>, vector<1x1024xf32>
    %c5 = arith.constant 5 : index
    %c0_5 = arith.constant 0 : index
    %9 = vector.load %arg3[%c5, %c0_5] : memref<8x1024xf32, #tpu.memory_space<vmem>>, vector<1x1024xf32>
    %c6 = arith.constant 6 : index
    %c0_6 = arith.constant 0 : index
    %10 = vector.load %arg3[%c6, %c0_6] : memref<8x1024xf32, #tpu.memory_space<vmem>>, vector<1x128xf32>
    %c0_7 = arith.constant 0 : index
    %c0_8 = arith.constant 0 : index
    %11 = vector.load %arg0[%c0_7, %c0_8] : memref<8x128xbf16, #tpu.memory_space<vmem>>, vector<8x128xbf16>
    %c0_9 = arith.constant 0 : index
    %c0_10 = arith.constant 0 : index
    %12 = vector.load %arg1[%c0_9, %c0_10] : memref<128x256xbf16, #tpu.memory_space<vmem>>, vector<128x256xbf16>
    %cst = arith.constant dense<0.000000e+00> : vector<8x256xf32>
    %13 = tpu.matmul %11, %12, %cst {dimension_numbers = #tpu.dot_dimension_numbers<[1], [0], [0], [1], [0, 0, 1, 1], [], []>} : vector<8x128xbf16>, vector<128x256xbf16>, vector<8x256xf32> -> vector<8x256xf32>
    %cst_11 = arith.constant dense<0.000000e+00> : vector<256xf32>
    %14 = vector.multi_reduction <add>, %13, %cst_11 [0] : vector<8x256xf32> to vector<256xf32>
    %15 = vector.shape_cast %14 : vector<256xf32> to vector<1x256xf32>
    %cst_12 = arith.constant 1.250000e-01 : f32
    %16 = vector.broadcast %cst_12 : f32 to vector<1x256xf32>
    %17 = arith.mulf %15, %16 : vector<1x256xf32>
    %18 = arith.mulf %13, %13 : vector<8x256xf32>
    %cst_13 = arith.constant dense<0.000000e+00> : vector<256xf32>
    %19 = vector.multi_reduction <add>, %18, %cst_13 [0] : vector<8x256xf32> to vector<256xf32>
    %20 = vector.shape_cast %19 : vector<256xf32> to vector<1x256xf32>
    %cst_14 = arith.constant 1.250000e-01 : f32
    %21 = vector.broadcast %cst_14 : f32 to vector<1x256xf32>
    %22 = arith.mulf %20, %21 : vector<1x256xf32>
    %23 = arith.mulf %17, %17 : vector<1x256xf32>
    %24 = arith.subf %22, %23 : vector<1x256xf32>
    %cst_15 = arith.constant 0.000000e+00 : f32
    %25 = vector.broadcast %cst_15 : f32 to vector<1x256xf32>
    %26 = arith.maximumf %24, %25 : vector<1x256xf32>
    %cst_16 = arith.constant 8.000000e-01 : f32
    %27 = vector.broadcast %cst_16 : f32 to vector<1x256xf32>
    %28 = arith.addf %26, %27 : vector<1x256xf32>
    %29 = math.rsqrt %28 : vector<1x256xf32>
    %30 = arith.mulf %4, %29 : vector<1x256xf32>
    %31 = arith.mulf %30, %17 : vector<1x256xf32>
    %32 = arith.subf %5, %31 : vector<1x256xf32>
    %33 = vector.broadcast %30 : vector<1x256xf32> to vector<8x256xf32>
    %34 = arith.mulf %33, %13 : vector<8x256xf32>
    %35 = vector.broadcast %32 : vector<1x256xf32> to vector<8x256xf32>
    %36 = arith.addf %34, %35 : vector<8x256xf32>
    %cst_17 = arith.constant 2.000000e-01 : f32
    %37 = vector.broadcast %cst_17 : f32 to vector<8x256xf32>
    %38 = arith.mulf %37, %36 : vector<8x256xf32>
    %39 = arith.maximumf %36, %38 : vector<8x256xf32>
    %c0_18 = arith.constant 0 : index
    %c0_19 = arith.constant 0 : index
    %40 = vector.load %arg2[%c0_18, %c0_19] : memref<256x512xbf16, #tpu.memory_space<vmem>>, vector<256x512xbf16>
    %41 = arith.truncf %39 : vector<8x256xf32> to vector<8x256xbf16>
    %cst_20 = arith.constant dense<0.000000e+00> : vector<8x512xf32>
    %42 = tpu.matmul %41, %40, %cst_20 {dimension_numbers = #tpu.dot_dimension_numbers<[1], [0], [0], [1], [0, 0, 1, 1], [], []>} : vector<8x256xbf16>, vector<256x512xbf16>, vector<8x512xf32> -> vector<8x512xf32>
    %cst_21 = arith.constant dense<0.000000e+00> : vector<512xf32>
    %43 = vector.multi_reduction <add>, %42, %cst_21 [0] : vector<8x512xf32> to vector<512xf32>
    %44 = vector.shape_cast %43 : vector<512xf32> to vector<1x512xf32>
    %cst_22 = arith.constant 1.250000e-01 : f32
    %45 = vector.broadcast %cst_22 : f32 to vector<1x512xf32>
    %46 = arith.mulf %44, %45 : vector<1x512xf32>
    %47 = arith.mulf %42, %42 : vector<8x512xf32>
    %cst_23 = arith.constant dense<0.000000e+00> : vector<512xf32>
    %48 = vector.multi_reduction <add>, %47, %cst_23 [0] : vector<8x512xf32> to vector<512xf32>
    %49 = vector.shape_cast %48 : vector<512xf32> to vector<1x512xf32>
    %cst_24 = arith.constant 1.250000e-01 : f32
    %50 = vector.broadcast %cst_24 : f32 to vector<1x512xf32>
    %51 = arith.mulf %49, %50 : vector<1x512xf32>
    %52 = arith.mulf %46, %46 : vector<1x512xf32>
    %53 = arith.subf %51, %52 : vector<1x512xf32>
    %cst_25 = arith.constant 0.000000e+00 : f32
    %54 = vector.broadcast %cst_25 : f32 to vector<1x512xf32>
    %55 = arith.maximumf %53, %54 : vector<1x512xf32>
    %cst_26 = arith.constant 8.000000e-01 : f32
    %56 = vector.broadcast %cst_26 : f32 to vector<1x512xf32>
    %57 = arith.addf %55, %56 : vector<1x512xf32>
    %58 = math.rsqrt %57 : vector<1x512xf32>
    %59 = arith.mulf %6, %58 : vector<1x512xf32>
    %60 = arith.mulf %59, %46 : vector<1x512xf32>
    %61 = arith.subf %7, %60 : vector<1x512xf32>
    %62 = vector.broadcast %59 : vector<1x512xf32> to vector<8x512xf32>
    %63 = arith.mulf %62, %42 : vector<8x512xf32>
    %64 = vector.broadcast %61 : vector<1x512xf32> to vector<8x512xf32>
    %65 = arith.addf %63, %64 : vector<8x512xf32>
    %cst_27 = arith.constant 2.000000e-01 : f32
    %66 = vector.broadcast %cst_27 : f32 to vector<8x512xf32>
    %67 = arith.mulf %66, %65 : vector<8x512xf32>
    %68 = arith.maximumf %65, %67 : vector<8x512xf32>
    %c0_i32_28 = arith.constant 0 : i32
    %69 = tpu.memref_slice %arg9[%c0_i32_28] : memref<2x!tpu.dma_semaphore, #tpu.memory_space<semaphore_mem>> -> memref<1x!tpu.dma_semaphore, #tpu.memory_space<semaphore_mem>>
    %70 = tpu.memref_squeeze %69 : memref<1x!tpu.dma_semaphore, #tpu.memory_space<semaphore_mem>> -> memref<!tpu.dma_semaphore, #tpu.memory_space<semaphore_mem>>
    tpu.wait_dma2 semaphore(%70 : memref<!tpu.dma_semaphore, #tpu.memory_space<semaphore_mem>>) src(%arg4 : memref<512x1024xbf16, #tpu.memory_space<any>>) dst(%arg7 : memref<512x1024xbf16, #tpu.memory_space<vmem>>)
    %c0_29 = arith.constant 0 : index
    %c0_30 = arith.constant 0 : index
    %71 = vector.load %arg7[%c0_29, %c0_30] : memref<512x1024xbf16, #tpu.memory_space<vmem>>, vector<512x1024xbf16>
    %72 = arith.truncf %68 : vector<8x512xf32> to vector<8x512xbf16>
    %cst_31 = arith.constant dense<0.000000e+00> : vector<8x1024xf32>
    %73 = tpu.matmul %72, %71, %cst_31 {dimension_numbers = #tpu.dot_dimension_numbers<[1], [0], [0], [1], [0, 0, 1, 1], [], []>} : vector<8x512xbf16>, vector<512x1024xbf16>, vector<8x1024xf32> -> vector<8x1024xf32>
    %cst_32 = arith.constant dense<0.000000e+00> : vector<1024xf32>
    %74 = vector.multi_reduction <add>, %73, %cst_32 [0] : vector<8x1024xf32> to vector<1024xf32>
    %75 = vector.shape_cast %74 : vector<1024xf32> to vector<1x1024xf32>
    %cst_33 = arith.constant 1.250000e-01 : f32
    %76 = vector.broadcast %cst_33 : f32 to vector<1x1024xf32>
    %77 = arith.mulf %75, %76 : vector<1x1024xf32>
    %78 = arith.mulf %73, %73 : vector<8x1024xf32>
    %cst_34 = arith.constant dense<0.000000e+00> : vector<1024xf32>
    %79 = vector.multi_reduction <add>, %78, %cst_34 [0] : vector<8x1024xf32> to vector<1024xf32>
    %80 = vector.shape_cast %79 : vector<1024xf32> to vector<1x1024xf32>
    %cst_35 = arith.constant 1.250000e-01 : f32
    %81 = vector.broadcast %cst_35 : f32 to vector<1x1024xf32>
    %82 = arith.mulf %80, %81 : vector<1x1024xf32>
    %83 = arith.mulf %77, %77 : vector<1x1024xf32>
    %84 = arith.subf %82, %83 : vector<1x1024xf32>
    %cst_36 = arith.constant 0.000000e+00 : f32
    %85 = vector.broadcast %cst_36 : f32 to vector<1x1024xf32>
    %86 = arith.maximumf %84, %85 : vector<1x1024xf32>
    %cst_37 = arith.constant 8.000000e-01 : f32
    %87 = vector.broadcast %cst_37 : f32 to vector<1x1024xf32>
    %88 = arith.addf %86, %87 : vector<1x1024xf32>
    %89 = math.rsqrt %88 : vector<1x1024xf32>
    %90 = arith.mulf %8, %89 : vector<1x1024xf32>
    %91 = arith.mulf %90, %77 : vector<1x1024xf32>
    %92 = arith.subf %9, %91 : vector<1x1024xf32>
    %93 = vector.broadcast %90 : vector<1x1024xf32> to vector<8x1024xf32>
    %94 = arith.mulf %93, %73 : vector<8x1024xf32>
    %95 = vector.broadcast %92 : vector<1x1024xf32> to vector<8x1024xf32>
    %96 = arith.addf %94, %95 : vector<8x1024xf32>
    %cst_38 = arith.constant 2.000000e-01 : f32
    %97 = vector.broadcast %cst_38 : f32 to vector<8x1024xf32>
    %98 = arith.mulf %97, %96 : vector<8x1024xf32>
    %99 = arith.maximumf %96, %98 : vector<8x1024xf32>
    %c1_i32_39 = arith.constant 1 : i32
    %100 = tpu.memref_slice %arg9[%c1_i32_39] : memref<2x!tpu.dma_semaphore, #tpu.memory_space<semaphore_mem>> -> memref<1x!tpu.dma_semaphore, #tpu.memory_space<semaphore_mem>>
    %101 = tpu.memref_squeeze %100 : memref<1x!tpu.dma_semaphore, #tpu.memory_space<semaphore_mem>> -> memref<!tpu.dma_semaphore, #tpu.memory_space<semaphore_mem>>
    tpu.wait_dma2 semaphore(%101 : memref<!tpu.dma_semaphore, #tpu.memory_space<semaphore_mem>>) src(%arg5 : memref<1024x128xbf16, #tpu.memory_space<any>>) dst(%arg8 : memref<1024x128xbf16, #tpu.memory_space<vmem>>)
    %c0_40 = arith.constant 0 : index
    %c0_41 = arith.constant 0 : index
    %102 = vector.load %arg8[%c0_40, %c0_41] : memref<1024x128xbf16, #tpu.memory_space<vmem>>, vector<1024x128xbf16>
    %103 = arith.truncf %99 : vector<8x1024xf32> to vector<8x1024xbf16>
    %cst_42 = arith.constant dense<0.000000e+00> : vector<8x128xf32>
    %104 = tpu.matmul %103, %102, %cst_42 {dimension_numbers = #tpu.dot_dimension_numbers<[1], [0], [0], [1], [0, 0, 1, 1], [], []>} : vector<8x1024xbf16>, vector<1024x128xbf16>, vector<8x128xf32> -> vector<8x128xf32>
    %105 = vector.broadcast %10 : vector<1x128xf32> to vector<8x128xf32>
    %106 = arith.addf %104, %105 : vector<8x128xf32>
    %107 = math.tanh %106 : vector<8x128xf32>
    %c0_43 = arith.constant 0 : index
    %c0_44 = arith.constant 0 : index
    %108 = vector.load %arg6[%c0_43, %c0_44] : memref<8x128xf32, #tpu.memory_space<vmem>>, vector<8x128xf32>
    tpu.vector_store %arg6[%c0_43, %c0_44], %107 {strides = array<i32>} : memref<8x128xf32, #tpu.memory_space<vmem>>, vector<8x128xf32>,
    return
  }
}

</mosaic_0001>

<llo_original>
// kernel: generator_bn_forward.1
$region0: #{generator_bn_forward.1}
  #allocation0 [shape = 'u32[]', space=smem, size = 0x4, offset = 0x4, fixed_abs, tag = 'smem constant byte address 0x4 - core index']
  #allocation1 [shape = 'u32[144,128]{1,0:T(1,128)}', space=vmem, size = 0x12000, scoped, tag = 'internal scratch']
  #allocation2 [shape = 'bf16[512,1024]{1,0:T(16,128)(2,1)}', space=vmem, size = 0x100000, scoped, tag = 'scratch operand']
  #allocation3 [shape = 'bf16[1024,128]{1,0:T(16,128)(2,1)}', space=vmem, size = 0x40000, scoped, tag = 'scratch operand']
  #allocation4 [shape = 's32[2]{0}', space=sflag, size = 0x8, scoped, tag = 'scratch operand']
  #allocation7 [shape = 's32[]', space=sflag, size = 0x4, offset = 0, fixed_abs, tag = 'sflag constant byte address 0x0 - dummy sync flag']
  #allocation8 [shape = 's32[]', space=sflag, size = 0x4, offset = 0, fixed_abs, tag = 'sflag constant byte address 0x0 - dummy sync flag']
  %s0 = inlined_call_operand.vmem [shape: bf16[8,128], index: 0, kind: input, shape index: {}]
  %s1 = inlined_call_operand.vmem [shape: bf16[128,256], index: 1, kind: input, shape index: {}]
  %s2 = inlined_call_operand.vmem [shape: bf16[256,512], index: 2, kind: input, shape index: {}]
  %s3 = inlined_call_operand.vmem [shape: f32[8,1024], index: 3, kind: input, shape index: {}]
  %s4 = inlined_call_operand.vmem [shape: bf16[512,1024], index: 4, kind: input, shape index: {}]
  %s5 = inlined_call_operand.vmem [shape: bf16[1024,128], index: 5, kind: input, shape index: {}]
  %s6 = inlined_call_operand.hbm [shape: f32[8,128], index: 6, kind: output, shape index: {}]
  %s7 = sld [smem:[#allocation0]]
  $region108: #{generator_bn_forward.1} parent=0
    _
  %s9 = ssub.s32 1, %s7
  %s10 = scalar_select 0, %s9, %s7
  $region1: #{generator_bn_forward.1} parent=0
    #allocation5 [shape = 'u8[4096]{0}', space=vmem, size = 0x1000, scoped, tag = 'output window, operand 0, single buffered']
    #allocation6 [shape = 's32[1]{0}', space=sflag, size = 0x4, scoped, tag = 'scoped memory for generator_bn_forward.1']
    %11 = vsyncpa [#allocation6], 0
    // Predicated region
    $region2: #{generator_bn_forward.1} parent=1 // pred_check
      _
    $region3: #{generator_bn_forward.1} parent=1 // pred_check_branch
      %13 = sbr.rel (0) target = $region5
    $region4: #{generator_bn_forward.1} parent=1 // pred_region
      _
    $region5: #{generator_bn_forward.1} parent=1 // pred_fallthru
      _
    // Predicated region
    $region6: #{generator_bn_forward.1} parent=1 // pred_check
      _
    $region7: #{generator_bn_forward.1} parent=1 // pred_check_branch
      %15 = sbr.rel (0) target = $region9
    $region8: #{generator_bn_forward.1} parent=1 // pred_region
      _
    $region9: #{generator_bn_forward.1} parent=1 // pred_fallthru
      _
    // Predicated region
    $region10: #{generator_bn_forward.1} parent=1 // pred_check
      _
    $region11: #{generator_bn_forward.1} parent=1 // pred_check_branch
      %17 = sbr.rel (0) target = $region13
    $region12: #{generator_bn_forward.1} parent=1 // pred_region
      _
    $region13: #{generator_bn_forward.1} parent=1 // pred_fallthru
      _
    // Predicated region
    $region14: #{generator_bn_forward.1} parent=1 // pred_check
      _
    $region15: #{generator_bn_forward.1} parent=1 // pred_check_branch
      %19 = sbr.rel (0) target = $region17
    $region16: #{generator_bn_forward.1} parent=1 // pred_region
      _
    $region17: #{generator_bn_forward.1} parent=1 // pred_fallthru
      _
    %p22 = scmp.lt.u32.totalorder 4, 8
    %p23 = pneg %p22
    // Predicated region
    $region18: #{generator_bn_forward.1} parent=1 // pred_check
      _
    $region19: #{generator_bn_forward.1} parent=1 // pred_check_branch
      %25 = sbr.rel (%p22) target = $region21
    $region20: #{generator_bn_forward.1} parent=1 // pred_region
      %s1062 = sand.u32 4, 7
      %p1063 = scmp.eq.s32.totalorder %s1062, 0
      // Predicated region
      $region33: #{generator_bn_forward.1} parent=20 // pred_check
        %p1064 = pneg %p1063
      $region34: #{generator_bn_forward.1} parent=20 // pred_check_branch
        %1066 = sbr.rel (%p1064) target = $region36
      $region35: #{generator_bn_forward.1} parent=20 // pred_region
        %s1067 = sshrl.u32 4, 3
        // While loop
        $region37: #{generator_bn_forward.1} parent=35 // loop_pre_header
          _
        $region38: #{generator_bn_forward.1} parent=35 // loop_header
          %s1071 = sphi 0, %s1073
          %p1072 = scmp.ge.s32.totalorder %s1071, %s1067
          %s1076 = sphi 0, %s2105
          %s1077 = sphi %s4, %s2108
          %s1078 = sphi [#allocation2], %s2109
        $region39: #{generator_bn_forward.1} parent=35 // loop_header_branch
          %1075 = sbr.rel (%p1072) target = $region43
        $region40: #{generator_bn_forward.1} parent=35 // loop_body
          %v1079 = vld [vmem:[%s1077] sm:$0xff]
          %1080 = vst [vmem:[%s1078] sm:$0xff] %v1079
          %v1081 = vld [vmem:[%s1077 + $0x20] sm:$0xff]
          %1082 = vst [vmem:[%s1078 + $0x4] sm:$0xff] %v1081
          %v1083 = vld [vmem:[%s1077 + $0x4] sm:$0xff]
          %1084 = vst [vmem:[%s1078 + $0x8] sm:$0xff] %v1083
          %v1085 = vld [vmem:[%s1077 + $0x24] sm:$0xff]
          %1086 = vst [vmem:[%s1078 + $0xc] sm:$0xff] %v1085
          %v1087 = vld [vmem:[%s1077 + $0x8] sm:$0xff]
          %1088 = vst [vmem:[%s1078 + $0x10] sm:$0xff] %v1087
          %v1089 = vld [vmem:[%s1077 + $0x28] sm:$0xff]
          %1090 = vst [vmem:[%s1078 + $0x14] sm:$0xff] %v1089
          %v1091 = vld [vmem:[%s1077 + $0xc] sm:$0xff]
          %1092 = vst [vmem:[%s1078 + $0x18] sm:$0xff] %v1091
          %v1093 = vld [vmem:[%s1077 + $0x2c] sm:$0xff]
          %1094 = vst [vmem:[%s1078 + $0x1c] sm:$0xff] %v1093
          %v1095 = vld [vmem:[%s1077 + $0x10] sm:$0xff]
          %1096 = vst [vmem:[%s1078 + $0x20] sm:$0xff] %v1095
          %v1097 = vld [vmem:[%s1077 + $0x30] sm:$0xff]
          %1098 = vst [vmem:[%s1078 + $0x24] sm:$0xff] %v1097
          %v1099 = vld [vmem:[%s1077 + $0x14] sm:$0xff]
          %1100 = vst [vmem:[%s1078 + $0x28] sm:$0xff] %v1099
          %v1101 = vld [vmem:[%s1077 + $0x34] sm:$0xff]
          %1102 = vst [vmem:[%s1078 + $0x2c] sm:$0xff] %v1101
          %v1103 = vld [vmem:[%s1077 + $0x18] sm:$0xff]
          %1104 = vst [vmem:[%s1078 + $0x30] sm:$0xff] %v1103
          %v1105 = vld [vmem:[%s1077 + $0x38] sm:$0xff]
          %1106 = vst [vmem:[%s1078 + $0x34] sm:$0xff] %v1105
          %v1107 = vld [vmem:[%s1077 + $0x1c] sm:$0xff]
          %1108 = vst [vmem:[%s1078 + $0x38] sm:$0xff] %v1107
          %v1109 = vld [vmem:[%s1077 + $0x3c] sm:$0xff]
          %1110 = vst [vmem:[%s1078 + $0x3c] sm:$0xff] %v1109
          %v1111 = vld [vmem:[%s1077 + $0x40] sm:$0xff]
          %1112 = vst [vmem:[%s1078 + $0x40] sm:$0xff] %v1111
          %v1113 = vld [vmem:[%s1077 + $0x60] sm:$0xff]
          %1114 = vst [vmem:[%s1078 + $0x44] sm:$0xff] %v1113
          %v1115 = vld [vmem:[%s1077 + $0x44] sm:$0xff]
          %1116 = vst [vmem:[%s1078 + $0x48] sm:$0xff] %v1115
          %v1117 = vld [vmem:[%s1077 + $0x64] sm:$0xff]
          %1118 = vst [vmem:[%s1078 + $0x4c] sm:$0xff] %v1117
          %v1119 = vld [vmem:[%s1077 + $0x48] sm:$0xff]
          %1120 = vst [vmem:[%s1078 + $0x50] sm:$0xff] %v1119
          %v1121 = vld [vmem:[%s1077 + $0x68] sm:$0xff]
          %1122 = vst [vmem:[%s1078 + $0x54] sm:$0xff] %v1121
          %v1123 = vld [vmem:[%s1077 + $0x4c] sm:$0xff]
          %1124 = vst [vmem:[%s1078 + $0x58] sm:$0xff] %v1123
          %v1125 = vld [vmem:[%s1077 + $0x6c] sm:$0xff]
          %1126 = vst [vmem:[%s1078 + $0x5c] sm:$0xff] %v1125
          %v1127 = vld [vmem:[%s1077 + $0x50] sm:$0xff]
          %1128 = vst [vmem:[%s1078 + $0x60] sm:$0xff] %v1127
          %v1129 = vld [vmem:[%s1077 + $0x70] sm:$0xff]
          %1130 = vst [vmem:[%s1078 + $0x64] sm:$0xff] %v1129
          %v1131 = vld [vmem:[%s1077 + $0x54] sm:$0xff]
          %1132 = vst [vmem:[%s1078 + $0x68] sm:$0xff] %v1131
          %v1133 = vld [vmem:[%s1077 + $0x74] sm:$0xff]
          %1134 = vst [vmem:[%s1078 + $0x6c] sm:$0xff] %v1133
          %v1135 = vld [vmem:[%s1077 + $0x58] sm:$0xff]
          %1136 = vst [vmem:[%s1078 + $0x70] sm:$0xff] %v1135
          %v1137 = vld [vmem:[%s1077 + $0x78] sm:$0xff]
          %1138 = vst [vmem:[%s1078 + $0x74] sm:$0xff] %v1137
          %v1139 = vld [vmem:[%s1077 + $0x5c] sm:$0xff]
          %1140 = vst [vmem:[%s1078 + $0x78] sm:$0xff] %v1139
          %v1141 = vld [vmem:[%s1077 + $0x7c] sm:$0xff]
          %1142 = vst [vmem:[%s1078 + $0x7c] sm:$0xff] %v1141
          %v1143 = vld [vmem:[%s1077 + $0x80] sm:$0xff]
          %1144 = vst [vmem:[%s1078 + $0x80] sm:$0xff] %v1143
          %v1145 = vld [vmem:[%s1077 + $0xa0] sm:$0xff]
          %1146 = vst [vmem:[%s1078 + $0x84] sm:$0xff] %v1145
          %v1147 = vld [vmem:[%s1077 + $0x84] sm:$0xff]
          %1148 = vst [vmem:[%s1078 + $0x88] sm:$0xff] %v1147
          %v1149 = vld [vmem:[%s1077 + $0xa4] sm:$0xff]
          %1150 = vst [vmem:[%s1078 + $0x8c] sm:$0xff] %v1149
          %v1151 = vld [vmem:[%s1077 + $0x88] sm:$0xff]
          %1152 = vst [vmem:[%s1078 + $0x90] sm:$0xff] %v1151
          %v1153 = vld [vmem:[%s1077 + $0xa8] sm:$0xff]
          %1154 = vst [vmem:[%s1078 + $0x94] sm:$0xff] %v1153
          %v1155 = vld [vmem:[%s1077 + $0x8c] sm:$0xff]
          %1156 = vst [vmem:[%s1078 + $0x98] sm:$0xff] %v1155
          %v1157 = vld [vmem:[%s1077 + $0xac] sm:$0xff]
          %1158 = vst [vmem:[%s1078 + $0x9c] sm:$0xff] %v1157
          %v1159 = vld [vmem:[%s1077 + $0x90] sm:$0xff]
          %1160 = vst [vmem:[%s1078 + $0xa0] sm:$0xff] %v1159
          %v1161 = vld [vmem:[%s1077 + $0xb0] sm:$0xff]
          %1162 = vst [vmem:[%s1078 + $0xa4] sm:$0xff] %v1161
          %v1163 = vld [vmem:[%s1077 + $0x94] sm:$0xff]
          %1164 = vst [vmem:[%s1078 + $0xa8] sm:$0xff] %v1163
          %v1165 = vld [vmem:[%s1077 + $0xb4] sm:$0xff]
          %1166 = vst [vmem:[%s1078 + $0xac] sm:$0xff] %v1165
          %v1167 = vld [vmem:[%s1077 + $0x98] sm:$0xff]
          %1168 = vst [vmem:[%s1078 + $0xb0] sm:$0xff] %v1167
          %v1169 = vld [vmem:[%s1077 + $0xb8] sm:$0xff]
          %1170 = vst [vmem:[%s1078 + $0xb4] sm:$0xff] %v1169
          %v1171 = vld [vmem:[%s1077 + $0x9c] sm:$0xff]
          %1172 = vst [vmem:[%s1078 + $0xb8] sm:$0xff] %v1171
          %v1173 = vld [vmem:[%s1077 + $0xbc] sm:$0xff]
          %1174 = vst [vmem:[%s1078 + $0xbc] sm:$0xff] %v1173
          %v1175 = vld [vmem:[%s1077 + $0xc0] sm:$0xff]
          %1176 = vst [vmem:[%s1078 + $0xc0] sm:$0xff] %v1175
          %v1177 = vld [vmem:[%s1077 + $0xe0] sm:$0xff]
          %1178 = vst [vmem:[%s1078 + $0xc4] sm:$0xff] %v1177
          %v1179 = vld [vmem:[%s1077 + $0xc4] sm:$0xff]
          %1180 = vst [vmem:[%s1078 + $0xc8] sm:$0xff] %v1179
          %v1181 = vld [vmem:[%s1077 + $0xe4] sm:$0xff]
          %1182 = vst [vmem:[%s1078 + $0xcc] sm:$0xff] %v1181
          %v1183 = vld [vmem:[%s1077 + $0xc8] sm:$0xff]
          %1184 = vst [vmem:[%s1078 + $0xd0] sm:$0xff] %v1183
          %v1185 = vld [vmem:[%s1077 + $0xe8] sm:$0xff]
          %1186 = vst [vmem:[%s1078 + $0xd4] sm:$0xff] %v1185
          %v1187 = vld [vmem:[%s1077 + $0xcc] sm:$0xff]
          %1188 = vst [vmem:[%s1078 + $0xd8] sm:$0xff] %v1187
          %v1189 = vld [vmem:[%s1077 + $0xec] sm:$0xff]
          %1190 = vst [vmem:[%s1078 + $0xdc] sm:$0xff] %v1189
          %v1191 = vld [vmem:[%s1077 + $0xd0] sm:$0xff]
          %1192 = vst [vmem:[%s1078 + $0xe0] sm:$0xff] %v1191
          %v1193 = vld [vmem:[%s1077 + $0xf0] sm:$0xff]
          %1194 = vst [vmem:[%s1078 + $0xe4] sm:$0xff] %v1193
          %v1195 = vld [vmem:[%s1077 + $0xd4] sm:$0xff]
          %1196 = vst [vmem:[%s1078 + $0xe8] sm:$0xff] %v1195
          %v1197 = vld [vmem:[%s1077 + $0xf4] sm:$0xff]
          %1198 = vst [vmem:[%s1078 + $0xec] sm:$0xff] %v1197
          %v1199 = vld [vmem:[%s1077 + $0xd8] sm:$0xff]
          %1200 = vst [vmem:[%s1078 + $0xf0] sm:$0xff] %v1199
          %v1201 = vld [vmem:[%s1077 + $0xf8] sm:$0xff]
          %1202 = vst [vmem:[%s1078 + $0xf4] sm:$0xff] %v1201
          %v1203 = vld [vmem:[%s1077 + $0xdc] sm:$0xff]
          %1204 = vst [vmem:[%s1078 + $0xf8] sm:$0xff] %v1203
          %v1205 = vld [vmem:[%s1077 + $0xfc] sm:$0xff]
          %1206 = vst [vmem:[%s1078 + $0xfc] sm:$0xff] %v1205
          %v1207 = vld [vmem:[%s1077 + $0x100] sm:$0xff]
          %1208 = vst [vmem:[%s1078 + $0x100] sm:$0xff] %v1207
          %v1209 = vld [vmem:[%s1077 + $0x120] sm:$0xff]
          %1210 = vst [vmem:[%s1078 + $0x104] sm:$0xff] %v1209
          %v1211 = vld [vmem:[%s1077 + $0x104] sm:$0xff]
          %1212 = vst [vmem:[%s1078 + $0x108] sm:$0xff] %v1211
          %v1213 = vld [vmem:[%s1077 + $0x124] sm:$0xff]
          %1214 = vst [vmem:[%s1078 + $0x10c] sm:$0xff] %v1213
          %v1215 = vld [vmem:[%s1077 + $0x108] sm:$0xff]
          %1216 = vst [vmem:[%s1078 + $0x110] sm:$0xff] %v1215
          %v1217 = vld [vmem:[%s1077 + $0x128] sm:$0xff]
          %1218 = vst [vmem:[%s1078 + $0x114] sm:$0xff] %v1217
          %v1219 = vld [vmem:[%s1077 + $0x10c] sm:$0xff]
          %1220 = vst [vmem:[%s1078 + $0x118] sm:$0xff] %v1219
          %v1221 = vld [vmem:[%s1077 + $0x12c] sm:$0xff]
          %1222 = vst [vmem:[%s1078 + $0x11c] sm:$0xff] %v1221
          %v1223 = vld [vmem:[%s1077 + $0x110] sm:$0xff]
          %1224 = vst [vmem:[%s1078 + $0x120] sm:$0xff] %v1223
          %v1225 = vld [vmem:[%s1077 + $0x130] sm:$0xff]
          %1226 = vst [vmem:[%s1078 + $0x124] sm:$0xff] %v1225
          %v1227 = vld [vmem:[%s1077 + $0x114] sm:$0xff]
          %1228 = vst [vmem:[%s1078 + $0x128] sm:$0xff] %v1227
          %v1229 = vld [vmem:[%s1077 + $0x134] sm:$0xff]
          %1230 = vst [vmem:[%s1078 + $0x12c] sm:$0xff] %v1229
          %v1231 = vld [vmem:[%s1077 + $0x118] sm:$0xff]
          %1232 = vst [vmem:[%s1078 + $0x130] sm:$0xff] %v1231
          %v1233 = vld [vmem:[%s1077 + $0x138] sm:$0xff]
          %1234 = vst [vmem:[%s1078 + $0x134] sm:$0xff] %v1233
          %v1235 = vld [vmem:[%s1077 + $0x11c] sm:$0xff]
          %1236 = vst [vmem:[%s1078 + $0x138] sm:$0xff] %v1235
          %v1237 = vld [vmem:[%s1077 + $0x13c] sm:$0xff]
          %1238 = vst [vmem:[%s1078 + $0x13c] sm:$0xff] %v1237
          %v1239 = vld [vmem:[%s1077 + $0x140] sm:$0xff]
          %1240 = vst [vmem:[%s1078 + $0x140] sm:$0xff] %v1239
          %v1241 = vld [vmem:[%s1077 + $0x160] sm:$0xff]
          %1242 = vst [vmem:[%s1078 + $0x144] sm:$0xff] %v1241
          %v1243 = vld [vmem:[%s1077 + $0x144] sm:$0xff]
          %1244 = vst [vmem:[%s1078 + $0x148] sm:$0xff] %v1243
          %v1245 = vld [vmem:[%s1077 + $0x164] sm:$0xff]
          %1246 = vst [vmem:[%s1078 + $0x14c] sm:$0xff] %v1245
          %v1247 = vld [vmem:[%s1077 + $0x148] sm:$0xff]
          %1248 = vst [vmem:[%s1078 + $0x150] sm:$0xff] %v1247
          %v1249 = vld [vmem:[%s1077 + $0x168] sm:$0xff]
          %1250 = vst [vmem:[%s1078 + $0x154] sm:$0xff] %v1249
          %v1251 = vld [vmem:[%s1077 + $0x14c] sm:$0xff]
          %1252 = vst [vmem:[%s1078 + $0x158] sm:$0xff] %v1251
          %v1253 = vld [vmem:[%s1077 + $0x16c] sm:$0xff]
          %1254 = vst [vmem:[%s1078 + $0x15c] sm:$0xff] %v1253
          %v1255 = vld [vmem:[%s1077 + $0x150] sm:$0xff]
          %1256 = vst [vmem:[%s1078 + $0x160] sm:$0xff] %v1255
          %v1257 = vld [vmem:[%s1077 + $0x170] sm:$0xff]
          %1258 = vst [vmem:[%s1078 + $0x164] sm:$0xff] %v1257
          %v1259 = vld [vmem:[%s1077 + $0x154] sm:$0xff]
          %1260 = vst [vmem:[%s1078 + $0x168] sm:$0xff] %v1259
          %v1261 = vld [vmem:[%s1077 + $0x174] sm:$0xff]
          %1262 = vst [vmem:[%s1078 + $0x16c] sm:$0xff] %v1261
          %v1263 = vld [vmem:[%s1077 + $0x158] sm:$0xff]
          %1264 = vst [vmem:[%s1078 + $0x170] sm:$0xff] %v1263
          %v1265 = vld [vmem:[%s1077 + $0x178] sm:$0xff]
          %1266 = vst [vmem:[%s1078 + $0x174] sm:$0xff] %v1265
          %v1267 = vld [vmem:[%s1077 + $0x15c] sm:$0xff]
          %1268 = vst [vmem:[%s1078 + $0x178] sm:$0xff] %v1267
          %v1269 = vld [vmem:[%s1077 + $0x17c] sm:$0xff]
          %1270 = vst [vmem:[%s1078 + $0x17c] sm:$0xff] %v1269
          %v1271 = vld [vmem:[%s1077 + $0x180] sm:$0xff]
          %1272 = vst [vmem:[%s1078 + $0x180] sm:$0xff] %v1271
          %v1273 = vld [vmem:[%s1077 + $0x1a0] sm:$0xff]
          %1274 = vst [vmem:[%s1078 + $0x184] sm:$0xff] %v1273
          %v1275 = vld [vmem:[%s1077 + $0x184] sm:$0xff]
          %1276 = vst [vmem:[%s1078 + $0x188] sm:$0xff] %v1275
          %v1277 = vld [vmem:[%s1077 + $0x1a4] sm:$0xff]
          %1278 = vst [vmem:[%s1078 + $0x18c] sm:$0xff] %v1277
          %v1279 = vld [vmem:[%s1077 + $0x188] sm:$0xff]
          %1280 = vst [vmem:[%s1078 + $0x190] sm:$0xff] %v1279
          %v1281 = vld [vmem:[%s1077 + $0x1a8] sm:$0xff]
          %1282 = vst [vmem:[%s1078 + $0x194] sm:$0xff] %v1281
          %v1283 = vld [vmem:[%s1077 + $0x18c] sm:$0xff]
          %1284 = vst [vmem:[%s1078 + $0x198] sm:$0xff] %v1283
          %v1285 = vld [vmem:[%s1077 + $0x1ac] sm:$0xff]
          %1286 = vst [vmem:[%s1078 + $0x19c] sm:$0xff] %v1285
          %v1287 = vld [vmem:[%s1077 + $0x190] sm:$0xff]
          %1288 = vst [vmem:[%s1078 + $0x1a0] sm:$0xff] %v1287
          %v1289 = vld [vmem:[%s1077 + $0x1b0] sm:$0xff]
          %1290 = vst [vmem:[%s1078 + $0x1a4] sm:$0xff] %v1289
          %v1291 = vld [vmem:[%s1077 + $0x194] sm:$0xff]
          %1292 = vst [vmem:[%s1078 + $0x1a8] sm:$0xff] %v1291
          %v1293 = vld [vmem:[%s1077 + $0x1b4] sm:$0xff]
          %1294 = vst [vmem:[%s1078 + $0x1ac] sm:$0xff] %v1293
          %v1295 = vld [vmem:[%s1077 + $0x198] sm:$0xff]
          %1296 = vst [vmem:[%s1078 + $0x1b0] sm:$0xff] %v1295
          %v1297 = vld [vmem:[%s1077 + $0x1b8] sm:$0xff]
          %1298 = vst [vmem:[%s1078 + $0x1b4] sm:$0xff] %v1297
          %v1299 = vld [vmem:[%s1077 + $0x19c] sm:$0xff]
          %1300 = vst [vmem:[%s1078 + $0x1b8] sm:$0xff] %v1299
          %v1301 = vld [vmem:[%s1077 + $0x1bc] sm:$0xff]
          %1302 = vst [vmem:[%s1078 + $0x1bc] sm:$0xff] %v1301
          %v1303 = vld [vmem:[%s1077 + $0x1c0] sm:$0xff]
          %1304 = vst [vmem:[%s1078 + $0x1c0] sm:$0xff] %v1303
          %v1305 = vld [vmem:[%s1077 + $0x1e0] sm:$0xff]
          %1306 = vst [vmem:[%s1078 + $0x1c4] sm:$0xff] %v1305
          %v1307 = vld [vmem:[%s1077 + $0x1c4] sm:$0xff]
          %1308 = vst [vmem:[%s1078 + $0x1c8] sm:$0xff] %v1307
          %v1309 = vld [vmem:[%s1077 + $0x1e4] sm:$0xff]
          %1310 = vst [vmem:[%s1078 + $0x1cc] sm:$0xff] %v1309
          %v1311 = vld [vmem:[%s1077 + $0x1c8] sm:$0xff]
          %1312 = vst [vmem:[%s1078 + $0x1d0] sm:$0xff] %v1311
          %v1313 = vld [vmem:[%s1077 + $0x1e8] sm:$0xff]
          %1314 = vst [vmem:[%s1078 + $0x1d4] sm:$0xff] %v1313
          %v1315 = vld [vmem:[%s1077 + $0x1cc] sm:$0xff]
          %1316 = vst [vmem:[%s1078 + $0x1d8] sm:$0xff] %v1315
          %v1317 = vld [vmem:[%s1077 + $0x1ec] sm:$0xff]
          %1318 = vst [vmem:[%s1078 + $0x1dc] sm:$0xff] %v1317
          %v1319 = vld [vmem:[%s1077 + $0x1d0] sm:$0xff]
          %1320 = vst [vmem:[%s1078 + $0x1e0] sm:$0xff] %v1319
          %v1321 = vld [vmem:[%s1077 + $0x1f0] sm:$0xff]
          %1322 = vst [vmem:[%s1078 + $0x1e4] sm:$0xff] %v1321
          %v1323 = vld [vmem:[%s1077 + $0x1d4] sm:$0xff]
          %1324 = vst [vmem:[%s1078 + $0x1e8] sm:$0xff] %v1323
          %v1325 = vld [vmem:[%s1077 + $0x1f4] sm:$0xff]
          %1326 = vst [vmem:[%s1078 + $0x1ec] sm:$0xff] %v1325
          %v1327 = vld [vmem:[%s1077 + $0x1d8] sm:$0xff]
          %1328 = vst [vmem:[%s1078 + $0x1f0] sm:$0xff] %v1327
          %v1329 = vld [vmem:[%s1077 + $0x1f8] sm:$0xff]
          %1330 = vst [vmem:[%s1078 + $0x1f4] sm:$0xff] %v1329
          %v1331 = vld [vmem:[%s1077 + $0x1dc] sm:$0xff]
          %1332 = vst [vmem:[%s1078 + $0x1f8] sm:$0xff] %v1331
          %v1333 = vld [vmem:[%s1077 + $0x1fc] sm:$0xff]
          %1334 = vst [vmem:[%s1078 + $0x1fc] sm:$0xff] %v1333
          %v1335 = vld [vmem:[%s1077 + $0x200] sm:$0xff]
          %1336 = vst [vmem:[%s1078 + $0x200] sm:$0xff] %v1335
          %v1337 = vld [vmem:[%s1077 + $0x220] sm:$0xff]
          %1338 = vst [vmem:[%s1078 + $0x204] sm:$0xff] %v1337
          %v1339 = vld [vmem:[%s1077 + $0x204] sm:$0xff]
          %1340 = vst [vmem:[%s1078 + $0x208] sm:$0xff] %v1339
          %v1341 = vld [vmem:[%s1077 + $0x224] sm:$0xff]
          %1342 = vst [vmem:[%s1078 + $0x20c] sm:$0xff] %v1341
          %v1343 = vld [vmem:[%s1077 + $0x208] sm:$0xff]
          %1344 = vst [vmem:[%s1078 + $0x210] sm:$0xff] %v1343
          %v1345 = vld [vmem:[%s1077 + $0x228] sm:$0xff]
          %1346 = vst [vmem:[%s1078 + $0x214] sm:$0xff] %v1345
          %v1347 = vld [vmem:[%s1077 + $0x20c] sm:$0xff]
          %1348 = vst [vmem:[%s1078 + $0x218] sm:$0xff] %v1347
          %v1349 = vld [vmem:[%s1077 + $0x22c] sm:$0xff]
          %1350 = vst [vmem:[%s1078 + $0x21c] sm:$0xff] %v1349
          %v1351 = vld [vmem:[%s1077 + $0x210] sm:$0xff]
          %1352 = vst [vmem:[%s1078 + $0x220] sm:$0xff] %v1351
          %v1353 = vld [vmem:[%s1077 + $0x230] sm:$0xff]
          %1354 = vst [vmem:[%s1078 + $0x224] sm:$0xff] %v1353
          %v1355 = vld [vmem:[%s1077 + $0x214] sm:$0xff]
          %1356 = vst [vmem:[%s1078 + $0x228] sm:$0xff] %v1355
          %v1357 = vld [vmem:[%s1077 + $0x234] sm:$0xff]
          %1358 = vst [vmem:[%s1078 + $0x22c] sm:$0xff] %v1357
          %v1359 = vld [vmem:[%s1077 + $0x218] sm:$0xff]
          %1360 = vst [vmem:[%s1078 + $0x230] sm:$0xff] %v1359
          %v1361 = vld [vmem:[%s1077 + $0x238] sm:$0xff]
          %1362 = vst [vmem:[%s1078 + $0x234] sm:$0xff] %v1361
          %v1363 = vld [vmem:[%s1077 + $0x21c] sm:$0xff]
          %1364 = vst [vmem:[%s1078 + $0x238] sm:$0xff] %v1363
          %v1365 = vld [vmem:[%s1077 + $0x23c] sm:$0xff]
          %1366 = vst [vmem:[%s1078 + $0x23c] sm:$0xff] %v1365
          %v1367 = vld [vmem:[%s1077 + $0x240] sm:$0xff]
          %1368 = vst [vmem:[%s1078 + $0x240] sm:$0xff] %v1367
          %v1369 = vld [vmem:[%s1077 + $0x260] sm:$0xff]
          %1370 = vst [vmem:[%s1078 + $0x244] sm:$0xff] %v1369
          %v1371 = vld [vmem:[%s1077 + $0x244] sm:$0xff]
          %1372 = vst [vmem:[%s1078 + $0x248] sm:$0xff] %v1371
          %v1373 = vld [vmem:[%s1077 + $0x264] sm:$0xff]
          %1374 = vst [vmem:[%s1078 + $0x24c] sm:$0xff] %v1373
          %v1375 = vld [vmem:[%s1077 + $0x248] sm:$0xff]
          %1376 = vst [vmem:[%s1078 + $0x250] sm:$0xff] %v1375
          %v1377 = vld [vmem:[%s1077 + $0x268] sm:$0xff]
          %1378 = vst [vmem:[%s1078 + $0x254] sm:$0xff] %v1377
          %v1379 = vld [vmem:[%s1077 + $0x24c] sm:$0xff]
          %1380 = vst [vmem:[%s1078 + $0x258] sm:$0xff] %v1379
          %v1381 = vld [vmem:[%s1077 + $0x26c] sm:$0xff]
          %1382 = vst [vmem:[%s1078 + $0x25c] sm:$0xff] %v1381
          %v1383 = vld [vmem:[%s1077 + $0x250] sm:$0xff]
          %1384 = vst [vmem:[%s1078 + $0x260] sm:$0xff] %v1383
          %v1385 = vld [vmem:[%s1077 + $0x270] sm:$0xff]
          %1386 = vst [vmem:[%s1078 + $0x264] sm:$0xff] %v1385
          %v1387 = vld [vmem:[%s1077 + $0x254] sm:$0xff]
          %1388 = vst [vmem:[%s1078 + $0x268] sm:$0xff] %v1387
          %v1389 = vld [vmem:[%s1077 + $0x274] sm:$0xff]
          %1390 = vst [vmem:[%s1078 + $0x26c] sm:$0xff] %v1389
          %v1391 = vld [vmem:[%s1077 + $0x258] sm:$0xff]
          %1392 = vst [vmem:[%s1078 + $0x270] sm:$0xff] %v1391
          %v1393 = vld [vmem:[%s1077 + $0x278] sm:$0xff]
          %1394 = vst [vmem:[%s1078 + $0x274] sm:$0xff] %v1393
          %v1395 = vld [vmem:[%s1077 + $0x25c] sm:$0xff]
          %1396 = vst [vmem:[%s1078 + $0x278] sm:$0xff] %v1395
          %v1397 = vld [vmem:[%s1077 + $0x27c] sm:$0xff]
          %1398 = vst [vmem:[%s1078 + $0x27c] sm:$0xff] %v1397
          %v1399 = vld [vmem:[%s1077 + $0x280] sm:$0xff]
          %1400 = vst [vmem:[%s1078 + $0x280] sm:$0xff] %v1399
          %v1401 = vld [vmem:[%s1077 + $0x2a0] sm:$0xff]
          %1402 = vst [vmem:[%s1078 + $0x284] sm:$0xff] %v1401
          %v1403 = vld [vmem:[%s1077 + $0x284] sm:$0xff]
          %1404 = vst [vmem:[%s1078 + $0x288] sm:$0xff] %v1403
          %v1405 = vld [vmem:[%s1077 + $0x2a4] sm:$0xff]
          %1406 = vst [vmem:[%s1078 + $0x28c] sm:$0xff] %v1405
          %v1407 = vld [vmem:[%s1077 + $0x288] sm:$0xff]
          %1408 = vst [vmem:[%s1078 + $0x290] sm:$0xff] %v1407
          %v1409 = vld [vmem:[%s1077 + $0x2a8] sm:$0xff]
          %1410 = vst [vmem:[%s1078 + $0x294] sm:$0xff] %v1409
          %v1411 = vld [vmem:[%s1077 + $0x28c] sm:$0xff]
          %1412 = vst [vmem:[%s1078 + $0x298] sm:$0xff] %v1411
          %v1413 = vld [vmem:[%s1077 + $0x2ac] sm:$0xff]
          %1414 = vst [vmem:[%s1078 + $0x29c] sm:$0xff] %v1413
          %v1415 = vld [vmem:[%s1077 + $0x290] sm:$0xff]
          %1416 = vst [vmem:[%s1078 + $0x2a0] sm:$0xff] %v1415
          %v1417 = vld [vmem:[%s1077 + $0x2b0] sm:$0xff]
          %1418 = vst [vmem:[%s1078 + $0x2a4] sm:$0xff] %v1417
          %v1419 = vld [vmem:[%s1077 + $0x294] sm:$0xff]
          %1420 = vst [vmem:[%s1078 + $0x2a8] sm:$0xff] %v1419
          %v1421 = vld [vmem:[%s1077 + $0x2b4] sm:$0xff]
          %1422 = vst [vmem:[%s1078 + $0x2ac] sm:$0xff] %v1421
          %v1423 = vld [vmem:[%s1077 + $0x298] sm:$0xff]
          %1424 = vst [vmem:[%s1078 + $0x2b0] sm:$0xff] %v1423
          %v1425 = vld [vmem:[%s1077 + $0x2b8] sm:$0xff]
          %1426 = vst [vmem:[%s1078 + $0x2b4] sm:$0xff] %v1425
          %v1427 = vld [vmem:[%s1077 + $0x29c] sm:$0xff]
          %1428 = vst [vmem:[%s1078 + $0x2b8] sm:$0xff] %v1427
          %v1429 = vld [vmem:[%s1077 + $0x2bc] sm:$0xff]
          %1430 = vst [vmem:[%s1078 + $0x2bc] sm:$0xff] %v1429
          %v1431 = vld [vmem:[%s1077 + $0x2c0] sm:$0xff]
          %1432 = vst [vmem:[%s1078 + $0x2c0] sm:$0xff] %v1431
          %v1433 = vld [vmem:[%s1077 + $0x2e0] sm:$0xff]
          %1434 = vst [vmem:[%s1078 + $0x2c4] sm:$0xff] %v1433
          %v1435 = vld [vmem:[%s1077 + $0x2c4] sm:$0xff]
          %1436 = vst [vmem:[%s1078 + $0x2c8] sm:$0xff] %v1435
          %v1437 = vld [vmem:[%s1077 + $0x2e4] sm:$0xff]
          %1438 = vst [vmem:[%s1078 + $0x2cc] sm:$0xff] %v1437
          %v1439 = vld [vmem:[%s1077 + $0x2c8] sm:$0xff]
          %1440 = vst [vmem:[%s1078 + $0x2d0] sm:$0xff] %v1439
          %v1441 = vld [vmem:[%s1077 + $0x2e8] sm:$0xff]
          %1442 = vst [vmem:[%s1078 + $0x2d4] sm:$0xff] %v1441
          %v1443 = vld [vmem:[%s1077 + $0x2cc] sm:$0xff]
          %1444 = vst [vmem:[%s1078 + $0x2d8] sm:$0xff] %v1443
          %v1445 = vld [vmem:[%s1077 + $0x2ec] sm:$0xff]
          %1446 = vst [vmem:[%s1078 + $0x2dc] sm:$0xff] %v1445
          %v1447 = vld [vmem:[%s1077 + $0x2d0] sm:$0xff]
          %1448 = vst [vmem:[%s1078 + $0x2e0] sm:$0xff] %v1447
          %v1449 = vld [vmem:[%s1077 + $0x2f0] sm:$0xff]
          %1450 = vst [vmem:[%s1078 + $0x2e4] sm:$0xff] %v1449
          %v1451 = vld [vmem:[%s1077 + $0x2d4] sm:$0xff]
          %1452 = vst [vmem:[%s1078 + $0x2e8] sm:$0xff] %v1451
          %v1453 = vld [vmem:[%s1077 + $0x2f4] sm:$0xff]
          %1454 = vst [vmem:[%s1078 + $0x2ec] sm:$0xff] %v1453
          %v1455 = vld [vmem:[%s1077 + $0x2d8] sm:$0xff]
          %1456 = vst [vmem:[%s1078 + $0x2f0] sm:$0xff] %v1455
          %v1457 = vld [vmem:[%s1077 + $0x2f8] sm:$0xff]
          %1458 = vst [vmem:[%s1078 + $0x2f4] sm:$0xff] %v1457
          %v1459 = vld [vmem:[%s1077 + $0x2dc] sm:$0xff]
          %1460 = vst [vmem:[%s1078 + $0x2f8] sm:$0xff] %v1459
          %v1461 = vld [vmem:[%s1077 + $0x2fc] sm:$0xff]
          %1462 = vst [vmem:[%s1078 + $0x2fc] sm:$0xff] %v1461
          %v1463 = vld [vmem:[%s1077 + $0x300] sm:$0xff]
          %1464 = vst [vmem:[%s1078 + $0x300] sm:$0xff] %v1463
          %v1465 = vld [vmem:[%s1077 + $0x320] sm:$0xff]
          %1466 = vst [vmem:[%s1078 + $0x304] sm:$0xff] %v1465
          %v1467 = vld [vmem:[%s1077 + $0x304] sm:$0xff]
          %1468 = vst [vmem:[%s1078 + $0x308] sm:$0xff] %v1467
          %v1469 = vld [vmem:[%s1077 + $0x324] sm:$0xff]
          %1470 = vst [vmem:[%s1078 + $0x30c] sm:$0xff] %v1469
          %v1471 = vld [vmem:[%s1077 + $0x308] sm:$0xff]
          %1472 = vst [vmem:[%s1078 + $0x310] sm:$0xff] %v1471
          %v1473 = vld [vmem:[%s1077 + $0x328] sm:$0xff]
          %1474 = vst [vmem:[%s1078 + $0x314] sm:$0xff] %v1473
          %v1475 = vld [vmem:[%s1077 + $0x30c] sm:$0xff]
          %1476 = vst [vmem:[%s1078 + $0x318] sm:$0xff] %v1475
          %v1477 = vld [vmem:[%s1077 + $0x32c] sm:$0xff]
          %1478 = vst [vmem:[%s1078 + $0x31c] sm:$0xff] %v1477
          %v1479 = vld [vmem:[%s1077 + $0x310] sm:$0xff]
          %1480 = vst [vmem:[%s1078 + $0x320] sm:$0xff] %v1479
          %v1481 = vld [vmem:[%s1077 + $0x330] sm:$0xff]
          %1482 = vst [vmem:[%s1078 + $0x324] sm:$0xff] %v1481
          %v1483 = vld [vmem:[%s1077 + $0x314] sm:$0xff]
          %1484 = vst [vmem:[%s1078 + $0x328] sm:$0xff] %v1483
          %v1485 = vld [vmem:[%s1077 + $0x334] sm:$0xff]
          %1486 = vst [vmem:[%s1078 + $0x32c] sm:$0xff] %v1485
          %v1487 = vld [vmem:[%s1077 + $0x318] sm:$0xff]
          %1488 = vst [vmem:[%s1078 + $0x330] sm:$0xff] %v1487
          %v1489 = vld [vmem:[%s1077 + $0x338] sm:$0xff]
          %1490 = vst [vmem:[%s1078 + $0x334] sm:$0xff] %v1489
          %v1491 = vld [vmem:[%s1077 + $0x31c] sm:$0xff]
          %1492 = vst [vmem:[%s1078 + $0x338] sm:$0xff] %v1491
          %v1493 = vld [vmem:[%s1077 + $0x33c] sm:$0xff]
          %1494 = vst [vmem:[%s1078 + $0x33c] sm:$0xff] %v1493
          %v1495 = vld [vmem:[%s1077 + $0x340] sm:$0xff]
          %1496 = vst [vmem:[%s1078 + $0x340] sm:$0xff] %v1495
          %v1497 = vld [vmem:[%s1077 + $0x360] sm:$0xff]
          %1498 = vst [vmem:[%s1078 + $0x344] sm:$0xff] %v1497
          %v1499 = vld [vmem:[%s1077 + $0x344] sm:$0xff]
          %1500 = vst [vmem:[%s1078 + $0x348] sm:$0xff] %v1499
          %v1501 = vld [vmem:[%s1077 + $0x364] sm:$0xff]
          %1502 = vst [vmem:[%s1078 + $0x34c] sm:$0xff] %v1501
          %v1503 = vld [vmem:[%s1077 + $0x348] sm:$0xff]
          %1504 = vst [vmem:[%s1078 + $0x350] sm:$0xff] %v1503
          %v1505 = vld [vmem:[%s1077 + $0x368] sm:$0xff]
          %1506 = vst [vmem:[%s1078 + $0x354] sm:$0xff] %v1505
          %v1507 = vld [vmem:[%s1077 + $0x34c] sm:$0xff]
          %1508 = vst [vmem:[%s1078 + $0x358] sm:$0xff] %v1507
          %v1509 = vld [vmem:[%s1077 + $0x36c] sm:$0xff]
          %1510 = vst [vmem:[%s1078 + $0x35c] sm:$0xff] %v1509
          %v1511 = vld [vmem:[%s1077 + $0x350] sm:$0xff]
          %1512 = vst [vmem:[%s1078 + $0x360] sm:$0xff] %v1511
          %v1513 = vld [vmem:[%s1077 + $0x370] sm:$0xff]
          %1514 = vst [vmem:[%s1078 + $0x364] sm:$0xff] %v1513
          %v1515 = vld [vmem:[%s1077 + $0x354] sm:$0xff]
          %1516 = vst [vmem:[%s1078 + $0x368] sm:$0xff] %v1515
          %v1517 = vld [vmem:[%s1077 + $0x374] sm:$0xff]
          %1518 = vst [vmem:[%s1078 + $0x36c] sm:$0xff] %v1517
          %v1519 = vld [vmem:[%s1077 + $0x358] sm:$0xff]
          %1520 = vst [vmem:[%s1078 + $0x370] sm:$0xff] %v1519
          %v1521 = vld [vmem:[%s1077 + $0x378] sm:$0xff]
          %1522 = vst [vmem:[%s1078 + $0x374] sm:$0xff] %v1521
          %v1523 = vld [vmem:[%s1077 + $0x35c] sm:$0xff]
          %1524 = vst [vmem:[%s1078 + $0x378] sm:$0xff] %v1523
          %v1525 = vld [vmem:[%s1077 + $0x37c] sm:$0xff]
          %1526 = vst [vmem:[%s1078 + $0x37c] sm:$0xff] %v1525
          %v1527 = vld [vmem:[%s1077 + $0x380] sm:$0xff]
          %1528 = vst [vmem:[%s1078 + $0x380] sm:$0xff] %v1527
          %v1529 = vld [vmem:[%s1077 + $0x3a0] sm:$0xff]
          %1530 = vst [vmem:[%s1078 + $0x384] sm:$0xff] %v1529
          %v1531 = vld [vmem:[%s1077 + $0x384] sm:$0xff]
          %1532 = vst [vmem:[%s1078 + $0x388] sm:$0xff] %v1531
          %v1533 = vld [vmem:[%s1077 + $0x3a4] sm:$0xff]
          %1534 = vst [vmem:[%s1078 + $0x38c] sm:$0xff] %v1533
          %v1535 = vld [vmem:[%s1077 + $0x388] sm:$0xff]
          %1536 = vst [vmem:[%s1078 + $0x390] sm:$0xff] %v1535
          %v1537 = vld [vmem:[%s1077 + $0x3a8] sm:$0xff]
          %1538 = vst [vmem:[%s1078 + $0x394] sm:$0xff] %v1537
          %v1539 = vld [vmem:[%s1077 + $0x38c] sm:$0xff]
          %1540 = vst [vmem:[%s1078 + $0x398] sm:$0xff] %v1539
          %v1541 = vld [vmem:[%s1077 + $0x3ac] sm:$0xff]
          %1542 = vst [vmem:[%s1078 + $0x39c] sm:$0xff] %v1541
          %v1543 = vld [vmem:[%s1077 + $0x390] sm:$0xff]
          %1544 = vst [vmem:[%s1078 + $0x3a0] sm:$0xff] %v1543
          %v1545 = vld [vmem:[%s1077 + $0x3b0] sm:$0xff]
          %1546 = vst [vmem:[%s1078 + $0x3a4] sm:$0xff] %v1545
          %v1547 = vld [vmem:[%s1077 + $0x394] sm:$0xff]
          %1548 = vst [vmem:[%s1078 + $0x3a8] sm:$0xff] %v1547
          %v1549 = vld [vmem:[%s1077 + $0x3b4] sm:$0xff]
          %1550 = vst [vmem:[%s1078 + $0x3ac] sm:$0xff] %v1549
          %v1551 = vld [vmem:[%s1077 + $0x398] sm:$0xff]
          %1552 = vst [vmem:[%s1078 + $0x3b0] sm:$0xff] %v1551
          %v1553 = vld [vmem:[%s1077 + $0x3b8] sm:$0xff]
          %1554 = vst [vmem:[%s1078 + $0x3b4] sm:$0xff] %v1553
          %v1555 = vld [vmem:[%s1077 + $0x39c] sm:$0xff]
          %1556 = vst [vmem:[%s1078 + $0x3b8] sm:$0xff] %v1555
          %v1557 = vld [vmem:[%s1077 + $0x3bc] sm:$0xff]
          %1558 = vst [vmem:[%s1078 + $0x3bc] sm:$0xff] %v1557
          %v1559 = vld [vmem:[%s1077 + $0x3c0] sm:$0xff]
          %1560 = vst [vmem:[%s1078 + $0x3c0] sm:$0xff] %v1559
          %v1561 = vld [vmem:[%s1077 + $0x3e0] sm:$0xff]
          %1562 = vst [vmem:[%s1078 + $0x3c4] sm:$0xff] %v1561
          %v1563 = vld [vmem:[%s1077 + $0x3c4] sm:$0xff]
          %1564 = vst [vmem:[%s1078 + $0x3c8] sm:$0xff] %v1563
          %v1565 = vld [vmem:[%s1077 + $0x3e4] sm:$0xff]
          %1566 = vst [vmem:[%s1078 + $0x3cc] sm:$0xff] %v1565
          %v1567 = vld [vmem:[%s1077 + $0x3c8] sm:$0xff]
          %1568 = vst [vmem:[%s1078 + $0x3d0] sm:$0xff] %v1567
          %v1569 = vld [vmem:[%s1077 + $0x3e8] sm:$0xff]
          %1570 = vst [vmem:[%s1078 + $0x3d4] sm:$0xff] %v1569
          %v1571 = vld [vmem:[%s1077 + $0x3cc] sm:$0xff]
          %1572 = vst [vmem:[%s1078 + $0x3d8] sm:$0xff] %v1571
          %v1573 = vld [vmem:[%s1077 + $0x3ec] sm:$0xff]
          %1574 = vst [vmem:[%s1078 + $0x3dc] sm:$0xff] %v1573
          %v1575 = vld [vmem:[%s1077 + $0x3d0] sm:$0xff]
          %1576 = vst [vmem:[%s1078 + $0x3e0] sm:$0xff] %v1575
          %v1577 = vld [vmem:[%s1077 + $0x3f0] sm:$0xff]
          %1578 = vst [vmem:[%s1078 + $0x3e4] sm:$0xff] %v1577
          %v1579 = vld [vmem:[%s1077 + $0x3d4] sm:$0xff]
          %1580 = vst [vmem:[%s1078 + $0x3e8] sm:$0xff] %v1579
          %v1581 = vld [vmem:[%s1077 + $0x3f4] sm:$0xff]
          %1582 = vst [vmem:[%s1078 + $0x3ec] sm:$0xff] %v1581
          %v1583 = vld [vmem:[%s1077 + $0x3d8] sm:$0xff]
          %1584 = vst [vmem:[%s1078 + $0x3f0] sm:$0xff] %v1583
          %v1585 = vld [vmem:[%s1077 + $0x3f8] sm:$0xff]
          %1586 = vst [vmem:[%s1078 + $0x3f4] sm:$0xff] %v1585
          %v1587 = vld [vmem:[%s1077 + $0x3dc] sm:$0xff]
          %1588 = vst [vmem:[%s1078 + $0x3f8] sm:$0xff] %v1587
          %v1589 = vld [vmem:[%s1077 + $0x3fc] sm:$0xff]
          %1590 = vst [vmem:[%s1078 + $0x3fc] sm:$0xff] %v1589
          %v1591 = vld [vmem:[%s1077 + $0x400] sm:$0xff]
          %1592 = vst [vmem:[%s1078 + $0x400] sm:$0xff] %v1591
          %v1593 = vld [vmem:[%s1077 + $0x420] sm:$0xff]
          %1594 = vst [vmem:[%s1078 + $0x404] sm:$0xff] %v1593
          %v1595 = vld [vmem:[%s1077 + $0x404] sm:$0xff]
          %1596 = vst [vmem:[%s1078 + $0x408] sm:$0xff] %v1595
          %v1597 = vld [vmem:[%s1077 + $0x424] sm:$0xff]
          %1598 = vst [vmem:[%s1078 + $0x40c] sm:$0xff] %v1597
          %v1599 = vld [vmem:[%s1077 + $0x408] sm:$0xff]
          %1600 = vst [vmem:[%s1078 + $0x410] sm:$0xff] %v1599
          %v1601 = vld [vmem:[%s1077 + $0x428] sm:$0xff]
          %1602 = vst [vmem:[%s1078 + $0x414] sm:$0xff] %v1601
          %v1603 = vld [vmem:[%s1077 + $0x40c] sm:$0xff]
          %1604 = vst [vmem:[%s1078 + $0x418] sm:$0xff] %v1603
          %v1605 = vld [vmem:[%s1077 + $0x42c] sm:$0xff]
          %1606 = vst [vmem:[%s1078 + $0x41c] sm:$0xff] %v1605
          %v1607 = vld [vmem:[%s1077 + $0x410] sm:$0xff]
          %1608 = vst [vmem:[%s1078 + $0x420] sm:$0xff] %v1607
          %v1609 = vld [vmem:[%s1077 + $0x430] sm:$0xff]
          %1610 = vst [vmem:[%s1078 + $0x424] sm:$0xff] %v1609
          %v1611 = vld [vmem:[%s1077 + $0x414] sm:$0xff]
          %1612 = vst [vmem:[%s1078 + $0x428] sm:$0xff] %v1611
          %v1613 = vld [vmem:[%s1077 + $0x434] sm:$0xff]
          %1614 = vst [vmem:[%s1078 + $0x42c] sm:$0xff] %v1613
          %v1615 = vld [vmem:[%s1077 + $0x418] sm:$0xff]
          %1616 = vst [vmem:[%s1078 + $0x430] sm:$0xff] %v1615
          %v1617 = vld [vmem:[%s1077 + $0x438] sm:$0xff]
          %1618 = vst [vmem:[%s1078 + $0x434] sm:$0xff] %v1617
          %v1619 = vld [vmem:[%s1077 + $0x41c] sm:$0xff]
          %1620 = vst [vmem:[%s1078 + $0x438] sm:$0xff] %v1619
          %v1621 = vld [vmem:[%s1077 + $0x43c] sm:$0xff]
          %1622 = vst [vmem:[%s1078 + $0x43c] sm:$0xff] %v1621
          %v1623 = vld [vmem:[%s1077 + $0x440] sm:$0xff]
          %1624 = vst [vmem:[%s1078 + $0x440] sm:$0xff] %v1623
          %v1625 = vld [vmem:[%s1077 + $0x460] sm:$0xff]
          %1626 = vst [vmem:[%s1078 + $0x444] sm:$0xff] %v1625
          %v1627 = vld [vmem:[%s1077 + $0x444] sm:$0xff]
          %1628 = vst [vmem:[%s1078 + $0x448] sm:$0xff] %v1627
          %v1629 = vld [vmem:[%s1077 + $0x464] sm:$0xff]
          %1630 = vst [vmem:[%s1078 + $0x44c] sm:$0xff] %v1629
          %v1631 = vld [vmem:[%s1077 + $0x448] sm:$0xff]
          %1632 = vst [vmem:[%s1078 + $0x450] sm:$0xff] %v1631
          %v1633 = vld [vmem:[%s1077 + $0x468] sm:$0xff]
          %1634 = vst [vmem:[%s1078 + $0x454] sm:$0xff] %v1633
          %v1635 = vld [vmem:[%s1077 + $0x44c] sm:$0xff]
          %1636 = vst [vmem:[%s1078 + $0x458] sm:$0xff] %v1635
          %v1637 = vld [vmem:[%s1077 + $0x46c] sm:$0xff]
          %1638 = vst [vmem:[%s1078 + $0x45c] sm:$0xff] %v1637
          %v1639 = vld [vmem:[%s1077 + $0x450] sm:$0xff]
          %1640 = vst [vmem:[%s1078 + $0x460] sm:$0xff] %v1639
          %v1641 = vld [vmem:[%s1077 + $0x470] sm:$0xff]
          %1642 = vst [vmem:[%s1078 + $0x464] sm:$0xff] %v1641
          %v1643 = vld [vmem:[%s1077 + $0x454] sm:$0xff]
          %1644 = vst [vmem:[%s1078 + $0x468] sm:$0xff] %v1643
          %v1645 = vld [vmem:[%s1077 + $0x474] sm:$0xff]
          %1646 = vst [vmem:[%s1078 + $0x46c] sm:$0xff] %v1645
          %v1647 = vld [vmem:[%s1077 + $0x458] sm:$0xff]
          %1648 = vst [vmem:[%s1078 + $0x470] sm:$0xff] %v1647
          %v1649 = vld [vmem:[%s1077 + $0x478] sm:$0xff]
          %1650 = vst [vmem:[%s1078 + $0x474] sm:$0xff] %v1649
          %v1651 = vld [vmem:[%s1077 + $0x45c] sm:$0xff]
          %1652 = vst [vmem:[%s1078 + $0x478] sm:$0xff] %v1651
          %v1653 = vld [vmem:[%s1077 + $0x47c] sm:$0xff]
          %1654 = vst [vmem:[%s1078 + $0x47c] sm:$0xff] %v1653
          %v1655 = vld [vmem:[%s1077 + $0x480] sm:$0xff]
          %1656 = vst [vmem:[%s1078 + $0x480] sm:$0xff] %v1655
          %v1657 = vld [vmem:[%s1077 + $0x4a0] sm:$0xff]
          %1658 = vst [vmem:[%s1078 + $0x484] sm:$0xff] %v1657
          %v1659 = vld [vmem:[%s1077 + $0x484] sm:$0xff]
          %1660 = vst [vmem:[%s1078 + $0x488] sm:$0xff] %v1659
          %v1661 = vld [vmem:[%s1077 + $0x4a4] sm:$0xff]
          %1662 = vst [vmem:[%s1078 + $0x48c] sm:$0xff] %v1661
          %v1663 = vld [vmem:[%s1077 + $0x488] sm:$0xff]
          %1664 = vst [vmem:[%s1078 + $0x490] sm:$0xff] %v1663
          %v1665 = vld [vmem:[%s1077 + $0x4a8] sm:$0xff]
          %1666 = vst [vmem:[%s1078 + $0x494] sm:$0xff] %v1665
          %v1667 = vld [vmem:[%s1077 + $0x48c] sm:$0xff]
          %1668 = vst [vmem:[%s1078 + $0x498] sm:$0xff] %v1667
          %v1669 = vld [vmem:[%s1077 + $0x4ac] sm:$0xff]
          %1670 = vst [vmem:[%s1078 + $0x49c] sm:$0xff] %v1669
          %v1671 = vld [vmem:[%s1077 + $0x490] sm:$0xff]
          %1672 = vst [vmem:[%s1078 + $0x4a0] sm:$0xff] %v1671
          %v1673 = vld [vmem:[%s1077 + $0x4b0] sm:$0xff]
          %1674 = vst [vmem:[%s1078 + $0x4a4] sm:$0xff] %v1673
          %v1675 = vld [vmem:[%s1077 + $0x494] sm:$0xff]
          %1676 = vst [vmem:[%s1078 + $0x4a8] sm:$0xff] %v1675
          %v1677 = vld [vmem:[%s1077 + $0x4b4] sm:$0xff]
          %1678 = vst [vmem:[%s1078 + $0x4ac] sm:$0xff] %v1677
          %v1679 = vld [vmem:[%s1077 + $0x498] sm:$0xff]
          %1680 = vst [vmem:[%s1078 + $0x4b0] sm:$0xff] %v1679
          %v1681 = vld [vmem:[%s1077 + $0x4b8] sm:$0xff]
          %1682 = vst [vmem:[%s1078 + $0x4b4] sm:$0xff] %v1681
          %v1683 = vld [vmem:[%s1077 + $0x49c] sm:$0xff]
          %1684 = vst [vmem:[%s1078 + $0x4b8] sm:$0xff] %v1683
          %v1685 = vld [vmem:[%s1077 + $0x4bc] sm:$0xff]
          %1686 = vst [vmem:[%s1078 + $0x4bc] sm:$0xff] %v1685
          %v1687 = vld [vmem:[%s1077 + $0x4c0] sm:$0xff]
          %1688 = vst [vmem:[%s1078 + $0x4c0] sm:$0xff] %v1687
          %v1689 = vld [vmem:[%s1077 + $0x4e0] sm:$0xff]
          %1690 = vst [vmem:[%s1078 + $0x4c4] sm:$0xff] %v1689
          %v1691 = vld [vmem:[%s1077 + $0x4c4] sm:$0xff]
          %1692 = vst [vmem:[%s1078 + $0x4c8] sm:$0xff] %v1691
          %v1693 = vld [vmem:[%s1077 + $0x4e4] sm:$0xff]
          %1694 = vst [vmem:[%s1078 + $0x4cc] sm:$0xff] %v1693
          %v1695 = vld [vmem:[%s1077 + $0x4c8] sm:$0xff]
          %1696 = vst [vmem:[%s1078 + $0x4d0] sm:$0xff] %v1695
          %v1697 = vld [vmem:[%s1077 + $0x4e8] sm:$0xff]
          %1698 = vst [vmem:[%s1078 + $0x4d4] sm:$0xff] %v1697
          %v1699 = vld [vmem:[%s1077 + $0x4cc] sm:$0xff]
          %1700 = vst [vmem:[%s1078 + $0x4d8] sm:$0xff] %v1699
          %v1701 = vld [vmem:[%s1077 + $0x4ec] sm:$0xff]
          %1702 = vst [vmem:[%s1078 + $0x4dc] sm:$0xff] %v1701
          %v1703 = vld [vmem:[%s1077 + $0x4d0] sm:$0xff]
          %1704 = vst [vmem:[%s1078 + $0x4e0] sm:$0xff] %v1703
          %v1705 = vld [vmem:[%s1077 + $0x4f0] sm:$0xff]
          %1706 = vst [vmem:[%s1078 + $0x4e4] sm:$0xff] %v1705
          %v1707 = vld [vmem:[%s1077 + $0x4d4] sm:$0xff]
          %1708 = vst [vmem:[%s1078 + $0x4e8] sm:$0xff] %v1707
          %v1709 = vld [vmem:[%s1077 + $0x4f4] sm:$0xff]
          %1710 = vst [vmem:[%s1078 + $0x4ec] sm:$0xff] %v1709
          %v1711 = vld [vmem:[%s1077 + $0x4d8] sm:$0xff]
          %1712 = vst [vmem:[%s1078 + $0x4f0] sm:$0xff] %v1711
          %v1713 = vld [vmem:[%s1077 + $0x4f8] sm:$0xff]
          %1714 = vst [vmem:[%s1078 + $0x4f4] sm:$0xff] %v1713
          %v1715 = vld [vmem:[%s1077 + $0x4dc] sm:$0xff]
          %1716 = vst [vmem:[%s1078 + $0x4f8] sm:$0xff] %v1715
          %v1717 = vld [vmem:[%s1077 + $0x4fc] sm:$0xff]
          %1718 = vst [vmem:[%s1078 + $0x4fc] sm:$0xff] %v1717
          %v1719 = vld [vmem:[%s1077 + $0x500] sm:$0xff]
          %1720 = vst [vmem:[%s1078 + $0x500] sm:$0xff] %v1719
          %v1721 = vld [vmem:[%s1077 + $0x520] sm:$0xff]
          %1722 = vst [vmem:[%s1078 + $0x504] sm:$0xff] %v1721
          %v1723 = vld [vmem:[%s1077 + $0x504] sm:$0xff]
          %1724 = vst [vmem:[%s1078 + $0x508] sm:$0xff] %v1723
          %v1725 = vld [vmem:[%s1077 + $0x524] sm:$0xff]
          %1726 = vst [vmem:[%s1078 + $0x50c] sm:$0xff] %v1725
          %v1727 = vld [vmem:[%s1077 + $0x508] sm:$0xff]
          %1728 = vst [vmem:[%s1078 + $0x510] sm:$0xff] %v1727
          %v1729 = vld [vmem:[%s1077 + $0x528] sm:$0xff]
          %1730 = vst [vmem:[%s1078 + $0x514] sm:$0xff] %v1729
          %v1731 = vld [vmem:[%s1077 + $0x50c] sm:$0xff]
          %1732 = vst [vmem:[%s1078 + $0x518] sm:$0xff] %v1731
          %v1733 = vld [vmem:[%s1077 + $0x52c] sm:$0xff]
          %1734 = vst [vmem:[%s1078 + $0x51c] sm:$0xff] %v1733
          %v1735 = vld [vmem:[%s1077 + $0x510] sm:$0xff]
          %1736 = vst [vmem:[%s1078 + $0x520] sm:$0xff] %v1735
          %v1737 = vld [vmem:[%s1077 + $0x530] sm:$0xff]
          %1738 = vst [vmem:[%s1078 + $0x524] sm:$0xff] %v1737
          %v1739 = vld [vmem:[%s1077 + $0x514] sm:$0xff]
          %1740 = vst [vmem:[%s1078 + $0x528] sm:$0xff] %v1739
          %v1741 = vld [vmem:[%s1077 + $0x534] sm:$0xff]
          %1742 = vst [vmem:[%s1078 + $0x52c] sm:$0xff] %v1741
          %v1743 = vld [vmem:[%s1077 + $0x518] sm:$0xff]
          %1744 = vst [vmem:[%s1078 + $0x530] sm:$0xff] %v1743
          %v1745 = vld [vmem:[%s1077 + $0x538] sm:$0xff]
          %1746 = vst [vmem:[%s1078 + $0x534] sm:$0xff] %v1745
          %v1747 = vld [vmem:[%s1077 + $0x51c] sm:$0xff]
          %1748 = vst [vmem:[%s1078 + $0x538] sm:$0xff] %v1747
          %v1749 = vld [vmem:[%s1077 + $0x53c] sm:$0xff]
          %1750 = vst [vmem:[%s1078 + $0x53c] sm:$0xff] %v1749
          %v1751 = vld [vmem:[%s1077 + $0x540] sm:$0xff]
          %1752 = vst [vmem:[%s1078 + $0x540] sm:$0xff] %v1751
          %v1753 = vld [vmem:[%s1077 + $0x560] sm:$0xff]
          %1754 = vst [vmem:[%s1078 + $0x544] sm:$0xff] %v1753
          %v1755 = vld [vmem:[%s1077 + $0x544] sm:$0xff]
          %1756 = vst [vmem:[%s1078 + $0x548] sm:$0xff] %v1755
          %v1757 = vld [vmem:[%s1077 + $0x564] sm:$0xff]
          %1758 = vst [vmem:[%s1078 + $0x54c] sm:$0xff] %v1757
          %v1759 = vld [vmem:[%s1077 + $0x548] sm:$0xff]
          %1760 = vst [vmem:[%s1078 + $0x550] sm:$0xff] %v1759
          %v1761 = vld [vmem:[%s1077 + $0x568] sm:$0xff]
          %1762 = vst [vmem:[%s1078 + $0x554] sm:$0xff] %v1761
          %v1763 = vld [vmem:[%s1077 + $0x54c] sm:$0xff]
          %1764 = vst [vmem:[%s1078 + $0x558] sm:$0xff] %v1763
          %v1765 = vld [vmem:[%s1077 + $0x56c] sm:$0xff]
          %1766 = vst [vmem:[%s1078 + $0x55c] sm:$0xff] %v1765
          %v1767 = vld [vmem:[%s1077 + $0x550] sm:$0xff]
          %1768 = vst [vmem:[%s1078 + $0x560] sm:$0xff] %v1767
          %v1769 = vld [vmem:[%s1077 + $0x570] sm:$0xff]
          %1770 = vst [vmem:[%s1078 + $0x564] sm:$0xff] %v1769
          %v1771 = vld [vmem:[%s1077 + $0x554] sm:$0xff]
          %1772 = vst [vmem:[%s1078 + $0x568] sm:$0xff] %v1771
          %v1773 = vld [vmem:[%s1077 + $0x574] sm:$0xff]
          %1774 = vst [vmem:[%s1078 + $0x56c] sm:$0xff] %v1773
          %v1775 = vld [vmem:[%s1077 + $0x558] sm:$0xff]
          %1776 = vst [vmem:[%s1078 + $0x570] sm:$0xff] %v1775
          %v1777 = vld [vmem:[%s1077 + $0x578] sm:$0xff]
          %1778 = vst [vmem:[%s1078 + $0x574] sm:$0xff] %v1777
          %v1779 = vld [vmem:[%s1077 + $0x55c] sm:$0xff]
          %1780 = vst [vmem:[%s1078 + $0x578] sm:$0xff] %v1779
          %v1781 = vld [vmem:[%s1077 + $0x57c] sm:$0xff]
          %1782 = vst [vmem:[%s1078 + $0x57c] sm:$0xff] %v1781
          %v1783 = vld [vmem:[%s1077 + $0x580] sm:$0xff]
          %1784 = vst [vmem:[%s1078 + $0x580] sm:$0xff] %v1783
          %v1785 = vld [vmem:[%s1077 + $0x5a0] sm:$0xff]
          %1786 = vst [vmem:[%s1078 + $0x584] sm:$0xff] %v1785
          %v1787 = vld [vmem:[%s1077 + $0x584] sm:$0xff]
          %1788 = vst [vmem:[%s1078 + $0x588] sm:$0xff] %v1787
          %v1789 = vld [vmem:[%s1077 + $0x5a4] sm:$0xff]
          %1790 = vst [vmem:[%s1078 + $0x58c] sm:$0xff] %v1789
          %v1791 = vld [vmem:[%s1077 + $0x588] sm:$0xff]
          %1792 = vst [vmem:[%s1078 + $0x590] sm:$0xff] %v1791
          %v1793 = vld [vmem:[%s1077 + $0x5a8] sm:$0xff]
          %1794 = vst [vmem:[%s1078 + $0x594] sm:$0xff] %v1793
          %v1795 = vld [vmem:[%s1077 + $0x58c] sm:$0xff]
          %1796 = vst [vmem:[%s1078 + $0x598] sm:$0xff] %v1795
          %v1797 = vld [vmem:[%s1077 + $0x5ac] sm:$0xff]
          %1798 = vst [vmem:[%s1078 + $0x59c] sm:$0xff] %v1797
          %v1799 = vld [vmem:[%s1077 + $0x590] sm:$0xff]
          %1800 = vst [vmem:[%s1078 + $0x5a0] sm:$0xff] %v1799
          %v1801 = vld [vmem:[%s1077 + $0x5b0] sm:$0xff]
          %1802 = vst [vmem:[%s1078 + $0x5a4] sm:$0xff] %v1801
          %v1803 = vld [vmem:[%s1077 + $0x594] sm:$0xff]
          %1804 = vst [vmem:[%s1078 + $0x5a8] sm:$0xff] %v1803
          %v1805 = vld [vmem:[%s1077 + $0x5b4] sm:$0xff]
          %1806 = vst [vmem:[%s1078 + $0x5ac] sm:$0xff] %v1805
          %v1807 = vld [vmem:[%s1077 + $0x598] sm:$0xff]
          %1808 = vst [vmem:[%s1078 + $0x5b0] sm:$0xff] %v1807
          %v1809 = vld [vmem:[%s1077 + $0x5b8] sm:$0xff]
          %1810 = vst [vmem:[%s1078 + $0x5b4] sm:$0xff] %v1809
          %v1811 = vld [vmem:[%s1077 + $0x59c] sm:$0xff]
          %1812 = vst [vmem:[%s1078 + $0x5b8] sm:$0xff] %v1811
          %v1813 = vld [vmem:[%s1077 + $0x5bc] sm:$0xff]
          %1814 = vst [vmem:[%s1078 + $0x5bc] sm:$0xff] %v1813
          %v1815 = vld [vmem:[%s1077 + $0x5c0] sm:$0xff]
          %1816 = vst [vmem:[%s1078 + $0x5c0] sm:$0xff] %v1815
          %v1817 = vld [vmem:[%s1077 + $0x5e0] sm:$0xff]
          %1818 = vst [vmem:[%s1078 + $0x5c4] sm:$0xff] %v1817
          %v1819 = vld [vmem:[%s1077 + $0x5c4] sm:$0xff]
          %1820 = vst [vmem:[%s1078 + $0x5c8] sm:$0xff] %v1819
          %v1821 = vld [vmem:[%s1077 + $0x5e4] sm:$0xff]
          %1822 = vst [vmem:[%s1078 + $0x5cc] sm:$0xff] %v1821
          %v1823 = vld [vmem:[%s1077 + $0x5c8] sm:$0xff]
          %1824 = vst [vmem:[%s1078 + $0x5d0] sm:$0xff] %v1823
          %v1825 = vld [vmem:[%s1077 + $0x5e8] sm:$0xff]
          %1826 = vst [vmem:[%s1078 + $0x5d4] sm:$0xff] %v1825
          %v1827 = vld [vmem:[%s1077 + $0x5cc] sm:$0xff]
          %1828 = vst [vmem:[%s1078 + $0x5d8] sm:$0xff] %v1827
          %v1829 = vld [vmem:[%s1077 + $0x5ec] sm:$0xff]
          %1830 = vst [vmem:[%s1078 + $0x5dc] sm:$0xff] %v1829
          %v1831 = vld [vmem:[%s1077 + $0x5d0] sm:$0xff]
          %1832 = vst [vmem:[%s1078 + $0x5e0] sm:$0xff] %v1831
          %v1833 = vld [vmem:[%s1077 + $0x5f0] sm:$0xff]
          %1834 = vst [vmem:[%s1078 + $0x5e4] sm:$0xff] %v1833
          %v1835 = vld [vmem:[%s1077 + $0x5d4] sm:$0xff]
          %1836 = vst [vmem:[%s1078 + $0x5e8] sm:$0xff] %v1835
          %v1837 = vld [vmem:[%s1077 + $0x5f4] sm:$0xff]
          %1838 = vst [vmem:[%s1078 + $0x5ec] sm:$0xff] %v1837
          %v1839 = vld [vmem:[%s1077 + $0x5d8] sm:$0xff]
          %1840 = vst [vmem:[%s1078 + $0x5f0] sm:$0xff] %v1839
          %v1841 = vld [vmem:[%s1077 + $0x5f8] sm:$0xff]
          %1842 = vst [vmem:[%s1078 + $0x5f4] sm:$0xff] %v1841
          %v1843 = vld [vmem:[%s1077 + $0x5dc] sm:$0xff]
          %1844 = vst [vmem:[%s1078 + $0x5f8] sm:$0xff] %v1843
          %v1845 = vld [vmem:[%s1077 + $0x5fc] sm:$0xff]
          %1846 = vst [vmem:[%s1078 + $0x5fc] sm:$0xff] %v1845
          %v1847 = vld [vmem:[%s1077 + $0x600] sm:$0xff]
          %1848 = vst [vmem:[%s1078 + $0x600] sm:$0xff] %v1847
          %v1849 = vld [vmem:[%s1077 + $0x620] sm:$0xff]
          %1850 = vst [vmem:[%s1078 + $0x604] sm:$0xff] %v1849
          %v1851 = vld [vmem:[%s1077 + $0x604] sm:$0xff]
          %1852 = vst [vmem:[%s1078 + $0x608] sm:$0xff] %v1851
          %v1853 = vld [vmem:[%s1077 + $0x624] sm:$0xff]
          %1854 = vst [vmem:[%s1078 + $0x60c] sm:$0xff] %v1853
          %v1855 = vld [vmem:[%s1077 + $0x608] sm:$0xff]
          %1856 = vst [vmem:[%s1078 + $0x610] sm:$0xff] %v1855
          %v1857 = vld [vmem:[%s1077 + $0x628] sm:$0xff]
          %1858 = vst [vmem:[%s1078 + $0x614] sm:$0xff] %v1857
          %v1859 = vld [vmem:[%s1077 + $0x60c] sm:$0xff]
          %1860 = vst [vmem:[%s1078 + $0x618] sm:$0xff] %v1859
          %v1861 = vld [vmem:[%s1077 + $0x62c] sm:$0xff]
          %1862 = vst [vmem:[%s1078 + $0x61c] sm:$0xff] %v1861
          %v1863 = vld [vmem:[%s1077 + $0x610] sm:$0xff]
          %1864 = vst [vmem:[%s1078 + $0x620] sm:$0xff] %v1863
          %v1865 = vld [vmem:[%s1077 + $0x630] sm:$0xff]
          %1866 = vst [vmem:[%s1078 + $0x624] sm:$0xff] %v1865
          %v1867 = vld [vmem:[%s1077 + $0x614] sm:$0xff]
          %1868 = vst [vmem:[%s1078 + $0x628] sm:$0xff] %v1867
          %v1869 = vld [vmem:[%s1077 + $0x634] sm:$0xff]
          %1870 = vst [vmem:[%s1078 + $0x62c] sm:$0xff] %v1869
          %v1871 = vld [vmem:[%s1077 + $0x618] sm:$0xff]
          %1872 = vst [vmem:[%s1078 + $0x630] sm:$0xff] %v1871
          %v1873 = vld [vmem:[%s1077 + $0x638] sm:$0xff]
          %1874 = vst [vmem:[%s1078 + $0x634] sm:$0xff] %v1873
          %v1875 = vld [vmem:[%s1077 + $0x61c] sm:$0xff]
          %1876 = vst [vmem:[%s1078 + $0x638] sm:$0xff] %v1875
          %v1877 = vld [vmem:[%s1077 + $0x63c] sm:$0xff]
          %1878 = vst [vmem:[%s1078 + $0x63c] sm:$0xff] %v1877
          %v1879 = vld [vmem:[%s1077 + $0x640] sm:$0xff]
          %1880 = vst [vmem:[%s1078 + $0x640] sm:$0xff] %v1879
          %v1881 = vld [vmem:[%s1077 + $0x660] sm:$0xff]
          %1882 = vst [vmem:[%s1078 + $0x644] sm:$0xff] %v1881
          %v1883 = vld [vmem:[%s1077 + $0x644] sm:$0xff]
          %1884 = vst [vmem:[%s1078 + $0x648] sm:$0xff] %v1883
          %v1885 = vld [vmem:[%s1077 + $0x664] sm:$0xff]
          %1886 = vst [vmem:[%s1078 + $0x64c] sm:$0xff] %v1885
          %v1887 = vld [vmem:[%s1077 + $0x648] sm:$0xff]
          %1888 = vst [vmem:[%s1078 + $0x650] sm:$0xff] %v1887
          %v1889 = vld [vmem:[%s1077 + $0x668] sm:$0xff]
          %1890 = vst [vmem:[%s1078 + $0x654] sm:$0xff] %v1889
          %v1891 = vld [vmem:[%s1077 + $0x64c] sm:$0xff]
          %1892 = vst [vmem:[%s1078 + $0x658] sm:$0xff] %v1891
          %v1893 = vld [vmem:[%s1077 + $0x66c] sm:$0xff]
          %1894 = vst [vmem:[%s1078 + $0x65c] sm:$0xff] %v1893
          %v1895 = vld [vmem:[%s1077 + $0x650] sm:$0xff]
          %1896 = vst [vmem:[%s1078 + $0x660] sm:$0xff] %v1895
          %v1897 = vld [vmem:[%s1077 + $0x670] sm:$0xff]
          %1898 = vst [vmem:[%s1078 + $0x664] sm:$0xff] %v1897
          %v1899 = vld [vmem:[%s1077 + $0x654] sm:$0xff]
          %1900 = vst [vmem:[%s1078 + $0x668] sm:$0xff] %v1899
          %v1901 = vld [vmem:[%s1077 + $0x674] sm:$0xff]
          %1902 = vst [vmem:[%s1078 + $0x66c] sm:$0xff] %v1901
          %v1903 = vld [vmem:[%s1077 + $0x658] sm:$0xff]
          %1904 = vst [vmem:[%s1078 + $0x670] sm:$0xff] %v1903
          %v1905 = vld [vmem:[%s1077 + $0x678] sm:$0xff]
          %1906 = vst [vmem:[%s1078 + $0x674] sm:$0xff] %v1905
          %v1907 = vld [vmem:[%s1077 + $0x65c] sm:$0xff]
          %1908 = vst [vmem:[%s1078 + $0x678] sm:$0xff] %v1907
          %v1909 = vld [vmem:[%s1077 + $0x67c] sm:$0xff]
          %1910 = vst [vmem:[%s1078 + $0x67c] sm:$0xff] %v1909
          %v1911 = vld [vmem:[%s1077 + $0x680] sm:$0xff]
          %1912 = vst [vmem:[%s1078 + $0x680] sm:$0xff] %v1911
          %v1913 = vld [vmem:[%s1077 + $0x6a0] sm:$0xff]
          %1914 = vst [vmem:[%s1078 + $0x684] sm:$0xff] %v1913
          %v1915 = vld [vmem:[%s1077 + $0x684] sm:$0xff]
          %1916 = vst [vmem:[%s1078 + $0x688] sm:$0xff] %v1915
          %v1917 = vld [vmem:[%s1077 + $0x6a4] sm:$0xff]
          %1918 = vst [vmem:[%s1078 + $0x68c] sm:$0xff] %v1917
          %v1919 = vld [vmem:[%s1077 + $0x688] sm:$0xff]
          %1920 = vst [vmem:[%s1078 + $0x690] sm:$0xff] %v1919
          %v1921 = vld [vmem:[%s1077 + $0x6a8] sm:$0xff]
          %1922 = vst [vmem:[%s1078 + $0x694] sm:$0xff] %v1921
          %v1923 = vld [vmem:[%s1077 + $0x68c] sm:$0xff]
          %1924 = vst [vmem:[%s1078 + $0x698] sm:$0xff] %v1923
          %v1925 = vld [vmem:[%s1077 + $0x6ac] sm:$0xff]
          %1926 = vst [vmem:[%s1078 + $0x69c] sm:$0xff] %v1925
          %v1927 = vld [vmem:[%s1077 + $0x690] sm:$0xff]
          %1928 = vst [vmem:[%s1078 + $0x6a0] sm:$0xff] %v1927
          %v1929 = vld [vmem:[%s1077 + $0x6b0] sm:$0xff]
          %1930 = vst [vmem:[%s1078 + $0x6a4] sm:$0xff] %v1929
          %v1931 = vld [vmem:[%s1077 + $0x694] sm:$0xff]
          %1932 = vst [vmem:[%s1078 + $0x6a8] sm:$0xff] %v1931
          %v1933 = vld [vmem:[%s1077 + $0x6b4] sm:$0xff]
          %1934 = vst [vmem:[%s1078 + $0x6ac] sm:$0xff] %v1933
          %v1935 = vld [vmem:[%s1077 + $0x698] sm:$0xff]
          %1936 = vst [vmem:[%s1078 + $0x6b0] sm:$0xff] %v1935
          %v1937 = vld [vmem:[%s1077 + $0x6b8] sm:$0xff]
          %1938 = vst [vmem:[%s1078 + $0x6b4] sm:$0xff] %v1937
          %v1939 = vld [vmem:[%s1077 + $0x69c] sm:$0xff]
          %1940 = vst [vmem:[%s1078 + $0x6b8] sm:$0xff] %v1939
          %v1941 = vld [vmem:[%s1077 + $0x6bc] sm:$0xff]
          %1942 = vst [vmem:[%s1078 + $0x6bc] sm:$0xff] %v1941
          %v1943 = vld [vmem:[%s1077 + $0x6c0] sm:$0xff]
          %1944 = vst [vmem:[%s1078 + $0x6c0] sm:$0xff] %v1943
          %v1945 = vld [vmem:[%s1077 + $0x6e0] sm:$0xff]
          %1946 = vst [vmem:[%s1078 + $0x6c4] sm:$0xff] %v1945
          %v1947 = vld [vmem:[%s1077 + $0x6c4] sm:$0xff]
          %1948 = vst [vmem:[%s1078 + $0x6c8] sm:$0xff] %v1947
          %v1949 = vld [vmem:[%s1077 + $0x6e4] sm:$0xff]
          %1950 = vst [vmem:[%s1078 + $0x6cc] sm:$0xff] %v1949
          %v1951 = vld [vmem:[%s1077 + $0x6c8] sm:$0xff]
          %1952 = vst [vmem:[%s1078 + $0x6d0] sm:$0xff] %v1951
          %v1953 = vld [vmem:[%s1077 + $0x6e8] sm:$0xff]
          %1954 = vst [vmem:[%s1078 + $0x6d4] sm:$0xff] %v1953
          %v1955 = vld [vmem:[%s1077 + $0x6cc] sm:$0xff]
          %1956 = vst [vmem:[%s1078 + $0x6d8] sm:$0xff] %v1955
          %v1957 = vld [vmem:[%s1077 + $0x6ec] sm:$0xff]
          %1958 = vst [vmem:[%s1078 + $0x6dc] sm:$0xff] %v1957
          %v1959 = vld [vmem:[%s1077 + $0x6d0] sm:$0xff]
          %1960 = vst [vmem:[%s1078 + $0x6e0] sm:$0xff] %v1959
          %v1961 = vld [vmem:[%s1077 + $0x6f0] sm:$0xff]
          %1962 = vst [vmem:[%s1078 + $0x6e4] sm:$0xff] %v1961
          %v1963 = vld [vmem:[%s1077 + $0x6d4] sm:$0xff]
          %1964 = vst [vmem:[%s1078 + $0x6e8] sm:$0xff] %v1963
          %v1965 = vld [vmem:[%s1077 + $0x6f4] sm:$0xff]
          %1966 = vst [vmem:[%s1078 + $0x6ec] sm:$0xff] %v1965
          %v1967 = vld [vmem:[%s1077 + $0x6d8] sm:$0xff]
          %1968 = vst [vmem:[%s1078 + $0x6f0] sm:$0xff] %v1967
          %v1969 = vld [vmem:[%s1077 + $0x6f8] sm:$0xff]
          %1970 = vst [vmem:[%s1078 + $0x6f4] sm:$0xff] %v1969
          %v1971 = vld [vmem:[%s1077 + $0x6dc] sm:$0xff]
          %1972 = vst [vmem:[%s1078 + $0x6f8] sm:$0xff] %v1971
          %v1973 = vld [vmem:[%s1077 + $0x6fc] sm:$0xff]
          %1974 = vst [vmem:[%s1078 + $0x6fc] sm:$0xff] %v1973
          %v1975 = vld [vmem:[%s1077 + $0x700] sm:$0xff]
          %1976 = vst [vmem:[%s1078 + $0x700] sm:$0xff] %v1975
          %v1977 = vld [vmem:[%s1077 + $0x720] sm:$0xff]
          %1978 = vst [vmem:[%s1078 + $0x704] sm:$0xff] %v1977
          %v1979 = vld [vmem:[%s1077 + $0x704] sm:$0xff]
          %1980 = vst [vmem:[%s1078 + $0x708] sm:$0xff] %v1979
          %v1981 = vld [vmem:[%s1077 + $0x724] sm:$0xff]
          %1982 = vst [vmem:[%s1078 + $0x70c] sm:$0xff] %v1981
          %v1983 = vld [vmem:[%s1077 + $0x708] sm:$0xff]
          %1984 = vst [vmem:[%s1078 + $0x710] sm:$0xff] %v1983
          %v1985 = vld [vmem:[%s1077 + $0x728] sm:$0xff]
          %1986 = vst [vmem:[%s1078 + $0x714] sm:$0xff] %v1985
          %v1987 = vld [vmem:[%s1077 + $0x70c] sm:$0xff]
          %1988 = vst [vmem:[%s1078 + $0x718] sm:$0xff] %v1987
          %v1989 = vld [vmem:[%s1077 + $0x72c] sm:$0xff]
          %1990 = vst [vmem:[%s1078 + $0x71c] sm:$0xff] %v1989
          %v1991 = vld [vmem:[%s1077 + $0x710] sm:$0xff]
          %1992 = vst [vmem:[%s1078 + $0x720] sm:$0xff] %v1991
          %v1993 = vld [vmem:[%s1077 + $0x730] sm:$0xff]
          %1994 = vst [vmem:[%s1078 + $0x724] sm:$0xff] %v1993
          %v1995 = vld [vmem:[%s1077 + $0x714] sm:$0xff]
          %1996 = vst [vmem:[%s1078 + $0x728] sm:$0xff] %v1995
          %v1997 = vld [vmem:[%s1077 + $0x734] sm:$0xff]
          %1998 = vst [vmem:[%s1078 + $0x72c] sm:$0xff] %v1997
          %v1999 = vld [vmem:[%s1077 + $0x718] sm:$0xff]
          %2000 = vst [vmem:[%s1078 + $0x730] sm:$0xff] %v1999
          %v2001 = vld [vmem:[%s1077 + $0x738] sm:$0xff]
          %2002 = vst [vmem:[%s1078 + $0x734] sm:$0xff] %v2001
          %v2003 = vld [vmem:[%s1077 + $0x71c] sm:$0xff]
          %2004 = vst [vmem:[%s1078 + $0x738] sm:$0xff] %v2003
          %v2005 = vld [vmem:[%s1077 + $0x73c] sm:$0xff]
          %2006 = vst [vmem:[%s1078 + $0x73c] sm:$0xff] %v2005
          %v2007 = vld [vmem:[%s1077 + $0x740] sm:$0xff]
          %2008 = vst [vmem:[%s1078 + $0x740] sm:$0xff] %v2007
          %v2009 = vld [vmem:[%s1077 + $0x760] sm:$0xff]
          %2010 = vst [vmem:[%s1078 + $0x744] sm:$0xff] %v2009
          %v2011 = vld [vmem:[%s1077 + $0x744] sm:$0xff]
          %2012 = vst [vmem:[%s1078 + $0x748] sm:$0xff] %v2011
          %v2013 = vld [vmem:[%s1077 + $0x764] sm:$0xff]
          %2014 = vst [vmem:[%s1078 + $0x74c] sm:$0xff] %v2013
          %v2015 = vld [vmem:[%s1077 + $0x748] sm:$0xff]
          %2016 = vst [vmem:[%s1078 + $0x750] sm:$0xff] %v2015
          %v2017 = vld [vmem:[%s1077 + $0x768] sm:$0xff]
          %2018 = vst [vmem:[%s1078 + $0x754] sm:$0xff] %v2017
          %v2019 = vld [vmem:[%s1077 + $0x74c] sm:$0xff]
          %2020 = vst [vmem:[%s1078 + $0x758] sm:$0xff] %v2019
          %v2021 = vld [vmem:[%s1077 + $0x76c] sm:$0xff]
          %2022 = vst [vmem:[%s1078 + $0x75c] sm:$0xff] %v2021
          %v2023 = vld [vmem:[%s1077 + $0x750] sm:$0xff]
          %2024 = vst [vmem:[%s1078 + $0x760] sm:$0xff] %v2023
          %v2025 = vld [vmem:[%s1077 + $0x770] sm:$0xff]
          %2026 = vst [vmem:[%s1078 + $0x764] sm:$0xff] %v2025
          %v2027 = vld [vmem:[%s1077 + $0x754] sm:$0xff]
          %2028 = vst [vmem:[%s1078 + $0x768] sm:$0xff] %v2027
          %v2029 = vld [vmem:[%s1077 + $0x774] sm:$0xff]
          %2030 = vst [vmem:[%s1078 + $0x76c] sm:$0xff] %v2029
          %v2031 = vld [vmem:[%s1077 + $0x758] sm:$0xff]
          %2032 = vst [vmem:[%s1078 + $0x770] sm:$0xff] %v2031
          %v2033 = vld [vmem:[%s1077 + $0x778] sm:$0xff]
          %2034 = vst [vmem:[%s1078 + $0x774] sm:$0xff] %v2033
          %v2035 = vld [vmem:[%s1077 + $0x75c] sm:$0xff]
          %2036 = vst [vmem:[%s1078 + $0x778] sm:$0xff] %v2035
          %v2037 = vld [vmem:[%s1077 + $0x77c] sm:$0xff]
          %2038 = vst [vmem:[%s1078 + $0x77c] sm:$0xff] %v2037
          %v2039 = vld [vmem:[%s1077 + $0x780] sm:$0xff]
          %2040 = vst [vmem:[%s1078 + $0x780] sm:$0xff] %v2039
          %v2041 = vld [vmem:[%s1077 + $0x7a0] sm:$0xff]
          %2042 = vst [vmem:[%s1078 + $0x784] sm:$0xff] %v2041
          %v2043 = vld [vmem:[%s1077 + $0x784] sm:$0xff]
          %2044 = vst [vmem:[%s1078 + $0x788] sm:$0xff] %v2043
          %v2045 = vld [vmem:[%s1077 + $0x7a4] sm:$0xff]
          %2046 = vst [vmem:[%s1078 + $0x78c] sm:$0xff] %v2045
          %v2047 = vld [vmem:[%s1077 + $0x788] sm:$0xff]
          %2048 = vst [vmem:[%s1078 + $0x790] sm:$0xff] %v2047
          %v2049 = vld [vmem:[%s1077 + $0x7a8] sm:$0xff]
          %2050 = vst [vmem:[%s1078 + $0x794] sm:$0xff] %v2049
          %v2051 = vld [vmem:[%s1077 + $0x78c] sm:$0xff]
          %2052 = vst [vmem:[%s1078 + $0x798] sm:$0xff] %v2051
          %v2053 = vld [vmem:[%s1077 + $0x7ac] sm:$0xff]
          %2054 = vst [vmem:[%s1078 + $0x79c] sm:$0xff] %v2053
          %v2055 = vld [vmem:[%s1077 + $0x790] sm:$0xff]
          %2056 = vst [vmem:[%s1078 + $0x7a0] sm:$0xff] %v2055
          %v2057 = vld [vmem:[%s1077 + $0x7b0] sm:$0xff]
          %2058 = vst [vmem:[%s1078 + $0x7a4] sm:$0xff] %v2057
          %v2059 = vld [vmem:[%s1077 + $0x794] sm:$0xff]
          %2060 = vst [vmem:[%s1078 + $0x7a8] sm:$0xff] %v2059
          %v2061 = vld [vmem:[%s1077 + $0x7b4] sm:$0xff]
          %2062 = vst [vmem:[%s1078 + $0x7ac] sm:$0xff] %v2061
          %v2063 = vld [vmem:[%s1077 + $0x798] sm:$0xff]
          %2064 = vst [vmem:[%s1078 + $0x7b0] sm:$0xff] %v2063
          %v2065 = vld [vmem:[%s1077 + $0x7b8] sm:$0xff]
          %2066 = vst [vmem:[%s1078 + $0x7b4] sm:$0xff] %v2065
          %v2067 = vld [vmem:[%s1077 + $0x79c] sm:$0xff]
          %2068 = vst [vmem:[%s1078 + $0x7b8] sm:$0xff] %v2067
          %v2069 = vld [vmem:[%s1077 + $0x7bc] sm:$0xff]
          %2070 = vst [vmem:[%s1078 + $0x7bc] sm:$0xff] %v2069
          %v2071 = vld [vmem:[%s1077 + $0x7c0] sm:$0xff]
          %2072 = vst [vmem:[%s1078 + $0x7c0] sm:$0xff] %v2071
          %v2073 = vld [vmem:[%s1077 + $0x7e0] sm:$0xff]
          %2074 = vst [vmem:[%s1078 + $0x7c4] sm:$0xff] %v2073
          %v2075 = vld [vmem:[%s1077 + $0x7c4] sm:$0xff]
          %2076 = vst [vmem:[%s1078 + $0x7c8] sm:$0xff] %v2075
          %v2077 = vld [vmem:[%s1077 + $0x7e4] sm:$0xff]
          %2078 = vst [vmem:[%s1078 + $0x7cc] sm:$0xff] %v2077
          %v2079 = vld [vmem:[%s1077 + $0x7c8] sm:$0xff]
          %2080 = vst [vmem:[%s1078 + $0x7d0] sm:$0xff] %v2079
          %v2081 = vld [vmem:[%s1077 + $0x7e8] sm:$0xff]
          %2082 = vst [vmem:[%s1078 + $0x7d4] sm:$0xff] %v2081
          %v2083 = vld [vmem:[%s1077 + $0x7cc] sm:$0xff]
          %2084 = vst [vmem:[%s1078 + $0x7d8] sm:$0xff] %v2083
          %v2085 = vld [vmem:[%s1077 + $0x7ec] sm:$0xff]
          %2086 = vst [vmem:[%s1078 + $0x7dc] sm:$0xff] %v2085
          %v2087 = vld [vmem:[%s1077 + $0x7d0] sm:$0xff]
          %2088 = vst [vmem:[%s1078 + $0x7e0] sm:$0xff] %v2087
          %v2089 = vld [vmem:[%s1077 + $0x7f0] sm:$0xff]
          %2090 = vst [vmem:[%s1078 + $0x7e4] sm:$0xff] %v2089
          %v2091 = vld [vmem:[%s1077 + $0x7d4] sm:$0xff]
          %2092 = vst [vmem:[%s1078 + $0x7e8] sm:$0xff] %v2091
          %v2093 = vld [vmem:[%s1077 + $0x7f4] sm:$0xff]
          %2094 = vst [vmem:[%s1078 + $0x7ec] sm:$0xff] %v2093
          %v2095 = vld [vmem:[%s1077 + $0x7d8] sm:$0xff]
          %2096 = vst [vmem:[%s1078 + $0x7f0] sm:$0xff] %v2095
          %v2097 = vld [vmem:[%s1077 + $0x7f8] sm:$0xff]
          %2098 = vst [vmem:[%s1078 + $0x7f4] sm:$0xff] %v2097
          %v2099 = vld [vmem:[%s1077 + $0x7dc] sm:$0xff]
          %2100 = vst [vmem:[%s1078 + $0x7f8] sm:$0xff] %v2099
          %v2101 = vld [vmem:[%s1077 + $0x7fc] sm:$0xff]
          %2102 = vst [vmem:[%s1078 + $0x7fc] sm:$0xff] %v2101
          %s2103 = sadd.s32 1, %s1076
          %p2104 = scmp.ge.s32.totalorder %s2103, %s1067
          %s2105 = scalar_select %p2104, 0, %s2103
          %s2106 = smul.u32 %s2105, 8
          %s2107 = smul.u32 %s2105, 8
          %s2108 = scalar_lea.vmem %s4, %s2106
          %s2109 = scalar_lea.vmem [#allocation2], %s2107
        $region41: #{generator_bn_forward.1} parent=35 // loop_footer
          %s1073 = sadd.s32 %s1071, 1
        $region42: #{generator_bn_forward.1} parent=35 // loop_footer_branch
          %1070 = sbr.rel target = $region38
        $region43: #{generator_bn_forward.1} parent=35 // loop_exit
          _
      $region36: #{generator_bn_forward.1} parent=20 // pred_fallthru
        _
      %p2110 = pneg %p1063
      // Predicated region
      $region44: #{generator_bn_forward.1} parent=20 // pred_check
        _
      $region45: #{generator_bn_forward.1} parent=20 // pred_check_branch
        %2112 = sbr.rel (%p1063) target = $region47
      $region46: #{generator_bn_forward.1} parent=20 // pred_region
        %s2113 = sand.u32 4, 7
        %s2114 = ssub.s32 4, %s2113
        %s2115 = scalar_lea.vmem %s4, %s2114
        %s2116 = ssub.s32 4, %s2113
        %s2117 = scalar_lea.vmem [#allocation2], %s2116
        %s2118 = sshrl.u32 4, 3
        // While loop
        $region48: #{generator_bn_forward.1} parent=46 // loop_pre_header
          _
        $region49: #{generator_bn_forward.1} parent=46 // loop_header
          %s2122 = sphi 0, %s2124
          %p2123 = scmp.ge.s32.totalorder %s2122, %s2118
          %s2127 = sphi 0, %s3156
          %s2128 = sphi %s4, %s3159
          %s2129 = sphi [#allocation2], %s3160
        $region50: #{generator_bn_forward.1} parent=46 // loop_header_branch
          %2126 = sbr.rel (%p2123) target = $region54
        $region51: #{generator_bn_forward.1} parent=46 // loop_body
          %v2130 = vld [vmem:[%s2128] sm:$0xff]
          %2131 = vst [vmem:[%s2129] sm:$0xff] %v2130
          %v2132 = vld [vmem:[%s2128 + $0x20] sm:$0xff]
          %2133 = vst [vmem:[%s2129 + $0x4] sm:$0xff] %v2132
          %v2134 = vld [vmem:[%s2128 + $0x4] sm:$0xff]
          %2135 = vst [vmem:[%s2129 + $0x8] sm:$0xff] %v2134
          %v2136 = vld [vmem:[%s2128 + $0x24] sm:$0xff]
          %2137 = vst [vmem:[%s2129 + $0xc] sm:$0xff] %v2136
          %v2138 = vld [vmem:[%s2128 + $0x8] sm:$0xff]
          %2139 = vst [vmem:[%s2129 + $0x10] sm:$0xff] %v2138
          %v2140 = vld [vmem:[%s2128 + $0x28] sm:$0xff]
          %2141 = vst [vmem:[%s2129 + $0x14] sm:$0xff] %v2140
          %v2142 = vld [vmem:[%s2128 + $0xc] sm:$0xff]
          %2143 = vst [vmem:[%s2129 + $0x18] sm:$0xff] %v2142
          %v2144 = vld [vmem:[%s2128 + $0x2c] sm:$0xff]
          %2145 = vst [vmem:[%s2129 + $0x1c] sm:$0xff] %v2144
          %v2146 = vld [vmem:[%s2128 + $0x10] sm:$0xff]
          %2147 = vst [vmem:[%s2129 + $0x20] sm:$0xff] %v2146
          %v2148 = vld [vmem:[%s2128 + $0x30] sm:$0xff]
          %2149 = vst [vmem:[%s2129 + $0x24] sm:$0xff] %v2148
          %v2150 = vld [vmem:[%s2128 + $0x14] sm:$0xff]
          %2151 = vst [vmem:[%s2129 + $0x28] sm:$0xff] %v2150
          %v2152 = vld [vmem:[%s2128 + $0x34] sm:$0xff]
          %2153 = vst [vmem:[%s2129 + $0x2c] sm:$0xff] %v2152
          %v2154 = vld [vmem:[%s2128 + $0x18] sm:$0xff]
          %2155 = vst [vmem:[%s2129 + $0x30] sm:$0xff] %v2154
          %v2156 = vld [vmem:[%s2128 + $0x38] sm:$0xff]
          %2157 = vst [vmem:[%s2129 + $0x34] sm:$0xff] %v2156
          %v2158 = vld [vmem:[%s2128 + $0x1c] sm:$0xff]
          %2159 = vst [vmem:[%s2129 + $0x38] sm:$0xff] %v2158
          %v2160 = vld [vmem:[%s2128 + $0x3c] sm:$0xff]
          %2161 = vst [vmem:[%s2129 + $0x3c] sm:$0xff] %v2160
          %v2162 = vld [vmem:[%s2128 + $0x40] sm:$0xff]
          %2163 = vst [vmem:[%s2129 + $0x40] sm:$0xff] %v2162
          %v2164 = vld [vmem:[%s2128 + $0x60] sm:$0xff]
          %2165 = vst [vmem:[%s2129 + $0x44] sm:$0xff] %v2164
          %v2166 = vld [vmem:[%s2128 + $0x44] sm:$0xff]
          %2167 = vst [vmem:[%s2129 + $0x48] sm:$0xff] %v2166
          %v2168 = vld [vmem:[%s2128 + $0x64] sm:$0xff]
          %2169 = vst [vmem:[%s2129 + $0x4c] sm:$0xff] %v2168
          %v2170 = vld [vmem:[%s2128 + $0x48] sm:$0xff]
          %2171 = vst [vmem:[%s2129 + $0x50] sm:$0xff] %v2170
          %v2172 = vld [vmem:[%s2128 + $0x68] sm:$0xff]
          %2173 = vst [vmem:[%s2129 + $0x54] sm:$0xff] %v2172
          %v2174 = vld [vmem:[%s2128 + $0x4c] sm:$0xff]
          %2175 = vst [vmem:[%s2129 + $0x58] sm:$0xff] %v2174
          %v2176 = vld [vmem:[%s2128 + $0x6c] sm:$0xff]
          %2177 = vst [vmem:[%s2129 + $0x5c] sm:$0xff] %v2176
          %v2178 = vld [vmem:[%s2128 + $0x50] sm:$0xff]
          %2179 = vst [vmem:[%s2129 + $0x60] sm:$0xff] %v2178
          %v2180 = vld [vmem:[%s2128 + $0x70] sm:$0xff]
          %2181 = vst [vmem:[%s2129 + $0x64] sm:$0xff] %v2180
          %v2182 = vld [vmem:[%s2128 + $0x54] sm:$0xff]
          %2183 = vst [vmem:[%s2129 + $0x68] sm:$0xff] %v2182
          %v2184 = vld [vmem:[%s2128 + $0x74] sm:$0xff]
          %2185 = vst [vmem:[%s2129 + $0x6c] sm:$0xff] %v2184
          %v2186 = vld [vmem:[%s2128 + $0x58] sm:$0xff]
          %2187 = vst [vmem:[%s2129 + $0x70] sm:$0xff] %v2186
          %v2188 = vld [vmem:[%s2128 + $0x78] sm:$0xff]
          %2189 = vst [vmem:[%s2129 + $0x74] sm:$0xff] %v2188
          %v2190 = vld [vmem:[%s2128 + $0x5c] sm:$0xff]
          %2191 = vst [vmem:[%s2129 + $0x78] sm:$0xff] %v2190
          %v2192 = vld [vmem:[%s2128 + $0x7c] sm:$0xff]
          %2193 = vst [vmem:[%s2129 + $0x7c] sm:$0xff] %v2192
          %v2194 = vld [vmem:[%s2128 + $0x80] sm:$0xff]
          %2195 = vst [vmem:[%s2129 + $0x80] sm:$0xff] %v2194
          %v2196 = vld [vmem:[%s2128 + $0xa0] sm:$0xff]
          %2197 = vst [vmem:[%s2129 + $0x84] sm:$0xff] %v2196
          %v2198 = vld [vmem:[%s2128 + $0x84] sm:$0xff]
          %2199 = vst [vmem:[%s2129 + $0x88] sm:$0xff] %v2198
          %v2200 = vld [vmem:[%s2128 + $0xa4] sm:$0xff]
          %2201 = vst [vmem:[%s2129 + $0x8c] sm:$0xff] %v2200
          %v2202 = vld [vmem:[%s2128 + $0x88] sm:$0xff]
          %2203 = vst [vmem:[%s2129 + $0x90] sm:$0xff] %v2202
          %v2204 = vld [vmem:[%s2128 + $0xa8] sm:$0xff]
          %2205 = vst [vmem:[%s2129 + $0x94] sm:$0xff] %v2204
          %v2206 = vld [vmem:[%s2128 + $0x8c] sm:$0xff]
          %2207 = vst [vmem:[%s2129 + $0x98] sm:$0xff] %v2206
          %v2208 = vld [vmem:[%s2128 + $0xac] sm:$0xff]
          %2209 = vst [vmem:[%s2129 + $0x9c] sm:$0xff] %v2208
          %v2210 = vld [vmem:[%s2128 + $0x90] sm:$0xff]
          %2211 = vst [vmem:[%s2129 + $0xa0] sm:$0xff] %v2210
          %v2212 = vld [vmem:[%s2128 + $0xb0] sm:$0xff]
          %2213 = vst [vmem:[%s2129 + $0xa4] sm:$0xff] %v2212
          %v2214 = vld [vmem:[%s2128 + $0x94] sm:$0xff]
          %2215 = vst [vmem:[%s2129 + $0xa8] sm:$0xff] %v2214
          %v2216 = vld [vmem:[%s2128 + $0xb4] sm:$0xff]
          %2217 = vst [vmem:[%s2129 + $0xac] sm:$0xff] %v2216
          %v2218 = vld [vmem:[%s2128 + $0x98] sm:$0xff]
          %2219 = vst [vmem:[%s2129 + $0xb0] sm:$0xff] %v2218
          %v2220 = vld [vmem:[%s2128 + $0xb8] sm:$0xff]
          %2221 = vst [vmem:[%s2129 + $0xb4] sm:$0xff] %v2220
          %v2222 = vld [vmem:[%s2128 + $0x9c] sm:$0xff]
          %2223 = vst [vmem:[%s2129 + $0xb8] sm:$0xff] %v2222
          %v2224 = vld [vmem:[%s2128 + $0xbc] sm:$0xff]
          %2225 = vst [vmem:[%s2129 + $0xbc] sm:$0xff] %v2224
          %v2226 = vld [vmem:[%s2128 + $0xc0] sm:$0xff]
          %2227 = vst [vmem:[%s2129 + $0xc0] sm:$0xff] %v2226
          %v2228 = vld [vmem:[%s2128 + $0xe0] sm:$0xff]
          %2229 = vst [vmem:[%s2129 + $0xc4] sm:$0xff] %v2228
          %v2230 = vld [vmem:[%s2128 + $0xc4] sm:$0xff]
          %2231 = vst [vmem:[%s2129 + $0xc8] sm:$0xff] %v2230
          %v2232 = vld [vmem:[%s2128 + $0xe4] sm:$0xff]
          %2233 = vst [vmem:[%s2129 + $0xcc] sm:$0xff] %v2232
          %v2234 = vld [vmem:[%s2128 + $0xc8] sm:$0xff]
          %2235 = vst [vmem:[%s2129 + $0xd0] sm:$0xff] %v2234
          %v2236 = vld [vmem:[%s2128 + $0xe8] sm:$0xff]
          %2237 = vst [vmem:[%s2129 + $0xd4] sm:$0xff] %v2236
          %v2238 = vld [vmem:[%s2128 + $0xcc] sm:$0xff]
          %2239 = vst [vmem:[%s2129 + $0xd8] sm:$0xff] %v2238
          %v2240 = vld [vmem:[%s2128 + $0xec] sm:$0xff]
          %2241 = vst [vmem:[%s2129 + $0xdc] sm:$0xff] %v2240
          %v2242 = vld [vmem:[%s2128 + $0xd0] sm:$0xff]
          %2243 = vst [vmem:[%s2129 + $0xe0] sm:$0xff] %v2242
          %v2244 = vld [vmem:[%s2128 + $0xf0] sm:$0xff]
          %2245 = vst [vmem:[%s2129 + $0xe4] sm:$0xff] %v2244
          %v2246 = vld [vmem:[%s2128 + $0xd4] sm:$0xff]
          %2247 = vst [vmem:[%s2129 + $0xe8] sm:$0xff] %v2246
          %v2248 = vld [vmem:[%s2128 + $0xf4] sm:$0xff]
          %2249 = vst [vmem:[%s2129 + $0xec] sm:$0xff] %v2248
          %v2250 = vld [vmem:[%s2128 + $0xd8] sm:$0xff]
          %2251 = vst [vmem:[%s2129 + $0xf0] sm:$0xff] %v2250
          %v2252 = vld [vmem:[%s2128 + $0xf8] sm:$0xff]
          %2253 = vst [vmem:[%s2129 + $0xf4] sm:$0xff] %v2252
          %v2254 = vld [vmem:[%s2128 + $0xdc] sm:$0xff]
          %2255 = vst [vmem:[%s2129 + $0xf8] sm:$0xff] %v2254
          %v2256 = vld [vmem:[%s2128 + $0xfc] sm:$0xff]
          %2257 = vst [vmem:[%s2129 + $0xfc] sm:$0xff] %v2256
          %v2258 = vld [vmem:[%s2128 + $0x100] sm:$0xff]
          %2259 = vst [vmem:[%s2129 + $0x100] sm:$0xff] %v2258
          %v2260 = vld [vmem:[%s2128 + $0x120] sm:$0xff]
          %2261 = vst [vmem:[%s2129 + $0x104] sm:$0xff] %v2260
          %v2262 = vld [vmem:[%s2128 + $0x104] sm:$0xff]
          %2263 = vst [vmem:[%s2129 + $0x108] sm:$0xff] %v2262
          %v2264 = vld [vmem:[%s2128 + $0x124] sm:$0xff]
          %2265 = vst [vmem:[%s2129 + $0x10c] sm:$0xff] %v2264
          %v2266 = vld [vmem:[%s2128 + $0x108] sm:$0xff]
          %2267 = vst [vmem:[%s2129 + $0x110] sm:$0xff] %v2266
          %v2268 = vld [vmem:[%s2128 + $0x128] sm:$0xff]
          %2269 = vst [vmem:[%s2129 + $0x114] sm:$0xff] %v2268
          %v2270 = vld [vmem:[%s2128 + $0x10c] sm:$0xff]
          %2271 = vst [vmem:[%s2129 + $0x118] sm:$0xff] %v2270
          %v2272 = vld [vmem:[%s2128 + $0x12c] sm:$0xff]
          %2273 = vst [vmem:[%s2129 + $0x11c] sm:$0xff] %v2272
          %v2274 = vld [vmem:[%s2128 + $0x110] sm:$0xff]
          %2275 = vst [vmem:[%s2129 + $0x120] sm:$0xff] %v2274
          %v2276 = vld [vmem:[%s2128 + $0x130] sm:$0xff]
          %2277 = vst [vmem:[%s2129 + $0x124] sm:$0xff] %v2276
          %v2278 = vld [vmem:[%s2128 + $0x114] sm:$0xff]
          %2279 = vst [vmem:[%s2129 + $0x128] sm:$0xff] %v2278
          %v2280 = vld [vmem:[%s2128 + $0x134] sm:$0xff]
          %2281 = vst [vmem:[%s2129 + $0x12c] sm:$0xff] %v2280
          %v2282 = vld [vmem:[%s2128 + $0x118] sm:$0xff]
          %2283 = vst [vmem:[%s2129 + $0x130] sm:$0xff] %v2282
          %v2284 = vld [vmem:[%s2128 + $0x138] sm:$0xff]
          %2285 = vst [vmem:[%s2129 + $0x134] sm:$0xff] %v2284
          %v2286 = vld [vmem:[%s2128 + $0x11c] sm:$0xff]
          %2287 = vst [vmem:[%s2129 + $0x138] sm:$0xff] %v2286
          %v2288 = vld [vmem:[%s2128 + $0x13c] sm:$0xff]
          %2289 = vst [vmem:[%s2129 + $0x13c] sm:$0xff] %v2288
          %v2290 = vld [vmem:[%s2128 + $0x140] sm:$0xff]
          %2291 = vst [vmem:[%s2129 + $0x140] sm:$0xff] %v2290
          %v2292 = vld [vmem:[%s2128 + $0x160] sm:$0xff]
          %2293 = vst [vmem:[%s2129 + $0x144] sm:$0xff] %v2292
          %v2294 = vld [vmem:[%s2128 + $0x144] sm:$0xff]
          %2295 = vst [vmem:[%s2129 + $0x148] sm:$0xff] %v2294
          %v2296 = vld [vmem:[%s2128 + $0x164] sm:$0xff]
          %2297 = vst [vmem:[%s2129 + $0x14c] sm:$0xff] %v2296
          %v2298 = vld [vmem:[%s2128 + $0x148] sm:$0xff]
          %2299 = vst [vmem:[%s2129 + $0x150] sm:$0xff] %v2298
          %v2300 = vld [vmem:[%s2128 + $0x168] sm:$0xff]
          %2301 = vst [vmem:[%s2129 + $0x154] sm:$0xff] %v2300
          %v2302 = vld [vmem:[%s2128 + $0x14c] sm:$0xff]
          %2303 = vst [vmem:[%s2129 + $0x158] sm:$0xff] %v2302
          %v2304 = vld [vmem:[%s2128 + $0x16c] sm:$0xff]
          %2305 = vst [vmem:[%s2129 + $0x15c] sm:$0xff] %v2304
          %v2306 = vld [vmem:[%s2128 + $0x150] sm:$0xff]
          %2307 = vst [vmem:[%s2129 + $0x160] sm:$0xff] %v2306
          %v2308 = vld [vmem:[%s2128 + $0x170] sm:$0xff]
          %2309 = vst [vmem:[%s2129 + $0x164] sm:$0xff] %v2308
          %v2310 = vld [vmem:[%s2128 + $0x154] sm:$0xff]
          %2311 = vst [vmem:[%s2129 + $0x168] sm:$0xff] %v2310
          %v2312 = vld [vmem:[%s2128 + $0x174] sm:$0xff]
          %2313 = vst [vmem:[%s2129 + $0x16c] sm:$0xff] %v2312
          %v2314 = vld [vmem:[%s2128 + $0x158] sm:$0xff]
          %2315 = vst [vmem:[%s2129 + $0x170] sm:$0xff] %v2314
          %v2316 = vld [vmem:[%s2128 + $0x178] sm:$0xff]
          %2317 = vst [vmem:[%s2129 + $0x174] sm:$0xff] %v2316
          %v2318 = vld [vmem:[%s2128 + $0x15c] sm:$0xff]
          %2319 = vst [vmem:[%s2129 + $0x178] sm:$0xff] %v2318
          %v2320 = vld [vmem:[%s2128 + $0x17c] sm:$0xff]
          %2321 = vst [vmem:[%s2129 + $0x17c] sm:$0xff] %v2320
          %v2322 = vld [vmem:[%s2128 + $0x180] sm:$0xff]
          %2323 = vst [vmem:[%s2129 + $0x180] sm:$0xff] %v2322
          %v2324 = vld [vmem:[%s2128 + $0x1a0] sm:$0xff]
          %2325 = vst [vmem:[%s2129 + $0x184] sm:$0xff] %v2324
          %v2326 = vld [vmem:[%s2128 + $0x184] sm:$0xff]
          %2327 = vst [vmem:[%s2129 + $0x188] sm:$0xff] %v2326
          %v2328 = vld [vmem:[%s2128 + $0x1a4] sm:$0xff]
          %2329 = vst [vmem:[%s2129 + $0x18c] sm:$0xff] %v2328
          %v2330 = vld [vmem:[%s2128 + $0x188] sm:$0xff]
          %2331 = vst [vmem:[%s2129 + $0x190] sm:$0xff] %v2330
          %v2332 = vld [vmem:[%s2128 + $0x1a8] sm:$0xff]
          %2333 = vst [vmem:[%s2129 + $0x194] sm:$0xff] %v2332
          %v2334 = vld [vmem:[%s2128 + $0x18c] sm:$0xff]
          %2335 = vst [vmem:[%s2129 + $0x198] sm:$0xff] %v2334
          %v2336 = vld [vmem:[%s2128 + $0x1ac] sm:$0xff]
          %2337 = vst [vmem:[%s2129 + $0x19c] sm:$0xff] %v2336
          %v2338 = vld [vmem:[%s2128 + $0x190] sm:$0xff]
          %2339 = vst [vmem:[%s2129 + $0x1a0] sm:$0xff] %v2338
          %v2340 = vld [vmem:[%s2128 + $0x1b0] sm:$0xff]
          %2341 = vst [vmem:[%s2129 + $0x1a4] sm:$0xff] %v2340
          %v2342 = vld [vmem:[%s2128 + $0x194] sm:$0xff]
          %2343 = vst [vmem:[%s2129 + $0x1a8] sm:$0xff] %v2342
          %v2344 = vld [vmem:[%s2128 + $0x1b4] sm:$0xff]
          %2345 = vst [vmem:[%s2129 + $0x1ac] sm:$0xff] %v2344
          %v2346 = vld [vmem:[%s2128 + $0x198] sm:$0xff]
          %2347 = vst [vmem:[%s2129 + $0x1b0] sm:$0xff] %v2346
          %v2348 = vld [vmem:[%s2128 + $0x1b8] sm:$0xff]
          %2349 = vst [vmem:[%s2129 + $0x1b4] sm:$0xff] %v2348
          %v2350 = vld [vmem:[%s2128 + $0x19c] sm:$0xff]
          %2351 = vst [vmem:[%s2129 + $0x1b8] sm:$0xff] %v2350
          %v2352 = vld [vmem:[%s2128 + $0x1bc] sm:$0xff]
          %2353 = vst [vmem:[%s2129 + $0x1bc] sm:$0xff] %v2352
          %v2354 = vld [vmem:[%s2128 + $0x1c0] sm:$0xff]
          %2355 = vst [vmem:[%s2129 + $0x1c0] sm:$0xff] %v2354
          %v2356 = vld [vmem:[%s2128 + $0x1e0] sm:$0xff]
          %2357 = vst [vmem:[%s2129 + $0x1c4] sm:$0xff] %v2356
          %v2358 = vld [vmem:[%s2128 + $0x1c4] sm:$0xff]
          %2359 = vst [vmem:[%s2129 + $0x1c8] sm:$0xff] %v2358
          %v2360 = vld [vmem:[%s2128 + $0x1e4] sm:$0xff]
          %2361 = vst [vmem:[%s2129 + $0x1cc] sm:$0xff] %v2360
          %v2362 = vld [vmem:[%s2128 + $0x1c8] sm:$0xff]
          %2363 = vst [vmem:[%s2129 + $0x1d0] sm:$0xff] %v2362
          %v2364 = vld [vmem:[%s2128 + $0x1e8] sm:$0xff]
          %2365 = vst [vmem:[%s2129 + $0x1d4] sm:$0xff] %v2364
          %v2366 = vld [vmem:[%s2128 + $0x1cc] sm:$0xff]
          %2367 = vst [vmem:[%s2129 + $0x1d8] sm:$0xff] %v2366
          %v2368 = vld [vmem:[%s2128 + $0x1ec] sm:$0xff]
          %2369 = vst [vmem:[%s2129 + $0x1dc] sm:$0xff] %v2368
          %v2370 = vld [vmem:[%s2128 + $0x1d0] sm:$0xff]
          %2371 = vst [vmem:[%s2129 + $0x1e0] sm:$0xff] %v2370
          %v2372 = vld [vmem:[%s2128 + $0x1f0] sm:$0xff]
          %2373 = vst [vmem:[%s2129 + $0x1e4] sm:$0xff] %v2372
          %v2374 = vld [vmem:[%s2128 + $0x1d4] sm:$0xff]
          %2375 = vst [vmem:[%s2129 + $0x1e8] sm:$0xff] %v2374
          %v2376 = vld [vmem:[%s2128 + $0x1f4] sm:$0xff]
          %2377 = vst [vmem:[%s2129 + $0x1ec] sm:$0xff] %v2376
          %v2378 = vld [vmem:[%s2128 + $0x1d8] sm:$0xff]
          %2379 = vst [vmem:[%s2129 + $0x1f0] sm:$0xff] %v2378
          %v2380 = vld [vmem:[%s2128 + $0x1f8] sm:$0xff]
          %2381 = vst [vmem:[%s2129 + $0x1f4] sm:$0xff] %v2380
          %v2382 = vld [vmem:[%s2128 + $0x1dc] sm:$0xff]
          %2383 = vst [vmem:[%s2129 + $0x1f8] sm:$0xff] %v2382
          %v2384 = vld [vmem:[%s2128 + $0x1fc] sm:$0xff]
          %2385 = vst [vmem:[%s2129 + $0x1fc] sm:$0xff] %v2384
          %v2386 = vld [vmem:[%s2128 + $0x200] sm:$0xff]
          %2387 = vst [vmem:[%s2129 + $0x200] sm:$0xff] %v2386
          %v2388 = vld [vmem:[%s2128 + $0x220] sm:$0xff]
          %2389 = vst [vmem:[%s2129 + $0x204] sm:$0xff] %v2388
          %v2390 = vld [vmem:[%s2128 + $0x204] sm:$0xff]
          %2391 = vst [vmem:[%s2129 + $0x208] sm:$0xff] %v2390
          %v2392 = vld [vmem:[%s2128 + $0x224] sm:$0xff]
          %2393 = vst [vmem:[%s2129 + $0x20c] sm:$0xff] %v2392
          %v2394 = vld [vmem:[%s2128 + $0x208] sm:$0xff]
          %2395 = vst [vmem:[%s2129 + $0x210] sm:$0xff] %v2394
          %v2396 = vld [vmem:[%s2128 + $0x228] sm:$0xff]
          %2397 = vst [vmem:[%s2129 + $0x214] sm:$0xff] %v2396
          %v2398 = vld [vmem:[%s2128 + $0x20c] sm:$0xff]
          %2399 = vst [vmem:[%s2129 + $0x218] sm:$0xff] %v2398
          %v2400 = vld [vmem:[%s2128 + $0x22c] sm:$0xff]
          %2401 = vst [vmem:[%s2129 + $0x21c] sm:$0xff] %v2400
          %v2402 = vld [vmem:[%s2128 + $0x210] sm:$0xff]
          %2403 = vst [vmem:[%s2129 + $0x220] sm:$0xff] %v2402
          %v2404 = vld [vmem:[%s2128 + $0x230] sm:$0xff]
          %2405 = vst [vmem:[%s2129 + $0x224] sm:$0xff] %v2404
          %v2406 = vld [vmem:[%s2128 + $0x214] sm:$0xff]
          %2407 = vst [vmem:[%s2129 + $0x228] sm:$0xff] %v2406
          %v2408 = vld [vmem:[%s2128 + $0x234] sm:$0xff]
          %2409 = vst [vmem:[%s2129 + $0x22c] sm:$0xff] %v2408
          %v2410 = vld [vmem:[%s2128 + $0x218] sm:$0xff]
          %2411 = vst [vmem:[%s2129 + $0x230] sm:$0xff] %v2410
          %v2412 = vld [vmem:[%s2128 + $0x238] sm:$0xff]
          %2413 = vst [vmem:[%s2129 + $0x234] sm:$0xff] %v2412
          %v2414 = vld [vmem:[%s2128 + $0x21c] sm:$0xff]
          %2415 = vst [vmem:[%s2129 + $0x238] sm:$0xff] %v2414
          %v2416 = vld [vmem:[%s2128 + $0x23c] sm:$0xff]
          %2417 = vst [vmem:[%s2129 + $0x23c] sm:$0xff] %v2416
          %v2418 = vld [vmem:[%s2128 + $0x240] sm:$0xff]
          %2419 = vst [vmem:[%s2129 + $0x240] sm:$0xff] %v2418
          %v2420 = vld [vmem:[%s2128 + $0x260] sm:$0xff]
          %2421 = vst [vmem:[%s2129 + $0x244] sm:$0xff] %v2420
          %v2422 = vld [vmem:[%s2128 + $0x244] sm:$0xff]
          %2423 = vst [vmem:[%s2129 + $0x248] sm:$0xff] %v2422
          %v2424 = vld [vmem:[%s2128 + $0x264] sm:$0xff]
          %2425 = vst [vmem:[%s2129 + $0x24c] sm:$0xff] %v2424
          %v2426 = vld [vmem:[%s2128 + $0x248] sm:$0xff]
          %2427 = vst [vmem:[%s2129 + $0x250] sm:$0xff] %v2426
          %v2428 = vld [vmem:[%s2128 + $0x268] sm:$0xff]
          %2429 = vst [vmem:[%s2129 + $0x254] sm:$0xff] %v2428
          %v2430 = vld [vmem:[%s2128 + $0x24c] sm:$0xff]
          %2431 = vst [vmem:[%s2129 + $0x258] sm:$0xff] %v2430
          %v2432 = vld [vmem:[%s2128 + $0x26c] sm:$0xff]
          %2433 = vst [vmem:[%s2129 + $0x25c] sm:$0xff] %v2432
          %v2434 = vld [vmem:[%s2128 + $0x250] sm:$0xff]
          %2435 = vst [vmem:[%s2129 + $0x260] sm:$0xff] %v2434
          %v2436 = vld [vmem:[%s2128 + $0x270] sm:$0xff]
          %2437 = vst [vmem:[%s2129 + $0x264] sm:$0xff] %v2436
          %v2438 = vld [vmem:[%s2128 + $0x254] sm:$0xff]
          %2439 = vst [vmem:[%s2129 + $0x268] sm:$0xff] %v2438
          %v2440 = vld [vmem:[%s2128 + $0x274] sm:$0xff]
          %2441 = vst [vmem:[%s2129 + $0x26c] sm:$0xff] %v2440
          %v2442 = vld [vmem:[%s2128 + $0x258] sm:$0xff]
          %2443 = vst [vmem:[%s2129 + $0x270] sm:$0xff] %v2442
          %v2444 = vld [vmem:[%s2128 + $0x278] sm:$0xff]
          %2445 = vst [vmem:[%s2129 + $0x274] sm:$0xff] %v2444
          %v2446 = vld [vmem:[%s2128 + $0x25c] sm:$0xff]
          %2447 = vst [vmem:[%s2129 + $0x278] sm:$0xff] %v2446
          %v2448 = vld [vmem:[%s2128 + $0x27c] sm:$0xff]
          %2449 = vst [vmem:[%s2129 + $0x27c] sm:$0xff] %v2448
          %v2450 = vld [vmem:[%s2128 + $0x280] sm:$0xff]
          %2451 = vst [vmem:[%s2129 + $0x280] sm:$0xff] %v2450
          %v2452 = vld [vmem:[%s2128 + $0x2a0] sm:$0xff]
          %2453 = vst [vmem:[%s2129 + $0x284] sm:$0xff] %v2452
          %v2454 = vld [vmem:[%s2128 + $0x284] sm:$0xff]
          %2455 = vst [vmem:[%s2129 + $0x288] sm:$0xff] %v2454
          %v2456 = vld [vmem:[%s2128 + $0x2a4] sm:$0xff]
          %2457 = vst [vmem:[%s2129 + $0x28c] sm:$0xff] %v2456
          %v2458 = vld [vmem:[%s2128 + $0x288] sm:$0xff]
          %2459 = vst [vmem:[%s2129 + $0x290] sm:$0xff] %v2458
          %v2460 = vld [vmem:[%s2128 + $0x2a8] sm:$0xff]
          %2461 = vst [vmem:[%s2129 + $0x294] sm:$0xff] %v2460
          %v2462 = vld [vmem:[%s2128 + $0x28c] sm:$0xff]
          %2463 = vst [vmem:[%s2129 + $0x298] sm:$0xff] %v2462
          %v2464 = vld [vmem:[%s2128 + $0x2ac] sm:$0xff]
          %2465 = vst [vmem:[%s2129 + $0x29c] sm:$0xff] %v2464
          %v2466 = vld [vmem:[%s2128 + $0x290] sm:$0xff]
          %2467 = vst [vmem:[%s2129 + $0x2a0] sm:$0xff] %v2466
          %v2468 = vld [vmem:[%s2128 + $0x2b0] sm:$0xff]
          %2469 = vst [vmem:[%s2129 + $0x2a4] sm:$0xff] %v2468
          %v2470 = vld [vmem:[%s2128 + $0x294] sm:$0xff]
          %2471 = vst [vmem:[%s2129 + $0x2a8] sm:$0xff] %v2470
          %v2472 = vld [vmem:[%s2128 + $0x2b4] sm:$0xff]
          %2473 = vst [vmem:[%s2129 + $0x2ac] sm:$0xff] %v2472
          %v2474 = vld [vmem:[%s2128 + $0x298] sm:$0xff]
          %2475 = vst [vmem:[%s2129 + $0x2b0] sm:$0xff] %v2474
          %v2476 = vld [vmem:[%s2128 + $0x2b8] sm:$0xff]
          %2477 = vst [vmem:[%s2129 + $0x2b4] sm:$0xff] %v2476
          %v2478 = vld [vmem:[%s2128 + $0x29c] sm:$0xff]
          %2479 = vst [vmem:[%s2129 + $0x2b8] sm:$0xff] %v2478
          %v2480 = vld [vmem:[%s2128 + $0x2bc] sm:$0xff]
          %2481 = vst [vmem:[%s2129 + $0x2bc] sm:$0xff] %v2480
          %v2482 = vld [vmem:[%s2128 + $0x2c0] sm:$0xff]
          %2483 = vst [vmem:[%s2129 + $0x2c0] sm:$0xff] %v2482
          %v2484 = vld [vmem:[%s2128 + $0x2e0] sm:$0xff]
          %2485 = vst [vmem:[%s2129 + $0x2c4] sm:$0xff] %v2484
          %v2486 = vld [vmem:[%s2128 + $0x2c4] sm:$0xff]
          %2487 = vst [vmem:[%s2129 + $0x2c8] sm:$0xff] %v2486
          %v2488 = vld [vmem:[%s2128 + $0x2e4] sm:$0xff]
          %2489 = vst [vmem:[%s2129 + $0x2cc] sm:$0xff] %v2488
          %v2490 = vld [vmem:[%s2128 + $0x2c8] sm:$0xff]
          %2491 = vst [vmem:[%s2129 + $0x2d0] sm:$0xff] %v2490
          %v2492 = vld [vmem:[%s2128 + $0x2e8] sm:$0xff]
          %2493 = vst [vmem:[%s2129 + $0x2d4] sm:$0xff] %v2492
          %v2494 = vld [vmem:[%s2128 + $0x2cc] sm:$0xff]
          %2495 = vst [vmem:[%s2129 + $0x2d8] sm:$0xff] %v2494
          %v2496 = vld [vmem:[%s2128 + $0x2ec] sm:$0xff]
          %2497 = vst [vmem:[%s2129 + $0x2dc] sm:$0xff] %v2496
          %v2498 = vld [vmem:[%s2128 + $0x2d0] sm:$0xff]
          %2499 = vst [vmem:[%s2129 + $0x2e0] sm:$0xff] %v2498
          %v2500 = vld [vmem:[%s2128 + $0x2f0] sm:$0xff]
          %2501 = vst [vmem:[%s2129 + $0x2e4] sm:$0xff] %v2500
          %v2502 = vld [vmem:[%s2128 + $0x2d4] sm:$0xff]
          %2503 = vst [vmem:[%s2129 + $0x2e8] sm:$0xff] %v2502
          %v2504 = vld [vmem:[%s2128 + $0x2f4] sm:$0xff]
          %2505 = vst [vmem:[%s2129 + $0x2ec] sm:$0xff] %v2504
          %v2506 = vld [vmem:[%s2128 + $0x2d8] sm:$0xff]
          %2507 = vst [vmem:[%s2129 + $0x2f0] sm:$0xff] %v2506
          %v2508 = vld [vmem:[%s2128 + $0x2f8] sm:$0xff]
          %2509 = vst [vmem:[%s2129 + $0x2f4] sm:$0xff] %v2508
          %v2510 = vld [vmem:[%s2128 + $0x2dc] sm:$0xff]
          %2511 = vst [vmem:[%s2129 + $0x2f8] sm:$0xff] %v2510
          %v2512 = vld [vmem:[%s2128 + $0x2fc] sm:$0xff]
          %2513 = vst [vmem:[%s2129 + $0x2fc] sm:$0xff] %v2512
          %v2514 = vld [vmem:[%s2128 + $0x300] sm:$0xff]
          %2515 = vst [vmem:[%s2129 + $0x300] sm:$0xff] %v2514
          %v2516 = vld [vmem:[%s2128 + $0x320] sm:$0xff]
          %2517 = vst [vmem:[%s2129 + $0x304] sm:$0xff] %v2516
          %v2518 = vld [vmem:[%s2128 + $0x304] sm:$0xff]
          %2519 = vst [vmem:[%s2129 + $0x308] sm:$0xff] %v2518
          %v2520 = vld [vmem:[%s2128 + $0x324] sm:$0xff]
          %2521 = vst [vmem:[%s2129 + $0x30c] sm:$0xff] %v2520
          %v2522 = vld [vmem:[%s2128 + $0x308] sm:$0xff]
          %2523 = vst [vmem:[%s2129 + $0x310] sm:$0xff] %v2522
          %v2524 = vld [vmem:[%s2128 + $0x328] sm:$0xff]
          %2525 = vst [vmem:[%s2129 + $0x314] sm:$0xff] %v2524
          %v2526 = vld [vmem:[%s2128 + $0x30c] sm:$0xff]
          %2527 = vst [vmem:[%s2129 + $0x318] sm:$0xff] %v2526
          %v2528 = vld [vmem:[%s2128 + $0x32c] sm:$0xff]
          %2529 = vst [vmem:[%s2129 + $0x31c] sm:$0xff] %v2528
          %v2530 = vld [vmem:[%s2128 + $0x310] sm:$0xff]
          %2531 = vst [vmem:[%s2129 + $0x320] sm:$0xff] %v2530
          %v2532 = vld [vmem:[%s2128 + $0x330] sm:$0xff]
          %2533 = vst [vmem:[%s2129 + $0x324] sm:$0xff] %v2532
          %v2534 = vld [vmem:[%s2128 + $0x314] sm:$0xff]
          %2535 = vst [vmem:[%s2129 + $0x328] sm:$0xff] %v2534
          %v2536 = vld [vmem:[%s2128 + $0x334] sm:$0xff]
          %2537 = vst [vmem:[%s2129 + $0x32c] sm:$0xff] %v2536
          %v2538 = vld [vmem:[%s2128 + $0x318] sm:$0xff]
          %2539 = vst [vmem:[%s2129 + $0x330] sm:$0xff] %v2538
          %v2540 = vld [vmem:[%s2128 + $0x338] sm:$0xff]
          %2541 = vst [vmem:[%s2129 + $0x334] sm:$0xff] %v2540
          %v2542 = vld [vmem:[%s2128 + $0x31c] sm:$0xff]
          %2543 = vst [vmem:[%s2129 + $0x338] sm:$0xff] %v2542
          %v2544 = vld [vmem:[%s2128 + $0x33c] sm:$0xff]
          %2545 = vst [vmem:[%s2129 + $0x33c] sm:$0xff] %v2544
          %v2546 = vld [vmem:[%s2128 + $0x340] sm:$0xff]
          %2547 = vst [vmem:[%s2129 + $0x340] sm:$0xff] %v2546
          %v2548 = vld [vmem:[%s2128 + $0x360] sm:$0xff]
          %2549 = vst [vmem:[%s2129 + $0x344] sm:$0xff] %v2548
          %v2550 = vld [vmem:[%s2128 + $0x344] sm:$0xff]
          %2551 = vst [vmem:[%s2129 + $0x348] sm:$0xff] %v2550
          %v2552 = vld [vmem:[%s2128 + $0x364] sm:$0xff]
          %2553 = vst [vmem:[%s2129 + $0x34c] sm:$0xff] %v2552
          %v2554 = vld [vmem:[%s2128 + $0x348] sm:$0xff]
          %2555 = vst [vmem:[%s2129 + $0x350] sm:$0xff] %v2554
          %v2556 = vld [vmem:[%s2128 + $0x368] sm:$0xff]
          %2557 = vst [vmem:[%s2129 + $0x354] sm:$0xff] %v2556
          %v2558 = vld [vmem:[%s2128 + $0x34c] sm:$0xff]
          %2559 = vst [vmem:[%s2129 + $0x358] sm:$0xff] %v2558
          %v2560 = vld [vmem:[%s2128 + $0x36c] sm:$0xff]
          %2561 = vst [vmem:[%s2129 + $0x35c] sm:$0xff] %v2560
          %v2562 = vld [vmem:[%s2128 + $0x350] sm:$0xff]
          %2563 = vst [vmem:[%s2129 + $0x360] sm:$0xff] %v2562
          %v2564 = vld [vmem:[%s2128 + $0x370] sm:$0xff]
          %2565 = vst [vmem:[%s2129 + $0x364] sm:$0xff] %v2564
          %v2566 = vld [vmem:[%s2128 + $0x354] sm:$0xff]
          %2567 = vst [vmem:[%s2129 + $0x368] sm:$0xff] %v2566
          %v2568 = vld [vmem:[%s2128 + $0x374] sm:$0xff]
          %2569 = vst [vmem:[%s2129 + $0x36c] sm:$0xff] %v2568
          %v2570 = vld [vmem:[%s2128 + $0x358] sm:$0xff]
          %2571 = vst [vmem:[%s2129 + $0x370] sm:$0xff] %v2570
          %v2572 = vld [vmem:[%s2128 + $0x378] sm:$0xff]
          %2573 = vst [vmem:[%s2129 + $0x374] sm:$0xff] %v2572
          %v2574 = vld [vmem:[%s2128 + $0x35c] sm:$0xff]
          %2575 = vst [vmem:[%s2129 + $0x378] sm:$0xff] %v2574
          %v2576 = vld [vmem:[%s2128 + $0x37c] sm:$0xff]
          %2577 = vst [vmem:[%s2129 + $0x37c] sm:$0xff] %v2576
          %v2578 = vld [vmem:[%s2128 + $0x380] sm:$0xff]
          %2579 = vst [vmem:[%s2129 + $0x380] sm:$0xff] %v2578
          %v2580 = vld [vmem:[%s2128 + $0x3a0] sm:$0xff]
          %2581 = vst [vmem:[%s2129 + $0x384] sm:$0xff] %v2580
          %v2582 = vld [vmem:[%s2128 + $0x384] sm:$0xff]
          %2583 = vst [vmem:[%s2129 + $0x388] sm:$0xff] %v2582
          %v2584 = vld [vmem:[%s2128 + $0x3a4] sm:$0xff]
          %2585 = vst [vmem:[%s2129 + $0x38c] sm:$0xff] %v2584
          %v2586 = vld [vmem:[%s2128 + $0x388] sm:$0xff]
          %2587 = vst [vmem:[%s2129 + $0x390] sm:$0xff] %v2586
          %v2588 = vld [vmem:[%s2128 + $0x3a8] sm:$0xff]
          %2589 = vst [vmem:[%s2129 + $0x394] sm:$0xff] %v2588
          %v2590 = vld [vmem:[%s2128 + $0x38c] sm:$0xff]
          %2591 = vst [vmem:[%s2129 + $0x398] sm:$0xff] %v2590
          %v2592 = vld [vmem:[%s2128 + $0x3ac] sm:$0xff]
          %2593 = vst [vmem:[%s2129 + $0x39c] sm:$0xff] %v2592
          %v2594 = vld [vmem:[%s2128 + $0x390] sm:$0xff]
          %2595 = vst [vmem:[%s2129 + $0x3a0] sm:$0xff] %v2594
          %v2596 = vld [vmem:[%s2128 + $0x3b0] sm:$0xff]
          %2597 = vst [vmem:[%s2129 + $0x3a4] sm:$0xff] %v2596
          %v2598 = vld [vmem:[%s2128 + $0x394] sm:$0xff]
          %2599 = vst [vmem:[%s2129 + $0x3a8] sm:$0xff] %v2598
          %v2600 = vld [vmem:[%s2128 + $0x3b4] sm:$0xff]
          %2601 = vst [vmem:[%s2129 + $0x3ac] sm:$0xff] %v2600
          %v2602 = vld [vmem:[%s2128 + $0x398] sm:$0xff]
          %2603 = vst [vmem:[%s2129 + $0x3b0] sm:$0xff] %v2602
          %v2604 = vld [vmem:[%s2128 + $0x3b8] sm:$0xff]
          %2605 = vst [vmem:[%s2129 + $0x3b4] sm:$0xff] %v2604
          %v2606 = vld [vmem:[%s2128 + $0x39c] sm:$0xff]
          %2607 = vst [vmem:[%s2129 + $0x3b8] sm:$0xff] %v2606
          %v2608 = vld [vmem:[%s2128 + $0x3bc] sm:$0xff]
          %2609 = vst [vmem:[%s2129 + $0x3bc] sm:$0xff] %v2608
          %v2610 = vld [vmem:[%s2128 + $0x3c0] sm:$0xff]
          %2611 = vst [vmem:[%s2129 + $0x3c0] sm:$0xff] %v2610
          %v2612 = vld [vmem:[%s2128 + $0x3e0] sm:$0xff]
          %2613 = vst [vmem:[%s2129 + $0x3c4] sm:$0xff] %v2612
          %v2614 = vld [vmem:[%s2128 + $0x3c4] sm:$0xff]
          %2615 = vst [vmem:[%s2129 + $0x3c8] sm:$0xff] %v2614
          %v2616 = vld [vmem:[%s2128 + $0x3e4] sm:$0xff]
          %2617 = vst [vmem:[%s2129 + $0x3cc] sm:$0xff] %v2616
          %v2618 = vld [vmem:[%s2128 + $0x3c8] sm:$0xff]
          %2619 = vst [vmem:[%s2129 + $0x3d0] sm:$0xff] %v2618
          %v2620 = vld [vmem:[%s2128 + $0x3e8] sm:$0xff]
          %2621 = vst [vmem:[%s2129 + $0x3d4] sm:$0xff] %v2620
          %v2622 = vld [vmem:[%s2128 + $0x3cc] sm:$0xff]
          %2623 = vst [vmem:[%s2129 + $0x3d8] sm:$0xff] %v2622
          %v2624 = vld [vmem:[%s2128 + $0x3ec] sm:$0xff]
          %2625 = vst [vmem:[%s2129 + $0x3dc] sm:$0xff] %v2624
          %v2626 = vld [vmem:[%s2128 + $0x3d0] sm:$0xff]
          %2627 = vst [vmem:[%s2129 + $0x3e0] sm:$0xff] %v2626
          %v2628 = vld [vmem:[%s2128 + $0x3f0] sm:$0xff]
          %2629 = vst [vmem:[%s2129 + $0x3e4] sm:$0xff] %v2628
          %v2630 = vld [vmem:[%s2128 + $0x3d4] sm:$0xff]
          %2631 = vst [vmem:[%s2129 + $0x3e8] sm:$0xff] %v2630
          %v2632 = vld [vmem:[%s2128 + $0x3f4] sm:$0xff]
          %2633 = vst [vmem:[%s2129 + $0x3ec] sm:$0xff] %v2632
          %v2634 = vld [vmem:[%s2128 + $0x3d8] sm:$0xff]
          %2635 = vst [vmem:[%s2129 + $0x3f0] sm:$0xff] %v2634
          %v2636 = vld [vmem:[%s2128 + $0x3f8] sm:$0xff]
          %2637 = vst [vmem:[%s2129 + $0x3f4] sm:$0xff] %v2636
          %v2638 = vld [vmem:[%s2128 + $0x3dc] sm:$0xff]
          %2639 = vst [vmem:[%s2129 + $0x3f8] sm:$0xff] %v2638
          %v2640 = vld [vmem:[%s2128 + $0x3fc] sm:$0xff]
          %2641 = vst [vmem:[%s2129 + $0x3fc] sm:$0xff] %v2640
          %v2642 = vld [vmem:[%s2128 + $0x400] sm:$0xff]
          %2643 = vst [vmem:[%s2129 + $0x400] sm:$0xff] %v2642
          %v2644 = vld [vmem:[%s2128 + $0x420] sm:$0xff]
          %2645 = vst [vmem:[%s2129 + $0x404] sm:$0xff] %v2644
          %v2646 = vld [vmem:[%s2128 + $0x404] sm:$0xff]
          %2647 = vst [vmem:[%s2129 + $0x408] sm:$0xff] %v2646
          %v2648 = vld [vmem:[%s2128 + $0x424] sm:$0xff]
          %2649 = vst [vmem:[%s2129 + $0x40c] sm:$0xff] %v2648
          %v2650 = vld [vmem:[%s2128 + $0x408] sm:$0xff]
          %2651 = vst [vmem:[%s2129 + $0x410] sm:$0xff] %v2650
          %v2652 = vld [vmem:[%s2128 + $0x428] sm:$0xff]
          %2653 = vst [vmem:[%s2129 + $0x414] sm:$0xff] %v2652
          %v2654 = vld [vmem:[%s2128 + $0x40c] sm:$0xff]
          %2655 = vst [vmem:[%s2129 + $0x418] sm:$0xff] %v2654
          %v2656 = vld [vmem:[%s2128 + $0x42c] sm:$0xff]
          %2657 = vst [vmem:[%s2129 + $0x41c] sm:$0xff] %v2656
          %v2658 = vld [vmem:[%s2128 + $0x410] sm:$0xff]
          %2659 = vst [vmem:[%s2129 + $0x420] sm:$0xff] %v2658
          %v2660 = vld [vmem:[%s2128 + $0x430] sm:$0xff]
          %2661 = vst [vmem:[%s2129 + $0x424] sm:$0xff] %v2660
          %v2662 = vld [vmem:[%s2128 + $0x414] sm:$0xff]
          %2663 = vst [vmem:[%s2129 + $0x428] sm:$0xff] %v2662
          %v2664 = vld [vmem:[%s2128 + $0x434] sm:$0xff]
          %2665 = vst [vmem:[%s2129 + $0x42c] sm:$0xff] %v2664
          %v2666 = vld [vmem:[%s2128 + $0x418] sm:$0xff]
          %2667 = vst [vmem:[%s2129 + $0x430] sm:$0xff] %v2666
          %v2668 = vld [vmem:[%s2128 + $0x438] sm:$0xff]
          %2669 = vst [vmem:[%s2129 + $0x434] sm:$0xff] %v2668
          %v2670 = vld [vmem:[%s2128 + $0x41c] sm:$0xff]
          %2671 = vst [vmem:[%s2129 + $0x438] sm:$0xff] %v2670
          %v2672 = vld [vmem:[%s2128 + $0x43c] sm:$0xff]
          %2673 = vst [vmem:[%s2129 + $0x43c] sm:$0xff] %v2672
          %v2674 = vld [vmem:[%s2128 + $0x440] sm:$0xff]
          %2675 = vst [vmem:[%s2129 + $0x440] sm:$0xff] %v2674
          %v2676 = vld [vmem:[%s2128 + $0x460] sm:$0xff]
          %2677 = vst [vmem:[%s2129 + $0x444] sm:$0xff] %v2676
          %v2678 = vld [vmem:[%s2128 + $0x444] sm:$0xff]
          %2679 = vst [vmem:[%s2129 + $0x448] sm:$0xff] %v2678
          %v2680 = vld [vmem:[%s2128 + $0x464] sm:$0xff]
          %2681 = vst [vmem:[%s2129 + $0x44c] sm:$0xff] %v2680
          %v2682 = vld [vmem:[%s2128 + $0x448] sm:$0xff]
          %2683 = vst [vmem:[%s2129 + $0x450] sm:$0xff] %v2682
          %v2684 = vld [vmem:[%s2128 + $0x468] sm:$0xff]
          %2685 = vst [vmem:[%s2129 + $0x454] sm:$0xff] %v2684
          %v2686 = vld [vmem:[%s2128 + $0x44c] sm:$0xff]
          %2687 = vst [vmem:[%s2129 + $0x458] sm:$0xff] %v2686
          %v2688 = vld [vmem:[%s2128 + $0x46c] sm:$0xff]
          %2689 = vst [vmem:[%s2129 + $0x45c] sm:$0xff] %v2688
          %v2690 = vld [vmem:[%s2128 + $0x450] sm:$0xff]
          %2691 = vst [vmem:[%s2129 + $0x460] sm:$0xff] %v2690
          %v2692 = vld [vmem:[%s2128 + $0x470] sm:$0xff]
          %2693 = vst [vmem:[%s2129 + $0x464] sm:$0xff] %v2692
          %v2694 = vld [vmem:[%s2128 + $0x454] sm:$0xff]
          %2695 = vst [vmem:[%s2129 + $0x468] sm:$0xff] %v2694
          %v2696 = vld [vmem:[%s2128 + $0x474] sm:$0xff]
          %2697 = vst [vmem:[%s2129 + $0x46c] sm:$0xff] %v2696
          %v2698 = vld [vmem:[%s2128 + $0x458] sm:$0xff]
          %2699 = vst [vmem:[%s2129 + $0x470] sm:$0xff] %v2698
          %v2700 = vld [vmem:[%s2128 + $0x478] sm:$0xff]
          %2701 = vst [vmem:[%s2129 + $0x474] sm:$0xff] %v2700
          %v2702 = vld [vmem:[%s2128 + $0x45c] sm:$0xff]
          %2703 = vst [vmem:[%s2129 + $0x478] sm:$0xff] %v2702
          %v2704 = vld [vmem:[%s2128 + $0x47c] sm:$0xff]
          %2705 = vst [vmem:[%s2129 + $0x47c] sm:$0xff] %v2704
          %v2706 = vld [vmem:[%s2128 + $0x480] sm:$0xff]
          %2707 = vst [vmem:[%s2129 + $0x480] sm:$0xff] %v2706
          %v2708 = vld [vmem:[%s2128 + $0x4a0] sm:$0xff]
          %2709 = vst [vmem:[%s2129 + $0x484] sm:$0xff] %v2708
          %v2710 = vld [vmem:[%s2128 + $0x484] sm:$0xff]
          %2711 = vst [vmem:[%s2129 + $0x488] sm:$0xff] %v2710
          %v2712 = vld [vmem:[%s2128 + $0x4a4] sm:$0xff]
          %2713 = vst [vmem:[%s2129 + $0x48c] sm:$0xff] %v2712
          %v2714 = vld [vmem:[%s2128 + $0x488] sm:$0xff]
          %2715 = vst [vmem:[%s2129 + $0x490] sm:$0xff] %v2714
          %v2716 = vld [vmem:[%s2128 + $0x4a8] sm:$0xff]
          %2717 = vst [vmem:[%s2129 + $0x494] sm:$0xff] %v2716
          %v2718 = vld [vmem:[%s2128 + $0x48c] sm:$0xff]
          %2719 = vst [vmem:[%s2129 + $0x498] sm:$0xff] %v2718
          %v2720 = vld [vmem:[%s2128 + $0x4ac] sm:$0xff]
          %2721 = vst [vmem:[%s2129 + $0x49c] sm:$0xff] %v2720
          %v2722 = vld [vmem:[%s2128 + $0x490] sm:$0xff]
          %2723 = vst [vmem:[%s2129 + $0x4a0] sm:$0xff] %v2722
          %v2724 = vld [vmem:[%s2128 + $0x4b0] sm:$0xff]
          %2725 = vst [vmem:[%s2129 + $0x4a4] sm:$0xff] %v2724
          %v2726 = vld [vmem:[%s2128 + $0x494] sm:$0xff]
          %2727 = vst [vmem:[%s2129 + $0x4a8] sm:$0xff] %v2726
          %v2728 = vld [vmem:[%s2128 + $0x4b4] sm:$0xff]
          %2729 = vst [vmem:[%s2129 + $0x4ac] sm:$0xff] %v2728
          %v2730 = vld [vmem:[%s2128 + $0x498] sm:$0xff]
          %2731 = vst [vmem:[%s2129 + $0x4b0] sm:$0xff] %v2730
          %v2732 = vld [vmem:[%s2128 + $0x4b8] sm:$0xff]
          %2733 = vst [vmem:[%s2129 + $0x4b4] sm:$0xff] %v2732
          %v2734 = vld [vmem:[%s2128 + $0x49c] sm:$0xff]
          %2735 = vst [vmem:[%s2129 + $0x4b8] sm:$0xff] %v2734
          %v2736 = vld [vmem:[%s2128 + $0x4bc] sm:$0xff]
          %2737 = vst [vmem:[%s2129 + $0x4bc] sm:$0xff] %v2736
          %v2738 = vld [vmem:[%s2128 + $0x4c0] sm:$0xff]
          %2739 = vst [vmem:[%s2129 + $0x4c0] sm:$0xff] %v2738
          %v2740 = vld [vmem:[%s2128 + $0x4e0] sm:$0xff]
          %2741 = vst [vmem:[%s2129 + $0x4c4] sm:$0xff] %v2740
          %v2742 = vld [vmem:[%s2128 + $0x4c4] sm:$0xff]
          %2743 = vst [vmem:[%s2129 + $0x4c8] sm:$0xff] %v2742
          %v2744 = vld [vmem:[%s2128 + $0x4e4] sm:$0xff]
          %2745 = vst [vmem:[%s2129 + $0x4cc] sm:$0xff] %v2744
          %v2746 = vld [vmem:[%s2128 + $0x4c8] sm:$0xff]
          %2747 = vst [vmem:[%s2129 + $0x4d0] sm:$0xff] %v2746
          %v2748 = vld [vmem:[%s2128 + $0x4e8] sm:$0xff]
          %2749 = vst [vmem:[%s2129 + $0x4d4] sm:$0xff] %v2748
          %v2750 = vld [vmem:[%s2128 + $0x4cc] sm:$0xff]
          %2751 = vst [vmem:[%s2129 + $0x4d8] sm:$0xff] %v2750
          %v2752 = vld [vmem:[%s2128 + $0x4ec] sm:$0xff]
          %2753 = vst [vmem:[%s2129 + $0x4dc] sm:$0xff] %v2752
          %v2754 = vld [vmem:[%s2128 + $0x4d0] sm:$0xff]
          %2755 = vst [vmem:[%s2129 + $0x4e0] sm:$0xff] %v2754
          %v2756 = vld [vmem:[%s2128 + $0x4f0] sm:$0xff]
          %2757 = vst [vmem:[%s2129 + $0x4e4] sm:$0xff] %v2756
          %v2758 = vld [vmem:[%s2128 + $0x4d4] sm:$0xff]
          %2759 = vst [vmem:[%s2129 + $0x4e8] sm:$0xff] %v2758
          %v2760 = vld [vmem:[%s2128 + $0x4f4] sm:$0xff]
          %2761 = vst [vmem:[%s2129 + $0x4ec] sm:$0xff] %v2760
          %v2762 = vld [vmem:[%s2128 + $0x4d8] sm:$0xff]
          %2763 = vst [vmem:[%s2129 + $0x4f0] sm:$0xff] %v2762
          %v2764 = vld [vmem:[%s2128 + $0x4f8] sm:$0xff]
          %2765 = vst [vmem:[%s2129 + $0x4f4] sm:$0xff] %v2764
          %v2766 = vld [vmem:[%s2128 + $0x4dc] sm:$0xff]
          %2767 = vst [vmem:[%s2129 + $0x4f8] sm:$0xff] %v2766
          %v2768 = vld [vmem:[%s2128 + $0x4fc] sm:$0xff]
          %2769 = vst [vmem:[%s2129 + $0x4fc] sm:$0xff] %v2768
          %v2770 = vld [vmem:[%s2128 + $0x500] sm:$0xff]
          %2771 = vst [vmem:[%s2129 + $0x500] sm:$0xff] %v2770
          %v2772 = vld [vmem:[%s2128 + $0x520] sm:$0xff]
          %2773 = vst [vmem:[%s2129 + $0x504] sm:$0xff] %v2772
          %v2774 = vld [vmem:[%s2128 + $0x504] sm:$0xff]
          %2775 = vst [vmem:[%s2129 + $0x508] sm:$0xff] %v2774
          %v2776 = vld [vmem:[%s2128 + $0x524] sm:$0xff]
          %2777 = vst [vmem:[%s2129 + $0x50c] sm:$0xff] %v2776
          %v2778 = vld [vmem:[%s2128 + $0x508] sm:$0xff]
          %2779 = vst [vmem:[%s2129 + $0x510] sm:$0xff] %v2778
          %v2780 = vld [vmem:[%s2128 + $0x528] sm:$0xff]
          %2781 = vst [vmem:[%s2129 + $0x514] sm:$0xff] %v2780
          %v2782 = vld [vmem:[%s2128 + $0x50c] sm:$0xff]
          %2783 = vst [vmem:[%s2129 + $0x518] sm:$0xff] %v2782
          %v2784 = vld [vmem:[%s2128 + $0x52c] sm:$0xff]
          %2785 = vst [vmem:[%s2129 + $0x51c] sm:$0xff] %v2784
          %v2786 = vld [vmem:[%s2128 + $0x510] sm:$0xff]
          %2787 = vst [vmem:[%s2129 + $0x520] sm:$0xff] %v2786
          %v2788 = vld [vmem:[%s2128 + $0x530] sm:$0xff]
          %2789 = vst [vmem:[%s2129 + $0x524] sm:$0xff] %v2788
          %v2790 = vld [vmem:[%s2128 + $0x514] sm:$0xff]
          %2791 = vst [vmem:[%s2129 + $0x528] sm:$0xff] %v2790
          %v2792 = vld [vmem:[%s2128 + $0x534] sm:$0xff]
          %2793 = vst [vmem:[%s2129 + $0x52c] sm:$0xff] %v2792
          %v2794 = vld [vmem:[%s2128 + $0x518] sm:$0xff]
          %2795 = vst [vmem:[%s2129 + $0x530] sm:$0xff] %v2794
          %v2796 = vld [vmem:[%s2128 + $0x538] sm:$0xff]
          %2797 = vst [vmem:[%s2129 + $0x534] sm:$0xff] %v2796
          %v2798 = vld [vmem:[%s2128 + $0x51c] sm:$0xff]
          %2799 = vst [vmem:[%s2129 + $0x538] sm:$0xff] %v2798
          %v2800 = vld [vmem:[%s2128 + $0x53c] sm:$0xff]
          %2801 = vst [vmem:[%s2129 + $0x53c] sm:$0xff] %v2800
          %v2802 = vld [vmem:[%s2128 + $0x540] sm:$0xff]
          %2803 = vst [vmem:[%s2129 + $0x540] sm:$0xff] %v2802
          %v2804 = vld [vmem:[%s2128 + $0x560] sm:$0xff]
          %2805 = vst [vmem:[%s2129 + $0x544] sm:$0xff] %v2804
          %v2806 = vld [vmem:[%s2128 + $0x544] sm:$0xff]
          %2807 = vst [vmem:[%s2129 + $0x548] sm:$0xff] %v2806
          %v2808 = vld [vmem:[%s2128 + $0x564] sm:$0xff]
          %2809 = vst [vmem:[%s2129 + $0x54c] sm:$0xff] %v2808
          %v2810 = vld [vmem:[%s2128 + $0x548] sm:$0xff]
          %2811 = vst [vmem:[%s2129 + $0x550] sm:$0xff] %v2810
          %v2812 = vld [vmem:[%s2128 + $0x568] sm:$0xff]
          %2813 = vst [vmem:[%s2129 + $0x554] sm:$0xff] %v2812
          %v2814 = vld [vmem:[%s2128 + $0x54c] sm:$0xff]
          %2815 = vst [vmem:[%s2129 + $0x558] sm:$0xff] %v2814
          %v2816 = vld [vmem:[%s2128 + $0x56c] sm:$0xff]
          %2817 = vst [vmem:[%s2129 + $0x55c] sm:$0xff] %v2816
          %v2818 = vld [vmem:[%s2128 + $0x550] sm:$0xff]
          %2819 = vst [vmem:[%s2129 + $0x560] sm:$0xff] %v2818
          %v2820 = vld [vmem:[%s2128 + $0x570] sm:$0xff]
          %2821 = vst [vmem:[%s2129 + $0x564] sm:$0xff] %v2820
          %v2822 = vld [vmem:[%s2128 + $0x554] sm:$0xff]
          %2823 = vst [vmem:[%s2129 + $0x568] sm:$0xff] %v2822
          %v2824 = vld [vmem:[%s2128 + $0x574] sm:$0xff]
          %2825 = vst [vmem:[%s2129 + $0x56c] sm:$0xff] %v2824
          %v2826 = vld [vmem:[%s2128 + $0x558] sm:$0xff]
          %2827 = vst [vmem:[%s2129 + $0x570] sm:$0xff] %v2826
          %v2828 = vld [vmem:[%s2128 + $0x578] sm:$0xff]
          %2829 = vst [vmem:[%s2129 + $0x574] sm:$0xff] %v2828
          %v2830 = vld [vmem:[%s2128 + $0x55c] sm:$0xff]
          %2831 = vst [vmem:[%s2129 + $0x578] sm:$0xff] %v2830
          %v2832 = vld [vmem:[%s2128 + $0x57c] sm:$0xff]
          %2833 = vst [vmem:[%s2129 + $0x57c] sm:$0xff] %v2832
          %v2834 = vld [vmem:[%s2128 + $0x580] sm:$0xff]
          %2835 = vst [vmem:[%s2129 + $0x580] sm:$0xff] %v2834
          %v2836 = vld [vmem:[%s2128 + $0x5a0] sm:$0xff]
          %2837 = vst [vmem:[%s2129 + $0x584] sm:$0xff] %v2836
          %v2838 = vld [vmem:[%s2128 + $0x584] sm:$0xff]
          %2839 = vst [vmem:[%s2129 + $0x588] sm:$0xff] %v2838
          %v2840 = vld [vmem:[%s2128 + $0x5a4] sm:$0xff]
          %2841 = vst [vmem:[%s2129 + $0x58c] sm:$0xff] %v2840
          %v2842 = vld [vmem:[%s2128 + $0x588] sm:$0xff]
          %2843 = vst [vmem:[%s2129 + $0x590] sm:$0xff] %v2842
          %v2844 = vld [vmem:[%s2128 + $0x5a8] sm:$0xff]
          %2845 = vst [vmem:[%s2129 + $0x594] sm:$0xff] %v2844
          %v2846 = vld [vmem:[%s2128 + $0x58c] sm:$0xff]
          %2847 = vst [vmem:[%s2129 + $0x598] sm:$0xff] %v2846
          %v2848 = vld [vmem:[%s2128 + $0x5ac] sm:$0xff]
          %2849 = vst [vmem:[%s2129 + $0x59c] sm:$0xff] %v2848
          %v2850 = vld [vmem:[%s2128 + $0x590] sm:$0xff]
          %2851 = vst [vmem:[%s2129 + $0x5a0] sm:$0xff] %v2850
          %v2852 = vld [vmem:[%s2128 + $0x5b0] sm:$0xff]
          %2853 = vst [vmem:[%s2129 + $0x5a4] sm:$0xff] %v2852
          %v2854 = vld [vmem:[%s2128 + $0x594] sm:$0xff]
          %2855 = vst [vmem:[%s2129 + $0x5a8] sm:$0xff] %v2854
          %v2856 = vld [vmem:[%s2128 + $0x5b4] sm:$0xff]
          %2857 = vst [vmem:[%s2129 + $0x5ac] sm:$0xff] %v2856
          %v2858 = vld [vmem:[%s2128 + $0x598] sm:$0xff]
          %2859 = vst [vmem:[%s2129 + $0x5b0] sm:$0xff] %v2858
          %v2860 = vld [vmem:[%s2128 + $0x5b8] sm:$0xff]
          %2861 = vst [vmem:[%s2129 + $0x5b4] sm:$0xff] %v2860
          %v2862 = vld [vmem:[%s2128 + $0x59c] sm:$0xff]
          %2863 = vst [vmem:[%s2129 + $0x5b8] sm:$0xff] %v2862
          %v2864 = vld [vmem:[%s2128 + $0x5bc] sm:$0xff]
          %2865 = vst [vmem:[%s2129 + $0x5bc] sm:$0xff] %v2864
          %v2866 = vld [vmem:[%s2128 + $0x5c0] sm:$0xff]
          %2867 = vst [vmem:[%s2129 + $0x5c0] sm:$0xff] %v2866
          %v2868 = vld [vmem:[%s2128 + $0x5e0] sm:$0xff]
          %2869 = vst [vmem:[%s2129 + $0x5c4] sm:$0xff] %v2868
          %v2870 = vld [vmem:[%s2128 + $0x5c4] sm:$0xff]
          %2871 = vst [vmem:[%s2129 + $0x5c8] sm:$0xff] %v2870
          %v2872 = vld [vmem:[%s2128 + $0x5e4] sm:$0xff]
          %2873 = vst [vmem:[%s2129 + $0x5cc] sm:$0xff] %v2872
          %v2874 = vld [vmem:[%s2128 + $0x5c8] sm:$0xff]
          %2875 = vst [vmem:[%s2129 + $0x5d0] sm:$0xff] %v2874
          %v2876 = vld [vmem:[%s2128 + $0x5e8] sm:$0xff]
          %2877 = vst [vmem:[%s2129 + $0x5d4] sm:$0xff] %v2876
          %v2878 = vld [vmem:[%s2128 + $0x5cc] sm:$0xff]
          %2879 = vst [vmem:[%s2129 + $0x5d8] sm:$0xff] %v2878
          %v2880 = vld [vmem:[%s2128 + $0x5ec] sm:$0xff]
          %2881 = vst [vmem:[%s2129 + $0x5dc] sm:$0xff] %v2880
          %v2882 = vld [vmem:[%s2128 + $0x5d0] sm:$0xff]
          %2883 = vst [vmem:[%s2129 + $0x5e0] sm:$0xff] %v2882
          %v2884 = vld [vmem:[%s2128 + $0x5f0] sm:$0xff]
          %2885 = vst [vmem:[%s2129 + $0x5e4] sm:$0xff] %v2884
          %v2886 = vld [vmem:[%s2128 + $0x5d4] sm:$0xff]
          %2887 = vst [vmem:[%s2129 + $0x5e8] sm:$0xff] %v2886
          %v2888 = vld [vmem:[%s2128 + $0x5f4] sm:$0xff]
          %2889 = vst [vmem:[%s2129 + $0x5ec] sm:$0xff] %v2888
          %v2890 = vld [vmem:[%s2128 + $0x5d8] sm:$0xff]
          %2891 = vst [vmem:[%s2129 + $0x5f0] sm:$0xff] %v2890
          %v2892 = vld [vmem:[%s2128 + $0x5f8] sm:$0xff]
          %2893 = vst [vmem:[%s2129 + $0x5f4] sm:$0xff] %v2892
          %v2894 = vld [vmem:[%s2128 + $0x5dc] sm:$0xff]
          %2895 = vst [vmem:[%s2129 + $0x5f8] sm:$0xff] %v2894
          %v2896 = vld [vmem:[%s2128 + $0x5fc] sm:$0xff]
          %2897 = vst [vmem:[%s2129 + $0x5fc] sm:$0xff] %v2896
          %v2898 = vld [vmem:[%s2128 + $0x600] sm:$0xff]
          %2899 = vst [vmem:[%s2129 + $0x600] sm:$0xff] %v2898
          %v2900 = vld [vmem:[%s2128 + $0x620] sm:$0xff]
          %2901 = vst [vmem:[%s2129 + $0x604] sm:$0xff] %v2900
          %v2902 = vld [vmem:[%s2128 + $0x604] sm:$0xff]
          %2903 = vst [vmem:[%s2129 + $0x608] sm:$0xff] %v2902
          %v2904 = vld [vmem:[%s2128 + $0x624] sm:$0xff]
          %2905 = vst [vmem:[%s2129 + $0x60c] sm:$0xff] %v2904
          %v2906 = vld [vmem:[%s2128 + $0x608] sm:$0xff]
          %2907 = vst [vmem:[%s2129 + $0x610] sm:$0xff] %v2906
          %v2908 = vld [vmem:[%s2128 + $0x628] sm:$0xff]
          %2909 = vst [vmem:[%s2129 + $0x614] sm:$0xff] %v2908
          %v2910 = vld [vmem:[%s2128 + $0x60c] sm:$0xff]
          %2911 = vst [vmem:[%s2129 + $0x618] sm:$0xff] %v2910
          %v2912 = vld [vmem:[%s2128 + $0x62c] sm:$0xff]
          %2913 = vst [vmem:[%s2129 + $0x61c] sm:$0xff] %v2912
          %v2914 = vld [vmem:[%s2128 + $0x610] sm:$0xff]
          %2915 = vst [vmem:[%s2129 + $0x620] sm:$0xff] %v2914
          %v2916 = vld [vmem:[%s2128 + $0x630] sm:$0xff]
          %2917 = vst [vmem:[%s2129 + $0x624] sm:$0xff] %v2916
          %v2918 = vld [vmem:[%s2128 + $0x614] sm:$0xff]
          %2919 = vst [vmem:[%s2129 + $0x628] sm:$0xff] %v2918
          %v2920 = vld [vmem:[%s2128 + $0x634] sm:$0xff]
          %2921 = vst [vmem:[%s2129 + $0x62c] sm:$0xff] %v2920
          %v2922 = vld [vmem:[%s2128 + $0x618] sm:$0xff]
          %2923 = vst [vmem:[%s2129 + $0x630] sm:$0xff] %v2922
          %v2924 = vld [vmem:[%s2128 + $0x638] sm:$0xff]
          %2925 = vst [vmem:[%s2129 + $0x634] sm:$0xff] %v2924
          %v2926 = vld [vmem:[%s2128 + $0x61c] sm:$0xff]
          %2927 = vst [vmem:[%s2129 + $0x638] sm:$0xff] %v2926
          %v2928 = vld [vmem:[%s2128 + $0x63c] sm:$0xff]
          %2929 = vst [vmem:[%s2129 + $0x63c] sm:$0xff] %v2928
          %v2930 = vld [vmem:[%s2128 + $0x640] sm:$0xff]
          %2931 = vst [vmem:[%s2129 + $0x640] sm:$0xff] %v2930
          %v2932 = vld [vmem:[%s2128 + $0x660] sm:$0xff]
          %2933 = vst [vmem:[%s2129 + $0x644] sm:$0xff] %v2932
          %v2934 = vld [vmem:[%s2128 + $0x644] sm:$0xff]
          %2935 = vst [vmem:[%s2129 + $0x648] sm:$0xff] %v2934
          %v2936 = vld [vmem:[%s2128 + $0x664] sm:$0xff]
          %2937 = vst [vmem:[%s2129 + $0x64c] sm:$0xff] %v2936
          %v2938 = vld [vmem:[%s2128 + $0x648] sm:$0xff]
          %2939 = vst [vmem:[%s2129 + $0x650] sm:$0xff] %v2938
          %v2940 = vld [vmem:[%s2128 + $0x668] sm:$0xff]
          %2941 = vst [vmem:[%s2129 + $0x654] sm:$0xff] %v2940
          %v2942 = vld [vmem:[%s2128 + $0x64c] sm:$0xff]
          %2943 = vst [vmem:[%s2129 + $0x658] sm:$0xff] %v2942
          %v2944 = vld [vmem:[%s2128 + $0x66c] sm:$0xff]
          %2945 = vst [vmem:[%s2129 + $0x65c] sm:$0xff] %v2944
          %v2946 = vld [vmem:[%s2128 + $0x650] sm:$0xff]
          %2947 = vst [vmem:[%s2129 + $0x660] sm:$0xff] %v2946
          %v2948 = vld [vmem:[%s2128 + $0x670] sm:$0xff]
          %2949 = vst [vmem:[%s2129 + $0x664] sm:$0xff] %v2948
          %v2950 = vld [vmem:[%s2128 + $0x654] sm:$0xff]
          %2951 = vst [vmem:[%s2129 + $0x668] sm:$0xff] %v2950
          %v2952 = vld [vmem:[%s2128 + $0x674] sm:$0xff]
          %2953 = vst [vmem:[%s2129 + $0x66c] sm:$0xff] %v2952
          %v2954 = vld [vmem:[%s2128 + $0x658] sm:$0xff]
          %2955 = vst [vmem:[%s2129 + $0x670] sm:$0xff] %v2954
          %v2956 = vld [vmem:[%s2128 + $0x678] sm:$0xff]
          %2957 = vst [vmem:[%s2129 + $0x674] sm:$0xff] %v2956
          %v2958 = vld [vmem:[%s2128 + $0x65c] sm:$0xff]
          %2959 = vst [vmem:[%s2129 + $0x678] sm:$0xff] %v2958
          %v2960 = vld [vmem:[%s2128 + $0x67c] sm:$0xff]
          %2961 = vst [vmem:[%s2129 + $0x67c] sm:$0xff] %v2960
          %v2962 = vld [vmem:[%s2128 + $0x680] sm:$0xff]
          %2963 = vst [vmem:[%s2129 + $0x680] sm:$0xff] %v2962
          %v2964 = vld [vmem:[%s2128 + $0x6a0] sm:$0xff]
          %2965 = vst [vmem:[%s2129 + $0x684] sm:$0xff] %v2964
          %v2966 = vld [vmem:[%s2128 + $0x684] sm:$0xff]
          %2967 = vst [vmem:[%s2129 + $0x688] sm:$0xff] %v2966
          %v2968 = vld [vmem:[%s2128 + $0x6a4] sm:$0xff]
          %2969 = vst [vmem:[%s2129 + $0x68c] sm:$0xff] %v2968
          %v2970 = vld [vmem:[%s2128 + $0x688] sm:$0xff]
          %2971 = vst [vmem:[%s2129 + $0x690] sm:$0xff] %v2970
          %v2972 = vld [vmem:[%s2128 + $0x6a8] sm:$0xff]
          %2973 = vst [vmem:[%s2129 + $0x694] sm:$0xff] %v2972
          %v2974 = vld [vmem:[%s2128 + $0x68c] sm:$0xff]
          %2975 = vst [vmem:[%s2129 + $0x698] sm:$0xff] %v2974
          %v2976 = vld [vmem:[%s2128 + $0x6ac] sm:$0xff]
          %2977 = vst [vmem:[%s2129 + $0x69c] sm:$0xff] %v2976
          %v2978 = vld [vmem:[%s2128 + $0x690] sm:$0xff]
          %2979 = vst [vmem:[%s2129 + $0x6a0] sm:$0xff] %v2978
          %v2980 = vld [vmem:[%s2128 + $0x6b0] sm:$0xff]
          %2981 = vst [vmem:[%s2129 + $0x6a4] sm:$0xff] %v2980
          %v2982 = vld [vmem:[%s2128 + $0x694] sm:$0xff]
          %2983 = vst [vmem:[%s2129 + $0x6a8] sm:$0xff] %v2982
          %v2984 = vld [vmem:[%s2128 + $0x6b4] sm:$0xff]
          %2985 = vst [vmem:[%s2129 + $0x6ac] sm:$0xff] %v2984
          %v2986 = vld [vmem:[%s2128 + $0x698] sm:$0xff]
          %2987 = vst [vmem:[%s2129 + $0x6b0] sm:$0xff] %v2986
          %v2988 = vld [vmem:[%s2128 + $0x6b8] sm:$0xff]
          %2989 = vst [vmem:[%s2129 + $0x6b4] sm:$0xff] %v2988
          %v2990 = vld [vmem:[%s2128 + $0x69c] sm:$0xff]
          %2991 = vst [vmem:[%s2129 + $0x6b8] sm:$0xff] %v2990
          %v2992 = vld [vmem:[%s2128 + $0x6bc] sm:$0xff]
          %2993 = vst [vmem:[%s2129 + $0x6bc] sm:$0xff] %v2992
          %v2994 = vld [vmem:[%s2128 + $0x6c0] sm:$0xff]
          %2995 = vst [vmem:[%s2129 + $0x6c0] sm:$0xff] %v2994
          %v2996 = vld [vmem:[%s2128 + $0x6e0] sm:$0xff]
          %2997 = vst [vmem:[%s2129 + $0x6c4] sm:$0xff] %v2996
          %v2998 = vld [vmem:[%s2128 + $0x6c4] sm:$0xff]
          %2999 = vst [vmem:[%s2129 + $0x6c8] sm:$0xff] %v2998
          %v3000 = vld [vmem:[%s2128 + $0x6e4] sm:$0xff]
          %3001 = vst [vmem:[%s2129 + $0x6cc] sm:$0xff] %v3000
          %v3002 = vld [vmem:[%s2128 + $0x6c8] sm:$0xff]
          %3003 = vst [vmem:[%s2129 + $0x6d0] sm:$0xff] %v3002
          %v3004 = vld [vmem:[%s2128 + $0x6e8] sm:$0xff]
          %3005 = vst [vmem:[%s2129 + $0x6d4] sm:$0xff] %v3004
          %v3006 = vld [vmem:[%s2128 + $0x6cc] sm:$0xff]
          %3007 = vst [vmem:[%s2129 + $0x6d8] sm:$0xff] %v3006
          %v3008 = vld [vmem:[%s2128 + $0x6ec] sm:$0xff]
          %3009 = vst [vmem:[%s2129 + $0x6dc] sm:$0xff] %v3008
          %v3010 = vld [vmem:[%s2128 + $0x6d0] sm:$0xff]
          %3011 = vst [vmem:[%s2129 + $0x6e0] sm:$0xff] %v3010
          %v3012 = vld [vmem:[%s2128 + $0x6f0] sm:$0xff]
          %3013 = vst [vmem:[%s2129 + $0x6e4] sm:$0xff] %v3012
          %v3014 = vld [vmem:[%s2128 + $0x6d4] sm:$0xff]
          %3015 = vst [vmem:[%s2129 + $0x6e8] sm:$0xff] %v3014
          %v3016 = vld [vmem:[%s2128 + $0x6f4] sm:$0xff]
          %3017 = vst [vmem:[%s2129 + $0x6ec] sm:$0xff] %v3016
          %v3018 = vld [vmem:[%s2128 + $0x6d8] sm:$0xff]
          %3019 = vst [vmem:[%s2129 + $0x6f0] sm:$0xff] %v3018
          %v3020 = vld [vmem:[%s2128 + $0x6f8] sm:$0xff]
          %3021 = vst [vmem:[%s2129 + $0x6f4] sm:$0xff] %v3020
          %v3022 = vld [vmem:[%s2128 + $0x6dc] sm:$0xff]
          %3023 = vst [vmem:[%s2129 + $0x6f8] sm:$0xff] %v3022
          %v3024 = vld [vmem:[%s2128 + $0x6fc] sm:$0xff]
          %3025 = vst [vmem:[%s2129 + $0x6fc] sm:$0xff] %v3024
          %v3026 = vld [vmem:[%s2128 + $0x700] sm:$0xff]
          %3027 = vst [vmem:[%s2129 + $0x700] sm:$0xff] %v3026
          %v3028 = vld [vmem:[%s2128 + $0x720] sm:$0xff]
          %3029 = vst [vmem:[%s2129 + $0x704] sm:$0xff] %v3028
          %v3030 = vld [vmem:[%s2128 + $0x704] sm:$0xff]
          %3031 = vst [vmem:[%s2129 + $0x708] sm:$0xff] %v3030
          %v3032 = vld [vmem:[%s2128 + $0x724] sm:$0xff]
          %3033 = vst [vmem:[%s2129 + $0x70c] sm:$0xff] %v3032
          %v3034 = vld [vmem:[%s2128 + $0x708] sm:$0xff]
          %3035 = vst [vmem:[%s2129 + $0x710] sm:$0xff] %v3034
          %v3036 = vld [vmem:[%s2128 + $0x728] sm:$0xff]
          %3037 = vst [vmem:[%s2129 + $0x714] sm:$0xff] %v3036
          %v3038 = vld [vmem:[%s2128 + $0x70c] sm:$0xff]
          %3039 = vst [vmem:[%s2129 + $0x718] sm:$0xff] %v3038
          %v3040 = vld [vmem:[%s2128 + $0x72c] sm:$0xff]
          %3041 = vst [vmem:[%s2129 + $0x71c] sm:$0xff] %v3040
          %v3042 = vld [vmem:[%s2128 + $0x710] sm:$0xff]
          %3043 = vst [vmem:[%s2129 + $0x720] sm:$0xff] %v3042
          %v3044 = vld [vmem:[%s2128 + $0x730] sm:$0xff]
          %3045 = vst [vmem:[%s2129 + $0x724] sm:$0xff] %v3044
          %v3046 = vld [vmem:[%s2128 + $0x714] sm:$0xff]
          %3047 = vst [vmem:[%s2129 + $0x728] sm:$0xff] %v3046
          %v3048 = vld [vmem:[%s2128 + $0x734] sm:$0xff]
          %3049 = vst [vmem:[%s2129 + $0x72c] sm:$0xff] %v3048
          %v3050 = vld [vmem:[%s2128 + $0x718] sm:$0xff]
          %3051 = vst [vmem:[%s2129 + $0x730] sm:$0xff] %v3050
          %v3052 = vld [vmem:[%s2128 + $0x738] sm:$0xff]
          %3053 = vst [vmem:[%s2129 + $0x734] sm:$0xff] %v3052
          %v3054 = vld [vmem:[%s2128 + $0x71c] sm:$0xff]
          %3055 = vst [vmem:[%s2129 + $0x738] sm:$0xff] %v3054
          %v3056 = vld [vmem:[%s2128 + $0x73c] sm:$0xff]
          %3057 = vst [vmem:[%s2129 + $0x73c] sm:$0xff] %v3056
          %v3058 = vld [vmem:[%s2128 + $0x740] sm:$0xff]
          %3059 = vst [vmem:[%s2129 + $0x740] sm:$0xff] %v3058
          %v3060 = vld [vmem:[%s2128 + $0x760] sm:$0xff]
          %3061 = vst [vmem:[%s2129 + $0x744] sm:$0xff] %v3060
          %v3062 = vld [vmem:[%s2128 + $0x744] sm:$0xff]
          %3063 = vst [vmem:[%s2129 + $0x748] sm:$0xff] %v3062
          %v3064 = vld [vmem:[%s2128 + $0x764] sm:$0xff]
          %3065 = vst [vmem:[%s2129 + $0x74c] sm:$0xff] %v3064
          %v3066 = vld [vmem:[%s2128 + $0x748] sm:$0xff]
          %3067 = vst [vmem:[%s2129 + $0x750] sm:$0xff] %v3066
          %v3068 = vld [vmem:[%s2128 + $0x768] sm:$0xff]
          %3069 = vst [vmem:[%s2129 + $0x754] sm:$0xff] %v3068
          %v3070 = vld [vmem:[%s2128 + $0x74c] sm:$0xff]
          %3071 = vst [vmem:[%s2129 + $0x758] sm:$0xff] %v3070
          %v3072 = vld [vmem:[%s2128 + $0x76c] sm:$0xff]
          %3073 = vst [vmem:[%s2129 + $0x75c] sm:$0xff] %v3072
          %v3074 = vld [vmem:[%s2128 + $0x750] sm:$0xff]
          %3075 = vst [vmem:[%s2129 + $0x760] sm:$0xff] %v3074
          %v3076 = vld [vmem:[%s2128 + $0x770] sm:$0xff]
          %3077 = vst [vmem:[%s2129 + $0x764] sm:$0xff] %v3076
          %v3078 = vld [vmem:[%s2128 + $0x754] sm:$0xff]
          %3079 = vst [vmem:[%s2129 + $0x768] sm:$0xff] %v3078
          %v3080 = vld [vmem:[%s2128 + $0x774] sm:$0xff]
          %3081 = vst [vmem:[%s2129 + $0x76c] sm:$0xff] %v3080
          %v3082 = vld [vmem:[%s2128 + $0x758] sm:$0xff]
          %3083 = vst [vmem:[%s2129 + $0x770] sm:$0xff] %v3082
          %v3084 = vld [vmem:[%s2128 + $0x778] sm:$0xff]
          %3085 = vst [vmem:[%s2129 + $0x774] sm:$0xff] %v3084
          %v3086 = vld [vmem:[%s2128 + $0x75c] sm:$0xff]
          %3087 = vst [vmem:[%s2129 + $0x778] sm:$0xff] %v3086
          %v3088 = vld [vmem:[%s2128 + $0x77c] sm:$0xff]
          %3089 = vst [vmem:[%s2129 + $0x77c] sm:$0xff] %v3088
          %v3090 = vld [vmem:[%s2128 + $0x780] sm:$0xff]
          %3091 = vst [vmem:[%s2129 + $0x780] sm:$0xff] %v3090
          %v3092 = vld [vmem:[%s2128 + $0x7a0] sm:$0xff]
          %3093 = vst [vmem:[%s2129 + $0x784] sm:$0xff] %v3092
          %v3094 = vld [vmem:[%s2128 + $0x784] sm:$0xff]
          %3095 = vst [vmem:[%s2129 + $0x788] sm:$0xff] %v3094
          %v3096 = vld [vmem:[%s2128 + $0x7a4] sm:$0xff]
          %3097 = vst [vmem:[%s2129 + $0x78c] sm:$0xff] %v3096
          %v3098 = vld [vmem:[%s2128 + $0x788] sm:$0xff]
          %3099 = vst [vmem:[%s2129 + $0x790] sm:$0xff] %v3098
          %v3100 = vld [vmem:[%s2128 + $0x7a8] sm:$0xff]
          %3101 = vst [vmem:[%s2129 + $0x794] sm:$0xff] %v3100
          %v3102 = vld [vmem:[%s2128 + $0x78c] sm:$0xff]
          %3103 = vst [vmem:[%s2129 + $0x798] sm:$0xff] %v3102
          %v3104 = vld [vmem:[%s2128 + $0x7ac] sm:$0xff]
          %3105 = vst [vmem:[%s2129 + $0x79c] sm:$0xff] %v3104
          %v3106 = vld [vmem:[%s2128 + $0x790] sm:$0xff]
          %3107 = vst [vmem:[%s2129 + $0x7a0] sm:$0xff] %v3106
          %v3108 = vld [vmem:[%s2128 + $0x7b0] sm:$0xff]
          %3109 = vst [vmem:[%s2129 + $0x7a4] sm:$0xff] %v3108
          %v3110 = vld [vmem:[%s2128 + $0x794] sm:$0xff]
          %3111 = vst [vmem:[%s2129 + $0x7a8] sm:$0xff] %v3110
          %v3112 = vld [vmem:[%s2128 + $0x7b4] sm:$0xff]
          %3113 = vst [vmem:[%s2129 + $0x7ac] sm:$0xff] %v3112
          %v3114 = vld [vmem:[%s2128 + $0x798] sm:$0xff]
          %3115 = vst [vmem:[%s2129 + $0x7b0] sm:$0xff] %v3114
          %v3116 = vld [vmem:[%s2128 + $0x7b8] sm:$0xff]
          %3117 = vst [vmem:[%s2129 + $0x7b4] sm:$0xff] %v3116
          %v3118 = vld [vmem:[%s2128 + $0x79c] sm:$0xff]
          %3119 = vst [vmem:[%s2129 + $0x7b8] sm:$0xff] %v3118
          %v3120 = vld [vmem:[%s2128 + $0x7bc] sm:$0xff]
          %3121 = vst [vmem:[%s2129 + $0x7bc] sm:$0xff] %v3120
          %v3122 = vld [vmem:[%s2128 + $0x7c0] sm:$0xff]
          %3123 = vst [vmem:[%s2129 + $0x7c0] sm:$0xff] %v3122
          %v3124 = vld [vmem:[%s2128 + $0x7e0] sm:$0xff]
          %3125 = vst [vmem:[%s2129 + $0x7c4] sm:$0xff] %v3124
          %v3126 = vld [vmem:[%s2128 + $0x7c4] sm:$0xff]
          %3127 = vst [vmem:[%s2129 + $0x7c8] sm:$0xff] %v3126
          %v3128 = vld [vmem:[%s2128 + $0x7e4] sm:$0xff]
          %3129 = vst [vmem:[%s2129 + $0x7cc] sm:$0xff] %v3128
          %v3130 = vld [vmem:[%s2128 + $0x7c8] sm:$0xff]
          %3131 = vst [vmem:[%s2129 + $0x7d0] sm:$0xff] %v3130
          %v3132 = vld [vmem:[%s2128 + $0x7e8] sm:$0xff]
          %3133 = vst [vmem:[%s2129 + $0x7d4] sm:$0xff] %v3132
          %v3134 = vld [vmem:[%s2128 + $0x7cc] sm:$0xff]
          %3135 = vst [vmem:[%s2129 + $0x7d8] sm:$0xff] %v3134
          %v3136 = vld [vmem:[%s2128 + $0x7ec] sm:$0xff]
          %3137 = vst [vmem:[%s2129 + $0x7dc] sm:$0xff] %v3136
          %v3138 = vld [vmem:[%s2128 + $0x7d0] sm:$0xff]
          %3139 = vst [vmem:[%s2129 + $0x7e0] sm:$0xff] %v3138
          %v3140 = vld [vmem:[%s2128 + $0x7f0] sm:$0xff]
          %3141 = vst [vmem:[%s2129 + $0x7e4] sm:$0xff] %v3140
          %v3142 = vld [vmem:[%s2128 + $0x7d4] sm:$0xff]
          %3143 = vst [vmem:[%s2129 + $0x7e8] sm:$0xff] %v3142
          %v3144 = vld [vmem:[%s2128 + $0x7f4] sm:$0xff]
          %3145 = vst [vmem:[%s2129 + $0x7ec] sm:$0xff] %v3144
          %v3146 = vld [vmem:[%s2128 + $0x7d8] sm:$0xff]
          %3147 = vst [vmem:[%s2129 + $0x7f0] sm:$0xff] %v3146
          %v3148 = vld [vmem:[%s2128 + $0x7f8] sm:$0xff]
          %3149 = vst [vmem:[%s2129 + $0x7f4] sm:$0xff] %v3148
          %v3150 = vld [vmem:[%s2128 + $0x7dc] sm:$0xff]
          %3151 = vst [vmem:[%s2129 + $0x7f8] sm:$0xff] %v3150
          %v3152 = vld [vmem:[%s2128 + $0x7fc] sm:$0xff]
          %3153 = vst [vmem:[%s2129 + $0x7fc] sm:$0xff] %v3152
          %s3154 = sadd.s32 1, %s2127
          %p3155 = scmp.ge.s32.totalorder %s3154, %s2118
          %s3156 = scalar_select %p3155, 0, %s3154
          %s3157 = smul.u32 %s3156, 8
          %s3158 = smul.u32 %s3156, 8
          %s3159 = scalar_lea.vmem %s4, %s3157
          %s3160 = scalar_lea.vmem [#allocation2], %s3158
        $region52: #{generator_bn_forward.1} parent=46 // loop_footer
          %s2124 = sadd.s32 %s2122, 1
        $region53: #{generator_bn_forward.1} parent=46 // loop_footer_branch
          %2121 = sbr.rel target = $region49
        $region54: #{generator_bn_forward.1} parent=46 // loop_exit
          _
        %s3161 = sshllo.u32 0, %s2113
        loop: start=0, step=1, limit=1
        $region55: #{generator_bn_forward.1} parent=46 // loop_pre_header
          _
        $region56: #{generator_bn_forward.1} parent=46 // loop_header
          %s3163 = sphi 0, %s3167
          %p3164 = scmp.ge.s32.totalorder %s3163, 1
          %s3168 = sphi %s2115, %s2115
          %s3169 = sphi %s2117, %s2117
        $region57: #{generator_bn_forward.1} parent=46 // loop_header_branch
          %3166 = sbr.rel (%p3164) target = $region61
        $region58: #{generator_bn_forward.1} parent=46 // loop_body
          %v3170 = vld [vmem:[%s3168] sm:%s3161]
          %3171 = vst [vmem:[%s3169] sm:%s3161] %v3170
          %v3172 = vld [vmem:[%s3168 + $0x20] sm:%s3161]
          %3173 = vst [vmem:[%s3169 + $0x4] sm:%s3161] %v3172
          %v3174 = vld [vmem:[%s3168 + $0x4] sm:%s3161]
          %3175 = vst [vmem:[%s3169 + $0x8] sm:%s3161] %v3174
          %v3176 = vld [vmem:[%s3168 + $0x24] sm:%s3161]
          %3177 = vst [vmem:[%s3169 + $0xc] sm:%s3161] %v3176
          %v3178 = vld [vmem:[%s3168 + $0x8] sm:%s3161]
          %3179 = vst [vmem:[%s3169 + $0x10] sm:%s3161] %v3178
          %v3180 = vld [vmem:[%s3168 + $0x28] sm:%s3161]
          %3181 = vst [vmem:[%s3169 + $0x14] sm:%s3161] %v3180
          %v3182 = vld [vmem:[%s3168 + $0xc] sm:%s3161]
          %3183 = vst [vmem:[%s3169 + $0x18] sm:%s3161] %v3182
          %v3184 = vld [vmem:[%s3168 + $0x2c] sm:%s3161]
          %3185 = vst [vmem:[%s3169 + $0x1c] sm:%s3161] %v3184
          %v3186 = vld [vmem:[%s3168 + $0x10] sm:%s3161]
          %3187 = vst [vmem:[%s3169 + $0x20] sm:%s3161] %v3186
          %v3188 = vld [vmem:[%s3168 + $0x30] sm:%s3161]
          %3189 = vst [vmem:[%s3169 + $0x24] sm:%s3161] %v3188
          %v3190 = vld [vmem:[%s3168 + $0x14] sm:%s3161]
          %3191 = vst [vmem:[%s3169 + $0x28] sm:%s3161] %v3190
          %v3192 = vld [vmem:[%s3168 + $0x34] sm:%s3161]
          %3193 = vst [vmem:[%s3169 + $0x2c] sm:%s3161] %v3192
          %v3194 = vld [vmem:[%s3168 + $0x18] sm:%s3161]
          %3195 = vst [vmem:[%s3169 + $0x30] sm:%s3161] %v3194
          %v3196 = vld [vmem:[%s3168 + $0x38] sm:%s3161]
          %3197 = vst [vmem:[%s3169 + $0x34] sm:%s3161] %v3196
          %v3198 = vld [vmem:[%s3168 + $0x1c] sm:%s3161]
          %3199 = vst [vmem:[%s3169 + $0x38] sm:%s3161] %v3198
          %v3200 = vld [vmem:[%s3168 + $0x3c] sm:%s3161]
          %3201 = vst [vmem:[%s3169 + $0x3c] sm:%s3161] %v3200
          %v3202 = vld [vmem:[%s3168 + $0x40] sm:%s3161]
          %3203 = vst [vmem:[%s3169 + $0x40] sm:%s3161] %v3202
          %v3204 = vld [vmem:[%s3168 + $0x60] sm:%s3161]
          %3205 = vst [vmem:[%s3169 + $0x44] sm:%s3161] %v3204
          %v3206 = vld [vmem:[%s3168 + $0x44] sm:%s3161]
          %3207 = vst [vmem:[%s3169 + $0x48] sm:%s3161] %v3206
          %v3208 = vld [vmem:[%s3168 + $0x64] sm:%s3161]
          %3209 = vst [vmem:[%s3169 + $0x4c] sm:%s3161] %v3208
          %v3210 = vld [vmem:[%s3168 + $0x48] sm:%s3161]
          %3211 = vst [vmem:[%s3169 + $0x50] sm:%s3161] %v3210
          %v3212 = vld [vmem:[%s3168 + $0x68] sm:%s3161]
          %3213 = vst [vmem:[%s3169 + $0x54] sm:%s3161] %v3212
          %v3214 = vld [vmem:[%s3168 + $0x4c] sm:%s3161]
          %3215 = vst [vmem:[%s3169 + $0x58] sm:%s3161] %v3214
          %v3216 = vld [vmem:[%s3168 + $0x6c] sm:%s3161]
          %3217 = vst [vmem:[%s3169 + $0x5c] sm:%s3161] %v3216
          %v3218 = vld [vmem:[%s3168 + $0x50] sm:%s3161]
          %3219 = vst [vmem:[%s3169 + $0x60] sm:%s3161] %v3218
          %v3220 = vld [vmem:[%s3168 + $0x70] sm:%s3161]
          %3221 = vst [vmem:[%s3169 + $0x64] sm:%s3161] %v3220
          %v3222 = vld [vmem:[%s3168 + $0x54] sm:%s3161]
          %3223 = vst [vmem:[%s3169 + $0x68] sm:%s3161] %v3222
          %v3224 = vld [vmem:[%s3168 + $0x74] sm:%s3161]
          %3225 = vst [vmem:[%s3169 + $0x6c] sm:%s3161] %v3224
          %v3226 = vld [vmem:[%s3168 + $0x58] sm:%s3161]
          %3227 = vst [vmem:[%s3169 + $0x70] sm:%s3161] %v3226
          %v3228 = vld [vmem:[%s3168 + $0x78] sm:%s3161]
          %3229 = vst [vmem:[%s3169 + $0x74] sm:%s3161] %v3228
          %v3230 = vld [vmem:[%s3168 + $0x5c] sm:%s3161]
          %3231 = vst [vmem:[%s3169 + $0x78] sm:%s3161] %v3230
          %v3232 = vld [vmem:[%s3168 + $0x7c] sm:%s3161]
          %3233 = vst [vmem:[%s3169 + $0x7c] sm:%s3161] %v3232
          %v3234 = vld [vmem:[%s3168 + $0x80] sm:%s3161]
          %3235 = vst [vmem:[%s3169 + $0x80] sm:%s3161] %v3234
          %v3236 = vld [vmem:[%s3168 + $0xa0] sm:%s3161]
          %3237 = vst [vmem:[%s3169 + $0x84] sm:%s3161] %v3236
          %v3238 = vld [vmem:[%s3168 + $0x84] sm:%s3161]
          %3239 = vst [vmem:[%s3169 + $0x88] sm:%s3161] %v3238
          %v3240 = vld [vmem:[%s3168 + $0xa4] sm:%s3161]
          %3241 = vst [vmem:[%s3169 + $0x8c] sm:%s3161] %v3240
          %v3242 = vld [vmem:[%s3168 + $0x88] sm:%s3161]
          %3243 = vst [vmem:[%s3169 + $0x90] sm:%s3161] %v3242
          %v3244 = vld [vmem:[%s3168 + $0xa8] sm:%s3161]
          %3245 = vst [vmem:[%s3169 + $0x94] sm:%s3161] %v3244
          %v3246 = vld [vmem:[%s3168 + $0x8c] sm:%s3161]
          %3247 = vst [vmem:[%s3169 + $0x98] sm:%s3161] %v3246
          %v3248 = vld [vmem:[%s3168 + $0xac] sm:%s3161]
          %3249 = vst [vmem:[%s3169 + $0x9c] sm:%s3161] %v3248
          %v3250 = vld [vmem:[%s3168 + $0x90] sm:%s3161]
          %3251 = vst [vmem:[%s3169 + $0xa0] sm:%s3161] %v3250
          %v3252 = vld [vmem:[%s3168 + $0xb0] sm:%s3161]
          %3253 = vst [vmem:[%s3169 + $0xa4] sm:%s3161] %v3252
          %v3254 = vld [vmem:[%s3168 + $0x94] sm:%s3161]
          %3255 = vst [vmem:[%s3169 + $0xa8] sm:%s3161] %v3254
          %v3256 = vld [vmem:[%s3168 + $0xb4] sm:%s3161]
          %3257 = vst [vmem:[%s3169 + $0xac] sm:%s3161] %v3256
          %v3258 = vld [vmem:[%s3168 + $0x98] sm:%s3161]
          %3259 = vst [vmem:[%s3169 + $0xb0] sm:%s3161] %v3258
          %v3260 = vld [vmem:[%s3168 + $0xb8] sm:%s3161]
          %3261 = vst [vmem:[%s3169 + $0xb4] sm:%s3161] %v3260
          %v3262 = vld [vmem:[%s3168 + $0x9c] sm:%s3161]
          %3263 = vst [vmem:[%s3169 + $0xb8] sm:%s3161] %v3262
          %v3264 = vld [vmem:[%s3168 + $0xbc] sm:%s3161]
          %3265 = vst [vmem:[%s3169 + $0xbc] sm:%s3161] %v3264
          %v3266 = vld [vmem:[%s3168 + $0xc0] sm:%s3161]
          %3267 = vst [vmem:[%s3169 + $0xc0] sm:%s3161] %v3266
          %v3268 = vld [vmem:[%s3168 + $0xe0] sm:%s3161]
          %3269 = vst [vmem:[%s3169 + $0xc4] sm:%s3161] %v3268
          %v3270 = vld [vmem:[%s3168 + $0xc4] sm:%s3161]
          %3271 = vst [vmem:[%s3169 + $0xc8] sm:%s3161] %v3270
          %v3272 = vld [vmem:[%s3168 + $0xe4] sm:%s3161]
          %3273 = vst [vmem:[%s3169 + $0xcc] sm:%s3161] %v3272
          %v3274 = vld [vmem:[%s3168 + $0xc8] sm:%s3161]
          %3275 = vst [vmem:[%s3169 + $0xd0] sm:%s3161] %v3274
          %v3276 = vld [vmem:[%s3168 + $0xe8] sm:%s3161]
          %3277 = vst [vmem:[%s3169 + $0xd4] sm:%s3161] %v3276
          %v3278 = vld [vmem:[%s3168 + $0xcc] sm:%s3161]
          %3279 = vst [vmem:[%s3169 + $0xd8] sm:%s3161] %v3278
          %v3280 = vld [vmem:[%s3168 + $0xec] sm:%s3161]
          %3281 = vst [vmem:[%s3169 + $0xdc] sm:%s3161] %v3280
          %v3282 = vld [vmem:[%s3168 + $0xd0] sm:%s3161]
          %3283 = vst [vmem:[%s3169 + $0xe0] sm:%s3161] %v3282
          %v3284 = vld [vmem:[%s3168 + $0xf0] sm:%s3161]
          %3285 = vst [vmem:[%s3169 + $0xe4] sm:%s3161] %v3284
          %v3286 = vld [vmem:[%s3168 + $0xd4] sm:%s3161]
          %3287 = vst [vmem:[%s3169 + $0xe8] sm:%s3161] %v3286
          %v3288 = vld [vmem:[%s3168 + $0xf4] sm:%s3161]
          %3289 = vst [vmem:[%s3169 + $0xec] sm:%s3161] %v3288
          %v3290 = vld [vmem:[%s3168 + $0xd8] sm:%s3161]
          %3291 = vst [vmem:[%s3169 + $0xf0] sm:%s3161] %v3290
          %v3292 = vld [vmem:[%s3168 + $0xf8] sm:%s3161]
          %3293 = vst [vmem:[%s3169 + $0xf4] sm:%s3161] %v3292
          %v3294 = vld [vmem:[%s3168 + $0xdc] sm:%s3161]
          %3295 = vst [vmem:[%s3169 + $0xf8] sm:%s3161] %v3294
          %v3296 = vld [vmem:[%s3168 + $0xfc] sm:%s3161]
          %3297 = vst [vmem:[%s3169 + $0xfc] sm:%s3161] %v3296
          %v3298 = vld [vmem:[%s3168 + $0x100] sm:%s3161]
          %3299 = vst [vmem:[%s3169 + $0x100] sm:%s3161] %v3298
          %v3300 = vld [vmem:[%s3168 + $0x120] sm:%s3161]
          %3301 = vst [vmem:[%s3169 + $0x104] sm:%s3161] %v3300
          %v3302 = vld [vmem:[%s3168 + $0x104] sm:%s3161]
          %3303 = vst [vmem:[%s3169 + $0x108] sm:%s3161] %v3302
          %v3304 = vld [vmem:[%s3168 + $0x124] sm:%s3161]
          %3305 = vst [vmem:[%s3169 + $0x10c] sm:%s3161] %v3304
          %v3306 = vld [vmem:[%s3168 + $0x108] sm:%s3161]
          %3307 = vst [vmem:[%s3169 + $0x110] sm:%s3161] %v3306
          %v3308 = vld [vmem:[%s3168 + $0x128] sm:%s3161]
          %3309 = vst [vmem:[%s3169 + $0x114] sm:%s3161] %v3308
          %v3310 = vld [vmem:[%s3168 + $0x10c] sm:%s3161]
          %3311 = vst [vmem:[%s3169 + $0x118] sm:%s3161] %v3310
          %v3312 = vld [vmem:[%s3168 + $0x12c] sm:%s3161]
          %3313 = vst [vmem:[%s3169 + $0x11c] sm:%s3161] %v3312
          %v3314 = vld [vmem:[%s3168 + $0x110] sm:%s3161]
          %3315 = vst [vmem:[%s3169 + $0x120] sm:%s3161] %v3314
          %v3316 = vld [vmem:[%s3168 + $0x130] sm:%s3161]
          %3317 = vst [vmem:[%s3169 + $0x124] sm:%s3161] %v3316
          %v3318 = vld [vmem:[%s3168 + $0x114] sm:%s3161]
          %3319 = vst [vmem:[%s3169 + $0x128] sm:%s3161] %v3318
          %v3320 = vld [vmem:[%s3168 + $0x134] sm:%s3161]
          %3321 = vst [vmem:[%s3169 + $0x12c] sm:%s3161] %v3320
          %v3322 = vld [vmem:[%s3168 + $0x118] sm:%s3161]
          %3323 = vst [vmem:[%s3169 + $0x130] sm:%s3161] %v3322
          %v3324 = vld [vmem:[%s3168 + $0x138] sm:%s3161]
          %3325 = vst [vmem:[%s3169 + $0x134] sm:%s3161] %v3324
          %v3326 = vld [vmem:[%s3168 + $0x11c] sm:%s3161]
          %3327 = vst [vmem:[%s3169 + $0x138] sm:%s3161] %v3326
          %v3328 = vld [vmem:[%s3168 + $0x13c] sm:%s3161]
          %3329 = vst [vmem:[%s3169 + $0x13c] sm:%s3161] %v3328
          %v3330 = vld [vmem:[%s3168 + $0x140] sm:%s3161]
          %3331 = vst [vmem:[%s3169 + $0x140] sm:%s3161] %v3330
          %v3332 = vld [vmem:[%s3168 + $0x160] sm:%s3161]
          %3333 = vst [vmem:[%s3169 + $0x144] sm:%s3161] %v3332
          %v3334 = vld [vmem:[%s3168 + $0x144] sm:%s3161]
          %3335 = vst [vmem:[%s3169 + $0x148] sm:%s3161] %v3334
          %v3336 = vld [vmem:[%s3168 + $0x164] sm:%s3161]
          %3337 = vst [vmem:[%s3169 + $0x14c] sm:%s3161] %v3336
          %v3338 = vld [vmem:[%s3168 + $0x148] sm:%s3161]
          %3339 = vst [vmem:[%s3169 + $0x150] sm:%s3161] %v3338
          %v3340 = vld [vmem:[%s3168 + $0x168] sm:%s3161]
          %3341 = vst [vmem:[%s3169 + $0x154] sm:%s3161] %v3340
          %v3342 = vld [vmem:[%s3168 + $0x14c] sm:%s3161]
          %3343 = vst [vmem:[%s3169 + $0x158] sm:%s3161] %v3342
          %v3344 = vld [vmem:[%s3168 + $0x16c] sm:%s3161]
          %3345 = vst [vmem:[%s3169 + $0x15c] sm:%s3161] %v3344
          %v3346 = vld [vmem:[%s3168 + $0x150] sm:%s3161]
          %3347 = vst [vmem:[%s3169 + $0x160] sm:%s3161] %v3346
          %v3348 = vld [vmem:[%s3168 + $0x170] sm:%s3161]
          %3349 = vst [vmem:[%s3169 + $0x164] sm:%s3161] %v3348
          %v3350 = vld [vmem:[%s3168 + $0x154] sm:%s3161]
          %3351 = vst [vmem:[%s3169 + $0x168] sm:%s3161] %v3350
          %v3352 = vld [vmem:[%s3168 + $0x174] sm:%s3161]
          %3353 = vst [vmem:[%s3169 + $0x16c] sm:%s3161] %v3352
          %v3354 = vld [vmem:[%s3168 + $0x158] sm:%s3161]
          %3355 = vst [vmem:[%s3169 + $0x170] sm:%s3161] %v3354
          %v3356 = vld [vmem:[%s3168 + $0x178] sm:%s3161]
          %3357 = vst [vmem:[%s3169 + $0x174] sm:%s3161] %v3356
          %v3358 = vld [vmem:[%s3168 + $0x15c] sm:%s3161]
          %3359 = vst [vmem:[%s3169 + $0x178] sm:%s3161] %v3358
          %v3360 = vld [vmem:[%s3168 + $0x17c] sm:%s3161]
          %3361 = vst [vmem:[%s3169 + $0x17c] sm:%s3161] %v3360
          %v3362 = vld [vmem:[%s3168 + $0x180] sm:%s3161]
          %3363 = vst [vmem:[%s3169 + $0x180] sm:%s3161] %v3362
          %v3364 = vld [vmem:[%s3168 + $0x1a0] sm:%s3161]
          %3365 = vst [vmem:[%s3169 + $0x184] sm:%s3161] %v3364
          %v3366 = vld [vmem:[%s3168 + $0x184] sm:%s3161]
          %3367 = vst [vmem:[%s3169 + $0x188] sm:%s3161] %v3366
          %v3368 = vld [vmem:[%s3168 + $0x1a4] sm:%s3161]
          %3369 = vst [vmem:[%s3169 + $0x18c] sm:%s3161] %v3368
          %v3370 = vld [vmem:[%s3168 + $0x188] sm:%s3161]
          %3371 = vst [vmem:[%s3169 + $0x190] sm:%s3161] %v3370
          %v3372 = vld [vmem:[%s3168 + $0x1a8] sm:%s3161]
          %3373 = vst [vmem:[%s3169 + $0x194] sm:%s3161] %v3372
          %v3374 = vld [vmem:[%s3168 + $0x18c] sm:%s3161]
          %3375 = vst [vmem:[%s3169 + $0x198] sm:%s3161] %v3374
          %v3376 = vld [vmem:[%s3168 + $0x1ac] sm:%s3161]
          %3377 = vst [vmem:[%s3169 + $0x19c] sm:%s3161] %v3376
          %v3378 = vld [vmem:[%s3168 + $0x190] sm:%s3161]
          %3379 = vst [vmem:[%s3169 + $0x1a0] sm:%s3161] %v3378
          %v3380 = vld [vmem:[%s3168 + $0x1b0] sm:%s3161]
          %3381 = vst [vmem:[%s3169 + $0x1a4] sm:%s3161] %v3380
          %v3382 = vld [vmem:[%s3168 + $0x194] sm:%s3161]
          %3383 = vst [vmem:[%s3169 + $0x1a8] sm:%s3161] %v3382
          %v3384 = vld [vmem:[%s3168 + $0x1b4] sm:%s3161]
          %3385 = vst [vmem:[%s3169 + $0x1ac] sm:%s3161] %v3384
          %v3386 = vld [vmem:[%s3168 + $0x198] sm:%s3161]
          %3387 = vst [vmem:[%s3169 + $0x1b0] sm:%s3161] %v3386
          %v3388 = vld [vmem:[%s3168 + $0x1b8] sm:%s3161]
          %3389 = vst [vmem:[%s3169 + $0x1b4] sm:%s3161] %v3388
          %v3390 = vld [vmem:[%s3168 + $0x19c] sm:%s3161]
          %3391 = vst [vmem:[%s3169 + $0x1b8] sm:%s3161] %v3390
          %v3392 = vld [vmem:[%s3168 + $0x1bc] sm:%s3161]
          %3393 = vst [vmem:[%s3169 + $0x1bc] sm:%s3161] %v3392
          %v3394 = vld [vmem:[%s3168 + $0x1c0] sm:%s3161]
          %3395 = vst [vmem:[%s3169 + $0x1c0] sm:%s3161] %v3394
          %v3396 = vld [vmem:[%s3168 + $0x1e0] sm:%s3161]
          %3397 = vst [vmem:[%s3169 + $0x1c4] sm:%s3161] %v3396
          %v3398 = vld [vmem:[%s3168 + $0x1c4] sm:%s3161]
          %3399 = vst [vmem:[%s3169 + $0x1c8] sm:%s3161] %v3398
          %v3400 = vld [vmem:[%s3168 + $0x1e4] sm:%s3161]
          %3401 = vst [vmem:[%s3169 + $0x1cc] sm:%s3161] %v3400
          %v3402 = vld [vmem:[%s3168 + $0x1c8] sm:%s3161]
          %3403 = vst [vmem:[%s3169 + $0x1d0] sm:%s3161] %v3402
          %v3404 = vld [vmem:[%s3168 + $0x1e8] sm:%s3161]
          %3405 = vst [vmem:[%s3169 + $0x1d4] sm:%s3161] %v3404
          %v3406 = vld [vmem:[%s3168 + $0x1cc] sm:%s3161]
          %3407 = vst [vmem:[%s3169 + $0x1d8] sm:%s3161] %v3406
          %v3408 = vld [vmem:[%s3168 + $0x1ec] sm:%s3161]
          %3409 = vst [vmem:[%s3169 + $0x1dc] sm:%s3161] %v3408
          %v3410 = vld [vmem:[%s3168 + $0x1d0] sm:%s3161]
          %3411 = vst [vmem:[%s3169 + $0x1e0] sm:%s3161] %v3410
          %v3412 = vld [vmem:[%s3168 + $0x1f0] sm:%s3161]
          %3413 = vst [vmem:[%s3169 + $0x1e4] sm:%s3161] %v3412
          %v3414 = vld [vmem:[%s3168 + $0x1d4] sm:%s3161]
          %3415 = vst [vmem:[%s3169 + $0x1e8] sm:%s3161] %v3414
          %v3416 = vld [vmem:[%s3168 + $0x1f4] sm:%s3161]
          %3417 = vst [vmem:[%s3169 + $0x1ec] sm:%s3161] %v3416
          %v3418 = vld [vmem:[%s3168 + $0x1d8] sm:%s3161]
          %3419 = vst [vmem:[%s3169 + $0x1f0] sm:%s3161] %v3418
          %v3420 = vld [vmem:[%s3168 + $0x1f8] sm:%s3161]
          %3421 = vst [vmem:[%s3169 + $0x1f4] sm:%s3161] %v3420
          %v3422 = vld [vmem:[%s3168 + $0x1dc] sm:%s3161]
          %3423 = vst [vmem:[%s3169 + $0x1f8] sm:%s3161] %v3422
          %v3424 = vld [vmem:[%s3168 + $0x1fc] sm:%s3161]
          %3425 = vst [vmem:[%s3169 + $0x1fc] sm:%s3161] %v3424
          %v3426 = vld [vmem:[%s3168 + $0x200] sm:%s3161]
          %3427 = vst [vmem:[%s3169 + $0x200] sm:%s3161] %v3426
          %v3428 = vld [vmem:[%s3168 + $0x220] sm:%s3161]
          %3429 = vst [vmem:[%s3169 + $0x204] sm:%s3161] %v3428
          %v3430 = vld [vmem:[%s3168 + $0x204] sm:%s3161]
          %3431 = vst [vmem:[%s3169 + $0x208] sm:%s3161] %v3430
          %v3432 = vld [vmem:[%s3168 + $0x224] sm:%s3161]
          %3433 = vst [vmem:[%s3169 + $0x20c] sm:%s3161] %v3432
          %v3434 = vld [vmem:[%s3168 + $0x208] sm:%s3161]
          %3435 = vst [vmem:[%s3169 + $0x210] sm:%s3161] %v3434
          %v3436 = vld [vmem:[%s3168 + $0x228] sm:%s3161]
          %3437 = vst [vmem:[%s3169 + $0x214] sm:%s3161] %v3436
          %v3438 = vld [vmem:[%s3168 + $0x20c] sm:%s3161]
          %3439 = vst [vmem:[%s3169 + $0x218] sm:%s3161] %v3438
          %v3440 = vld [vmem:[%s3168 + $0x22c] sm:%s3161]
          %3441 = vst [vmem:[%s3169 + $0x21c] sm:%s3161] %v3440
          %v3442 = vld [vmem:[%s3168 + $0x210] sm:%s3161]
          %3443 = vst [vmem:[%s3169 + $0x220] sm:%s3161] %v3442
          %v3444 = vld [vmem:[%s3168 + $0x230] sm:%s3161]
          %3445 = vst [vmem:[%s3169 + $0x224] sm:%s3161] %v3444
          %v3446 = vld [vmem:[%s3168 + $0x214] sm:%s3161]
          %3447 = vst [vmem:[%s3169 + $0x228] sm:%s3161] %v3446
          %v3448 = vld [vmem:[%s3168 + $0x234] sm:%s3161]
          %3449 = vst [vmem:[%s3169 + $0x22c] sm:%s3161] %v3448
          %v3450 = vld [vmem:[%s3168 + $0x218] sm:%s3161]
          %3451 = vst [vmem:[%s3169 + $0x230] sm:%s3161] %v3450
          %v3452 = vld [vmem:[%s3168 + $0x238] sm:%s3161]
          %3453 = vst [vmem:[%s3169 + $0x234] sm:%s3161] %v3452
          %v3454 = vld [vmem:[%s3168 + $0x21c] sm:%s3161]
          %3455 = vst [vmem:[%s3169 + $0x238] sm:%s3161] %v3454
          %v3456 = vld [vmem:[%s3168 + $0x23c] sm:%s3161]
          %3457 = vst [vmem:[%s3169 + $0x23c] sm:%s3161] %v3456
          %v3458 = vld [vmem:[%s3168 + $0x240] sm:%s3161]
          %3459 = vst [vmem:[%s3169 + $0x240] sm:%s3161] %v3458
          %v3460 = vld [vmem:[%s3168 + $0x260] sm:%s3161]
          %3461 = vst [vmem:[%s3169 + $0x244] sm:%s3161] %v3460
          %v3462 = vld [vmem:[%s3168 + $0x244] sm:%s3161]
          %3463 = vst [vmem:[%s3169 + $0x248] sm:%s3161] %v3462
          %v3464 = vld [vmem:[%s3168 + $0x264] sm:%s3161]
          %3465 = vst [vmem:[%s3169 + $0x24c] sm:%s3161] %v3464
          %v3466 = vld [vmem:[%s3168 + $0x248] sm:%s3161]
          %3467 = vst [vmem:[%s3169 + $0x250] sm:%s3161] %v3466
          %v3468 = vld [vmem:[%s3168 + $0x268] sm:%s3161]
          %3469 = vst [vmem:[%s3169 + $0x254] sm:%s3161] %v3468
          %v3470 = vld [vmem:[%s3168 + $0x24c] sm:%s3161]
          %3471 = vst [vmem:[%s3169 + $0x258] sm:%s3161] %v3470
          %v3472 = vld [vmem:[%s3168 + $0x26c] sm:%s3161]
          %3473 = vst [vmem:[%s3169 + $0x25c] sm:%s3161] %v3472
          %v3474 = vld [vmem:[%s3168 + $0x250] sm:%s3161]
          %3475 = vst [vmem:[%s3169 + $0x260] sm:%s3161] %v3474
          %v3476 = vld [vmem:[%s3168 + $0x270] sm:%s3161]
          %3477 = vst [vmem:[%s3169 + $0x264] sm:%s3161] %v3476
          %v3478 = vld [vmem:[%s3168 + $0x254] sm:%s3161]
          %3479 = vst [vmem:[%s3169 + $0x268] sm:%s3161] %v3478
          %v3480 = vld [vmem:[%s3168 + $0x274] sm:%s3161]
          %3481 = vst [vmem:[%s3169 + $0x26c] sm:%s3161] %v3480
          %v3482 = vld [vmem:[%s3168 + $0x258] sm:%s3161]
          %3483 = vst [vmem:[%s3169 + $0x270] sm:%s3161] %v3482
          %v3484 = vld [vmem:[%s3168 + $0x278] sm:%s3161]
          %3485 = vst [vmem:[%s3169 + $0x274] sm:%s3161] %v3484
          %v3486 = vld [vmem:[%s3168 + $0x25c] sm:%s3161]
          %3487 = vst [vmem:[%s3169 + $0x278] sm:%s3161] %v3486
          %v3488 = vld [vmem:[%s3168 + $0x27c] sm:%s3161]
          %3489 = vst [vmem:[%s3169 + $0x27c] sm:%s3161] %v3488
          %v3490 = vld [vmem:[%s3168 + $0x280] sm:%s3161]
          %3491 = vst [vmem:[%s3169 + $0x280] sm:%s3161] %v3490
          %v3492 = vld [vmem:[%s3168 + $0x2a0] sm:%s3161]
          %3493 = vst [vmem:[%s3169 + $0x284] sm:%s3161] %v3492
          %v3494 = vld [vmem:[%s3168 + $0x284] sm:%s3161]
          %3495 = vst [vmem:[%s3169 + $0x288] sm:%s3161] %v3494
          %v3496 = vld [vmem:[%s3168 + $0x2a4] sm:%s3161]
          %3497 = vst [vmem:[%s3169 + $0x28c] sm:%s3161] %v3496
          %v3498 = vld [vmem:[%s3168 + $0x288] sm:%s3161]
          %3499 = vst [vmem:[%s3169 + $0x290] sm:%s3161] %v3498
          %v3500 = vld [vmem:[%s3168 + $0x2a8] sm:%s3161]
          %3501 = vst [vmem:[%s3169 + $0x294] sm:%s3161] %v3500
          %v3502 = vld [vmem:[%s3168 + $0x28c] sm:%s3161]
          %3503 = vst [vmem:[%s3169 + $0x298] sm:%s3161] %v3502
          %v3504 = vld [vmem:[%s3168 + $0x2ac] sm:%s3161]
          %3505 = vst [vmem:[%s3169 + $0x29c] sm:%s3161] %v3504
          %v3506 = vld [vmem:[%s3168 + $0x290] sm:%s3161]
          %3507 = vst [vmem:[%s3169 + $0x2a0] sm:%s3161] %v3506
          %v3508 = vld [vmem:[%s3168 + $0x2b0] sm:%s3161]
          %3509 = vst [vmem:[%s3169 + $0x2a4] sm:%s3161] %v3508
          %v3510 = vld [vmem:[%s3168 + $0x294] sm:%s3161]
          %3511 = vst [vmem:[%s3169 + $0x2a8] sm:%s3161] %v3510
          %v3512 = vld [vmem:[%s3168 + $0x2b4] sm:%s3161]
          %3513 = vst [vmem:[%s3169 + $0x2ac] sm:%s3161] %v3512
          %v3514 = vld [vmem:[%s3168 + $0x298] sm:%s3161]
          %3515 = vst [vmem:[%s3169 + $0x2b0] sm:%s3161] %v3514
          %v3516 = vld [vmem:[%s3168 + $0x2b8] sm:%s3161]
          %3517 = vst [vmem:[%s3169 + $0x2b4] sm:%s3161] %v3516
          %v3518 = vld [vmem:[%s3168 + $0x29c] sm:%s3161]
          %3519 = vst [vmem:[%s3169 + $0x2b8] sm:%s3161] %v3518
          %v3520 = vld [vmem:[%s3168 + $0x2bc] sm:%s3161]
          %3521 = vst [vmem:[%s3169 + $0x2bc] sm:%s3161] %v3520
          %v3522 = vld [vmem:[%s3168 + $0x2c0] sm:%s3161]
          %3523 = vst [vmem:[%s3169 + $0x2c0] sm:%s3161] %v3522
          %v3524 = vld [vmem:[%s3168 + $0x2e0] sm:%s3161]
          %3525 = vst [vmem:[%s3169 + $0x2c4] sm:%s3161] %v3524
          %v3526 = vld [vmem:[%s3168 + $0x2c4] sm:%s3161]
          %3527 = vst [vmem:[%s3169 + $0x2c8] sm:%s3161] %v3526
          %v3528 = vld [vmem:[%s3168 + $0x2e4] sm:%s3161]
          %3529 = vst [vmem:[%s3169 + $0x2cc] sm:%s3161] %v3528
          %v3530 = vld [vmem:[%s3168 + $0x2c8] sm:%s3161]
          %3531 = vst [vmem:[%s3169 + $0x2d0] sm:%s3161] %v3530
          %v3532 = vld [vmem:[%s3168 + $0x2e8] sm:%s3161]
          %3533 = vst [vmem:[%s3169 + $0x2d4] sm:%s3161] %v3532
          %v3534 = vld [vmem:[%s3168 + $0x2cc] sm:%s3161]
          %3535 = vst [vmem:[%s3169 + $0x2d8] sm:%s3161] %v3534
          %v3536 = vld [vmem:[%s3168 + $0x2ec] sm:%s3161]
          %3537 = vst [vmem:[%s3169 + $0x2dc] sm:%s3161] %v3536
          %v3538 = vld [vmem:[%s3168 + $0x2d0] sm:%s3161]
          %3539 = vst [vmem:[%s3169 + $0x2e0] sm:%s3161] %v3538
          %v3540 = vld [vmem:[%s3168 + $0x2f0] sm:%s3161]
          %3541 = vst [vmem:[%s3169 + $0x2e4] sm:%s3161] %v3540
          %v3542 = vld [vmem:[%s3168 + $0x2d4] sm:%s3161]
          %3543 = vst [vmem:[%s3169 + $0x2e8] sm:%s3161] %v3542
          %v3544 = vld [vmem:[%s3168 + $0x2f4] sm:%s3161]
          %3545 = vst [vmem:[%s3169 + $0x2ec] sm:%s3161] %v3544
          %v3546 = vld [vmem:[%s3168 + $0x2d8] sm:%s3161]
          %3547 = vst [vmem:[%s3169 + $0x2f0] sm:%s3161] %v3546
          %v3548 = vld [vmem:[%s3168 + $0x2f8] sm:%s3161]
          %3549 = vst [vmem:[%s3169 + $0x2f4] sm:%s3161] %v3548
          %v3550 = vld [vmem:[%s3168 + $0x2dc] sm:%s3161]
          %3551 = vst [vmem:[%s3169 + $0x2f8] sm:%s3161] %v3550
          %v3552 = vld [vmem:[%s3168 + $0x2fc] sm:%s3161]
          %3553 = vst [vmem:[%s3169 + $0x2fc] sm:%s3161] %v3552
          %v3554 = vld [vmem:[%s3168 + $0x300] sm:%s3161]
          %3555 = vst [vmem:[%s3169 + $0x300] sm:%s3161] %v3554
          %v3556 = vld [vmem:[%s3168 + $0x320] sm:%s3161]
          %3557 = vst [vmem:[%s3169 + $0x304] sm:%s3161] %v3556
          %v3558 = vld [vmem:[%s3168 + $0x304] sm:%s3161]
          %3559 = vst [vmem:[%s3169 + $0x308] sm:%s3161] %v3558
          %v3560 = vld [vmem:[%s3168 + $0x324] sm:%s3161]
          %3561 = vst [vmem:[%s3169 + $0x30c] sm:%s3161] %v3560
          %v3562 = vld [vmem:[%s3168 + $0x308] sm:%s3161]
          %3563 = vst [vmem:[%s3169 + $0x310] sm:%s3161] %v3562
          %v3564 = vld [vmem:[%s3168 + $0x328] sm:%s3161]
          %3565 = vst [vmem:[%s3169 + $0x314] sm:%s3161] %v3564
          %v3566 = vld [vmem:[%s3168 + $0x30c] sm:%s3161]
          %3567 = vst [vmem:[%s3169 + $0x318] sm:%s3161] %v3566
          %v3568 = vld [vmem:[%s3168 + $0x32c] sm:%s3161]
          %3569 = vst [vmem:[%s3169 + $0x31c] sm:%s3161] %v3568
          %v3570 = vld [vmem:[%s3168 + $0x310] sm:%s3161]
          %3571 = vst [vmem:[%s3169 + $0x320] sm:%s3161] %v3570
          %v3572 = vld [vmem:[%s3168 + $0x330] sm:%s3161]
          %3573 = vst [vmem:[%s3169 + $0x324] sm:%s3161] %v3572
          %v3574 = vld [vmem:[%s3168 + $0x314] sm:%s3161]
          %3575 = vst [vmem:[%s3169 + $0x328] sm:%s3161] %v3574
          %v3576 = vld [vmem:[%s3168 + $0x334] sm:%s3161]
          %3577 = vst [vmem:[%s3169 + $0x32c] sm:%s3161] %v3576
          %v3578 = vld [vmem:[%s3168 + $0x318] sm:%s3161]
          %3579 = vst [vmem:[%s3169 + $0x330] sm:%s3161] %v3578
          %v3580 = vld [vmem:[%s3168 + $0x338] sm:%s3161]
          %3581 = vst [vmem:[%s3169 + $0x334] sm:%s3161] %v3580
          %v3582 = vld [vmem:[%s3168 + $0x31c] sm:%s3161]
          %3583 = vst [vmem:[%s3169 + $0x338] sm:%s3161] %v3582
          %v3584 = vld [vmem:[%s3168 + $0x33c] sm:%s3161]
          %3585 = vst [vmem:[%s3169 + $0x33c] sm:%s3161] %v3584
          %v3586 = vld [vmem:[%s3168 + $0x340] sm:%s3161]
          %3587 = vst [vmem:[%s3169 + $0x340] sm:%s3161] %v3586
          %v3588 = vld [vmem:[%s3168 + $0x360] sm:%s3161]
          %3589 = vst [vmem:[%s3169 + $0x344] sm:%s3161] %v3588
          %v3590 = vld [vmem:[%s3168 + $0x344] sm:%s3161]
          %3591 = vst [vmem:[%s3169 + $0x348] sm:%s3161] %v3590
          %v3592 = vld [vmem:[%s3168 + $0x364] sm:%s3161]
          %3593 = vst [vmem:[%s3169 + $0x34c] sm:%s3161] %v3592
          %v3594 = vld [vmem:[%s3168 + $0x348] sm:%s3161]
          %3595 = vst [vmem:[%s3169 + $0x350] sm:%s3161] %v3594
          %v3596 = vld [vmem:[%s3168 + $0x368] sm:%s3161]
          %3597 = vst [vmem:[%s3169 + $0x354] sm:%s3161] %v3596
          %v3598 = vld [vmem:[%s3168 + $0x34c] sm:%s3161]
          %3599 = vst [vmem:[%s3169 + $0x358] sm:%s3161] %v3598
          %v3600 = vld [vmem:[%s3168 + $0x36c] sm:%s3161]
          %3601 = vst [vmem:[%s3169 + $0x35c] sm:%s3161] %v3600
          %v3602 = vld [vmem:[%s3168 + $0x350] sm:%s3161]
          %3603 = vst [vmem:[%s3169 + $0x360] sm:%s3161] %v3602
          %v3604 = vld [vmem:[%s3168 + $0x370] sm:%s3161]
          %3605 = vst [vmem:[%s3169 + $0x364] sm:%s3161] %v3604
          %v3606 = vld [vmem:[%s3168 + $0x354] sm:%s3161]
          %3607 = vst [vmem:[%s3169 + $0x368] sm:%s3161] %v3606
          %v3608 = vld [vmem:[%s3168 + $0x374] sm:%s3161]
          %3609 = vst [vmem:[%s3169 + $0x36c] sm:%s3161] %v3608
          %v3610 = vld [vmem:[%s3168 + $0x358] sm:%s3161]
          %3611 = vst [vmem:[%s3169 + $0x370] sm:%s3161] %v3610
          %v3612 = vld [vmem:[%s3168 + $0x378] sm:%s3161]
          %3613 = vst [vmem:[%s3169 + $0x374] sm:%s3161] %v3612
          %v3614 = vld [vmem:[%s3168 + $0x35c] sm:%s3161]
          %3615 = vst [vmem:[%s3169 + $0x378] sm:%s3161] %v3614
          %v3616 = vld [vmem:[%s3168 + $0x37c] sm:%s3161]
          %3617 = vst [vmem:[%s3169 + $0x37c] sm:%s3161] %v3616
          %v3618 = vld [vmem:[%s3168 + $0x380] sm:%s3161]
          %3619 = vst [vmem:[%s3169 + $0x380] sm:%s3161] %v3618
          %v3620 = vld [vmem:[%s3168 + $0x3a0] sm:%s3161]
          %3621 = vst [vmem:[%s3169 + $0x384] sm:%s3161] %v3620
          %v3622 = vld [vmem:[%s3168 + $0x384] sm:%s3161]
          %3623 = vst [vmem:[%s3169 + $0x388] sm:%s3161] %v3622
          %v3624 = vld [vmem:[%s3168 + $0x3a4] sm:%s3161]
          %3625 = vst [vmem:[%s3169 + $0x38c] sm:%s3161] %v3624
          %v3626 = vld [vmem:[%s3168 + $0x388] sm:%s3161]
          %3627 = vst [vmem:[%s3169 + $0x390] sm:%s3161] %v3626
          %v3628 = vld [vmem:[%s3168 + $0x3a8] sm:%s3161]
          %3629 = vst [vmem:[%s3169 + $0x394] sm:%s3161] %v3628
          %v3630 = vld [vmem:[%s3168 + $0x38c] sm:%s3161]
          %3631 = vst [vmem:[%s3169 + $0x398] sm:%s3161] %v3630
          %v3632 = vld [vmem:[%s3168 + $0x3ac] sm:%s3161]
          %3633 = vst [vmem:[%s3169 + $0x39c] sm:%s3161] %v3632
          %v3634 = vld [vmem:[%s3168 + $0x390] sm:%s3161]
          %3635 = vst [vmem:[%s3169 + $0x3a0] sm:%s3161] %v3634
          %v3636 = vld [vmem:[%s3168 + $0x3b0] sm:%s3161]
          %3637 = vst [vmem:[%s3169 + $0x3a4] sm:%s3161] %v3636
          %v3638 = vld [vmem:[%s3168 + $0x394] sm:%s3161]
          %3639 = vst [vmem:[%s3169 + $0x3a8] sm:%s3161] %v3638
          %v3640 = vld [vmem:[%s3168 + $0x3b4] sm:%s3161]
          %3641 = vst [vmem:[%s3169 + $0x3ac] sm:%s3161] %v3640
          %v3642 = vld [vmem:[%s3168 + $0x398] sm:%s3161]
          %3643 = vst [vmem:[%s3169 + $0x3b0] sm:%s3161] %v3642
          %v3644 = vld [vmem:[%s3168 + $0x3b8] sm:%s3161]
          %3645 = vst [vmem:[%s3169 + $0x3b4] sm:%s3161] %v3644
          %v3646 = vld [vmem:[%s3168 + $0x39c] sm:%s3161]
          %3647 = vst [vmem:[%s3169 + $0x3b8] sm:%s3161] %v3646
          %v3648 = vld [vmem:[%s3168 + $0x3bc] sm:%s3161]
          %3649 = vst [vmem:[%s3169 + $0x3bc] sm:%s3161] %v3648
          %v3650 = vld [vmem:[%s3168 + $0x3c0] sm:%s3161]
          %3651 = vst [vmem:[%s3169 + $0x3c0] sm:%s3161] %v3650
          %v3652 = vld [vmem:[%s3168 + $0x3e0] sm:%s3161]
          %3653 = vst [vmem:[%s3169 + $0x3c4] sm:%s3161] %v3652
          %v3654 = vld [vmem:[%s3168 + $0x3c4] sm:%s3161]
          %3655 = vst [vmem:[%s3169 + $0x3c8] sm:%s3161] %v3654
          %v3656 = vld [vmem:[%s3168 + $0x3e4] sm:%s3161]
          %3657 = vst [vmem:[%s3169 + $0x3cc] sm:%s3161] %v3656
          %v3658 = vld [vmem:[%s3168 + $0x3c8] sm:%s3161]
          %3659 = vst [vmem:[%s3169 + $0x3d0] sm:%s3161] %v3658
          %v3660 = vld [vmem:[%s3168 + $0x3e8] sm:%s3161]
          %3661 = vst [vmem:[%s3169 + $0x3d4] sm:%s3161] %v3660
          %v3662 = vld [vmem:[%s3168 + $0x3cc] sm:%s3161]
          %3663 = vst [vmem:[%s3169 + $0x3d8] sm:%s3161] %v3662
          %v3664 = vld [vmem:[%s3168 + $0x3ec] sm:%s3161]
          %3665 = vst [vmem:[%s3169 + $0x3dc] sm:%s3161] %v3664
          %v3666 = vld [vmem:[%s3168 + $0x3d0] sm:%s3161]
          %3667 = vst [vmem:[%s3169 + $0x3e0] sm:%s3161] %v3666
          %v3668 = vld [vmem:[%s3168 + $0x3f0] sm:%s3161]
          %3669 = vst [vmem:[%s3169 + $0x3e4] sm:%s3161] %v3668
          %v3670 = vld [vmem:[%s3168 + $0x3d4] sm:%s3161]
          %3671 = vst [vmem:[%s3169 + $0x3e8] sm:%s3161] %v3670
          %v3672 = vld [vmem:[%s3168 + $0x3f4] sm:%s3161]
          %3673 = vst [vmem:[%s3169 + $0x3ec] sm:%s3161] %v3672
          %v3674 = vld [vmem:[%s3168 + $0x3d8] sm:%s3161]
          %3675 = vst [vmem:[%s3169 + $0x3f0] sm:%s3161] %v3674
          %v3676 = vld [vmem:[%s3168 + $0x3f8] sm:%s3161]
          %3677 = vst [vmem:[%s3169 + $0x3f4] sm:%s3161] %v3676
          %v3678 = vld [vmem:[%s3168 + $0x3dc] sm:%s3161]
          %3679 = vst [vmem:[%s3169 + $0x3f8] sm:%s3161] %v3678
          %v3680 = vld [vmem:[%s3168 + $0x3fc] sm:%s3161]
          %3681 = vst [vmem:[%s3169 + $0x3fc] sm:%s3161] %v3680
          %v3682 = vld [vmem:[%s3168 + $0x400] sm:%s3161]
          %3683 = vst [vmem:[%s3169 + $0x400] sm:%s3161] %v3682
          %v3684 = vld [vmem:[%s3168 + $0x420] sm:%s3161]
          %3685 = vst [vmem:[%s3169 + $0x404] sm:%s3161] %v3684
          %v3686 = vld [vmem:[%s3168 + $0x404] sm:%s3161]
          %3687 = vst [vmem:[%s3169 + $0x408] sm:%s3161] %v3686
          %v3688 = vld [vmem:[%s3168 + $0x424] sm:%s3161]
          %3689 = vst [vmem:[%s3169 + $0x40c] sm:%s3161] %v3688
          %v3690 = vld [vmem:[%s3168 + $0x408] sm:%s3161]
          %3691 = vst [vmem:[%s3169 + $0x410] sm:%s3161] %v3690
          %v3692 = vld [vmem:[%s3168 + $0x428] sm:%s3161]
          %3693 = vst [vmem:[%s3169 + $0x414] sm:%s3161] %v3692
          %v3694 = vld [vmem:[%s3168 + $0x40c] sm:%s3161]
          %3695 = vst [vmem:[%s3169 + $0x418] sm:%s3161] %v3694
          %v3696 = vld [vmem:[%s3168 + $0x42c] sm:%s3161]
          %3697 = vst [vmem:[%s3169 + $0x41c] sm:%s3161] %v3696
          %v3698 = vld [vmem:[%s3168 + $0x410] sm:%s3161]
          %3699 = vst [vmem:[%s3169 + $0x420] sm:%s3161] %v3698
          %v3700 = vld [vmem:[%s3168 + $0x430] sm:%s3161]
          %3701 = vst [vmem:[%s3169 + $0x424] sm:%s3161] %v3700
          %v3702 = vld [vmem:[%s3168 + $0x414] sm:%s3161]
          %3703 = vst [vmem:[%s3169 + $0x428] sm:%s3161] %v3702
          %v3704 = vld [vmem:[%s3168 + $0x434] sm:%s3161]
          %3705 = vst [vmem:[%s3169 + $0x42c] sm:%s3161] %v3704
          %v3706 = vld [vmem:[%s3168 + $0x418] sm:%s3161]
          %3707 = vst [vmem:[%s3169 + $0x430] sm:%s3161] %v3706
          %v3708 = vld [vmem:[%s3168 + $0x438] sm:%s3161]
          %3709 = vst [vmem:[%s3169 + $0x434] sm:%s3161] %v3708
          %v3710 = vld [vmem:[%s3168 + $0x41c] sm:%s3161]
          %3711 = vst [vmem:[%s3169 + $0x438] sm:%s3161] %v3710
          %v3712 = vld [vmem:[%s3168 + $0x43c] sm:%s3161]
          %3713 = vst [vmem:[%s3169 + $0x43c] sm:%s3161] %v3712
          %v3714 = vld [vmem:[%s3168 + $0x440] sm:%s3161]
          %3715 = vst [vmem:[%s3169 + $0x440] sm:%s3161] %v3714
          %v3716 = vld [vmem:[%s3168 + $0x460] sm:%s3161]
          %3717 = vst [vmem:[%s3169 + $0x444] sm:%s3161] %v3716
          %v3718 = vld [vmem:[%s3168 + $0x444] sm:%s3161]
          %3719 = vst [vmem:[%s3169 + $0x448] sm:%s3161] %v3718
          %v3720 = vld [vmem:[%s3168 + $0x464] sm:%s3161]
          %3721 = vst [vmem:[%s3169 + $0x44c] sm:%s3161] %v3720
          %v3722 = vld [vmem:[%s3168 + $0x448] sm:%s3161]
          %3723 = vst [vmem:[%s3169 + $0x450] sm:%s3161] %v3722
          %v3724 = vld [vmem:[%s3168 + $0x468] sm:%s3161]
          %3725 = vst [vmem:[%s3169 + $0x454] sm:%s3161] %v3724
          %v3726 = vld [vmem:[%s3168 + $0x44c] sm:%s3161]
          %3727 = vst [vmem:[%s3169 + $0x458] sm:%s3161] %v3726
          %v3728 = vld [vmem:[%s3168 + $0x46c] sm:%s3161]
          %3729 = vst [vmem:[%s3169 + $0x45c] sm:%s3161] %v3728
          %v3730 = vld [vmem:[%s3168 + $0x450] sm:%s3161]
          %3731 = vst [vmem:[%s3169 + $0x460] sm:%s3161] %v3730
          %v3732 = vld [vmem:[%s3168 + $0x470] sm:%s3161]
          %3733 = vst [vmem:[%s3169 + $0x464] sm:%s3161] %v3732
          %v3734 = vld [vmem:[%s3168 + $0x454] sm:%s3161]
          %3735 = vst [vmem:[%s3169 + $0x468] sm:%s3161] %v3734
          %v3736 = vld [vmem:[%s3168 + $0x474] sm:%s3161]
          %3737 = vst [vmem:[%s3169 + $0x46c] sm:%s3161] %v3736
          %v3738 = vld [vmem:[%s3168 + $0x458] sm:%s3161]
          %3739 = vst [vmem:[%s3169 + $0x470] sm:%s3161] %v3738
          %v3740 = vld [vmem:[%s3168 + $0x478] sm:%s3161]
          %3741 = vst [vmem:[%s3169 + $0x474] sm:%s3161] %v3740
          %v3742 = vld [vmem:[%s3168 + $0x45c] sm:%s3161]
          %3743 = vst [vmem:[%s3169 + $0x478] sm:%s3161] %v3742
          %v3744 = vld [vmem:[%s3168 + $0x47c] sm:%s3161]
          %3745 = vst [vmem:[%s3169 + $0x47c] sm:%s3161] %v3744
          %v3746 = vld [vmem:[%s3168 + $0x480] sm:%s3161]
          %3747 = vst [vmem:[%s3169 + $0x480] sm:%s3161] %v3746
          %v3748 = vld [vmem:[%s3168 + $0x4a0] sm:%s3161]
          %3749 = vst [vmem:[%s3169 + $0x484] sm:%s3161] %v3748
          %v3750 = vld [vmem:[%s3168 + $0x484] sm:%s3161]
          %3751 = vst [vmem:[%s3169 + $0x488] sm:%s3161] %v3750
          %v3752 = vld [vmem:[%s3168 + $0x4a4] sm:%s3161]
          %3753 = vst [vmem:[%s3169 + $0x48c] sm:%s3161] %v3752
          %v3754 = vld [vmem:[%s3168 + $0x488] sm:%s3161]
          %3755 = vst [vmem:[%s3169 + $0x490] sm:%s3161] %v3754
          %v3756 = vld [vmem:[%s3168 + $0x4a8] sm:%s3161]
          %3757 = vst [vmem:[%s3169 + $0x494] sm:%s3161] %v3756
          %v3758 = vld [vmem:[%s3168 + $0x48c] sm:%s3161]
          %3759 = vst [vmem:[%s3169 + $0x498] sm:%s3161] %v3758
          %v3760 = vld [vmem:[%s3168 + $0x4ac] sm:%s3161]
          %3761 = vst [vmem:[%s3169 + $0x49c] sm:%s3161] %v3760
          %v3762 = vld [vmem:[%s3168 + $0x490] sm:%s3161]
          %3763 = vst [vmem:[%s3169 + $0x4a0] sm:%s3161] %v3762
          %v3764 = vld [vmem:[%s3168 + $0x4b0] sm:%s3161]
          %3765 = vst [vmem:[%s3169 + $0x4a4] sm:%s3161] %v3764
          %v3766 = vld [vmem:[%s3168 + $0x494] sm:%s3161]
          %3767 = vst [vmem:[%s3169 + $0x4a8] sm:%s3161] %v3766
          %v3768 = vld [vmem:[%s3168 + $0x4b4] sm:%s3161]
          %3769 = vst [vmem:[%s3169 + $0x4ac] sm:%s3161] %v3768
          %v3770 = vld [vmem:[%s3168 + $0x498] sm:%s3161]
          %3771 = vst [vmem:[%s3169 + $0x4b0] sm:%s3161] %v3770
          %v3772 = vld [vmem:[%s3168 + $0x4b8] sm:%s3161]
          %3773 = vst [vmem:[%s3169 + $0x4b4] sm:%s3161] %v3772
          %v3774 = vld [vmem:[%s3168 + $0x49c] sm:%s3161]
          %3775 = vst [vmem:[%s3169 + $0x4b8] sm:%s3161] %v3774
          %v3776 = vld [vmem:[%s3168 + $0x4bc] sm:%s3161]
          %3777 = vst [vmem:[%s3169 + $0x4bc] sm:%s3161] %v3776
          %v3778 = vld [vmem:[%s3168 + $0x4c0] sm:%s3161]
          %3779 = vst [vmem:[%s3169 + $0x4c0] sm:%s3161] %v3778
          %v3780 = vld [vmem:[%s3168 + $0x4e0] sm:%s3161]
          %3781 = vst [vmem:[%s3169 + $0x4c4] sm:%s3161] %v3780
          %v3782 = vld [vmem:[%s3168 + $0x4c4] sm:%s3161]
          %3783 = vst [vmem:[%s3169 + $0x4c8] sm:%s3161] %v3782
          %v3784 = vld [vmem:[%s3168 + $0x4e4] sm:%s3161]
          %3785 = vst [vmem:[%s3169 + $0x4cc] sm:%s3161] %v3784
          %v3786 = vld [vmem:[%s3168 + $0x4c8] sm:%s3161]
          %3787 = vst [vmem:[%s3169 + $0x4d0] sm:%s3161] %v3786
          %v3788 = vld [vmem:[%s3168 + $0x4e8] sm:%s3161]
          %3789 = vst [vmem:[%s3169 + $0x4d4] sm:%s3161] %v3788
          %v3790 = vld [vmem:[%s3168 + $0x4cc] sm:%s3161]
          %3791 = vst [vmem:[%s3169 + $0x4d8] sm:%s3161] %v3790
          %v3792 = vld [vmem:[%s3168 + $0x4ec] sm:%s3161]
          %3793 = vst [vmem:[%s3169 + $0x4dc] sm:%s3161] %v3792
          %v3794 = vld [vmem:[%s3168 + $0x4d0] sm:%s3161]
          %3795 = vst [vmem:[%s3169 + $0x4e0] sm:%s3161] %v3794
          %v3796 = vld [vmem:[%s3168 + $0x4f0] sm:%s3161]
          %3797 = vst [vmem:[%s3169 + $0x4e4] sm:%s3161] %v3796
          %v3798 = vld [vmem:[%s3168 + $0x4d4] sm:%s3161]
          %3799 = vst [vmem:[%s3169 + $0x4e8] sm:%s3161] %v3798
          %v3800 = vld [vmem:[%s3168 + $0x4f4] sm:%s3161]
          %3801 = vst [vmem:[%s3169 + $0x4ec] sm:%s3161] %v3800
          %v3802 = vld [vmem:[%s3168 + $0x4d8] sm:%s3161]
          %3803 = vst [vmem:[%s3169 + $0x4f0] sm:%s3161] %v3802
          %v3804 = vld [vmem:[%s3168 + $0x4f8] sm:%s3161]
          %3805 = vst [vmem:[%s3169 + $0x4f4] sm:%s3161] %v3804
          %v3806 = vld [vmem:[%s3168 + $0x4dc] sm:%s3161]
          %3807 = vst [vmem:[%s3169 + $0x4f8] sm:%s3161] %v3806
          %v3808 = vld [vmem:[%s3168 + $0x4fc] sm:%s3161]
          %3809 = vst [vmem:[%s3169 + $0x4fc] sm:%s3161] %v3808
          %v3810 = vld [vmem:[%s3168 + $0x500] sm:%s3161]
          %3811 = vst [vmem:[%s3169 + $0x500] sm:%s3161] %v3810
          %v3812 = vld [vmem:[%s3168 + $0x520] sm:%s3161]
          %3813 = vst [vmem:[%s3169 + $0x504] sm:%s3161] %v3812
          %v3814 = vld [vmem:[%s3168 + $0x504] sm:%s3161]
          %3815 = vst [vmem:[%s3169 + $0x508] sm:%s3161] %v3814
          %v3816 = vld [vmem:[%s3168 + $0x524] sm:%s3161]
          %3817 = vst [vmem:[%s3169 + $0x50c] sm:%s3161] %v3816
          %v3818 = vld [vmem:[%s3168 + $0x508] sm:%s3161]
          %3819 = vst [vmem:[%s3169 + $0x510] sm:%s3161] %v3818
          %v3820 = vld [vmem:[%s3168 + $0x528] sm:%s3161]
          %3821 = vst [vmem:[%s3169 + $0x514] sm:%s3161] %v3820
          %v3822 = vld [vmem:[%s3168 + $0x50c] sm:%s3161]
          %3823 = vst [vmem:[%s3169 + $0x518] sm:%s3161] %v3822
          %v3824 = vld [vmem:[%s3168 + $0x52c] sm:%s3161]
          %3825 = vst [vmem:[%s3169 + $0x51c] sm:%s3161] %v3824
          %v3826 = vld [vmem:[%s3168 + $0x510] sm:%s3161]
          %3827 = vst [vmem:[%s3169 + $0x520] sm:%s3161] %v3826
          %v3828 = vld [vmem:[%s3168 + $0x530] sm:%s3161]
          %3829 = vst [vmem:[%s3169 + $0x524] sm:%s3161] %v3828
          %v3830 = vld [vmem:[%s3168 + $0x514] sm:%s3161]
          %3831 = vst [vmem:[%s3169 + $0x528] sm:%s3161] %v3830
          %v3832 = vld [vmem:[%s3168 + $0x534] sm:%s3161]
          %3833 = vst [vmem:[%s3169 + $0x52c] sm:%s3161] %v3832
          %v3834 = vld [vmem:[%s3168 + $0x518] sm:%s3161]
          %3835 = vst [vmem:[%s3169 + $0x530] sm:%s3161] %v3834
          %v3836 = vld [vmem:[%s3168 + $0x538] sm:%s3161]
          %3837 = vst [vmem:[%s3169 + $0x534] sm:%s3161] %v3836
          %v3838 = vld [vmem:[%s3168 + $0x51c] sm:%s3161]
          %3839 = vst [vmem:[%s3169 + $0x538] sm:%s3161] %v3838
          %v3840 = vld [vmem:[%s3168 + $0x53c] sm:%s3161]
          %3841 = vst [vmem:[%s3169 + $0x53c] sm:%s3161] %v3840
          %v3842 = vld [vmem:[%s3168 + $0x540] sm:%s3161]
          %3843 = vst [vmem:[%s3169 + $0x540] sm:%s3161] %v3842
          %v3844 = vld [vmem:[%s3168 + $0x560] sm:%s3161]
          %3845 = vst [vmem:[%s3169 + $0x544] sm:%s3161] %v3844
          %v3846 = vld [vmem:[%s3168 + $0x544] sm:%s3161]
          %3847 = vst [vmem:[%s3169 + $0x548] sm:%s3161] %v3846
          %v3848 = vld [vmem:[%s3168 + $0x564] sm:%s3161]
          %3849 = vst [vmem:[%s3169 + $0x54c] sm:%s3161] %v3848
          %v3850 = vld [vmem:[%s3168 + $0x548] sm:%s3161]
          %3851 = vst [vmem:[%s3169 + $0x550] sm:%s3161] %v3850
          %v3852 = vld [vmem:[%s3168 + $0x568] sm:%s3161]
          %3853 = vst [vmem:[%s3169 + $0x554] sm:%s3161] %v3852
          %v3854 = vld [vmem:[%s3168 + $0x54c] sm:%s3161]
          %3855 = vst [vmem:[%s3169 + $0x558] sm:%s3161] %v3854
          %v3856 = vld [vmem:[%s3168 + $0x56c] sm:%s3161]
          %3857 = vst [vmem:[%s3169 + $0x55c] sm:%s3161] %v3856
          %v3858 = vld [vmem:[%s3168 + $0x550] sm:%s3161]
          %3859 = vst [vmem:[%s3169 + $0x560] sm:%s3161] %v3858
          %v3860 = vld [vmem:[%s3168 + $0x570] sm:%s3161]
          %3861 = vst [vmem:[%s3169 + $0x564] sm:%s3161] %v3860
          %v3862 = vld [vmem:[%s3168 + $0x554] sm:%s3161]
          %3863 = vst [vmem:[%s3169 + $0x568] sm:%s3161] %v3862
          %v3864 = vld [vmem:[%s3168 + $0x574] sm:%s3161]
          %3865 = vst [vmem:[%s3169 + $0x56c] sm:%s3161] %v3864
          %v3866 = vld [vmem:[%s3168 + $0x558] sm:%s3161]
          %3867 = vst [vmem:[%s3169 + $0x570] sm:%s3161] %v3866
          %v3868 = vld [vmem:[%s3168 + $0x578] sm:%s3161]
          %3869 = vst [vmem:[%s3169 + $0x574] sm:%s3161] %v3868
          %v3870 = vld [vmem:[%s3168 + $0x55c] sm:%s3161]
          %3871 = vst [vmem:[%s3169 + $0x578] sm:%s3161] %v3870
          %v3872 = vld [vmem:[%s3168 + $0x57c] sm:%s3161]
          %3873 = vst [vmem:[%s3169 + $0x57c] sm:%s3161] %v3872
          %v3874 = vld [vmem:[%s3168 + $0x580] sm:%s3161]
          %3875 = vst [vmem:[%s3169 + $0x580] sm:%s3161] %v3874
          %v3876 = vld [vmem:[%s3168 + $0x5a0] sm:%s3161]
          %3877 = vst [vmem:[%s3169 + $0x584] sm:%s3161] %v3876
          %v3878 = vld [vmem:[%s3168 + $0x584] sm:%s3161]
          %3879 = vst [vmem:[%s3169 + $0x588] sm:%s3161] %v3878
          %v3880 = vld [vmem:[%s3168 + $0x5a4] sm:%s3161]
          %3881 = vst [vmem:[%s3169 + $0x58c] sm:%s3161] %v3880
          %v3882 = vld [vmem:[%s3168 + $0x588] sm:%s3161]
          %3883 = vst [vmem:[%s3169 + $0x590] sm:%s3161] %v3882
          %v3884 = vld [vmem:[%s3168 + $0x5a8] sm:%s3161]
          %3885 = vst [vmem:[%s3169 + $0x594] sm:%s3161] %v3884
          %v3886 = vld [vmem:[%s3168 + $0x58c] sm:%s3161]
          %3887 = vst [vmem:[%s3169 + $0x598] sm:%s3161] %v3886
          %v3888 = vld [vmem:[%s3168 + $0x5ac] sm:%s3161]
          %3889 = vst [vmem:[%s3169 + $0x59c] sm:%s3161] %v3888
          %v3890 = vld [vmem:[%s3168 + $0x590] sm:%s3161]
          %3891 = vst [vmem:[%s3169 + $0x5a0] sm:%s3161] %v3890
          %v3892 = vld [vmem:[%s3168 + $0x5b0] sm:%s3161]
          %3893 = vst [vmem:[%s3169 + $0x5a4] sm:%s3161] %v3892
          %v3894 = vld [vmem:[%s3168 + $0x594] sm:%s3161]
          %3895 = vst [vmem:[%s3169 + $0x5a8] sm:%s3161] %v3894
          %v3896 = vld [vmem:[%s3168 + $0x5b4] sm:%s3161]
          %3897 = vst [vmem:[%s3169 + $0x5ac] sm:%s3161] %v3896
          %v3898 = vld [vmem:[%s3168 + $0x598] sm:%s3161]
          %3899 = vst [vmem:[%s3169 + $0x5b0] sm:%s3161] %v3898
          %v3900 = vld [vmem:[%s3168 + $0x5b8] sm:%s3161]
          %3901 = vst [vmem:[%s3169 + $0x5b4] sm:%s3161] %v3900
          %v3902 = vld [vmem:[%s3168 + $0x59c] sm:%s3161]
          %3903 = vst [vmem:[%s3169 + $0x5b8] sm:%s3161] %v3902
          %v3904 = vld [vmem:[%s3168 + $0x5bc] sm:%s3161]
          %3905 = vst [vmem:[%s3169 + $0x5bc] sm:%s3161] %v3904
          %v3906 = vld [vmem:[%s3168 + $0x5c0] sm:%s3161]
          %3907 = vst [vmem:[%s3169 + $0x5c0] sm:%s3161] %v3906
          %v3908 = vld [vmem:[%s3168 + $0x5e0] sm:%s3161]
          %3909 = vst [vmem:[%s3169 + $0x5c4] sm:%s3161] %v3908
          %v3910 = vld [vmem:[%s3168 + $0x5c4] sm:%s3161]
          %3911 = vst [vmem:[%s3169 + $0x5c8] sm:%s3161] %v3910
          %v3912 = vld [vmem:[%s3168 + $0x5e4] sm:%s3161]
          %3913 = vst [vmem:[%s3169 + $0x5cc] sm:%s3161] %v3912
          %v3914 = vld [vmem:[%s3168 + $0x5c8] sm:%s3161]
          %3915 = vst [vmem:[%s3169 + $0x5d0] sm:%s3161] %v3914
          %v3916 = vld [vmem:[%s3168 + $0x5e8] sm:%s3161]
          %3917 = vst [vmem:[%s3169 + $0x5d4] sm:%s3161] %v3916
          %v3918 = vld [vmem:[%s3168 + $0x5cc] sm:%s3161]
          %3919 = vst [vmem:[%s3169 + $0x5d8] sm:%s3161] %v3918
          %v3920 = vld [vmem:[%s3168 + $0x5ec] sm:%s3161]
          %3921 = vst [vmem:[%s3169 + $0x5dc] sm:%s3161] %v3920
          %v3922 = vld [vmem:[%s3168 + $0x5d0] sm:%s3161]
          %3923 = vst [vmem:[%s3169 + $0x5e0] sm:%s3161] %v3922
          %v3924 = vld [vmem:[%s3168 + $0x5f0] sm:%s3161]
          %3925 = vst [vmem:[%s3169 + $0x5e4] sm:%s3161] %v3924
          %v3926 = vld [vmem:[%s3168 + $0x5d4] sm:%s3161]
          %3927 = vst [vmem:[%s3169 + $0x5e8] sm:%s3161] %v3926
          %v3928 = vld [vmem:[%s3168 + $0x5f4] sm:%s3161]
          %3929 = vst [vmem:[%s3169 + $0x5ec] sm:%s3161] %v3928
          %v3930 = vld [vmem:[%s3168 + $0x5d8] sm:%s3161]
          %3931 = vst [vmem:[%s3169 + $0x5f0] sm:%s3161] %v3930
          %v3932 = vld [vmem:[%s3168 + $0x5f8] sm:%s3161]
          %3933 = vst [vmem:[%s3169 + $0x5f4] sm:%s3161] %v3932
          %v3934 = vld [vmem:[%s3168 + $0x5dc] sm:%s3161]
          %3935 = vst [vmem:[%s3169 + $0x5f8] sm:%s3161] %v3934
          %v3936 = vld [vmem:[%s3168 + $0x5fc] sm:%s3161]
          %3937 = vst [vmem:[%s3169 + $0x5fc] sm:%s3161] %v3936
          %v3938 = vld [vmem:[%s3168 + $0x600] sm:%s3161]
          %3939 = vst [vmem:[%s3169 + $0x600] sm:%s3161] %v3938
          %v3940 = vld [vmem:[%s3168 + $0x620] sm:%s3161]
          %3941 = vst [vmem:[%s3169 + $0x604] sm:%s3161] %v3940
          %v3942 = vld [vmem:[%s3168 + $0x604] sm:%s3161]
          %3943 = vst [vmem:[%s3169 + $0x608] sm:%s3161] %v3942
          %v3944 = vld [vmem:[%s3168 + $0x624] sm:%s3161]
          %3945 = vst [vmem:[%s3169 + $0x60c] sm:%s3161] %v3944
          %v3946 = vld [vmem:[%s3168 + $0x608] sm:%s3161]
          %3947 = vst [vmem:[%s3169 + $0x610] sm:%s3161] %v3946
          %v3948 = vld [vmem:[%s3168 + $0x628] sm:%s3161]
          %3949 = vst [vmem:[%s3169 + $0x614] sm:%s3161] %v3948
          %v3950 = vld [vmem:[%s3168 + $0x60c] sm:%s3161]
          %3951 = vst [vmem:[%s3169 + $0x618] sm:%s3161] %v3950
          %v3952 = vld [vmem:[%s3168 + $0x62c] sm:%s3161]
          %3953 = vst [vmem:[%s3169 + $0x61c] sm:%s3161] %v3952
          %v3954 = vld [vmem:[%s3168 + $0x610] sm:%s3161]
          %3955 = vst [vmem:[%s3169 + $0x620] sm:%s3161] %v3954
          %v3956 = vld [vmem:[%s3168 + $0x630] sm:%s3161]
          %3957 = vst [vmem:[%s3169 + $0x624] sm:%s3161] %v3956
          %v3958 = vld [vmem:[%s3168 + $0x614] sm:%s3161]
          %3959 = vst [vmem:[%s3169 + $0x628] sm:%s3161] %v3958
          %v3960 = vld [vmem:[%s3168 + $0x634] sm:%s3161]
          %3961 = vst [vmem:[%s3169 + $0x62c] sm:%s3161] %v3960
          %v3962 = vld [vmem:[%s3168 + $0x618] sm:%s3161]
          %3963 = vst [vmem:[%s3169 + $0x630] sm:%s3161] %v3962
          %v3964 = vld [vmem:[%s3168 + $0x638] sm:%s3161]
          %3965 = vst [vmem:[%s3169 + $0x634] sm:%s3161] %v3964
          %v3966 = vld [vmem:[%s3168 + $0x61c] sm:%s3161]
          %3967 = vst [vmem:[%s3169 + $0x638] sm:%s3161] %v3966
          %v3968 = vld [vmem:[%s3168 + $0x63c] sm:%s3161]
          %3969 = vst [vmem:[%s3169 + $0x63c] sm:%s3161] %v3968
          %v3970 = vld [vmem:[%s3168 + $0x640] sm:%s3161]
          %3971 = vst [vmem:[%s3169 + $0x640] sm:%s3161] %v3970
          %v3972 = vld [vmem:[%s3168 + $0x660] sm:%s3161]
          %3973 = vst [vmem:[%s3169 + $0x644] sm:%s3161] %v3972
          %v3974 = vld [vmem:[%s3168 + $0x644] sm:%s3161]
          %3975 = vst [vmem:[%s3169 + $0x648] sm:%s3161] %v3974
          %v3976 = vld [vmem:[%s3168 + $0x664] sm:%s3161]
          %3977 = vst [vmem:[%s3169 + $0x64c] sm:%s3161] %v3976
          %v3978 = vld [vmem:[%s3168 + $0x648] sm:%s3161]
          %3979 = vst [vmem:[%s3169 + $0x650] sm:%s3161] %v3978
          %v3980 = vld [vmem:[%s3168 + $0x668] sm:%s3161]
          %3981 = vst [vmem:[%s3169 + $0x654] sm:%s3161] %v3980
          %v3982 = vld [vmem:[%s3168 + $0x64c] sm:%s3161]
          %3983 = vst [vmem:[%s3169 + $0x658] sm:%s3161] %v3982
          %v3984 = vld [vmem:[%s3168 + $0x66c] sm:%s3161]
          %3985 = vst [vmem:[%s3169 + $0x65c] sm:%s3161] %v3984
          %v3986 = vld [vmem:[%s3168 + $0x650] sm:%s3161]
          %3987 = vst [vmem:[%s3169 + $0x660] sm:%s3161] %v3986
          %v3988 = vld [vmem:[%s3168 + $0x670] sm:%s3161]
          %3989 = vst [vmem:[%s3169 + $0x664] sm:%s3161] %v3988
          %v3990 = vld [vmem:[%s3168 + $0x654] sm:%s3161]
          %3991 = vst [vmem:[%s3169 + $0x668] sm:%s3161] %v3990
          %v3992 = vld [vmem:[%s3168 + $0x674] sm:%s3161]
          %3993 = vst [vmem:[%s3169 + $0x66c] sm:%s3161] %v3992
          %v3994 = vld [vmem:[%s3168 + $0x658] sm:%s3161]
          %3995 = vst [vmem:[%s3169 + $0x670] sm:%s3161] %v3994
          %v3996 = vld [vmem:[%s3168 + $0x678] sm:%s3161]
          %3997 = vst [vmem:[%s3169 + $0x674] sm:%s3161] %v3996
          %v3998 = vld [vmem:[%s3168 + $0x65c] sm:%s3161]
          %3999 = vst [vmem:[%s3169 + $0x678] sm:%s3161] %v3998
          %v4000 = vld [vmem:[%s3168 + $0x67c] sm:%s3161]
          %4001 = vst [vmem:[%s3169 + $0x67c] sm:%s3161] %v4000
          %v4002 = vld [vmem:[%s3168 + $0x680] sm:%s3161]
          %4003 = vst [vmem:[%s3169 + $0x680] sm:%s3161] %v4002
          %v4004 = vld [vmem:[%s3168 + $0x6a0] sm:%s3161]
          %4005 = vst [vmem:[%s3169 + $0x684] sm:%s3161] %v4004
          %v4006 = vld [vmem:[%s3168 + $0x684] sm:%s3161]
          %4007 = vst [vmem:[%s3169 + $0x688] sm:%s3161] %v4006
          %v4008 = vld [vmem:[%s3168 + $0x6a4] sm:%s3161]
          %4009 = vst [vmem:[%s3169 + $0x68c] sm:%s3161] %v4008
          %v4010 = vld [vmem:[%s3168 + $0x688] sm:%s3161]
          %4011 = vst [vmem:[%s3169 + $0x690] sm:%s3161] %v4010
          %v4012 = vld [vmem:[%s3168 + $0x6a8] sm:%s3161]
          %4013 = vst [vmem:[%s3169 + $0x694] sm:%s3161] %v4012
          %v4014 = vld [vmem:[%s3168 + $0x68c] sm:%s3161]
          %4015 = vst [vmem:[%s3169 + $0x698] sm:%s3161] %v4014
          %v4016 = vld [vmem:[%s3168 + $0x6ac] sm:%s3161]
          %4017 = vst [vmem:[%s3169 + $0x69c] sm:%s3161] %v4016
          %v4018 = vld [vmem:[%s3168 + $0x690] sm:%s3161]
          %4019 = vst [vmem:[%s3169 + $0x6a0] sm:%s3161] %v4018
          %v4020 = vld [vmem:[%s3168 + $0x6b0] sm:%s3161]
          %4021 = vst [vmem:[%s3169 + $0x6a4] sm:%s3161] %v4020
          %v4022 = vld [vmem:[%s3168 + $0x694] sm:%s3161]
          %4023 = vst [vmem:[%s3169 + $0x6a8] sm:%s3161] %v4022
          %v4024 = vld [vmem:[%s3168 + $0x6b4] sm:%s3161]
          %4025 = vst [vmem:[%s3169 + $0x6ac] sm:%s3161] %v4024
          %v4026 = vld [vmem:[%s3168 + $0x698] sm:%s3161]
          %4027 = vst [vmem:[%s3169 + $0x6b0] sm:%s3161] %v4026
          %v4028 = vld [vmem:[%s3168 + $0x6b8] sm:%s3161]
          %4029 = vst [vmem:[%s3169 + $0x6b4] sm:%s3161] %v4028
          %v4030 = vld [vmem:[%s3168 + $0x69c] sm:%s3161]
          %4031 = vst [vmem:[%s3169 + $0x6b8] sm:%s3161] %v4030
          %v4032 = vld [vmem:[%s3168 + $0x6bc] sm:%s3161]
          %4033 = vst [vmem:[%s3169 + $0x6bc] sm:%s3161] %v4032
          %v4034 = vld [vmem:[%s3168 + $0x6c0] sm:%s3161]
          %4035 = vst [vmem:[%s3169 + $0x6c0] sm:%s3161] %v4034
          %v4036 = vld [vmem:[%s3168 + $0x6e0] sm:%s3161]
          %4037 = vst [vmem:[%s3169 + $0x6c4] sm:%s3161] %v4036
          %v4038 = vld [vmem:[%s3168 + $0x6c4] sm:%s3161]
          %4039 = vst [vmem:[%s3169 + $0x6c8] sm:%s3161] %v4038
          %v4040 = vld [vmem:[%s3168 + $0x6e4] sm:%s3161]
          %4041 = vst [vmem:[%s3169 + $0x6cc] sm:%s3161] %v4040
          %v4042 = vld [vmem:[%s3168 + $0x6c8] sm:%s3161]
          %4043 = vst [vmem:[%s3169 + $0x6d0] sm:%s3161] %v4042
          %v4044 = vld [vmem:[%s3168 + $0x6e8] sm:%s3161]
          %4045 = vst [vmem:[%s3169 + $0x6d4] sm:%s3161] %v4044
          %v4046 = vld [vmem:[%s3168 + $0x6cc] sm:%s3161]
          %4047 = vst [vmem:[%s3169 + $0x6d8] sm:%s3161] %v4046
          %v4048 = vld [vmem:[%s3168 + $0x6ec] sm:%s3161]
          %4049 = vst [vmem:[%s3169 + $0x6dc] sm:%s3161] %v4048
          %v4050 = vld [vmem:[%s3168 + $0x6d0] sm:%s3161]
          %4051 = vst [vmem:[%s3169 + $0x6e0] sm:%s3161] %v4050
          %v4052 = vld [vmem:[%s3168 + $0x6f0] sm:%s3161]
          %4053 = vst [vmem:[%s3169 + $0x6e4] sm:%s3161] %v4052
          %v4054 = vld [vmem:[%s3168 + $0x6d4] sm:%s3161]
          %4055 = vst [vmem:[%s3169 + $0x6e8] sm:%s3161] %v4054
          %v4056 = vld [vmem:[%s3168 + $0x6f4] sm:%s3161]
          %4057 = vst [vmem:[%s3169 + $0x6ec] sm:%s3161] %v4056
          %v4058 = vld [vmem:[%s3168 + $0x6d8] sm:%s3161]
          %4059 = vst [vmem:[%s3169 + $0x6f0] sm:%s3161] %v4058
          %v4060 = vld [vmem:[%s3168 + $0x6f8] sm:%s3161]
          %4061 = vst [vmem:[%s3169 + $0x6f4] sm:%s3161] %v4060
          %v4062 = vld [vmem:[%s3168 + $0x6dc] sm:%s3161]
          %4063 = vst [vmem:[%s3169 + $0x6f8] sm:%s3161] %v4062
          %v4064 = vld [vmem:[%s3168 + $0x6fc] sm:%s3161]
          %4065 = vst [vmem:[%s3169 + $0x6fc] sm:%s3161] %v4064
          %v4066 = vld [vmem:[%s3168 + $0x700] sm:%s3161]
          %4067 = vst [vmem:[%s3169 + $0x700] sm:%s3161] %v4066
          %v4068 = vld [vmem:[%s3168 + $0x720] sm:%s3161]
          %4069 = vst [vmem:[%s3169 + $0x704] sm:%s3161] %v4068
          %v4070 = vld [vmem:[%s3168 + $0x704] sm:%s3161]
          %4071 = vst [vmem:[%s3169 + $0x708] sm:%s3161] %v4070
          %v4072 = vld [vmem:[%s3168 + $0x724] sm:%s3161]
          %4073 = vst [vmem:[%s3169 + $0x70c] sm:%s3161] %v4072
          %v4074 = vld [vmem:[%s3168 + $0x708] sm:%s3161]
          %4075 = vst [vmem:[%s3169 + $0x710] sm:%s3161] %v4074
          %v4076 = vld [vmem:[%s3168 + $0x728] sm:%s3161]
          %4077 = vst [vmem:[%s3169 + $0x714] sm:%s3161] %v4076
          %v4078 = vld [vmem:[%s3168 + $0x70c] sm:%s3161]
          %4079 = vst [vmem:[%s3169 + $0x718] sm:%s3161] %v4078
          %v4080 = vld [vmem:[%s3168 + $0x72c] sm:%s3161]
          %4081 = vst [vmem:[%s3169 + $0x71c] sm:%s3161] %v4080
          %v4082 = vld [vmem:[%s3168 + $0x710] sm:%s3161]
          %4083 = vst [vmem:[%s3169 + $0x720] sm:%s3161] %v4082
          %v4084 = vld [vmem:[%s3168 + $0x730] sm:%s3161]
          %4085 = vst [vmem:[%s3169 + $0x724] sm:%s3161] %v4084
          %v4086 = vld [vmem:[%s3168 + $0x714] sm:%s3161]
          %4087 = vst [vmem:[%s3169 + $0x728] sm:%s3161] %v4086
          %v4088 = vld [vmem:[%s3168 + $0x734] sm:%s3161]
          %4089 = vst [vmem:[%s3169 + $0x72c] sm:%s3161] %v4088
          %v4090 = vld [vmem:[%s3168 + $0x718] sm:%s3161]
          %4091 = vst [vmem:[%s3169 + $0x730] sm:%s3161] %v4090
          %v4092 = vld [vmem:[%s3168 + $0x738] sm:%s3161]
          %4093 = vst [vmem:[%s3169 + $0x734] sm:%s3161] %v4092
          %v4094 = vld [vmem:[%s3168 + $0x71c] sm:%s3161]
          %4095 = vst [vmem:[%s3169 + $0x738] sm:%s3161] %v4094
          %v4096 = vld [vmem:[%s3168 + $0x73c] sm:%s3161]
          %4097 = vst [vmem:[%s3169 + $0x73c] sm:%s3161] %v4096
          %v4098 = vld [vmem:[%s3168 + $0x740] sm:%s3161]
          %4099 = vst [vmem:[%s3169 + $0x740] sm:%s3161] %v4098
          %v4100 = vld [vmem:[%s3168 + $0x760] sm:%s3161]
          %4101 = vst [vmem:[%s3169 + $0x744] sm:%s3161] %v4100
          %v4102 = vld [vmem:[%s3168 + $0x744] sm:%s3161]
          %4103 = vst [vmem:[%s3169 + $0x748] sm:%s3161] %v4102
          %v4104 = vld [vmem:[%s3168 + $0x764] sm:%s3161]
          %4105 = vst [vmem:[%s3169 + $0x74c] sm:%s3161] %v4104
          %v4106 = vld [vmem:[%s3168 + $0x748] sm:%s3161]
          %4107 = vst [vmem:[%s3169 + $0x750] sm:%s3161] %v4106
          %v4108 = vld [vmem:[%s3168 + $0x768] sm:%s3161]
          %4109 = vst [vmem:[%s3169 + $0x754] sm:%s3161] %v4108
          %v4110 = vld [vmem:[%s3168 + $0x74c] sm:%s3161]
          %4111 = vst [vmem:[%s3169 + $0x758] sm:%s3161] %v4110
          %v4112 = vld [vmem:[%s3168 + $0x76c] sm:%s3161]
          %4113 = vst [vmem:[%s3169 + $0x75c] sm:%s3161] %v4112
          %v4114 = vld [vmem:[%s3168 + $0x750] sm:%s3161]
          %4115 = vst [vmem:[%s3169 + $0x760] sm:%s3161] %v4114
          %v4116 = vld [vmem:[%s3168 + $0x770] sm:%s3161]
          %4117 = vst [vmem:[%s3169 + $0x764] sm:%s3161] %v4116
          %v4118 = vld [vmem:[%s3168 + $0x754] sm:%s3161]
          %4119 = vst [vmem:[%s3169 + $0x768] sm:%s3161] %v4118
          %v4120 = vld [vmem:[%s3168 + $0x774] sm:%s3161]
          %4121 = vst [vmem:[%s3169 + $0x76c] sm:%s3161] %v4120
          %v4122 = vld [vmem:[%s3168 + $0x758] sm:%s3161]
          %4123 = vst [vmem:[%s3169 + $0x770] sm:%s3161] %v4122
          %v4124 = vld [vmem:[%s3168 + $0x778] sm:%s3161]
          %4125 = vst [vmem:[%s3169 + $0x774] sm:%s3161] %v4124
          %v4126 = vld [vmem:[%s3168 + $0x75c] sm:%s3161]
          %4127 = vst [vmem:[%s3169 + $0x778] sm:%s3161] %v4126
          %v4128 = vld [vmem:[%s3168 + $0x77c] sm:%s3161]
          %4129 = vst [vmem:[%s3169 + $0x77c] sm:%s3161] %v4128
          %v4130 = vld [vmem:[%s3168 + $0x780] sm:%s3161]
          %4131 = vst [vmem:[%s3169 + $0x780] sm:%s3161] %v4130
          %v4132 = vld [vmem:[%s3168 + $0x7a0] sm:%s3161]
          %4133 = vst [vmem:[%s3169 + $0x784] sm:%s3161] %v4132
          %v4134 = vld [vmem:[%s3168 + $0x784] sm:%s3161]
          %4135 = vst [vmem:[%s3169 + $0x788] sm:%s3161] %v4134
          %v4136 = vld [vmem:[%s3168 + $0x7a4] sm:%s3161]
          %4137 = vst [vmem:[%s3169 + $0x78c] sm:%s3161] %v4136
          %v4138 = vld [vmem:[%s3168 + $0x788] sm:%s3161]
          %4139 = vst [vmem:[%s3169 + $0x790] sm:%s3161] %v4138
          %v4140 = vld [vmem:[%s3168 + $0x7a8] sm:%s3161]
          %4141 = vst [vmem:[%s3169 + $0x794] sm:%s3161] %v4140
          %v4142 = vld [vmem:[%s3168 + $0x78c] sm:%s3161]
          %4143 = vst [vmem:[%s3169 + $0x798] sm:%s3161] %v4142
          %v4144 = vld [vmem:[%s3168 + $0x7ac] sm:%s3161]
          %4145 = vst [vmem:[%s3169 + $0x79c] sm:%s3161] %v4144
          %v4146 = vld [vmem:[%s3168 + $0x790] sm:%s3161]
          %4147 = vst [vmem:[%s3169 + $0x7a0] sm:%s3161] %v4146
          %v4148 = vld [vmem:[%s3168 + $0x7b0] sm:%s3161]
          %4149 = vst [vmem:[%s3169 + $0x7a4] sm:%s3161] %v4148
          %v4150 = vld [vmem:[%s3168 + $0x794] sm:%s3161]
          %4151 = vst [vmem:[%s3169 + $0x7a8] sm:%s3161] %v4150
          %v4152 = vld [vmem:[%s3168 + $0x7b4] sm:%s3161]
          %4153 = vst [vmem:[%s3169 + $0x7ac] sm:%s3161] %v4152
          %v4154 = vld [vmem:[%s3168 + $0x798] sm:%s3161]
          %4155 = vst [vmem:[%s3169 + $0x7b0] sm:%s3161] %v4154
          %v4156 = vld [vmem:[%s3168 + $0x7b8] sm:%s3161]
          %4157 = vst [vmem:[%s3169 + $0x7b4] sm:%s3161] %v4156
          %v4158 = vld [vmem:[%s3168 + $0x79c] sm:%s3161]
          %4159 = vst [vmem:[%s3169 + $0x7b8] sm:%s3161] %v4158
          %v4160 = vld [vmem:[%s3168 + $0x7bc] sm:%s3161]
          %4161 = vst [vmem:[%s3169 + $0x7bc] sm:%s3161] %v4160
          %v4162 = vld [vmem:[%s3168 + $0x7c0] sm:%s3161]
          %4163 = vst [vmem:[%s3169 + $0x7c0] sm:%s3161] %v4162
          %v4164 = vld [vmem:[%s3168 + $0x7e0] sm:%s3161]
          %4165 = vst [vmem:[%s3169 + $0x7c4] sm:%s3161] %v4164
          %v4166 = vld [vmem:[%s3168 + $0x7c4] sm:%s3161]
          %4167 = vst [vmem:[%s3169 + $0x7c8] sm:%s3161] %v4166
          %v4168 = vld [vmem:[%s3168 + $0x7e4] sm:%s3161]
          %4169 = vst [vmem:[%s3169 + $0x7cc] sm:%s3161] %v4168
          %v4170 = vld [vmem:[%s3168 + $0x7c8] sm:%s3161]
          %4171 = vst [vmem:[%s3169 + $0x7d0] sm:%s3161] %v4170
          %v4172 = vld [vmem:[%s3168 + $0x7e8] sm:%s3161]
          %4173 = vst [vmem:[%s3169 + $0x7d4] sm:%s3161] %v4172
          %v4174 = vld [vmem:[%s3168 + $0x7cc] sm:%s3161]
          %4175 = vst [vmem:[%s3169 + $0x7d8] sm:%s3161] %v4174
          %v4176 = vld [vmem:[%s3168 + $0x7ec] sm:%s3161]
          %4177 = vst [vmem:[%s3169 + $0x7dc] sm:%s3161] %v4176
          %v4178 = vld [vmem:[%s3168 + $0x7d0] sm:%s3161]
          %4179 = vst [vmem:[%s3169 + $0x7e0] sm:%s3161] %v4178
          %v4180 = vld [vmem:[%s3168 + $0x7f0] sm:%s3161]
          %4181 = vst [vmem:[%s3169 + $0x7e4] sm:%s3161] %v4180
          %v4182 = vld [vmem:[%s3168 + $0x7d4] sm:%s3161]
          %4183 = vst [vmem:[%s3169 + $0x7e8] sm:%s3161] %v4182
          %v4184 = vld [vmem:[%s3168 + $0x7f4] sm:%s3161]
          %4185 = vst [vmem:[%s3169 + $0x7ec] sm:%s3161] %v4184
          %v4186 = vld [vmem:[%s3168 + $0x7d8] sm:%s3161]
          %4187 = vst [vmem:[%s3169 + $0x7f0] sm:%s3161] %v4186
          %v4188 = vld [vmem:[%s3168 + $0x7f8] sm:%s3161]
          %4189 = vst [vmem:[%s3169 + $0x7f4] sm:%s3161] %v4188
          %v4190 = vld [vmem:[%s3168 + $0x7dc] sm:%s3161]
          %4191 = vst [vmem:[%s3169 + $0x7f8] sm:%s3161] %v4190
          %v4192 = vld [vmem:[%s3168 + $0x7fc] sm:%s3161]
          %4193 = vst [vmem:[%s3169 + $0x7fc] sm:%s3161] %v4192
        $region59: #{generator_bn_forward.1} parent=46 // loop_footer
          %s3167 = sadd.s32 1, %s3163
        $region60: #{generator_bn_forward.1} parent=46 // loop_footer_branch
          %3162 = sbr.rel target = $region56
        $region61: #{generator_bn_forward.1} parent=46 // loop_exit
          _
      $region47: #{generator_bn_forward.1} parent=20 // pred_fallthru
        _
    $region21: #{generator_bn_forward.1} parent=1 // pred_fallthru
      _
    // Predicated region
    $region22: #{generator_bn_forward.1} parent=1 // pred_check
      %p26 = pneg %p22
    $region23: #{generator_bn_forward.1} parent=1 // pred_check_branch
      %28 = sbr.rel (%p26) target = $region25
    $region24: #{generator_bn_forward.1} parent=1 // pred_region
      %s29 = sshllo.u32 0, 4
      loop: start=0, step=1, limit=1
      $region26: #{generator_bn_forward.1} parent=24 // loop_pre_header
        _
      $region27: #{generator_bn_forward.1} parent=24 // loop_header
        %s31 = sphi 0, %s35
        %p32 = scmp.ge.s32.totalorder %s31, 1
        %s36 = sphi %s4, %s4
        %s37 = sphi [#allocation2], [#allocation2]
      $region28: #{generator_bn_forward.1} parent=24 // loop_header_branch
        %34 = sbr.rel (%p32) target = $region32
      $region29: #{generator_bn_forward.1} parent=24 // loop_body
        %v38 = vld [vmem:[%s36] sm:%s29]
        %39 = vst [vmem:[%s37] sm:%s29] %v38
        %v40 = vld [vmem:[%s36 + $0x20] sm:%s29]
        %41 = vst [vmem:[%s37 + $0x4] sm:%s29] %v40
        %v42 = vld [vmem:[%s36 + $0x4] sm:%s29]
        %43 = vst [vmem:[%s37 + $0x8] sm:%s29] %v42
        %v44 = vld [vmem:[%s36 + $0x24] sm:%s29]
        %45 = vst [vmem:[%s37 + $0xc] sm:%s29] %v44
        %v46 = vld [vmem:[%s36 + $0x8] sm:%s29]
        %47 = vst [vmem:[%s37 + $0x10] sm:%s29] %v46
        %v48 = vld [vmem:[%s36 + $0x28] sm:%s29]
        %49 = vst [vmem:[%s37 + $0x14] sm:%s29] %v48
        %v50 = vld [vmem:[%s36 + $0xc] sm:%s29]
        %51 = vst [vmem:[%s37 + $0x18] sm:%s29] %v50
        %v52 = vld [vmem:[%s36 + $0x2c] sm:%s29]
        %53 = vst [vmem:[%s37 + $0x1c] sm:%s29] %v52
        %v54 = vld [vmem:[%s36 + $0x10] sm:%s29]
        %55 = vst [vmem:[%s37 + $0x20] sm:%s29] %v54
        %v56 = vld [vmem:[%s36 + $0x30] sm:%s29]
        %57 = vst [vmem:[%s37 + $0x24] sm:%s29] %v56
        %v58 = vld [vmem:[%s36 + $0x14] sm:%s29]
        %59 = vst [vmem:[%s37 + $0x28] sm:%s29] %v58
        %v60 = vld [vmem:[%s36 + $0x34] sm:%s29]
        %61 = vst [vmem:[%s37 + $0x2c] sm:%s29] %v60
        %v62 = vld [vmem:[%s36 + $0x18] sm:%s29]
        %63 = vst [vmem:[%s37 + $0x30] sm:%s29] %v62
        %v64 = vld [vmem:[%s36 + $0x38] sm:%s29]
        %65 = vst [vmem:[%s37 + $0x34] sm:%s29] %v64
        %v66 = vld [vmem:[%s36 + $0x1c] sm:%s29]
        %67 = vst [vmem:[%s37 + $0x38] sm:%s29] %v66
        %v68 = vld [vmem:[%s36 + $0x3c] sm:%s29]
        %69 = vst [vmem:[%s37 + $0x3c] sm:%s29] %v68
        %v70 = vld [vmem:[%s36 + $0x40] sm:%s29]
        %71 = vst [vmem:[%s37 + $0x40] sm:%s29] %v70
        %v72 = vld [vmem:[%s36 + $0x60] sm:%s29]
        %73 = vst [vmem:[%s37 + $0x44] sm:%s29] %v72
        %v74 = vld [vmem:[%s36 + $0x44] sm:%s29]
        %75 = vst [vmem:[%s37 + $0x48] sm:%s29] %v74
        %v76 = vld [vmem:[%s36 + $0x64] sm:%s29]
        %77 = vst [vmem:[%s37 + $0x4c] sm:%s29] %v76
        %v78 = vld [vmem:[%s36 + $0x48] sm:%s29]
        %79 = vst [vmem:[%s37 + $0x50] sm:%s29] %v78
        %v80 = vld [vmem:[%s36 + $0x68] sm:%s29]
        %81 = vst [vmem:[%s37 + $0x54] sm:%s29] %v80
        %v82 = vld [vmem:[%s36 + $0x4c] sm:%s29]
        %83 = vst [vmem:[%s37 + $0x58] sm:%s29] %v82
        %v84 = vld [vmem:[%s36 + $0x6c] sm:%s29]
        %85 = vst [vmem:[%s37 + $0x5c] sm:%s29] %v84
        %v86 = vld [vmem:[%s36 + $0x50] sm:%s29]
        %87 = vst [vmem:[%s37 + $0x60] sm:%s29] %v86
        %v88 = vld [vmem:[%s36 + $0x70] sm:%s29]
        %89 = vst [vmem:[%s37 + $0x64] sm:%s29] %v88
        %v90 = vld [vmem:[%s36 + $0x54] sm:%s29]
        %91 = vst [vmem:[%s37 + $0x68] sm:%s29] %v90
        %v92 = vld [vmem:[%s36 + $0x74] sm:%s29]
        %93 = vst [vmem:[%s37 + $0x6c] sm:%s29] %v92
        %v94 = vld [vmem:[%s36 + $0x58] sm:%s29]
        %95 = vst [vmem:[%s37 + $0x70] sm:%s29] %v94
        %v96 = vld [vmem:[%s36 + $0x78] sm:%s29]
        %97 = vst [vmem:[%s37 + $0x74] sm:%s29] %v96
        %v98 = vld [vmem:[%s36 + $0x5c] sm:%s29]
        %99 = vst [vmem:[%s37 + $0x78] sm:%s29] %v98
        %v100 = vld [vmem:[%s36 + $0x7c] sm:%s29]
        %101 = vst [vmem:[%s37 + $0x7c] sm:%s29] %v100
        %v102 = vld [vmem:[%s36 + $0x80] sm:%s29]
        %103 = vst [vmem:[%s37 + $0x80] sm:%s29] %v102
        %v104 = vld [vmem:[%s36 + $0xa0] sm:%s29]
        %105 = vst [vmem:[%s37 + $0x84] sm:%s29] %v104
        %v106 = vld [vmem:[%s36 + $0x84] sm:%s29]
        %107 = vst [vmem:[%s37 + $0x88] sm:%s29] %v106
        %v108 = vld [vmem:[%s36 + $0xa4] sm:%s29]
        %109 = vst [vmem:[%s37 + $0x8c] sm:%s29] %v108
        %v110 = vld [vmem:[%s36 + $0x88] sm:%s29]
        %111 = vst [vmem:[%s37 + $0x90] sm:%s29] %v110
        %v112 = vld [vmem:[%s36 + $0xa8] sm:%s29]
        %113 = vst [vmem:[%s37 + $0x94] sm:%s29] %v112
        %v114 = vld [vmem:[%s36 + $0x8c] sm:%s29]
        %115 = vst [vmem:[%s37 + $0x98] sm:%s29] %v114
        %v116 = vld [vmem:[%s36 + $0xac] sm:%s29]
        %117 = vst [vmem:[%s37 + $0x9c] sm:%s29] %v116
        %v118 = vld [vmem:[%s36 + $0x90] sm:%s29]
        %119 = vst [vmem:[%s37 + $0xa0] sm:%s29] %v118
        %v120 = vld [vmem:[%s36 + $0xb0] sm:%s29]
        %121 = vst [vmem:[%s37 + $0xa4] sm:%s29] %v120
        %v122 = vld [vmem:[%s36 + $0x94] sm:%s29]
        %123 = vst [vmem:[%s37 + $0xa8] sm:%s29] %v122
        %v124 = vld [vmem:[%s36 + $0xb4] sm:%s29]
        %125 = vst [vmem:[%s37 + $0xac] sm:%s29] %v124
        %v126 = vld [vmem:[%s36 + $0x98] sm:%s29]
        %127 = vst [vmem:[%s37 + $0xb0] sm:%s29] %v126
        %v128 = vld [vmem:[%s36 + $0xb8] sm:%s29]
        %129 = vst [vmem:[%s37 + $0xb4] sm:%s29] %v128
        %v130 = vld [vmem:[%s36 + $0x9c] sm:%s29]
        %131 = vst [vmem:[%s37 + $0xb8] sm:%s29] %v130
        %v132 = vld [vmem:[%s36 + $0xbc] sm:%s29]
        %133 = vst [vmem:[%s37 + $0xbc] sm:%s29] %v132
        %v134 = vld [vmem:[%s36 + $0xc0] sm:%s29]
        %135 = vst [vmem:[%s37 + $0xc0] sm:%s29] %v134
        %v136 = vld [vmem:[%s36 + $0xe0] sm:%s29]
        %137 = vst [vmem:[%s37 + $0xc4] sm:%s29] %v136
        %v138 = vld [vmem:[%s36 + $0xc4] sm:%s29]
        %139 = vst [vmem:[%s37 + $0xc8] sm:%s29] %v138
        %v140 = vld [vmem:[%s36 + $0xe4] sm:%s29]
        %141 = vst [vmem:[%s37 + $0xcc] sm:%s29] %v140
        %v142 = vld [vmem:[%s36 + $0xc8] sm:%s29]
        %143 = vst [vmem:[%s37 + $0xd0] sm:%s29] %v142
        %v144 = vld [vmem:[%s36 + $0xe8] sm:%s29]
        %145 = vst [vmem:[%s37 + $0xd4] sm:%s29] %v144
        %v146 = vld [vmem:[%s36 + $0xcc] sm:%s29]
        %147 = vst [vmem:[%s37 + $0xd8] sm:%s29] %v146
        %v148 = vld [vmem:[%s36 + $0xec] sm:%s29]
        %149 = vst [vmem:[%s37 + $0xdc] sm:%s29] %v148
        %v150 = vld [vmem:[%s36 + $0xd0] sm:%s29]
        %151 = vst [vmem:[%s37 + $0xe0] sm:%s29] %v150
        %v152 = vld [vmem:[%s36 + $0xf0] sm:%s29]
        %153 = vst [vmem:[%s37 + $0xe4] sm:%s29] %v152
        %v154 = vld [vmem:[%s36 + $0xd4] sm:%s29]
        %155 = vst [vmem:[%s37 + $0xe8] sm:%s29] %v154
        %v156 = vld [vmem:[%s36 + $0xf4] sm:%s29]
        %157 = vst [vmem:[%s37 + $0xec] sm:%s29] %v156
        %v158 = vld [vmem:[%s36 + $0xd8] sm:%s29]
        %159 = vst [vmem:[%s37 + $0xf0] sm:%s29] %v158
        %v160 = vld [vmem:[%s36 + $0xf8] sm:%s29]
        %161 = vst [vmem:[%s37 + $0xf4] sm:%s29] %v160
        %v162 = vld [vmem:[%s36 + $0xdc] sm:%s29]
        %163 = vst [vmem:[%s37 + $0xf8] sm:%s29] %v162
        %v164 = vld [vmem:[%s36 + $0xfc] sm:%s29]
        %165 = vst [vmem:[%s37 + $0xfc] sm:%s29] %v164
        %v166 = vld [vmem:[%s36 + $0x100] sm:%s29]
        %167 = vst [vmem:[%s37 + $0x100] sm:%s29] %v166
        %v168 = vld [vmem:[%s36 + $0x120] sm:%s29]
        %169 = vst [vmem:[%s37 + $0x104] sm:%s29] %v168
        %v170 = vld [vmem:[%s36 + $0x104] sm:%s29]
        %171 = vst [vmem:[%s37 + $0x108] sm:%s29] %v170
        %v172 = vld [vmem:[%s36 + $0x124] sm:%s29]
        %173 = vst [vmem:[%s37 + $0x10c] sm:%s29] %v172
        %v174 = vld [vmem:[%s36 + $0x108] sm:%s29]
        %175 = vst [vmem:[%s37 + $0x110] sm:%s29] %v174
        %v176 = vld [vmem:[%s36 + $0x128] sm:%s29]
        %177 = vst [vmem:[%s37 + $0x114] sm:%s29] %v176
        %v178 = vld [vmem:[%s36 + $0x10c] sm:%s29]
        %179 = vst [vmem:[%s37 + $0x118] sm:%s29] %v178
        %v180 = vld [vmem:[%s36 + $0x12c] sm:%s29]
        %181 = vst [vmem:[%s37 + $0x11c] sm:%s29] %v180
        %v182 = vld [vmem:[%s36 + $0x110] sm:%s29]
        %183 = vst [vmem:[%s37 + $0x120] sm:%s29] %v182
        %v184 = vld [vmem:[%s36 + $0x130] sm:%s29]
        %185 = vst [vmem:[%s37 + $0x124] sm:%s29] %v184
        %v186 = vld [vmem:[%s36 + $0x114] sm:%s29]
        %187 = vst [vmem:[%s37 + $0x128] sm:%s29] %v186
        %v188 = vld [vmem:[%s36 + $0x134] sm:%s29]
        %189 = vst [vmem:[%s37 + $0x12c] sm:%s29] %v188
        %v190 = vld [vmem:[%s36 + $0x118] sm:%s29]
        %191 = vst [vmem:[%s37 + $0x130] sm:%s29] %v190
        %v192 = vld [vmem:[%s36 + $0x138] sm:%s29]
        %193 = vst [vmem:[%s37 + $0x134] sm:%s29] %v192
        %v194 = vld [vmem:[%s36 + $0x11c] sm:%s29]
        %195 = vst [vmem:[%s37 + $0x138] sm:%s29] %v194
        %v196 = vld [vmem:[%s36 + $0x13c] sm:%s29]
        %197 = vst [vmem:[%s37 + $0x13c] sm:%s29] %v196
        %v198 = vld [vmem:[%s36 + $0x140] sm:%s29]
        %199 = vst [vmem:[%s37 + $0x140] sm:%s29] %v198
        %v200 = vld [vmem:[%s36 + $0x160] sm:%s29]
        %201 = vst [vmem:[%s37 + $0x144] sm:%s29] %v200
        %v202 = vld [vmem:[%s36 + $0x144] sm:%s29]
        %203 = vst [vmem:[%s37 + $0x148] sm:%s29] %v202
        %v204 = vld [vmem:[%s36 + $0x164] sm:%s29]
        %205 = vst [vmem:[%s37 + $0x14c] sm:%s29] %v204
        %v206 = vld [vmem:[%s36 + $0x148] sm:%s29]
        %207 = vst [vmem:[%s37 + $0x150] sm:%s29] %v206
        %v208 = vld [vmem:[%s36 + $0x168] sm:%s29]
        %209 = vst [vmem:[%s37 + $0x154] sm:%s29] %v208
        %v210 = vld [vmem:[%s36 + $0x14c] sm:%s29]
        %211 = vst [vmem:[%s37 + $0x158] sm:%s29] %v210
        %v212 = vld [vmem:[%s36 + $0x16c] sm:%s29]
        %213 = vst [vmem:[%s37 + $0x15c] sm:%s29] %v212
        %v214 = vld [vmem:[%s36 + $0x150] sm:%s29]
        %215 = vst [vmem:[%s37 + $0x160] sm:%s29] %v214
        %v216 = vld [vmem:[%s36 + $0x170] sm:%s29]
        %217 = vst [vmem:[%s37 + $0x164] sm:%s29] %v216
        %v218 = vld [vmem:[%s36 + $0x154] sm:%s29]
        %219 = vst [vmem:[%s37 + $0x168] sm:%s29] %v218
        %v220 = vld [vmem:[%s36 + $0x174] sm:%s29]
        %221 = vst [vmem:[%s37 + $0x16c] sm:%s29] %v220
        %v222 = vld [vmem:[%s36 + $0x158] sm:%s29]
        %223 = vst [vmem:[%s37 + $0x170] sm:%s29] %v222
        %v224 = vld [vmem:[%s36 + $0x178] sm:%s29]
        %225 = vst [vmem:[%s37 + $0x174] sm:%s29] %v224
        %v226 = vld [vmem:[%s36 + $0x15c] sm:%s29]
        %227 = vst [vmem:[%s37 + $0x178] sm:%s29] %v226
        %v228 = vld [vmem:[%s36 + $0x17c] sm:%s29]
        %229 = vst [vmem:[%s37 + $0x17c] sm:%s29] %v228
        %v230 = vld [vmem:[%s36 + $0x180] sm:%s29]
        %231 = vst [vmem:[%s37 + $0x180] sm:%s29] %v230
        %v232 = vld [vmem:[%s36 + $0x1a0] sm:%s29]
        %233 = vst [vmem:[%s37 + $0x184] sm:%s29] %v232
        %v234 = vld [vmem:[%s36 + $0x184] sm:%s29]
        %235 = vst [vmem:[%s37 + $0x188] sm:%s29] %v234
        %v236 = vld [vmem:[%s36 + $0x1a4] sm:%s29]
        %237 = vst [vmem:[%s37 + $0x18c] sm:%s29] %v236
        %v238 = vld [vmem:[%s36 + $0x188] sm:%s29]
        %239 = vst [vmem:[%s37 + $0x190] sm:%s29] %v238
        %v240 = vld [vmem:[%s36 + $0x1a8] sm:%s29]
        %241 = vst [vmem:[%s37 + $0x194] sm:%s29] %v240
        %v242 = vld [vmem:[%s36 + $0x18c] sm:%s29]
        %243 = vst [vmem:[%s37 + $0x198] sm:%s29] %v242
        %v244 = vld [vmem:[%s36 + $0x1ac] sm:%s29]
        %245 = vst [vmem:[%s37 + $0x19c] sm:%s29] %v244
        %v246 = vld [vmem:[%s36 + $0x190] sm:%s29]
        %247 = vst [vmem:[%s37 + $0x1a0] sm:%s29] %v246
        %v248 = vld [vmem:[%s36 + $0x1b0] sm:%s29]
        %249 = vst [vmem:[%s37 + $0x1a4] sm:%s29] %v248
        %v250 = vld [vmem:[%s36 + $0x194] sm:%s29]
        %251 = vst [vmem:[%s37 + $0x1a8] sm:%s29] %v250
        %v252 = vld [vmem:[%s36 + $0x1b4] sm:%s29]
        %253 = vst [vmem:[%s37 + $0x1ac] sm:%s29] %v252
        %v254 = vld [vmem:[%s36 + $0x198] sm:%s29]
        %255 = vst [vmem:[%s37 + $0x1b0] sm:%s29] %v254
        %v256 = vld [vmem:[%s36 + $0x1b8] sm:%s29]
        %257 = vst [vmem:[%s37 + $0x1b4] sm:%s29] %v256
        %v258 = vld [vmem:[%s36 + $0x19c] sm:%s29]
        %259 = vst [vmem:[%s37 + $0x1b8] sm:%s29] %v258
        %v260 = vld [vmem:[%s36 + $0x1bc] sm:%s29]
        %261 = vst [vmem:[%s37 + $0x1bc] sm:%s29] %v260
        %v262 = vld [vmem:[%s36 + $0x1c0] sm:%s29]
        %263 = vst [vmem:[%s37 + $0x1c0] sm:%s29] %v262
        %v264 = vld [vmem:[%s36 + $0x1e0] sm:%s29]
        %265 = vst [vmem:[%s37 + $0x1c4] sm:%s29] %v264
        %v266 = vld [vmem:[%s36 + $0x1c4] sm:%s29]
        %267 = vst [vmem:[%s37 + $0x1c8] sm:%s29] %v266
        %v268 = vld [vmem:[%s36 + $0x1e4] sm:%s29]
        %269 = vst [vmem:[%s37 + $0x1cc] sm:%s29] %v268
        %v270 = vld [vmem:[%s36 + $0x1c8] sm:%s29]
        %271 = vst [vmem:[%s37 + $0x1d0] sm:%s29] %v270
        %v272 = vld [vmem:[%s36 + $0x1e8] sm:%s29]
        %273 = vst [vmem:[%s37 + $0x1d4] sm:%s29] %v272
        %v274 = vld [vmem:[%s36 + $0x1cc] sm:%s29]
        %275 = vst [vmem:[%s37 + $0x1d8] sm:%s29] %v274
        %v276 = vld [vmem:[%s36 + $0x1ec] sm:%s29]
        %277 = vst [vmem:[%s37 + $0x1dc] sm:%s29] %v276
        %v278 = vld [vmem:[%s36 + $0x1d0] sm:%s29]
        %279 = vst [vmem:[%s37 + $0x1e0] sm:%s29] %v278
        %v280 = vld [vmem:[%s36 + $0x1f0] sm:%s29]
        %281 = vst [vmem:[%s37 + $0x1e4] sm:%s29] %v280
        %v282 = vld [vmem:[%s36 + $0x1d4] sm:%s29]
        %283 = vst [vmem:[%s37 + $0x1e8] sm:%s29] %v282
        %v284 = vld [vmem:[%s36 + $0x1f4] sm:%s29]
        %285 = vst [vmem:[%s37 + $0x1ec] sm:%s29] %v284
        %v286 = vld [vmem:[%s36 + $0x1d8] sm:%s29]
        %287 = vst [vmem:[%s37 + $0x1f0] sm:%s29] %v286
        %v288 = vld [vmem:[%s36 + $0x1f8] sm:%s29]
        %289 = vst [vmem:[%s37 + $0x1f4] sm:%s29] %v288
        %v290 = vld [vmem:[%s36 + $0x1dc] sm:%s29]
        %291 = vst [vmem:[%s37 + $0x1f8] sm:%s29] %v290
        %v292 = vld [vmem:[%s36 + $0x1fc] sm:%s29]
        %293 = vst [vmem:[%s37 + $0x1fc] sm:%s29] %v292
        %v294 = vld [vmem:[%s36 + $0x200] sm:%s29]
        %295 = vst [vmem:[%s37 + $0x200] sm:%s29] %v294
        %v296 = vld [vmem:[%s36 + $0x220] sm:%s29]
        %297 = vst [vmem:[%s37 + $0x204] sm:%s29] %v296
        %v298 = vld [vmem:[%s36 + $0x204] sm:%s29]
        %299 = vst [vmem:[%s37 + $0x208] sm:%s29] %v298
        %v300 = vld [vmem:[%s36 + $0x224] sm:%s29]
        %301 = vst [vmem:[%s37 + $0x20c] sm:%s29] %v300
        %v302 = vld [vmem:[%s36 + $0x208] sm:%s29]
        %303 = vst [vmem:[%s37 + $0x210] sm:%s29] %v302
        %v304 = vld [vmem:[%s36 + $0x228] sm:%s29]
        %305 = vst [vmem:[%s37 + $0x214] sm:%s29] %v304
        %v306 = vld [vmem:[%s36 + $0x20c] sm:%s29]
        %307 = vst [vmem:[%s37 + $0x218] sm:%s29] %v306
        %v308 = vld [vmem:[%s36 + $0x22c] sm:%s29]
        %309 = vst [vmem:[%s37 + $0x21c] sm:%s29] %v308
        %v310 = vld [vmem:[%s36 + $0x210] sm:%s29]
        %311 = vst [vmem:[%s37 + $0x220] sm:%s29] %v310
        %v312 = vld [vmem:[%s36 + $0x230] sm:%s29]
        %313 = vst [vmem:[%s37 + $0x224] sm:%s29] %v312
        %v314 = vld [vmem:[%s36 + $0x214] sm:%s29]
        %315 = vst [vmem:[%s37 + $0x228] sm:%s29] %v314
        %v316 = vld [vmem:[%s36 + $0x234] sm:%s29]
        %317 = vst [vmem:[%s37 + $0x22c] sm:%s29] %v316
        %v318 = vld [vmem:[%s36 + $0x218] sm:%s29]
        %319 = vst [vmem:[%s37 + $0x230] sm:%s29] %v318
        %v320 = vld [vmem:[%s36 + $0x238] sm:%s29]
        %321 = vst [vmem:[%s37 + $0x234] sm:%s29] %v320
        %v322 = vld [vmem:[%s36 + $0x21c] sm:%s29]
        %323 = vst [vmem:[%s37 + $0x238] sm:%s29] %v322
        %v324 = vld [vmem:[%s36 + $0x23c] sm:%s29]
        %325 = vst [vmem:[%s37 + $0x23c] sm:%s29] %v324
        %v326 = vld [vmem:[%s36 + $0x240] sm:%s29]
        %327 = vst [vmem:[%s37 + $0x240] sm:%s29] %v326
        %v328 = vld [vmem:[%s36 + $0x260] sm:%s29]
        %329 = vst [vmem:[%s37 + $0x244] sm:%s29] %v328
        %v330 = vld [vmem:[%s36 + $0x244] sm:%s29]
        %331 = vst [vmem:[%s37 + $0x248] sm:%s29] %v330
        %v332 = vld [vmem:[%s36 + $0x264] sm:%s29]
        %333 = vst [vmem:[%s37 + $0x24c] sm:%s29] %v332
        %v334 = vld [vmem:[%s36 + $0x248] sm:%s29]
        %335 = vst [vmem:[%s37 + $0x250] sm:%s29] %v334
        %v336 = vld [vmem:[%s36 + $0x268] sm:%s29]
        %337 = vst [vmem:[%s37 + $0x254] sm:%s29] %v336
        %v338 = vld [vmem:[%s36 + $0x24c] sm:%s29]
        %339 = vst [vmem:[%s37 + $0x258] sm:%s29] %v338
        %v340 = vld [vmem:[%s36 + $0x26c] sm:%s29]
        %341 = vst [vmem:[%s37 + $0x25c] sm:%s29] %v340
        %v342 = vld [vmem:[%s36 + $0x250] sm:%s29]
        %343 = vst [vmem:[%s37 + $0x260] sm:%s29] %v342
        %v344 = vld [vmem:[%s36 + $0x270] sm:%s29]
        %345 = vst [vmem:[%s37 + $0x264] sm:%s29] %v344
        %v346 = vld [vmem:[%s36 + $0x254] sm:%s29]
        %347 = vst [vmem:[%s37 + $0x268] sm:%s29] %v346
        %v348 = vld [vmem:[%s36 + $0x274] sm:%s29]
        %349 = vst [vmem:[%s37 + $0x26c] sm:%s29] %v348
        %v350 = vld [vmem:[%s36 + $0x258] sm:%s29]
        %351 = vst [vmem:[%s37 + $0x270] sm:%s29] %v350
        %v352 = vld [vmem:[%s36 + $0x278] sm:%s29]
        %353 = vst [vmem:[%s37 + $0x274] sm:%s29] %v352
        %v354 = vld [vmem:[%s36 + $0x25c] sm:%s29]
        %355 = vst [vmem:[%s37 + $0x278] sm:%s29] %v354
        %v356 = vld [vmem:[%s36 + $0x27c] sm:%s29]
        %357 = vst [vmem:[%s37 + $0x27c] sm:%s29] %v356
        %v358 = vld [vmem:[%s36 + $0x280] sm:%s29]
        %359 = vst [vmem:[%s37 + $0x280] sm:%s29] %v358
        %v360 = vld [vmem:[%s36 + $0x2a0] sm:%s29]
        %361 = vst [vmem:[%s37 + $0x284] sm:%s29] %v360
        %v362 = vld [vmem:[%s36 + $0x284] sm:%s29]
        %363 = vst [vmem:[%s37 + $0x288] sm:%s29] %v362
        %v364 = vld [vmem:[%s36 + $0x2a4] sm:%s29]
        %365 = vst [vmem:[%s37 + $0x28c] sm:%s29] %v364
        %v366 = vld [vmem:[%s36 + $0x288] sm:%s29]
        %367 = vst [vmem:[%s37 + $0x290] sm:%s29] %v366
        %v368 = vld [vmem:[%s36 + $0x2a8] sm:%s29]
        %369 = vst [vmem:[%s37 + $0x294] sm:%s29] %v368
        %v370 = vld [vmem:[%s36 + $0x28c] sm:%s29]
        %371 = vst [vmem:[%s37 + $0x298] sm:%s29] %v370
        %v372 = vld [vmem:[%s36 + $0x2ac] sm:%s29]
        %373 = vst [vmem:[%s37 + $0x29c] sm:%s29] %v372
        %v374 = vld [vmem:[%s36 + $0x290] sm:%s29]
        %375 = vst [vmem:[%s37 + $0x2a0] sm:%s29] %v374
        %v376 = vld [vmem:[%s36 + $0x2b0] sm:%s29]
        %377 = vst [vmem:[%s37 + $0x2a4] sm:%s29] %v376
        %v378 = vld [vmem:[%s36 + $0x294] sm:%s29]
        %379 = vst [vmem:[%s37 + $0x2a8] sm:%s29] %v378
        %v380 = vld [vmem:[%s36 + $0x2b4] sm:%s29]
        %381 = vst [vmem:[%s37 + $0x2ac] sm:%s29] %v380
        %v382 = vld [vmem:[%s36 + $0x298] sm:%s29]
        %383 = vst [vmem:[%s37 + $0x2b0] sm:%s29] %v382
        %v384 = vld [vmem:[%s36 + $0x2b8] sm:%s29]
        %385 = vst [vmem:[%s37 + $0x2b4] sm:%s29] %v384
        %v386 = vld [vmem:[%s36 + $0x29c] sm:%s29]
        %387 = vst [vmem:[%s37 + $0x2b8] sm:%s29] %v386
        %v388 = vld [vmem:[%s36 + $0x2bc] sm:%s29]
        %389 = vst [vmem:[%s37 + $0x2bc] sm:%s29] %v388
        %v390 = vld [vmem:[%s36 + $0x2c0] sm:%s29]
        %391 = vst [vmem:[%s37 + $0x2c0] sm:%s29] %v390
        %v392 = vld [vmem:[%s36 + $0x2e0] sm:%s29]
        %393 = vst [vmem:[%s37 + $0x2c4] sm:%s29] %v392
        %v394 = vld [vmem:[%s36 + $0x2c4] sm:%s29]
        %395 = vst [vmem:[%s37 + $0x2c8] sm:%s29] %v394
        %v396 = vld [vmem:[%s36 + $0x2e4] sm:%s29]
        %397 = vst [vmem:[%s37 + $0x2cc] sm:%s29] %v396
        %v398 = vld [vmem:[%s36 + $0x2c8] sm:%s29]
        %399 = vst [vmem:[%s37 + $0x2d0] sm:%s29] %v398
        %v400 = vld [vmem:[%s36 + $0x2e8] sm:%s29]
        %401 = vst [vmem:[%s37 + $0x2d4] sm:%s29] %v400
        %v402 = vld [vmem:[%s36 + $0x2cc] sm:%s29]
        %403 = vst [vmem:[%s37 + $0x2d8] sm:%s29] %v402
        %v404 = vld [vmem:[%s36 + $0x2ec] sm:%s29]
        %405 = vst [vmem:[%s37 + $0x2dc] sm:%s29] %v404
        %v406 = vld [vmem:[%s36 + $0x2d0] sm:%s29]
        %407 = vst [vmem:[%s37 + $0x2e0] sm:%s29] %v406
        %v408 = vld [vmem:[%s36 + $0x2f0] sm:%s29]
        %409 = vst [vmem:[%s37 + $0x2e4] sm:%s29] %v408
        %v410 = vld [vmem:[%s36 + $0x2d4] sm:%s29]
        %411 = vst [vmem:[%s37 + $0x2e8] sm:%s29] %v410
        %v412 = vld [vmem:[%s36 + $0x2f4] sm:%s29]
        %413 = vst [vmem:[%s37 + $0x2ec] sm:%s29] %v412
        %v414 = vld [vmem:[%s36 + $0x2d8] sm:%s29]
        %415 = vst [vmem:[%s37 + $0x2f0] sm:%s29] %v414
        %v416 = vld [vmem:[%s36 + $0x2f8] sm:%s29]
        %417 = vst [vmem:[%s37 + $0x2f4] sm:%s29] %v416
        %v418 = vld [vmem:[%s36 + $0x2dc] sm:%s29]
        %419 = vst [vmem:[%s37 + $0x2f8] sm:%s29] %v418
        %v420 = vld [vmem:[%s36 + $0x2fc] sm:%s29]
        %421 = vst [vmem:[%s37 + $0x2fc] sm:%s29] %v420
        %v422 = vld [vmem:[%s36 + $0x300] sm:%s29]
        %423 = vst [vmem:[%s37 + $0x300] sm:%s29] %v422
        %v424 = vld [vmem:[%s36 + $0x320] sm:%s29]
        %425 = vst [vmem:[%s37 + $0x304] sm:%s29] %v424
        %v426 = vld [vmem:[%s36 + $0x304] sm:%s29]
        %427 = vst [vmem:[%s37 + $0x308] sm:%s29] %v426
        %v428 = vld [vmem:[%s36 + $0x324] sm:%s29]
        %429 = vst [vmem:[%s37 + $0x30c] sm:%s29] %v428
        %v430 = vld [vmem:[%s36 + $0x308] sm:%s29]
        %431 = vst [vmem:[%s37 + $0x310] sm:%s29] %v430
        %v432 = vld [vmem:[%s36 + $0x328] sm:%s29]
        %433 = vst [vmem:[%s37 + $0x314] sm:%s29] %v432
        %v434 = vld [vmem:[%s36 + $0x30c] sm:%s29]
        %435 = vst [vmem:[%s37 + $0x318] sm:%s29] %v434
        %v436 = vld [vmem:[%s36 + $0x32c] sm:%s29]
        %437 = vst [vmem:[%s37 + $0x31c] sm:%s29] %v436
        %v438 = vld [vmem:[%s36 + $0x310] sm:%s29]
        %439 = vst [vmem:[%s37 + $0x320] sm:%s29] %v438
        %v440 = vld [vmem:[%s36 + $0x330] sm:%s29]
        %441 = vst [vmem:[%s37 + $0x324] sm:%s29] %v440
        %v442 = vld [vmem:[%s36 + $0x314] sm:%s29]
        %443 = vst [vmem:[%s37 + $0x328] sm:%s29] %v442
        %v444 = vld [vmem:[%s36 + $0x334] sm:%s29]
        %445 = vst [vmem:[%s37 + $0x32c] sm:%s29] %v444
        %v446 = vld [vmem:[%s36 + $0x318] sm:%s29]
        %447 = vst [vmem:[%s37 + $0x330] sm:%s29] %v446
        %v448 = vld [vmem:[%s36 + $0x338] sm:%s29]
        %449 = vst [vmem:[%s37 + $0x334] sm:%s29] %v448
        %v450 = vld [vmem:[%s36 + $0x31c] sm:%s29]
        %451 = vst [vmem:[%s37 + $0x338] sm:%s29] %v450
        %v452 = vld [vmem:[%s36 + $0x33c] sm:%s29]
        %453 = vst [vmem:[%s37 + $0x33c] sm:%s29] %v452
        %v454 = vld [vmem:[%s36 + $0x340] sm:%s29]
        %455 = vst [vmem:[%s37 + $0x340] sm:%s29] %v454
        %v456 = vld [vmem:[%s36 + $0x360] sm:%s29]
        %457 = vst [vmem:[%s37 + $0x344] sm:%s29] %v456
        %v458 = vld [vmem:[%s36 + $0x344] sm:%s29]
        %459 = vst [vmem:[%s37 + $0x348] sm:%s29] %v458
        %v460 = vld [vmem:[%s36 + $0x364] sm:%s29]
        %461 = vst [vmem:[%s37 + $0x34c] sm:%s29] %v460
        %v462 = vld [vmem:[%s36 + $0x348] sm:%s29]
        %463 = vst [vmem:[%s37 + $0x350] sm:%s29] %v462
        %v464 = vld [vmem:[%s36 + $0x368] sm:%s29]
        %465 = vst [vmem:[%s37 + $0x354] sm:%s29] %v464
        %v466 = vld [vmem:[%s36 + $0x34c] sm:%s29]
        %467 = vst [vmem:[%s37 + $0x358] sm:%s29] %v466
        %v468 = vld [vmem:[%s36 + $0x36c] sm:%s29]
        %469 = vst [vmem:[%s37 + $0x35c] sm:%s29] %v468
        %v470 = vld [vmem:[%s36 + $0x350] sm:%s29]
        %471 = vst [vmem:[%s37 + $0x360] sm:%s29] %v470
        %v472 = vld [vmem:[%s36 + $0x370] sm:%s29]
        %473 = vst [vmem:[%s37 + $0x364] sm:%s29] %v472
        %v474 = vld [vmem:[%s36 + $0x354] sm:%s29]
        %475 = vst [vmem:[%s37 + $0x368] sm:%s29] %v474
        %v476 = vld [vmem:[%s36 + $0x374] sm:%s29]
        %477 = vst [vmem:[%s37 + $0x36c] sm:%s29] %v476
        %v478 = vld [vmem:[%s36 + $0x358] sm:%s29]
        %479 = vst [vmem:[%s37 + $0x370] sm:%s29] %v478
        %v480 = vld [vmem:[%s36 + $0x378] sm:%s29]
        %481 = vst [vmem:[%s37 + $0x374] sm:%s29] %v480
        %v482 = vld [vmem:[%s36 + $0x35c] sm:%s29]
        %483 = vst [vmem:[%s37 + $0x378] sm:%s29] %v482
        %v484 = vld [vmem:[%s36 + $0x37c] sm:%s29]
        %485 = vst [vmem:[%s37 + $0x37c] sm:%s29] %v484
        %v486 = vld [vmem:[%s36 + $0x380] sm:%s29]
        %487 = vst [vmem:[%s37 + $0x380] sm:%s29] %v486
        %v488 = vld [vmem:[%s36 + $0x3a0] sm:%s29]
        %489 = vst [vmem:[%s37 + $0x384] sm:%s29] %v488
        %v490 = vld [vmem:[%s36 + $0x384] sm:%s29]
        %491 = vst [vmem:[%s37 + $0x388] sm:%s29] %v490
        %v492 = vld [vmem:[%s36 + $0x3a4] sm:%s29]
        %493 = vst [vmem:[%s37 + $0x38c] sm:%s29] %v492
        %v494 = vld [vmem:[%s36 + $0x388] sm:%s29]
        %495 = vst [vmem:[%s37 + $0x390] sm:%s29] %v494
        %v496 = vld [vmem:[%s36 + $0x3a8] sm:%s29]
        %497 = vst [vmem:[%s37 + $0x394] sm:%s29] %v496
        %v498 = vld [vmem:[%s36 + $0x38c] sm:%s29]
        %499 = vst [vmem:[%s37 + $0x398] sm:%s29] %v498
        %v500 = vld [vmem:[%s36 + $0x3ac] sm:%s29]
        %501 = vst [vmem:[%s37 + $0x39c] sm:%s29] %v500
        %v502 = vld [vmem:[%s36 + $0x390] sm:%s29]
        %503 = vst [vmem:[%s37 + $0x3a0] sm:%s29] %v502
        %v504 = vld [vmem:[%s36 + $0x3b0] sm:%s29]
        %505 = vst [vmem:[%s37 + $0x3a4] sm:%s29] %v504
        %v506 = vld [vmem:[%s36 + $0x394] sm:%s29]
        %507 = vst [vmem:[%s37 + $0x3a8] sm:%s29] %v506
        %v508 = vld [vmem:[%s36 + $0x3b4] sm:%s29]
        %509 = vst [vmem:[%s37 + $0x3ac] sm:%s29] %v508
        %v510 = vld [vmem:[%s36 + $0x398] sm:%s29]
        %511 = vst [vmem:[%s37 + $0x3b0] sm:%s29] %v510
        %v512 = vld [vmem:[%s36 + $0x3b8] sm:%s29]
        %513 = vst [vmem:[%s37 + $0x3b4] sm:%s29] %v512
        %v514 = vld [vmem:[%s36 + $0x39c] sm:%s29]
        %515 = vst [vmem:[%s37 + $0x3b8] sm:%s29] %v514
        %v516 = vld [vmem:[%s36 + $0x3bc] sm:%s29]
        %517 = vst [vmem:[%s37 + $0x3bc] sm:%s29] %v516
        %v518 = vld [vmem:[%s36 + $0x3c0] sm:%s29]
        %519 = vst [vmem:[%s37 + $0x3c0] sm:%s29] %v518
        %v520 = vld [vmem:[%s36 + $0x3e0] sm:%s29]
        %521 = vst [vmem:[%s37 + $0x3c4] sm:%s29] %v520
        %v522 = vld [vmem:[%s36 + $0x3c4] sm:%s29]
        %523 = vst [vmem:[%s37 + $0x3c8] sm:%s29] %v522
        %v524 = vld [vmem:[%s36 + $0x3e4] sm:%s29]
        %525 = vst [vmem:[%s37 + $0x3cc] sm:%s29] %v524
        %v526 = vld [vmem:[%s36 + $0x3c8] sm:%s29]
        %527 = vst [vmem:[%s37 + $0x3d0] sm:%s29] %v526
        %v528 = vld [vmem:[%s36 + $0x3e8] sm:%s29]
        %529 = vst [vmem:[%s37 + $0x3d4] sm:%s29] %v528
        %v530 = vld [vmem:[%s36 + $0x3cc] sm:%s29]
        %531 = vst [vmem:[%s37 + $0x3d8] sm:%s29] %v530
        %v532 = vld [vmem:[%s36 + $0x3ec] sm:%s29]
        %533 = vst [vmem:[%s37 + $0x3dc] sm:%s29] %v532
        %v534 = vld [vmem:[%s36 + $0x3d0] sm:%s29]
        %535 = vst [vmem:[%s37 + $0x3e0] sm:%s29] %v534
        %v536 = vld [vmem:[%s36 + $0x3f0] sm:%s29]
        %537 = vst [vmem:[%s37 + $0x3e4] sm:%s29] %v536
        %v538 = vld [vmem:[%s36 + $0x3d4] sm:%s29]
        %539 = vst [vmem:[%s37 + $0x3e8] sm:%s29] %v538
        %v540 = vld [vmem:[%s36 + $0x3f4] sm:%s29]
        %541 = vst [vmem:[%s37 + $0x3ec] sm:%s29] %v540
        %v542 = vld [vmem:[%s36 + $0x3d8] sm:%s29]
        %543 = vst [vmem:[%s37 + $0x3f0] sm:%s29] %v542
        %v544 = vld [vmem:[%s36 + $0x3f8] sm:%s29]
        %545 = vst [vmem:[%s37 + $0x3f4] sm:%s29] %v544
        %v546 = vld [vmem:[%s36 + $0x3dc] sm:%s29]
        %547 = vst [vmem:[%s37 + $0x3f8] sm:%s29] %v546
        %v548 = vld [vmem:[%s36 + $0x3fc] sm:%s29]
        %549 = vst [vmem:[%s37 + $0x3fc] sm:%s29] %v548
        %v550 = vld [vmem:[%s36 + $0x400] sm:%s29]
        %551 = vst [vmem:[%s37 + $0x400] sm:%s29] %v550
        %v552 = vld [vmem:[%s36 + $0x420] sm:%s29]
        %553 = vst [vmem:[%s37 + $0x404] sm:%s29] %v552
        %v554 = vld [vmem:[%s36 + $0x404] sm:%s29]
        %555 = vst [vmem:[%s37 + $0x408] sm:%s29] %v554
        %v556 = vld [vmem:[%s36 + $0x424] sm:%s29]
        %557 = vst [vmem:[%s37 + $0x40c] sm:%s29] %v556
        %v558 = vld [vmem:[%s36 + $0x408] sm:%s29]
        %559 = vst [vmem:[%s37 + $0x410] sm:%s29] %v558
        %v560 = vld [vmem:[%s36 + $0x428] sm:%s29]
        %561 = vst [vmem:[%s37 + $0x414] sm:%s29] %v560
        %v562 = vld [vmem:[%s36 + $0x40c] sm:%s29]
        %563 = vst [vmem:[%s37 + $0x418] sm:%s29] %v562
        %v564 = vld [vmem:[%s36 + $0x42c] sm:%s29]
        %565 = vst [vmem:[%s37 + $0x41c] sm:%s29] %v564
        %v566 = vld [vmem:[%s36 + $0x410] sm:%s29]
        %567 = vst [vmem:[%s37 + $0x420] sm:%s29] %v566
        %v568 = vld [vmem:[%s36 + $0x430] sm:%s29]
        %569 = vst [vmem:[%s37 + $0x424] sm:%s29] %v568
        %v570 = vld [vmem:[%s36 + $0x414] sm:%s29]
        %571 = vst [vmem:[%s37 + $0x428] sm:%s29] %v570
        %v572 = vld [vmem:[%s36 + $0x434] sm:%s29]
        %573 = vst [vmem:[%s37 + $0x42c] sm:%s29] %v572
        %v574 = vld [vmem:[%s36 + $0x418] sm:%s29]
        %575 = vst [vmem:[%s37 + $0x430] sm:%s29] %v574
        %v576 = vld [vmem:[%s36 + $0x438] sm:%s29]
        %577 = vst [vmem:[%s37 + $0x434] sm:%s29] %v576
        %v578 = vld [vmem:[%s36 + $0x41c] sm:%s29]
        %579 = vst [vmem:[%s37 + $0x438] sm:%s29] %v578
        %v580 = vld [vmem:[%s36 + $0x43c] sm:%s29]
        %581 = vst [vmem:[%s37 + $0x43c] sm:%s29] %v580
        %v582 = vld [vmem:[%s36 + $0x440] sm:%s29]
        %583 = vst [vmem:[%s37 + $0x440] sm:%s29] %v582
        %v584 = vld [vmem:[%s36 + $0x460] sm:%s29]
        %585 = vst [vmem:[%s37 + $0x444] sm:%s29] %v584
        %v586 = vld [vmem:[%s36 + $0x444] sm:%s29]
        %587 = vst [vmem:[%s37 + $0x448] sm:%s29] %v586
        %v588 = vld [vmem:[%s36 + $0x464] sm:%s29]
        %589 = vst [vmem:[%s37 + $0x44c] sm:%s29] %v588
        %v590 = vld [vmem:[%s36 + $0x448] sm:%s29]
        %591 = vst [vmem:[%s37 + $0x450] sm:%s29] %v590
        %v592 = vld [vmem:[%s36 + $0x468] sm:%s29]
        %593 = vst [vmem:[%s37 + $0x454] sm:%s29] %v592
        %v594 = vld [vmem:[%s36 + $0x44c] sm:%s29]
        %595 = vst [vmem:[%s37 + $0x458] sm:%s29] %v594
        %v596 = vld [vmem:[%s36 + $0x46c] sm:%s29]
        %597 = vst [vmem:[%s37 + $0x45c] sm:%s29] %v596
        %v598 = vld [vmem:[%s36 + $0x450] sm:%s29]
        %599 = vst [vmem:[%s37 + $0x460] sm:%s29] %v598
        %v600 = vld [vmem:[%s36 + $0x470] sm:%s29]
        %601 = vst [vmem:[%s37 + $0x464] sm:%s29] %v600
        %v602 = vld [vmem:[%s36 + $0x454] sm:%s29]
        %603 = vst [vmem:[%s37 + $0x468] sm:%s29] %v602
        %v604 = vld [vmem:[%s36 + $0x474] sm:%s29]
        %605 = vst [vmem:[%s37 + $0x46c] sm:%s29] %v604
        %v606 = vld [vmem:[%s36 + $0x458] sm:%s29]
        %607 = vst [vmem:[%s37 + $0x470] sm:%s29] %v606
        %v608 = vld [vmem:[%s36 + $0x478] sm:%s29]
        %609 = vst [vmem:[%s37 + $0x474] sm:%s29] %v608
        %v610 = vld [vmem:[%s36 + $0x45c] sm:%s29]
        %611 = vst [vmem:[%s37 + $0x478] sm:%s29] %v610
        %v612 = vld [vmem:[%s36 + $0x47c] sm:%s29]
        %613 = vst [vmem:[%s37 + $0x47c] sm:%s29] %v612
        %v614 = vld [vmem:[%s36 + $0x480] sm:%s29]
        %615 = vst [vmem:[%s37 + $0x480] sm:%s29] %v614
        %v616 = vld [vmem:[%s36 + $0x4a0] sm:%s29]
        %617 = vst [vmem:[%s37 + $0x484] sm:%s29] %v616
        %v618 = vld [vmem:[%s36 + $0x484] sm:%s29]
        %619 = vst [vmem:[%s37 + $0x488] sm:%s29] %v618
        %v620 = vld [vmem:[%s36 + $0x4a4] sm:%s29]
        %621 = vst [vmem:[%s37 + $0x48c] sm:%s29] %v620
        %v622 = vld [vmem:[%s36 + $0x488] sm:%s29]
        %623 = vst [vmem:[%s37 + $0x490] sm:%s29] %v622
        %v624 = vld [vmem:[%s36 + $0x4a8] sm:%s29]
        %625 = vst [vmem:[%s37 + $0x494] sm:%s29] %v624
        %v626 = vld [vmem:[%s36 + $0x48c] sm:%s29]
        %627 = vst [vmem:[%s37 + $0x498] sm:%s29] %v626
        %v628 = vld [vmem:[%s36 + $0x4ac] sm:%s29]
        %629 = vst [vmem:[%s37 + $0x49c] sm:%s29] %v628
        %v630 = vld [vmem:[%s36 + $0x490] sm:%s29]
        %631 = vst [vmem:[%s37 + $0x4a0] sm:%s29] %v630
        %v632 = vld [vmem:[%s36 + $0x4b0] sm:%s29]
        %633 = vst [vmem:[%s37 + $0x4a4] sm:%s29] %v632
        %v634 = vld [vmem:[%s36 + $0x494] sm:%s29]
        %635 = vst [vmem:[%s37 + $0x4a8] sm:%s29] %v634
        %v636 = vld [vmem:[%s36 + $0x4b4] sm:%s29]
        %637 = vst [vmem:[%s37 + $0x4ac] sm:%s29] %v636
        %v638 = vld [vmem:[%s36 + $0x498] sm:%s29]
        %639 = vst [vmem:[%s37 + $0x4b0] sm:%s29] %v638
        %v640 = vld [vmem:[%s36 + $0x4b8] sm:%s29]
        %641 = vst [vmem:[%s37 + $0x4b4] sm:%s29] %v640
        %v642 = vld [vmem:[%s36 + $0x49c] sm:%s29]
        %643 = vst [vmem:[%s37 + $0x4b8] sm:%s29] %v642
        %v644 = vld [vmem:[%s36 + $0x4bc] sm:%s29]
        %645 = vst [vmem:[%s37 + $0x4bc] sm:%s29] %v644
        %v646 = vld [vmem:[%s36 + $0x4c0] sm:%s29]
        %647 = vst [vmem:[%s37 + $0x4c0] sm:%s29] %v646
        %v648 = vld [vmem:[%s36 + $0x4e0] sm:%s29]
        %649 = vst [vmem:[%s37 + $0x4c4] sm:%s29] %v648
        %v650 = vld [vmem:[%s36 + $0x4c4] sm:%s29]
        %651 = vst [vmem:[%s37 + $0x4c8] sm:%s29] %v650
        %v652 = vld [vmem:[%s36 + $0x4e4] sm:%s29]
        %653 = vst [vmem:[%s37 + $0x4cc] sm:%s29] %v652
        %v654 = vld [vmem:[%s36 + $0x4c8] sm:%s29]
        %655 = vst [vmem:[%s37 + $0x4d0] sm:%s29] %v654
        %v656 = vld [vmem:[%s36 + $0x4e8] sm:%s29]
        %657 = vst [vmem:[%s37 + $0x4d4] sm:%s29] %v656
        %v658 = vld [vmem:[%s36 + $0x4cc] sm:%s29]
        %659 = vst [vmem:[%s37 + $0x4d8] sm:%s29] %v658
        %v660 = vld [vmem:[%s36 + $0x4ec] sm:%s29]
        %661 = vst [vmem:[%s37 + $0x4dc] sm:%s29] %v660
        %v662 = vld [vmem:[%s36 + $0x4d0] sm:%s29]
        %663 = vst [vmem:[%s37 + $0x4e0] sm:%s29] %v662
        %v664 = vld [vmem:[%s36 + $0x4f0] sm:%s29]
        %665 = vst [vmem:[%s37 + $0x4e4] sm:%s29] %v664
        %v666 = vld [vmem:[%s36 + $0x4d4] sm:%s29]
        %667 = vst [vmem:[%s37 + $0x4e8] sm:%s29] %v666
        %v668 = vld [vmem:[%s36 + $0x4f4] sm:%s29]
        %669 = vst [vmem:[%s37 + $0x4ec] sm:%s29] %v668
        %v670 = vld [vmem:[%s36 + $0x4d8] sm:%s29]
        %671 = vst [vmem:[%s37 + $0x4f0] sm:%s29] %v670
        %v672 = vld [vmem:[%s36 + $0x4f8] sm:%s29]
        %673 = vst [vmem:[%s37 + $0x4f4] sm:%s29] %v672
        %v674 = vld [vmem:[%s36 + $0x4dc] sm:%s29]
        %675 = vst [vmem:[%s37 + $0x4f8] sm:%s29] %v674
        %v676 = vld [vmem:[%s36 + $0x4fc] sm:%s29]
        %677 = vst [vmem:[%s37 + $0x4fc] sm:%s29] %v676
        %v678 = vld [vmem:[%s36 + $0x500] sm:%s29]
        %679 = vst [vmem:[%s37 + $0x500] sm:%s29] %v678
        %v680 = vld [vmem:[%s36 + $0x520] sm:%s29]
        %681 = vst [vmem:[%s37 + $0x504] sm:%s29] %v680
        %v682 = vld [vmem:[%s36 + $0x504] sm:%s29]
        %683 = vst [vmem:[%s37 + $0x508] sm:%s29] %v682
        %v684 = vld [vmem:[%s36 + $0x524] sm:%s29]
        %685 = vst [vmem:[%s37 + $0x50c] sm:%s29] %v684
        %v686 = vld [vmem:[%s36 + $0x508] sm:%s29]
        %687 = vst [vmem:[%s37 + $0x510] sm:%s29] %v686
        %v688 = vld [vmem:[%s36 + $0x528] sm:%s29]
        %689 = vst [vmem:[%s37 + $0x514] sm:%s29] %v688
        %v690 = vld [vmem:[%s36 + $0x50c] sm:%s29]
        %691 = vst [vmem:[%s37 + $0x518] sm:%s29] %v690
        %v692 = vld [vmem:[%s36 + $0x52c] sm:%s29]
        %693 = vst [vmem:[%s37 + $0x51c] sm:%s29] %v692
        %v694 = vld [vmem:[%s36 + $0x510] sm:%s29]
        %695 = vst [vmem:[%s37 + $0x520] sm:%s29] %v694
        %v696 = vld [vmem:[%s36 + $0x530] sm:%s29]
        %697 = vst [vmem:[%s37 + $0x524] sm:%s29] %v696
        %v698 = vld [vmem:[%s36 + $0x514] sm:%s29]
        %699 = vst [vmem:[%s37 + $0x528] sm:%s29] %v698
        %v700 = vld [vmem:[%s36 + $0x534] sm:%s29]
        %701 = vst [vmem:[%s37 + $0x52c] sm:%s29] %v700
        %v702 = vld [vmem:[%s36 + $0x518] sm:%s29]
        %703 = vst [vmem:[%s37 + $0x530] sm:%s29] %v702
        %v704 = vld [vmem:[%s36 + $0x538] sm:%s29]
        %705 = vst [vmem:[%s37 + $0x534] sm:%s29] %v704
        %v706 = vld [vmem:[%s36 + $0x51c] sm:%s29]
        %707 = vst [vmem:[%s37 + $0x538] sm:%s29] %v706
        %v708 = vld [vmem:[%s36 + $0x53c] sm:%s29]
        %709 = vst [vmem:[%s37 + $0x53c] sm:%s29] %v708
        %v710 = vld [vmem:[%s36 + $0x540] sm:%s29]
        %711 = vst [vmem:[%s37 + $0x540] sm:%s29] %v710
        %v712 = vld [vmem:[%s36 + $0x560] sm:%s29]
        %713 = vst [vmem:[%s37 + $0x544] sm:%s29] %v712
        %v714 = vld [vmem:[%s36 + $0x544] sm:%s29]
        %715 = vst [vmem:[%s37 + $0x548] sm:%s29] %v714
        %v716 = vld [vmem:[%s36 + $0x564] sm:%s29]
        %717 = vst [vmem:[%s37 + $0x54c] sm:%s29] %v716
        %v718 = vld [vmem:[%s36 + $0x548] sm:%s29]
        %719 = vst [vmem:[%s37 + $0x550] sm:%s29] %v718
        %v720 = vld [vmem:[%s36 + $0x568] sm:%s29]
        %721 = vst [vmem:[%s37 + $0x554] sm:%s29] %v720
        %v722 = vld [vmem:[%s36 + $0x54c] sm:%s29]
        %723 = vst [vmem:[%s37 + $0x558] sm:%s29] %v722
        %v724 = vld [vmem:[%s36 + $0x56c] sm:%s29]
        %725 = vst [vmem:[%s37 + $0x55c] sm:%s29] %v724
        %v726 = vld [vmem:[%s36 + $0x550] sm:%s29]
        %727 = vst [vmem:[%s37 + $0x560] sm:%s29] %v726
        %v728 = vld [vmem:[%s36 + $0x570] sm:%s29]
        %729 = vst [vmem:[%s37 + $0x564] sm:%s29] %v728
        %v730 = vld [vmem:[%s36 + $0x554] sm:%s29]
        %731 = vst [vmem:[%s37 + $0x568] sm:%s29] %v730
        %v732 = vld [vmem:[%s36 + $0x574] sm:%s29]
        %733 = vst [vmem:[%s37 + $0x56c] sm:%s29] %v732
        %v734 = vld [vmem:[%s36 + $0x558] sm:%s29]
        %735 = vst [vmem:[%s37 + $0x570] sm:%s29] %v734
        %v736 = vld [vmem:[%s36 + $0x578] sm:%s29]
        %737 = vst [vmem:[%s37 + $0x574] sm:%s29] %v736
        %v738 = vld [vmem:[%s36 + $0x55c] sm:%s29]
        %739 = vst [vmem:[%s37 + $0x578] sm:%s29] %v738
        %v740 = vld [vmem:[%s36 + $0x57c] sm:%s29]
        %741 = vst [vmem:[%s37 + $0x57c] sm:%s29] %v740
        %v742 = vld [vmem:[%s36 + $0x580] sm:%s29]
        %743 = vst [vmem:[%s37 + $0x580] sm:%s29] %v742
        %v744 = vld [vmem:[%s36 + $0x5a0] sm:%s29]
        %745 = vst [vmem:[%s37 + $0x584] sm:%s29] %v744
        %v746 = vld [vmem:[%s36 + $0x584] sm:%s29]
        %747 = vst [vmem:[%s37 + $0x588] sm:%s29] %v746
        %v748 = vld [vmem:[%s36 + $0x5a4] sm:%s29]
        %749 = vst [vmem:[%s37 + $0x58c] sm:%s29] %v748
        %v750 = vld [vmem:[%s36 + $0x588] sm:%s29]
        %751 = vst [vmem:[%s37 + $0x590] sm:%s29] %v750
        %v752 = vld [vmem:[%s36 + $0x5a8] sm:%s29]
        %753 = vst [vmem:[%s37 + $0x594] sm:%s29] %v752
        %v754 = vld [vmem:[%s36 + $0x58c] sm:%s29]
        %755 = vst [vmem:[%s37 + $0x598] sm:%s29] %v754
        %v756 = vld [vmem:[%s36 + $0x5ac] sm:%s29]
        %757 = vst [vmem:[%s37 + $0x59c] sm:%s29] %v756
        %v758 = vld [vmem:[%s36 + $0x590] sm:%s29]
        %759 = vst [vmem:[%s37 + $0x5a0] sm:%s29] %v758
        %v760 = vld [vmem:[%s36 + $0x5b0] sm:%s29]
        %761 = vst [vmem:[%s37 + $0x5a4] sm:%s29] %v760
        %v762 = vld [vmem:[%s36 + $0x594] sm:%s29]
        %763 = vst [vmem:[%s37 + $0x5a8] sm:%s29] %v762
        %v764 = vld [vmem:[%s36 + $0x5b4] sm:%s29]
        %765 = vst [vmem:[%s37 + $0x5ac] sm:%s29] %v764
        %v766 = vld [vmem:[%s36 + $0x598] sm:%s29]
        %767 = vst [vmem:[%s37 + $0x5b0] sm:%s29] %v766
        %v768 = vld [vmem:[%s36 + $0x5b8] sm:%s29]
        %769 = vst [vmem:[%s37 + $0x5b4] sm:%s29] %v768
        %v770 = vld [vmem:[%s36 + $0x59c] sm:%s29]
        %771 = vst [vmem:[%s37 + $0x5b8] sm:%s29] %v770
        %v772 = vld [vmem:[%s36 + $0x5bc] sm:%s29]
        %773 = vst [vmem:[%s37 + $0x5bc] sm:%s29] %v772
        %v774 = vld [vmem:[%s36 + $0x5c0] sm:%s29]
        %775 = vst [vmem:[%s37 + $0x5c0] sm:%s29] %v774
        %v776 = vld [vmem:[%s36 + $0x5e0] sm:%s29]
        %777 = vst [vmem:[%s37 + $0x5c4] sm:%s29] %v776
        %v778 = vld [vmem:[%s36 + $0x5c4] sm:%s29]
        %779 = vst [vmem:[%s37 + $0x5c8] sm:%s29] %v778
        %v780 = vld [vmem:[%s36 + $0x5e4] sm:%s29]
        %781 = vst [vmem:[%s37 + $0x5cc] sm:%s29] %v780
        %v782 = vld [vmem:[%s36 + $0x5c8] sm:%s29]
        %783 = vst [vmem:[%s37 + $0x5d0] sm:%s29] %v782
        %v784 = vld [vmem:[%s36 + $0x5e8] sm:%s29]
        %785 = vst [vmem:[%s37 + $0x5d4] sm:%s29] %v784
        %v786 = vld [vmem:[%s36 + $0x5cc] sm:%s29]
        %787 = vst [vmem:[%s37 + $0x5d8] sm:%s29] %v786
        %v788 = vld [vmem:[%s36 + $0x5ec] sm:%s29]
        %789 = vst [vmem:[%s37 + $0x5dc] sm:%s29] %v788
        %v790 = vld [vmem:[%s36 + $0x5d0] sm:%s29]
        %791 = vst [vmem:[%s37 + $0x5e0] sm:%s29] %v790
        %v792 = vld [vmem:[%s36 + $0x5f0] sm:%s29]
        %793 = vst [vmem:[%s37 + $0x5e4] sm:%s29] %v792
        %v794 = vld [vmem:[%s36 + $0x5d4] sm:%s29]
        %795 = vst [vmem:[%s37 + $0x5e8] sm:%s29] %v794
        %v796 = vld [vmem:[%s36 + $0x5f4] sm:%s29]
        %797 = vst [vmem:[%s37 + $0x5ec] sm:%s29] %v796
        %v798 = vld [vmem:[%s36 + $0x5d8] sm:%s29]
        %799 = vst [vmem:[%s37 + $0x5f0] sm:%s29] %v798
        %v800 = vld [vmem:[%s36 + $0x5f8] sm:%s29]
        %801 = vst [vmem:[%s37 + $0x5f4] sm:%s29] %v800
        %v802 = vld [vmem:[%s36 + $0x5dc] sm:%s29]
        %803 = vst [vmem:[%s37 + $0x5f8] sm:%s29] %v802
        %v804 = vld [vmem:[%s36 + $0x5fc] sm:%s29]
        %805 = vst [vmem:[%s37 + $0x5fc] sm:%s29] %v804
        %v806 = vld [vmem:[%s36 + $0x600] sm:%s29]
        %807 = vst [vmem:[%s37 + $0x600] sm:%s29] %v806
        %v808 = vld [vmem:[%s36 + $0x620] sm:%s29]
        %809 = vst [vmem:[%s37 + $0x604] sm:%s29] %v808
        %v810 = vld [vmem:[%s36 + $0x604] sm:%s29]
        %811 = vst [vmem:[%s37 + $0x608] sm:%s29] %v810
        %v812 = vld [vmem:[%s36 + $0x624] sm:%s29]
        %813 = vst [vmem:[%s37 + $0x60c] sm:%s29] %v812
        %v814 = vld [vmem:[%s36 + $0x608] sm:%s29]
        %815 = vst [vmem:[%s37 + $0x610] sm:%s29] %v814
        %v816 = vld [vmem:[%s36 + $0x628] sm:%s29]
        %817 = vst [vmem:[%s37 + $0x614] sm:%s29] %v816
        %v818 = vld [vmem:[%s36 + $0x60c] sm:%s29]
        %819 = vst [vmem:[%s37 + $0x618] sm:%s29] %v818
        %v820 = vld [vmem:[%s36 + $0x62c] sm:%s29]
        %821 = vst [vmem:[%s37 + $0x61c] sm:%s29] %v820
        %v822 = vld [vmem:[%s36 + $0x610] sm:%s29]
        %823 = vst [vmem:[%s37 + $0x620] sm:%s29] %v822
        %v824 = vld [vmem:[%s36 + $0x630] sm:%s29]
        %825 = vst [vmem:[%s37 + $0x624] sm:%s29] %v824
        %v826 = vld [vmem:[%s36 + $0x614] sm:%s29]
        %827 = vst [vmem:[%s37 + $0x628] sm:%s29] %v826
        %v828 = vld [vmem:[%s36 + $0x634] sm:%s29]
        %829 = vst [vmem:[%s37 + $0x62c] sm:%s29] %v828
        %v830 = vld [vmem:[%s36 + $0x618] sm:%s29]
        %831 = vst [vmem:[%s37 + $0x630] sm:%s29] %v830
        %v832 = vld [vmem:[%s36 + $0x638] sm:%s29]
        %833 = vst [vmem:[%s37 + $0x634] sm:%s29] %v832
        %v834 = vld [vmem:[%s36 + $0x61c] sm:%s29]
        %835 = vst [vmem:[%s37 + $0x638] sm:%s29] %v834
        %v836 = vld [vmem:[%s36 + $0x63c] sm:%s29]
        %837 = vst [vmem:[%s37 + $0x63c] sm:%s29] %v836
        %v838 = vld [vmem:[%s36 + $0x640] sm:%s29]
        %839 = vst [vmem:[%s37 + $0x640] sm:%s29] %v838
        %v840 = vld [vmem:[%s36 + $0x660] sm:%s29]
        %841 = vst [vmem:[%s37 + $0x644] sm:%s29] %v840
        %v842 = vld [vmem:[%s36 + $0x644] sm:%s29]
        %843 = vst [vmem:[%s37 + $0x648] sm:%s29] %v842
        %v844 = vld [vmem:[%s36 + $0x664] sm:%s29]
        %845 = vst [vmem:[%s37 + $0x64c] sm:%s29] %v844
        %v846 = vld [vmem:[%s36 + $0x648] sm:%s29]
        %847 = vst [vmem:[%s37 + $0x650] sm:%s29] %v846
        %v848 = vld [vmem:[%s36 + $0x668] sm:%s29]
        %849 = vst [vmem:[%s37 + $0x654] sm:%s29] %v848
        %v850 = vld [vmem:[%s36 + $0x64c] sm:%s29]
        %851 = vst [vmem:[%s37 + $0x658] sm:%s29] %v850
        %v852 = vld [vmem:[%s36 + $0x66c] sm:%s29]
        %853 = vst [vmem:[%s37 + $0x65c] sm:%s29] %v852
        %v854 = vld [vmem:[%s36 + $0x650] sm:%s29]
        %855 = vst [vmem:[%s37 + $0x660] sm:%s29] %v854
        %v856 = vld [vmem:[%s36 + $0x670] sm:%s29]
        %857 = vst [vmem:[%s37 + $0x664] sm:%s29] %v856
        %v858 = vld [vmem:[%s36 + $0x654] sm:%s29]
        %859 = vst [vmem:[%s37 + $0x668] sm:%s29] %v858
        %v860 = vld [vmem:[%s36 + $0x674] sm:%s29]
        %861 = vst [vmem:[%s37 + $0x66c] sm:%s29] %v860
        %v862 = vld [vmem:[%s36 + $0x658] sm:%s29]
        %863 = vst [vmem:[%s37 + $0x670] sm:%s29] %v862
        %v864 = vld [vmem:[%s36 + $0x678] sm:%s29]
        %865 = vst [vmem:[%s37 + $0x674] sm:%s29] %v864
        %v866 = vld [vmem:[%s36 + $0x65c] sm:%s29]
        %867 = vst [vmem:[%s37 + $0x678] sm:%s29] %v866
        %v868 = vld [vmem:[%s36 + $0x67c] sm:%s29]
        %869 = vst [vmem:[%s37 + $0x67c] sm:%s29] %v868
        %v870 = vld [vmem:[%s36 + $0x680] sm:%s29]
        %871 = vst [vmem:[%s37 + $0x680] sm:%s29] %v870
        %v872 = vld [vmem:[%s36 + $0x6a0] sm:%s29]
        %873 = vst [vmem:[%s37 + $0x684] sm:%s29] %v872
        %v874 = vld [vmem:[%s36 + $0x684] sm:%s29]
        %875 = vst [vmem:[%s37 + $0x688] sm:%s29] %v874
        %v876 = vld [vmem:[%s36 + $0x6a4] sm:%s29]
        %877 = vst [vmem:[%s37 + $0x68c] sm:%s29] %v876
        %v878 = vld [vmem:[%s36 + $0x688] sm:%s29]
        %879 = vst [vmem:[%s37 + $0x690] sm:%s29] %v878
        %v880 = vld [vmem:[%s36 + $0x6a8] sm:%s29]
        %881 = vst [vmem:[%s37 + $0x694] sm:%s29] %v880
        %v882 = vld [vmem:[%s36 + $0x68c] sm:%s29]
        %883 = vst [vmem:[%s37 + $0x698] sm:%s29] %v882
        %v884 = vld [vmem:[%s36 + $0x6ac] sm:%s29]
        %885 = vst [vmem:[%s37 + $0x69c] sm:%s29] %v884
        %v886 = vld [vmem:[%s36 + $0x690] sm:%s29]
        %887 = vst [vmem:[%s37 + $0x6a0] sm:%s29] %v886
        %v888 = vld [vmem:[%s36 + $0x6b0] sm:%s29]
        %889 = vst [vmem:[%s37 + $0x6a4] sm:%s29] %v888
        %v890 = vld [vmem:[%s36 + $0x694] sm:%s29]
        %891 = vst [vmem:[%s37 + $0x6a8] sm:%s29] %v890
        %v892 = vld [vmem:[%s36 + $0x6b4] sm:%s29]
        %893 = vst [vmem:[%s37 + $0x6ac] sm:%s29] %v892
        %v894 = vld [vmem:[%s36 + $0x698] sm:%s29]
        %895 = vst [vmem:[%s37 + $0x6b0] sm:%s29] %v894
        %v896 = vld [vmem:[%s36 + $0x6b8] sm:%s29]
        %897 = vst [vmem:[%s37 + $0x6b4] sm:%s29] %v896
        %v898 = vld [vmem:[%s36 + $0x69c] sm:%s29]
        %899 = vst [vmem:[%s37 + $0x6b8] sm:%s29] %v898
        %v900 = vld [vmem:[%s36 + $0x6bc] sm:%s29]
        %901 = vst [vmem:[%s37 + $0x6bc] sm:%s29] %v900
        %v902 = vld [vmem:[%s36 + $0x6c0] sm:%s29]
        %903 = vst [vmem:[%s37 + $0x6c0] sm:%s29] %v902
        %v904 = vld [vmem:[%s36 + $0x6e0] sm:%s29]
        %905 = vst [vmem:[%s37 + $0x6c4] sm:%s29] %v904
        %v906 = vld [vmem:[%s36 + $0x6c4] sm:%s29]
        %907 = vst [vmem:[%s37 + $0x6c8] sm:%s29] %v906
        %v908 = vld [vmem:[%s36 + $0x6e4] sm:%s29]
        %909 = vst [vmem:[%s37 + $0x6cc] sm:%s29] %v908
        %v910 = vld [vmem:[%s36 + $0x6c8] sm:%s29]
        %911 = vst [vmem:[%s37 + $0x6d0] sm:%s29] %v910
        %v912 = vld [vmem:[%s36 + $0x6e8] sm:%s29]
        %913 = vst [vmem:[%s37 + $0x6d4] sm:%s29] %v912
        %v914 = vld [vmem:[%s36 + $0x6cc] sm:%s29]
        %915 = vst [vmem:[%s37 + $0x6d8] sm:%s29] %v914
        %v916 = vld [vmem:[%s36 + $0x6ec] sm:%s29]
        %917 = vst [vmem:[%s37 + $0x6dc] sm:%s29] %v916
        %v918 = vld [vmem:[%s36 + $0x6d0] sm:%s29]
        %919 = vst [vmem:[%s37 + $0x6e0] sm:%s29] %v918
        %v920 = vld [vmem:[%s36 + $0x6f0] sm:%s29]
        %921 = vst [vmem:[%s37 + $0x6e4] sm:%s29] %v920
        %v922 = vld [vmem:[%s36 + $0x6d4] sm:%s29]
        %923 = vst [vmem:[%s37 + $0x6e8] sm:%s29] %v922
        %v924 = vld [vmem:[%s36 + $0x6f4] sm:%s29]
        %925 = vst [vmem:[%s37 + $0x6ec] sm:%s29] %v924
        %v926 = vld [vmem:[%s36 + $0x6d8] sm:%s29]
        %927 = vst [vmem:[%s37 + $0x6f0] sm:%s29] %v926
        %v928 = vld [vmem:[%s36 + $0x6f8] sm:%s29]
        %929 = vst [vmem:[%s37 + $0x6f4] sm:%s29] %v928
        %v930 = vld [vmem:[%s36 + $0x6dc] sm:%s29]
        %931 = vst [vmem:[%s37 + $0x6f8] sm:%s29] %v930
        %v932 = vld [vmem:[%s36 + $0x6fc] sm:%s29]
        %933 = vst [vmem:[%s37 + $0x6fc] sm:%s29] %v932
        %v934 = vld [vmem:[%s36 + $0x700] sm:%s29]
        %935 = vst [vmem:[%s37 + $0x700] sm:%s29] %v934
        %v936 = vld [vmem:[%s36 + $0x720] sm:%s29]
        %937 = vst [vmem:[%s37 + $0x704] sm:%s29] %v936
        %v938 = vld [vmem:[%s36 + $0x704] sm:%s29]
        %939 = vst [vmem:[%s37 + $0x708] sm:%s29] %v938
        %v940 = vld [vmem:[%s36 + $0x724] sm:%s29]
        %941 = vst [vmem:[%s37 + $0x70c] sm:%s29] %v940
        %v942 = vld [vmem:[%s36 + $0x708] sm:%s29]
        %943 = vst [vmem:[%s37 + $0x710] sm:%s29] %v942
        %v944 = vld [vmem:[%s36 + $0x728] sm:%s29]
        %945 = vst [vmem:[%s37 + $0x714] sm:%s29] %v944
        %v946 = vld [vmem:[%s36 + $0x70c] sm:%s29]
        %947 = vst [vmem:[%s37 + $0x718] sm:%s29] %v946
        %v948 = vld [vmem:[%s36 + $0x72c] sm:%s29]
        %949 = vst [vmem:[%s37 + $0x71c] sm:%s29] %v948
        %v950 = vld [vmem:[%s36 + $0x710] sm:%s29]
        %951 = vst [vmem:[%s37 + $0x720] sm:%s29] %v950
        %v952 = vld [vmem:[%s36 + $0x730] sm:%s29]
        %953 = vst [vmem:[%s37 + $0x724] sm:%s29] %v952
        %v954 = vld [vmem:[%s36 + $0x714] sm:%s29]
        %955 = vst [vmem:[%s37 + $0x728] sm:%s29] %v954
        %v956 = vld [vmem:[%s36 + $0x734] sm:%s29]
        %957 = vst [vmem:[%s37 + $0x72c] sm:%s29] %v956
        %v958 = vld [vmem:[%s36 + $0x718] sm:%s29]
        %959 = vst [vmem:[%s37 + $0x730] sm:%s29] %v958
        %v960 = vld [vmem:[%s36 + $0x738] sm:%s29]
        %961 = vst [vmem:[%s37 + $0x734] sm:%s29] %v960
        %v962 = vld [vmem:[%s36 + $0x71c] sm:%s29]
        %963 = vst [vmem:[%s37 + $0x738] sm:%s29] %v962
        %v964 = vld [vmem:[%s36 + $0x73c] sm:%s29]
        %965 = vst [vmem:[%s37 + $0x73c] sm:%s29] %v964
        %v966 = vld [vmem:[%s36 + $0x740] sm:%s29]
        %967 = vst [vmem:[%s37 + $0x740] sm:%s29] %v966
        %v968 = vld [vmem:[%s36 + $0x760] sm:%s29]
        %969 = vst [vmem:[%s37 + $0x744] sm:%s29] %v968
        %v970 = vld [vmem:[%s36 + $0x744] sm:%s29]
        %971 = vst [vmem:[%s37 + $0x748] sm:%s29] %v970
        %v972 = vld [vmem:[%s36 + $0x764] sm:%s29]
        %973 = vst [vmem:[%s37 + $0x74c] sm:%s29] %v972
        %v974 = vld [vmem:[%s36 + $0x748] sm:%s29]
        %975 = vst [vmem:[%s37 + $0x750] sm:%s29] %v974
        %v976 = vld [vmem:[%s36 + $0x768] sm:%s29]
        %977 = vst [vmem:[%s37 + $0x754] sm:%s29] %v976
        %v978 = vld [vmem:[%s36 + $0x74c] sm:%s29]
        %979 = vst [vmem:[%s37 + $0x758] sm:%s29] %v978
        %v980 = vld [vmem:[%s36 + $0x76c] sm:%s29]
        %981 = vst [vmem:[%s37 + $0x75c] sm:%s29] %v980
        %v982 = vld [vmem:[%s36 + $0x750] sm:%s29]
        %983 = vst [vmem:[%s37 + $0x760] sm:%s29] %v982
        %v984 = vld [vmem:[%s36 + $0x770] sm:%s29]
        %985 = vst [vmem:[%s37 + $0x764] sm:%s29] %v984
        %v986 = vld [vmem:[%s36 + $0x754] sm:%s29]
        %987 = vst [vmem:[%s37 + $0x768] sm:%s29] %v986
        %v988 = vld [vmem:[%s36 + $0x774] sm:%s29]
        %989 = vst [vmem:[%s37 + $0x76c] sm:%s29] %v988
        %v990 = vld [vmem:[%s36 + $0x758] sm:%s29]
        %991 = vst [vmem:[%s37 + $0x770] sm:%s29] %v990
        %v992 = vld [vmem:[%s36 + $0x778] sm:%s29]
        %993 = vst [vmem:[%s37 + $0x774] sm:%s29] %v992
        %v994 = vld [vmem:[%s36 + $0x75c] sm:%s29]
        %995 = vst [vmem:[%s37 + $0x778] sm:%s29] %v994
        %v996 = vld [vmem:[%s36 + $0x77c] sm:%s29]
        %997 = vst [vmem:[%s37 + $0x77c] sm:%s29] %v996
        %v998 = vld [vmem:[%s36 + $0x780] sm:%s29]
        %999 = vst [vmem:[%s37 + $0x780] sm:%s29] %v998
        %v1000 = vld [vmem:[%s36 + $0x7a0] sm:%s29]
        %1001 = vst [vmem:[%s37 + $0x784] sm:%s29] %v1000
        %v1002 = vld [vmem:[%s36 + $0x784] sm:%s29]
        %1003 = vst [vmem:[%s37 + $0x788] sm:%s29] %v1002
        %v1004 = vld [vmem:[%s36 + $0x7a4] sm:%s29]
        %1005 = vst [vmem:[%s37 + $0x78c] sm:%s29] %v1004
        %v1006 = vld [vmem:[%s36 + $0x788] sm:%s29]
        %1007 = vst [vmem:[%s37 + $0x790] sm:%s29] %v1006
        %v1008 = vld [vmem:[%s36 + $0x7a8] sm:%s29]
        %1009 = vst [vmem:[%s37 + $0x794] sm:%s29] %v1008
        %v1010 = vld [vmem:[%s36 + $0x78c] sm:%s29]
        %1011 = vst [vmem:[%s37 + $0x798] sm:%s29] %v1010
        %v1012 = vld [vmem:[%s36 + $0x7ac] sm:%s29]
        %1013 = vst [vmem:[%s37 + $0x79c] sm:%s29] %v1012
        %v1014 = vld [vmem:[%s36 + $0x790] sm:%s29]
        %1015 = vst [vmem:[%s37 + $0x7a0] sm:%s29] %v1014
        %v1016 = vld [vmem:[%s36 + $0x7b0] sm:%s29]
        %1017 = vst [vmem:[%s37 + $0x7a4] sm:%s29] %v1016
        %v1018 = vld [vmem:[%s36 + $0x794] sm:%s29]
        %1019 = vst [vmem:[%s37 + $0x7a8] sm:%s29] %v1018
        %v1020 = vld [vmem:[%s36 + $0x7b4] sm:%s29]
        %1021 = vst [vmem:[%s37 + $0x7ac] sm:%s29] %v1020
        %v1022 = vld [vmem:[%s36 + $0x798] sm:%s29]
        %1023 = vst [vmem:[%s37 + $0x7b0] sm:%s29] %v1022
        %v1024 = vld [vmem:[%s36 + $0x7b8] sm:%s29]
        %1025 = vst [vmem:[%s37 + $0x7b4] sm:%s29] %v1024
        %v1026 = vld [vmem:[%s36 + $0x79c] sm:%s29]
        %1027 = vst [vmem:[%s37 + $0x7b8] sm:%s29] %v1026
        %v1028 = vld [vmem:[%s36 + $0x7bc] sm:%s29]
        %1029 = vst [vmem:[%s37 + $0x7bc] sm:%s29] %v1028
        %v1030 = vld [vmem:[%s36 + $0x7c0] sm:%s29]
        %1031 = vst [vmem:[%s37 + $0x7c0] sm:%s29] %v1030
        %v1032 = vld [vmem:[%s36 + $0x7e0] sm:%s29]
        %1033 = vst [vmem:[%s37 + $0x7c4] sm:%s29] %v1032
        %v1034 = vld [vmem:[%s36 + $0x7c4] sm:%s29]
        %1035 = vst [vmem:[%s37 + $0x7c8] sm:%s29] %v1034
        %v1036 = vld [vmem:[%s36 + $0x7e4] sm:%s29]
        %1037 = vst [vmem:[%s37 + $0x7cc] sm:%s29] %v1036
        %v1038 = vld [vmem:[%s36 + $0x7c8] sm:%s29]
        %1039 = vst [vmem:[%s37 + $0x7d0] sm:%s29] %v1038
        %v1040 = vld [vmem:[%s36 + $0x7e8] sm:%s29]
        %1041 = vst [vmem:[%s37 + $0x7d4] sm:%s29] %v1040
        %v1042 = vld [vmem:[%s36 + $0x7cc] sm:%s29]
        %1043 = vst [vmem:[%s37 + $0x7d8] sm:%s29] %v1042
        %v1044 = vld [vmem:[%s36 + $0x7ec] sm:%s29]
        %1045 = vst [vmem:[%s37 + $0x7dc] sm:%s29] %v1044
        %v1046 = vld [vmem:[%s36 + $0x7d0] sm:%s29]
        %1047 = vst [vmem:[%s37 + $0x7e0] sm:%s29] %v1046
        %v1048 = vld [vmem:[%s36 + $0x7f0] sm:%s29]
        %1049 = vst [vmem:[%s37 + $0x7e4] sm:%s29] %v1048
        %v1050 = vld [vmem:[%s36 + $0x7d4] sm:%s29]
        %1051 = vst [vmem:[%s37 + $0x7e8] sm:%s29] %v1050
        %v1052 = vld [vmem:[%s36 + $0x7f4] sm:%s29]
        %1053 = vst [vmem:[%s37 + $0x7ec] sm:%s29] %v1052
        %v1054 = vld [vmem:[%s36 + $0x7d8] sm:%s29]
        %1055 = vst [vmem:[%s37 + $0x7f0] sm:%s29] %v1054
        %v1056 = vld [vmem:[%s36 + $0x7f8] sm:%s29]
        %1057 = vst [vmem:[%s37 + $0x7f4] sm:%s29] %v1056
        %v1058 = vld [vmem:[%s36 + $0x7dc] sm:%s29]
        %1059 = vst [vmem:[%s37 + $0x7f8] sm:%s29] %v1058
        %v1060 = vld [vmem:[%s36 + $0x7fc] sm:%s29]
        %1061 = vst [vmem:[%s37 + $0x7fc] sm:%s29] %v1060
      $region30: #{generator_bn_forward.1} parent=24 // loop_footer
        %s35 = sadd.s32 1, %s31
      $region31: #{generator_bn_forward.1} parent=24 // loop_footer_branch
        %30 = sbr.rel target = $region27
      $region32: #{generator_bn_forward.1} parent=24 // loop_exit
        _
    $region25: #{generator_bn_forward.1} parent=1 // pred_fallthru
      _
    // Predicated region
    $region62: #{generator_bn_forward.1} parent=1 // pred_check
      _
    $region63: #{generator_bn_forward.1} parent=1 // pred_check_branch
      %4196 = sbr.rel (0) target = $region65
    $region64: #{generator_bn_forward.1} parent=1 // pred_region
      %4197 = vsyncadd [#allocation4], 32768
    $region65: #{generator_bn_forward.1} parent=1 // pred_fallthru
      _
    %s4198 = scalar_lea.sflag [#allocation4], 1
    %p4200 = scmp.lt.u32.totalorder 512, 8
    %p4201 = pneg %p4200
    // Predicated region
    $region66: #{generator_bn_forward.1} parent=1 // pred_check
      _
    $region67: #{generator_bn_forward.1} parent=1 // pred_check_branch
      %4203 = sbr.rel (%p4200) target = $region69
    $region68: #{generator_bn_forward.1} parent=1 // pred_region
      %s4218 = sand.u32 512, 7
      %p4219 = scmp.eq.s32.totalorder %s4218, 0
      // Predicated region
      $region81: #{generator_bn_forward.1} parent=68 // pred_check
        %p4220 = pneg %p4219
      $region82: #{generator_bn_forward.1} parent=68 // pred_check_branch
        %4222 = sbr.rel (%p4220) target = $region84
      $region83: #{generator_bn_forward.1} parent=68 // pred_region
        loop: start=0, step=1, limit=1
        $region85: #{generator_bn_forward.1} parent=83 // loop_pre_header
          _
        $region86: #{generator_bn_forward.1} parent=83 // loop_header
          %s4224 = sphi 0, %s4228
          %p4225 = scmp.ge.s32.totalorder %s4224, 1
          %s4229 = sphi %s5, %s5
          %s4230 = sphi [#allocation3], [#allocation3]
        $region87: #{generator_bn_forward.1} parent=83 // loop_header_branch
          %4227 = sbr.rel (%p4225) target = $region91
        $region88: #{generator_bn_forward.1} parent=83 // loop_body
          %v4231 = vld [vmem:[%s4229] sm:$0xff]
          %4232 = vst [vmem:[%s4230] sm:$0xff] %v4231
          %v4233 = vld [vmem:[%s4229 + $0x8] sm:$0xff]
          %4234 = vst [vmem:[%s4230 + $0x8] sm:$0xff] %v4233
          %v4235 = vld [vmem:[%s4229 + $0x10] sm:$0xff]
          %4236 = vst [vmem:[%s4230 + $0x10] sm:$0xff] %v4235
          %v4237 = vld [vmem:[%s4229 + $0x18] sm:$0xff]
          %4238 = vst [vmem:[%s4230 + $0x18] sm:$0xff] %v4237
          %v4239 = vld [vmem:[%s4229 + $0x20] sm:$0xff]
          %4240 = vst [vmem:[%s4230 + $0x20] sm:$0xff] %v4239
          %v4241 = vld [vmem:[%s4229 + $0x28] sm:$0xff]
          %4242 = vst [vmem:[%s4230 + $0x28] sm:$0xff] %v4241
          %v4243 = vld [vmem:[%s4229 + $0x30] sm:$0xff]
          %4244 = vst [vmem:[%s4230 + $0x30] sm:$0xff] %v4243
          %v4245 = vld [vmem:[%s4229 + $0x38] sm:$0xff]
          %4246 = vst [vmem:[%s4230 + $0x38] sm:$0xff] %v4245
          %v4247 = vld [vmem:[%s4229 + $0x40] sm:$0xff]
          %4248 = vst [vmem:[%s4230 + $0x40] sm:$0xff] %v4247
          %v4249 = vld [vmem:[%s4229 + $0x48] sm:$0xff]
          %4250 = vst [vmem:[%s4230 + $0x48] sm:$0xff] %v4249
          %v4251 = vld [vmem:[%s4229 + $0x50] sm:$0xff]
          %4252 = vst [vmem:[%s4230 + $0x50] sm:$0xff] %v4251
          %v4253 = vld [vmem:[%s4229 + $0x58] sm:$0xff]
          %4254 = vst [vmem:[%s4230 + $0x58] sm:$0xff] %v4253
          %v4255 = vld [vmem:[%s4229 + $0x60] sm:$0xff]
          %4256 = vst [vmem:[%s4230 + $0x60] sm:$0xff] %v4255
          %v4257 = vld [vmem:[%s4229 + $0x68] sm:$0xff]
          %4258 = vst [vmem:[%s4230 + $0x68] sm:$0xff] %v4257
          %v4259 = vld [vmem:[%s4229 + $0x70] sm:$0xff]
          %4260 = vst [vmem:[%s4230 + $0x70] sm:$0xff] %v4259
          %v4261 = vld [vmem:[%s4229 + $0x78] sm:$0xff]
          %4262 = vst [vmem:[%s4230 + $0x78] sm:$0xff] %v4261
          %v4263 = vld [vmem:[%s4229 + $0x80] sm:$0xff]
          %4264 = vst [vmem:[%s4230 + $0x80] sm:$0xff] %v4263
          %v4265 = vld [vmem:[%s4229 + $0x88] sm:$0xff]
          %4266 = vst [vmem:[%s4230 + $0x88] sm:$0xff] %v4265
          %v4267 = vld [vmem:[%s4229 + $0x90] sm:$0xff]
          %4268 = vst [vmem:[%s4230 + $0x90] sm:$0xff] %v4267
          %v4269 = vld [vmem:[%s4229 + $0x98] sm:$0xff]
          %4270 = vst [vmem:[%s4230 + $0x98] sm:$0xff] %v4269
          %v4271 = vld [vmem:[%s4229 + $0xa0] sm:$0xff]
          %4272 = vst [vmem:[%s4230 + $0xa0] sm:$0xff] %v4271
          %v4273 = vld [vmem:[%s4229 + $0xa8] sm:$0xff]
          %4274 = vst [vmem:[%s4230 + $0xa8] sm:$0xff] %v4273
          %v4275 = vld [vmem:[%s4229 + $0xb0] sm:$0xff]
          %4276 = vst [vmem:[%s4230 + $0xb0] sm:$0xff] %v4275
          %v4277 = vld [vmem:[%s4229 + $0xb8] sm:$0xff]
          %4278 = vst [vmem:[%s4230 + $0xb8] sm:$0xff] %v4277
          %v4279 = vld [vmem:[%s4229 + $0xc0] sm:$0xff]
          %4280 = vst [vmem:[%s4230 + $0xc0] sm:$0xff] %v4279
          %v4281 = vld [vmem:[%s4229 + $0xc8] sm:$0xff]
          %4282 = vst [vmem:[%s4230 + $0xc8] sm:$0xff] %v4281
          %v4283 = vld [vmem:[%s4229 + $0xd0] sm:$0xff]
          %4284 = vst [vmem:[%s4230 + $0xd0] sm:$0xff] %v4283
          %v4285 = vld [vmem:[%s4229 + $0xd8] sm:$0xff]
          %4286 = vst [vmem:[%s4230 + $0xd8] sm:$0xff] %v4285
          %v4287 = vld [vmem:[%s4229 + $0xe0] sm:$0xff]
          %4288 = vst [vmem:[%s4230 + $0xe0] sm:$0xff] %v4287
          %v4289 = vld [vmem:[%s4229 + $0xe8] sm:$0xff]
          %4290 = vst [vmem:[%s4230 + $0xe8] sm:$0xff] %v4289
          %v4291 = vld [vmem:[%s4229 + $0xf0] sm:$0xff]
          %4292 = vst [vmem:[%s4230 + $0xf0] sm:$0xff] %v4291
          %v4293 = vld [vmem:[%s4229 + $0xf8] sm:$0xff]
          %4294 = vst [vmem:[%s4230 + $0xf8] sm:$0xff] %v4293
          %v4295 = vld [vmem:[%s4229 + $0x100] sm:$0xff]
          %4296 = vst [vmem:[%s4230 + $0x100] sm:$0xff] %v4295
          %v4297 = vld [vmem:[%s4229 + $0x108] sm:$0xff]
          %4298 = vst [vmem:[%s4230 + $0x108] sm:$0xff] %v4297
          %v4299 = vld [vmem:[%s4229 + $0x110] sm:$0xff]
          %4300 = vst [vmem:[%s4230 + $0x110] sm:$0xff] %v4299
          %v4301 = vld [vmem:[%s4229 + $0x118] sm:$0xff]
          %4302 = vst [vmem:[%s4230 + $0x118] sm:$0xff] %v4301
          %v4303 = vld [vmem:[%s4229 + $0x120] sm:$0xff]
          %4304 = vst [vmem:[%s4230 + $0x120] sm:$0xff] %v4303
          %v4305 = vld [vmem:[%s4229 + $0x128] sm:$0xff]
          %4306 = vst [vmem:[%s4230 + $0x128] sm:$0xff] %v4305
          %v4307 = vld [vmem:[%s4229 + $0x130] sm:$0xff]
          %4308 = vst [vmem:[%s4230 + $0x130] sm:$0xff] %v4307
          %v4309 = vld [vmem:[%s4229 + $0x138] sm:$0xff]
          %4310 = vst [vmem:[%s4230 + $0x138] sm:$0xff] %v4309
          %v4311 = vld [vmem:[%s4229 + $0x140] sm:$0xff]
          %4312 = vst [vmem:[%s4230 + $0x140] sm:$0xff] %v4311
          %v4313 = vld [vmem:[%s4229 + $0x148] sm:$0xff]
          %4314 = vst [vmem:[%s4230 + $0x148] sm:$0xff] %v4313
          %v4315 = vld [vmem:[%s4229 + $0x150] sm:$0xff]
          %4316 = vst [vmem:[%s4230 + $0x150] sm:$0xff] %v4315
          %v4317 = vld [vmem:[%s4229 + $0x158] sm:$0xff]
          %4318 = vst [vmem:[%s4230 + $0x158] sm:$0xff] %v4317
          %v4319 = vld [vmem:[%s4229 + $0x160] sm:$0xff]
          %4320 = vst [vmem:[%s4230 + $0x160] sm:$0xff] %v4319
          %v4321 = vld [vmem:[%s4229 + $0x168] sm:$0xff]
          %4322 = vst [vmem:[%s4230 + $0x168] sm:$0xff] %v4321
          %v4323 = vld [vmem:[%s4229 + $0x170] sm:$0xff]
          %4324 = vst [vmem:[%s4230 + $0x170] sm:$0xff] %v4323
          %v4325 = vld [vmem:[%s4229 + $0x178] sm:$0xff]
          %4326 = vst [vmem:[%s4230 + $0x178] sm:$0xff] %v4325
          %v4327 = vld [vmem:[%s4229 + $0x180] sm:$0xff]
          %4328 = vst [vmem:[%s4230 + $0x180] sm:$0xff] %v4327
          %v4329 = vld [vmem:[%s4229 + $0x188] sm:$0xff]
          %4330 = vst [vmem:[%s4230 + $0x188] sm:$0xff] %v4329
          %v4331 = vld [vmem:[%s4229 + $0x190] sm:$0xff]
          %4332 = vst [vmem:[%s4230 + $0x190] sm:$0xff] %v4331
          %v4333 = vld [vmem:[%s4229 + $0x198] sm:$0xff]
          %4334 = vst [vmem:[%s4230 + $0x198] sm:$0xff] %v4333
          %v4335 = vld [vmem:[%s4229 + $0x1a0] sm:$0xff]
          %4336 = vst [vmem:[%s4230 + $0x1a0] sm:$0xff] %v4335
          %v4337 = vld [vmem:[%s4229 + $0x1a8] sm:$0xff]
          %4338 = vst [vmem:[%s4230 + $0x1a8] sm:$0xff] %v4337
          %v4339 = vld [vmem:[%s4229 + $0x1b0] sm:$0xff]
          %4340 = vst [vmem:[%s4230 + $0x1b0] sm:$0xff] %v4339
          %v4341 = vld [vmem:[%s4229 + $0x1b8] sm:$0xff]
          %4342 = vst [vmem:[%s4230 + $0x1b8] sm:$0xff] %v4341
          %v4343 = vld [vmem:[%s4229 + $0x1c0] sm:$0xff]
          %4344 = vst [vmem:[%s4230 + $0x1c0] sm:$0xff] %v4343
          %v4345 = vld [vmem:[%s4229 + $0x1c8] sm:$0xff]
          %4346 = vst [vmem:[%s4230 + $0x1c8] sm:$0xff] %v4345
          %v4347 = vld [vmem:[%s4229 + $0x1d0] sm:$0xff]
          %4348 = vst [vmem:[%s4230 + $0x1d0] sm:$0xff] %v4347
          %v4349 = vld [vmem:[%s4229 + $0x1d8] sm:$0xff]
          %4350 = vst [vmem:[%s4230 + $0x1d8] sm:$0xff] %v4349
          %v4351 = vld [vmem:[%s4229 + $0x1e0] sm:$0xff]
          %4352 = vst [vmem:[%s4230 + $0x1e0] sm:$0xff] %v4351
          %v4353 = vld [vmem:[%s4229 + $0x1e8] sm:$0xff]
          %4354 = vst [vmem:[%s4230 + $0x1e8] sm:$0xff] %v4353
          %v4355 = vld [vmem:[%s4229 + $0x1f0] sm:$0xff]
          %4356 = vst [vmem:[%s4230 + $0x1f0] sm:$0xff] %v4355
          %v4357 = vld [vmem:[%s4229 + $0x1f8] sm:$0xff]
          %4358 = vst [vmem:[%s4230 + $0x1f8] sm:$0xff] %v4357
        $region89: #{generator_bn_forward.1} parent=83 // loop_footer
          %s4228 = sadd.s32 1, %s4224
        $region90: #{generator_bn_forward.1} parent=83 // loop_footer_branch
          %4223 = sbr.rel target = $region86
        $region91: #{generator_bn_forward.1} parent=83 // loop_exit
          _
      $region84: #{generator_bn_forward.1} parent=68 // pred_fallthru
        _
      %p4359 = pneg %p4219
      // Predicated region
      $region92: #{generator_bn_forward.1} parent=68 // pred_check
        _
      $region93: #{generator_bn_forward.1} parent=68 // pred_check_branch
        %4361 = sbr.rel (%p4219) target = $region95
      $region94: #{generator_bn_forward.1} parent=68 // pred_region
        %s4362 = sand.u32 512, 7
      $region95: #{generator_bn_forward.1} parent=68 // pred_fallthru
        _
    $region69: #{generator_bn_forward.1} parent=1 // pred_fallthru
      _
    // Predicated region
    $region70: #{generator_bn_forward.1} parent=1 // pred_check
      %p4204 = pneg %p4200
    $region71: #{generator_bn_forward.1} parent=1 // pred_check_branch
      %4206 = sbr.rel (%p4204) target = $region73
    $region72: #{generator_bn_forward.1} parent=1 // pred_region
      %s4207 = sshllo.u32 0, 512
      loop: start=0, step=1, limit=1
      $region74: #{generator_bn_forward.1} parent=72 // loop_pre_header
        _
      $region75: #{generator_bn_forward.1} parent=72 // loop_header
        %s4209 = sphi 0, %s4213
        %p4210 = scmp.ge.s32.totalorder %s4209, 1
        %s4214 = sphi %s5, %s5
        %s4215 = sphi [#allocation3], [#allocation3]
      $region76: #{generator_bn_forward.1} parent=72 // loop_header_branch
        %4212 = sbr.rel (%p4210) target = $region80
      $region77: #{generator_bn_forward.1} parent=72 // loop_body
        %v4216 = vld [vmem:[%s4214] sm:%s4207]
        %4217 = vst [vmem:[%s4215] sm:%s4207] %v4216
      $region78: #{generator_bn_forward.1} parent=72 // loop_footer
        %s4213 = sadd.s32 1, %s4209
      $region79: #{generator_bn_forward.1} parent=72 // loop_footer_branch
        %4208 = sbr.rel target = $region75
      $region80: #{generator_bn_forward.1} parent=72 // loop_exit
        _
    $region73: #{generator_bn_forward.1} parent=1 // pred_fallthru
      _
    // Predicated region
    $region96: #{generator_bn_forward.1} parent=1 // pred_check
      _
    $region97: #{generator_bn_forward.1} parent=1 // pred_check_branch
      %4365 = sbr.rel (0) target = $region99
    $region98: #{generator_bn_forward.1} parent=1 // pred_region
      %4366 = vsyncadd %s4198, 8192
    $region99: #{generator_bn_forward.1} parent=1 // pred_fallthru
      _
    %v4367 = vld [vmem:[%s3] ss:$8 sm:$0x3]
    %s4368 = scalar_lea.vmem %s3, 1
    %v4369 = vld [vmem:[%s4368] ss:$8 sm:$0x3]
    %s4370 = scalar_lea.vmem %s3, 2
    %v4371 = vld [vmem:[%s4370] ss:$8 sm:$0xf]
    %s4372 = scalar_lea.vmem %s3, 3
    %v4373 = vld [vmem:[%s4372] ss:$8 sm:$0xf]
    %s4374 = scalar_lea.vmem %s3, 4
    %v4375 = vld [vmem:[%s4374] ss:$8 sm:$0xf]
    %v4376 = vld [vmem:[%s4374] ss:$8 sm:$0xf0]
    %v4377 = vor.u32 %v4375, %v4376
    %s4378 = scalar_lea.vmem %s3, 5
    %v4379 = vld [vmem:[%s4378] ss:$8 sm:$0xf]
    %v4380 = vld [vmem:[%s4378] ss:$8 sm:$0xf0]
    %v4381 = vor.u32 %v4379, %v4380
    %v4382 = vld [vmem:[%s3 + $0x6] ss:$0 sm:$0xff]
    %v4383 = vld [vmem:[%s0] sm:$0xf]
    %v4384 = vld [vmem:[%s1] sm:$0xff]
    %v4385 = vld [vmem:[%s1 + $0x8] sm:$0xff]
    %v4386 = vld [vmem:[%s1 + $0x10] sm:$0xff]
    %v4387 = vld [vmem:[%s1 + $0x18] sm:$0xff]
    %v4388 = vld [vmem:[%s1 + $0x20] sm:$0xff]
    %v4389 = vld [vmem:[%s1 + $0x28] sm:$0xff]
    %v4390 = vld [vmem:[%s1 + $0x30] sm:$0xff]
    %v4391 = vld [vmem:[%s1 + $0x38] sm:$0xff]
    %v4392 = vld [vmem:[%s1 + $0x40] sm:$0xff]
    %v4393 = vld [vmem:[%s1 + $0x48] sm:$0xff]
    %v4394 = vld [vmem:[%s1 + $0x50] sm:$0xff]
    %v4395 = vld [vmem:[%s1 + $0x58] sm:$0xff]
    %v4396 = vld [vmem:[%s1 + $0x60] sm:$0xff]
    %v4397 = vld [vmem:[%s1 + $0x68] sm:$0xff]
    %v4398 = vld [vmem:[%s1 + $0x70] sm:$0xff]
    %v4399 = vld [vmem:[%s1 + $0x78] sm:$0xff]
    %v4416 = vunpack.c.l.b16 %v4384
    %v4417 = vunpack.c.h.b16 %v4384
    %v4418 = vunpack.c.l.b16 %v4385
    %v4419 = vunpack.c.h.b16 %v4385
    %v4420 = vunpack.c.l.b16 %v4386
    %v4421 = vunpack.c.h.b16 %v4386
    %v4422 = vunpack.c.l.b16 %v4387
    %v4423 = vunpack.c.h.b16 %v4387
    %v4424 = vunpack.c.l.b16 %v4388
    %v4425 = vunpack.c.h.b16 %v4388
    %v4426 = vunpack.c.l.b16 %v4389
    %v4427 = vunpack.c.h.b16 %v4389
    %v4428 = vunpack.c.l.b16 %v4390
    %v4429 = vunpack.c.h.b16 %v4390
    %v4430 = vunpack.c.l.b16 %v4391
    %v4431 = vunpack.c.h.b16 %v4391
    %v4432 = vunpack.c.l.b16 %v4392
    %v4433 = vunpack.c.h.b16 %v4392
    %v4434 = vunpack.c.l.b16 %v4393
    %v4435 = vunpack.c.h.b16 %v4393
    %v4436 = vunpack.c.l.b16 %v4394
    %v4437 = vunpack.c.h.b16 %v4394
    %v4438 = vunpack.c.l.b16 %v4395
    %v4439 = vunpack.c.h.b16 %v4395
    %v4440 = vunpack.c.l.b16 %v4396
    %v4441 = vunpack.c.h.b16 %v4396
    %v4442 = vunpack.c.l.b16 %v4397
    %v4443 = vunpack.c.h.b16 %v4397
    %v4444 = vunpack.c.l.b16 %v4398
    %v4445 = vunpack.c.h.b16 %v4398
    %v4446 = vunpack.c.l.b16 %v4399
    %v4447 = vunpack.c.h.b16 %v4399
    %v4448 = vpack.c.b16 %v4418, %v4416
    %v4449 = vpack.c.b16 %v4419, %v4417
    %v4450 = vpack.c.b16 %v4422, %v4420
    %v4451 = vpack.c.b16 %v4423, %v4421
    %v4452 = vpack.c.b16 %v4426, %v4424
    %v4453 = vpack.c.b16 %v4427, %v4425
    %v4454 = vpack.c.b16 %v4430, %v4428
    %v4455 = vpack.c.b16 %v4431, %v4429
    %v4456 = vpack.c.b16 %v4434, %v4432
    %v4457 = vpack.c.b16 %v4435, %v4433
    %v4458 = vpack.c.b16 %v4438, %v4436
    %v4459 = vpack.c.b16 %v4439, %v4437
    %v4460 = vpack.c.b16 %v4442, %v4440
    %v4461 = vpack.c.b16 %v4443, %v4441
    %v4462 = vpack.c.b16 %v4446, %v4444
    %v4463 = vpack.c.b16 %v4447, %v4445
    %4480 = vmatprep.subr.bf16.mxu0 %v4449
    %4481 = vmatpush1.bf16.msra.mxu0 %v4448
    %4482 = vmatprep.subr.bf16.mxu0 %v4451
    %4483 = vmatpush1.bf16.msra.mxu0 %v4450
    %4484 = vmatprep.subr.bf16.mxu0 %v4453
    %4485 = vmatpush1.bf16.msra.mxu0 %v4452
    %4486 = vmatprep.subr.bf16.mxu0 %v4455
    %4487 = vmatpush1.bf16.msra.mxu0 %v4454
    %4488 = vmatprep.subr.bf16.mxu0 %v4457
    %4489 = vmatpush1.bf16.msra.mxu0 %v4456
    %4490 = vmatprep.subr.bf16.mxu0 %v4459
    %4491 = vmatpush1.bf16.msra.mxu0 %v4458
    %4492 = vmatprep.subr.bf16.mxu0 %v4461
    %4493 = vmatpush1.bf16.msra.mxu0 %v4460
    %4494 = vmatprep.subr.bf16.mxu0 %v4463
    %4495 = vmatpush1.bf16.msra.mxu0 %v4462
    %4496 = vmatprep.subr.bf16.mxu0 0
    %4497 = vmatpush1.bf16.msra.mxu0 0
    %4498 = vmatprep.subr.bf16.mxu0 0
    %4499 = vmatpush1.bf16.msra.mxu0 0
    %4500 = vmatprep.subr.bf16.mxu0 0
    %4501 = vmatpush1.bf16.msra.mxu0 0
    %4502 = vmatprep.subr.bf16.mxu0 0
    %4503 = vmatpush1.bf16.msra.mxu0 0
    %4504 = vmatprep.subr.bf16.mxu0 0
    %4505 = vmatpush1.bf16.msra.mxu0 0
    %4506 = vmatprep.subr.bf16.mxu0 0
    %4507 = vmatpush1.bf16.msra.mxu0 0
    %4508 = vmatprep.subr.bf16.mxu0 0
    %4509 = vmatpush1.bf16.msra.mxu0 0
    %4510 = vmatprep.subr.bf16.mxu0 0
    %4511 = vmatpush1.bf16.msra.mxu0 0
    %4512 = vmatprep.mubr.bf16.mxu0 0
    %4513 = vmatmul.mubr.bf16.gmra.mrb[0].mxu0 %v4383
    %v4514 = vpop.f32.mrb[0].mxu0
    %v4515 = vadd.f32 0.0, %v4514
    %v4516 = vpop.f32.mrb[0].mxu0
    %v4517 = vadd.f32 0.0, %v4516
    %v4518 = vpop.f32.mrb[0].mxu0
    %v4519 = vpop.f32.mrb[0].mxu0
    %4520 = vdwg.mxu0
    %v4521 = vrot.slane %v4515, 4
    %v4522 = vadd.f32 %v4515, %v4521
    %v4523 = vrot.slane %v4522, 2
    %v4524 = vadd.f32 %v4522, %v4523
    %v4525 = vrot.slane %v4524, 1
    %v4526 = vadd.f32 %v4524, %v4525
    %v4527 = vrot.slane %v4517, 4
    %v4528 = vadd.f32 %v4517, %v4527
    %v4529 = vrot.slane %v4528, 2
    %v4530 = vadd.f32 %v4528, %v4529
    %v4531 = vrot.slane %v4530, 1
    %v4532 = vadd.f32 %v4530, %v4531
    %v4533 = vmul.f32 %v4526, 0.125
    %v4534 = vmul.f32 %v4532, 0.125
    %v4535 = vmul.f32 %v4515, %v4515
    %v4536 = vmul.f32 %v4517, %v4517
    %v4537 = vrot.slane %v4535, 4
    %v4538 = vadd.f32 %v4535, %v4537
    %v4539 = vrot.slane %v4538, 2
    %v4540 = vadd.f32 %v4538, %v4539
    %v4541 = vrot.slane %v4540, 1
    %v4542 = vadd.f32 %v4540, %v4541
    %v4543 = vrot.slane %v4536, 4
    %v4544 = vadd.f32 %v4536, %v4543
    %v4545 = vrot.slane %v4544, 2
    %v4546 = vadd.f32 %v4544, %v4545
    %v4547 = vrot.slane %v4546, 1
    %v4548 = vadd.f32 %v4546, %v4547
    %v4549 = vmul.f32 %v4542, 0.125
    %v4550 = vmul.f32 %v4548, 0.125
    %v4551 = vmul.f32 %v4533, %v4533
    %v4552 = vmul.f32 %v4534, %v4534
    %v4553 = vsub.f32 %v4549, %v4551
    %v4554 = vsub.f32 %v4550, %v4552
    %v4555 = vmax.f32 %v4553, 0.0
    %v4556 = vmax.f32 %v4554, 0.0
    %v4557 = vadd.f32 %v4555, 0.8
    %v4558 = vadd.f32 %v4556, 0.8
    %v4559 = vrsqrt.pop %v4557
    %v4560 = vrsqrt.pop %v4558
    %v4563 = vcombine.low %v4559, %v4560
    %v4565 = vunpack.c.l.s4 1966171168
    %v4566 = vunpack.c.0.s8 %v4565
    %v4567 = vlaneseq
    %v4568 = vshrl.u32 %v4567, 7
    %v4569 = vsub.s32 %v4566, %v4568
    %v4570 = vrot.slane %v4563, %v4569
    %v4572 = vunpack.c.l.s4 1966171168
    %v4573 = vunpack.c.0.s8 %v4572
    %v4574 = vlaneseq
    %v4575 = vshrl.u32 %v4574, 7
    %v4576 = vsub.s32 %v4573, %v4575
    %v4577 = vrot.slane %v4570, %v4576
    %v4579 = vmul.f32 %v4367, %v4577
    %v4582 = vcombine.low %v4533, %v4534
    %v4584 = vunpack.c.l.s4 1966171168
    %v4585 = vunpack.c.0.s8 %v4584
    %v4586 = vlaneseq
    %v4587 = vshrl.u32 %v4586, 7
    %v4588 = vsub.s32 %v4585, %v4587
    %v4589 = vrot.slane %v4582, %v4588
    %v4591 = vunpack.c.l.s4 1966171168
    %v4592 = vunpack.c.0.s8 %v4591
    %v4593 = vlaneseq
    %v4594 = vshrl.u32 %v4593, 7
    %v4595 = vsub.s32 %v4592, %v4594
    %v4596 = vrot.slane %v4589, %v4595
    %v4598 = vmul.f32 %v4579, %v4596
    %v4599 = vsub.f32 %v4369, %v4598
    %v4601 = vlaneseq
    %v4602 = vshrl.u32 %v4601, 7
    %v4603 = vsub.s32 0, %v4602
    %v4604 = vrot.slane %v4579, %v4603
    %v4605 = vlaneseq
    %v4606 = vshrl.u32 %v4605, 7
    %v4607 = vsub.s32 1, %v4606
    %v4608 = vrot.slane %v4579, %v4607
    %v4611 = vmul.f32 %v4604, %v4515
    %v4612 = vmul.f32 %v4608, %v4517
    %v4614 = vlaneseq
    %v4615 = vshrl.u32 %v4614, 7
    %v4616 = vsub.s32 0, %v4615
    %v4617 = vrot.slane %v4599, %v4616
    %v4618 = vlaneseq
    %v4619 = vshrl.u32 %v4618, 7
    %v4620 = vsub.s32 1, %v4619
    %v4621 = vrot.slane %v4599, %v4620
    %v4624 = vadd.f32 %v4611, %v4617
    %v4625 = vadd.f32 %v4612, %v4621
    %v4626 = vmul.f32 %v4624, 0.2
    %v4627 = vmul.f32 %v4625, 0.2
    %v4628 = vmax.f32 %v4624, %v4626
    %v4629 = vmax.f32 %v4625, %v4627
    %v4630 = vld [vmem:[%s2] sm:$0xff]
    %v4631 = vld [vmem:[%s2 + $0x8] sm:$0xff]
    %v4632 = vld [vmem:[%s2 + $0x10] sm:$0xff]
    %v4633 = vld [vmem:[%s2 + $0x18] sm:$0xff]
    %v4634 = vld [vmem:[%s2 + $0x20] sm:$0xff]
    %v4635 = vld [vmem:[%s2 + $0x28] sm:$0xff]
    %v4636 = vld [vmem:[%s2 + $0x30] sm:$0xff]
    %v4637 = vld [vmem:[%s2 + $0x38] sm:$0xff]
    %v4638 = vld [vmem:[%s2 + $0x40] sm:$0xff]
    %v4639 = vld [vmem:[%s2 + $0x48] sm:$0xff]
    %v4640 = vld [vmem:[%s2 + $0x50] sm:$0xff]
    %v4641 = vld [vmem:[%s2 + $0x58] sm:$0xff]
    %v4642 = vld [vmem:[%s2 + $0x60] sm:$0xff]
    %v4643 = vld [vmem:[%s2 + $0x68] sm:$0xff]
    %v4644 = vld [vmem:[%s2 + $0x70] sm:$0xff]
    %v4645 = vld [vmem:[%s2 + $0x78] sm:$0xff]
    %v4646 = vld [vmem:[%s2 + $0x80] sm:$0xff]
    %v4647 = vld [vmem:[%s2 + $0x88] sm:$0xff]
    %v4648 = vld [vmem:[%s2 + $0x90] sm:$0xff]
    %v4649 = vld [vmem:[%s2 + $0x98] sm:$0xff]
    %v4650 = vld [vmem:[%s2 + $0xa0] sm:$0xff]
    %v4651 = vld [vmem:[%s2 + $0xa8] sm:$0xff]
    %v4652 = vld [vmem:[%s2 + $0xb0] sm:$0xff]
    %v4653 = vld [vmem:[%s2 + $0xb8] sm:$0xff]
    %v4654 = vld [vmem:[%s2 + $0xc0] sm:$0xff]
    %v4655 = vld [vmem:[%s2 + $0xc8] sm:$0xff]
    %v4656 = vld [vmem:[%s2 + $0xd0] sm:$0xff]
    %v4657 = vld [vmem:[%s2 + $0xd8] sm:$0xff]
    %v4658 = vld [vmem:[%s2 + $0xe0] sm:$0xff]
    %v4659 = vld [vmem:[%s2 + $0xe8] sm:$0xff]
    %v4660 = vld [vmem:[%s2 + $0xf0] sm:$0xff]
    %v4661 = vld [vmem:[%s2 + $0xf8] sm:$0xff]
    %v4662 = vld [vmem:[%s2 + $0x100] sm:$0xff]
    %v4663 = vld [vmem:[%s2 + $0x108] sm:$0xff]
    %v4664 = vld [vmem:[%s2 + $0x110] sm:$0xff]
    %v4665 = vld [vmem:[%s2 + $0x118] sm:$0xff]
    %v4666 = vld [vmem:[%s2 + $0x120] sm:$0xff]
    %v4667 = vld [vmem:[%s2 + $0x128] sm:$0xff]
    %v4668 = vld [vmem:[%s2 + $0x130] sm:$0xff]
    %v4669 = vld [vmem:[%s2 + $0x138] sm:$0xff]
    %v4670 = vld [vmem:[%s2 + $0x140] sm:$0xff]
    %v4671 = vld [vmem:[%s2 + $0x148] sm:$0xff]
    %v4672 = vld [vmem:[%s2 + $0x150] sm:$0xff]
    %v4673 = vld [vmem:[%s2 + $0x158] sm:$0xff]
    %v4674 = vld [vmem:[%s2 + $0x160] sm:$0xff]
    %v4675 = vld [vmem:[%s2 + $0x168] sm:$0xff]
    %v4676 = vld [vmem:[%s2 + $0x170] sm:$0xff]
    %v4677 = vld [vmem:[%s2 + $0x178] sm:$0xff]
    %v4678 = vld [vmem:[%s2 + $0x180] sm:$0xff]
    %v4679 = vld [vmem:[%s2 + $0x188] sm:$0xff]
    %v4680 = vld [vmem:[%s2 + $0x190] sm:$0xff]
    %v4681 = vld [vmem:[%s2 + $0x198] sm:$0xff]
    %v4682 = vld [vmem:[%s2 + $0x1a0] sm:$0xff]
    %v4683 = vld [vmem:[%s2 + $0x1a8] sm:$0xff]
    %v4684 = vld [vmem:[%s2 + $0x1b0] sm:$0xff]
    %v4685 = vld [vmem:[%s2 + $0x1b8] sm:$0xff]
    %v4686 = vld [vmem:[%s2 + $0x1c0] sm:$0xff]
    %v4687 = vld [vmem:[%s2 + $0x1c8] sm:$0xff]
    %v4688 = vld [vmem:[%s2 + $0x1d0] sm:$0xff]
    %v4689 = vld [vmem:[%s2 + $0x1d8] sm:$0xff]
    %v4690 = vld [vmem:[%s2 + $0x1e0] sm:$0xff]
    %v4691 = vld [vmem:[%s2 + $0x1e8] sm:$0xff]
    %v4692 = vld [vmem:[%s2 + $0x1f0] sm:$0xff]
    %v4693 = vld [vmem:[%s2 + $0x1f8] sm:$0xff]
    %v4694 = vpack.c.bf16 %v4628, %v4628
    %v4695 = vpack.c.bf16 %v4629, %v4629
    %v4760 = vunpack.c.l.b16 %v4630
    %v4761 = vunpack.c.h.b16 %v4630
    %v4762 = vunpack.c.l.b16 %v4631
    %v4763 = vunpack.c.h.b16 %v4631
    %v4764 = vunpack.c.l.b16 %v4632
    %v4765 = vunpack.c.h.b16 %v4632
    %v4766 = vunpack.c.l.b16 %v4633
    %v4767 = vunpack.c.h.b16 %v4633
    %v4768 = vunpack.c.l.b16 %v4634
    %v4769 = vunpack.c.h.b16 %v4634
    %v4770 = vunpack.c.l.b16 %v4635
    %v4771 = vunpack.c.h.b16 %v4635
    %v4772 = vunpack.c.l.b16 %v4636
    %v4773 = vunpack.c.h.b16 %v4636
    %v4774 = vunpack.c.l.b16 %v4637
    %v4775 = vunpack.c.h.b16 %v4637
    %v4776 = vunpack.c.l.b16 %v4638
    %v4777 = vunpack.c.h.b16 %v4638
    %v4778 = vunpack.c.l.b16 %v4639
    %v4779 = vunpack.c.h.b16 %v4639
    %v4780 = vunpack.c.l.b16 %v4640
    %v4781 = vunpack.c.h.b16 %v4640
    %v4782 = vunpack.c.l.b16 %v4641
    %v4783 = vunpack.c.h.b16 %v4641
    %v4784 = vunpack.c.l.b16 %v4642
    %v4785 = vunpack.c.h.b16 %v4642
    %v4786 = vunpack.c.l.b16 %v4643
    %v4787 = vunpack.c.h.b16 %v4643
    %v4788 = vunpack.c.l.b16 %v4644
    %v4789 = vunpack.c.h.b16 %v4644
    %v4790 = vunpack.c.l.b16 %v4645
    %v4791 = vunpack.c.h.b16 %v4645
    %v4792 = vunpack.c.l.b16 %v4646
    %v4793 = vunpack.c.h.b16 %v4646
    %v4794 = vunpack.c.l.b16 %v4647
    %v4795 = vunpack.c.h.b16 %v4647
    %v4796 = vunpack.c.l.b16 %v4648
    %v4797 = vunpack.c.h.b16 %v4648
    %v4798 = vunpack.c.l.b16 %v4649
    %v4799 = vunpack.c.h.b16 %v4649
    %v4800 = vunpack.c.l.b16 %v4650
    %v4801 = vunpack.c.h.b16 %v4650
    %v4802 = vunpack.c.l.b16 %v4651
    %v4803 = vunpack.c.h.b16 %v4651
    %v4804 = vunpack.c.l.b16 %v4652
    %v4805 = vunpack.c.h.b16 %v4652
    %v4806 = vunpack.c.l.b16 %v4653
    %v4807 = vunpack.c.h.b16 %v4653
    %v4808 = vunpack.c.l.b16 %v4654
    %v4809 = vunpack.c.h.b16 %v4654
    %v4810 = vunpack.c.l.b16 %v4655
    %v4811 = vunpack.c.h.b16 %v4655
    %v4812 = vunpack.c.l.b16 %v4656
    %v4813 = vunpack.c.h.b16 %v4656
    %v4814 = vunpack.c.l.b16 %v4657
    %v4815 = vunpack.c.h.b16 %v4657
    %v4816 = vunpack.c.l.b16 %v4658
    %v4817 = vunpack.c.h.b16 %v4658
    %v4818 = vunpack.c.l.b16 %v4659
    %v4819 = vunpack.c.h.b16 %v4659
    %v4820 = vunpack.c.l.b16 %v4660
    %v4821 = vunpack.c.h.b16 %v4660
    %v4822 = vunpack.c.l.b16 %v4661
    %v4823 = vunpack.c.h.b16 %v4661
    %v4824 = vunpack.c.l.b16 %v4662
    %v4825 = vunpack.c.h.b16 %v4662
    %v4826 = vunpack.c.l.b16 %v4663
    %v4827 = vunpack.c.h.b16 %v4663
    %v4828 = vunpack.c.l.b16 %v4664
    %v4829 = vunpack.c.h.b16 %v4664
    %v4830 = vunpack.c.l.b16 %v4665
    %v4831 = vunpack.c.h.b16 %v4665
    %v4832 = vunpack.c.l.b16 %v4666
    %v4833 = vunpack.c.h.b16 %v4666
    %v4834 = vunpack.c.l.b16 %v4667
    %v4835 = vunpack.c.h.b16 %v4667
    %v4836 = vunpack.c.l.b16 %v4668
    %v4837 = vunpack.c.h.b16 %v4668
    %v4838 = vunpack.c.l.b16 %v4669
    %v4839 = vunpack.c.h.b16 %v4669
    %v4840 = vunpack.c.l.b16 %v4670
    %v4841 = vunpack.c.h.b16 %v4670
    %v4842 = vunpack.c.l.b16 %v4671
    %v4843 = vunpack.c.h.b16 %v4671
    %v4844 = vunpack.c.l.b16 %v4672
    %v4845 = vunpack.c.h.b16 %v4672
    %v4846 = vunpack.c.l.b16 %v4673
    %v4847 = vunpack.c.h.b16 %v4673
    %v4848 = vunpack.c.l.b16 %v4674
    %v4849 = vunpack.c.h.b16 %v4674
    %v4850 = vunpack.c.l.b16 %v4675
    %v4851 = vunpack.c.h.b16 %v4675
    %v4852 = vunpack.c.l.b16 %v4676
    %v4853 = vunpack.c.h.b16 %v4676
    %v4854 = vunpack.c.l.b16 %v4677
    %v4855 = vunpack.c.h.b16 %v4677
    %v4856 = vunpack.c.l.b16 %v4678
    %v4857 = vunpack.c.h.b16 %v4678
    %v4858 = vunpack.c.l.b16 %v4679
    %v4859 = vunpack.c.h.b16 %v4679
    %v4860 = vunpack.c.l.b16 %v4680
    %v4861 = vunpack.c.h.b16 %v4680
    %v4862 = vunpack.c.l.b16 %v4681
    %v4863 = vunpack.c.h.b16 %v4681
    %v4864 = vunpack.c.l.b16 %v4682
    %v4865 = vunpack.c.h.b16 %v4682
    %v4866 = vunpack.c.l.b16 %v4683
    %v4867 = vunpack.c.h.b16 %v4683
    %v4868 = vunpack.c.l.b16 %v4684
    %v4869 = vunpack.c.h.b16 %v4684
    %v4870 = vunpack.c.l.b16 %v4685
    %v4871 = vunpack.c.h.b16 %v4685
    %v4872 = vunpack.c.l.b16 %v4686
    %v4873 = vunpack.c.h.b16 %v4686
    %v4874 = vunpack.c.l.b16 %v4687
    %v4875 = vunpack.c.h.b16 %v4687
    %v4876 = vunpack.c.l.b16 %v4688
    %v4877 = vunpack.c.h.b16 %v4688
    %v4878 = vunpack.c.l.b16 %v4689
    %v4879 = vunpack.c.h.b16 %v4689
    %v4880 = vunpack.c.l.b16 %v4690
    %v4881 = vunpack.c.h.b16 %v4690
    %v4882 = vunpack.c.l.b16 %v4691
    %v4883 = vunpack.c.h.b16 %v4691
    %v4884 = vunpack.c.l.b16 %v4692
    %v4885 = vunpack.c.h.b16 %v4692
    %v4886 = vunpack.c.l.b16 %v4693
    %v4887 = vunpack.c.h.b16 %v4693
    %v4888 = vpack.c.b16 %v4764, %v4760
    %v4889 = vpack.c.b16 %v4765, %v4761
    %v4890 = vpack.c.b16 %v4766, %v4762
    %v4891 = vpack.c.b16 %v4767, %v4763
    %v4892 = vpack.c.b16 %v4772, %v4768
    %v4893 = vpack.c.b16 %v4773, %v4769
    %v4894 = vpack.c.b16 %v4774, %v4770
    %v4895 = vpack.c.b16 %v4775, %v4771
    %v4896 = vpack.c.b16 %v4780, %v4776
    %v4897 = vpack.c.b16 %v4781, %v4777
    %v4898 = vpack.c.b16 %v4782, %v4778
    %v4899 = vpack.c.b16 %v4783, %v4779
    %v4900 = vpack.c.b16 %v4788, %v4784
    %v4901 = vpack.c.b16 %v4789, %v4785
    %v4902 = vpack.c.b16 %v4790, %v4786
    %v4903 = vpack.c.b16 %v4791, %v4787
    %v4904 = vpack.c.b16 %v4796, %v4792
    %v4905 = vpack.c.b16 %v4797, %v4793
    %v4906 = vpack.c.b16 %v4798, %v4794
    %v4907 = vpack.c.b16 %v4799, %v4795
    %v4908 = vpack.c.b16 %v4804, %v4800
    %v4909 = vpack.c.b16 %v4805, %v4801
    %v4910 = vpack.c.b16 %v4806, %v4802
    %v4911 = vpack.c.b16 %v4807, %v4803
    %v4912 = vpack.c.b16 %v4812, %v4808
    %v4913 = vpack.c.b16 %v4813, %v4809
    %v4914 = vpack.c.b16 %v4814, %v4810
    %v4915 = vpack.c.b16 %v4815, %v4811
    %v4916 = vpack.c.b16 %v4820, %v4816
    %v4917 = vpack.c.b16 %v4821, %v4817
    %v4918 = vpack.c.b16 %v4822, %v4818
    %v4919 = vpack.c.b16 %v4823, %v4819
    %v4920 = vpack.c.b16 %v4828, %v4824
    %v4921 = vpack.c.b16 %v4829, %v4825
    %v4922 = vpack.c.b16 %v4830, %v4826
    %v4923 = vpack.c.b16 %v4831, %v4827
    %v4924 = vpack.c.b16 %v4836, %v4832
    %v4925 = vpack.c.b16 %v4837, %v4833
    %v4926 = vpack.c.b16 %v4838, %v4834
    %v4927 = vpack.c.b16 %v4839, %v4835
    %v4928 = vpack.c.b16 %v4844, %v4840
    %v4929 = vpack.c.b16 %v4845, %v4841
    %v4930 = vpack.c.b16 %v4846, %v4842
    %v4931 = vpack.c.b16 %v4847, %v4843
    %v4932 = vpack.c.b16 %v4852, %v4848
    %v4933 = vpack.c.b16 %v4853, %v4849
    %v4934 = vpack.c.b16 %v4854, %v4850
    %v4935 = vpack.c.b16 %v4855, %v4851
    %v4936 = vpack.c.b16 %v4860, %v4856
    %v4937 = vpack.c.b16 %v4861, %v4857
    %v4938 = vpack.c.b16 %v4862, %v4858
    %v4939 = vpack.c.b16 %v4863, %v4859
    %v4940 = vpack.c.b16 %v4868, %v4864
    %v4941 = vpack.c.b16 %v4869, %v4865
    %v4942 = vpack.c.b16 %v4870, %v4866
    %v4943 = vpack.c.b16 %v4871, %v4867
    %v4944 = vpack.c.b16 %v4876, %v4872
    %v4945 = vpack.c.b16 %v4877, %v4873
    %v4946 = vpack.c.b16 %v4878, %v4874
    %v4947 = vpack.c.b16 %v4879, %v4875
    %v4948 = vpack.c.b16 %v4884, %v4880
    %v4949 = vpack.c.b16 %v4885, %v4881
    %v4950 = vpack.c.b16 %v4886, %v4882
    %v4951 = vpack.c.b16 %v4887, %v4883
    %5016 = vmatprep.subr.bf16.mxu0 %v4889
    %5017 = vmatpush1.bf16.msra.mxu0 %v4888
    %5018 = vmatprep.subr.bf16.mxu0 %v4893
    %5019 = vmatpush1.bf16.msra.mxu0 %v4892
    %5020 = vmatprep.subr.bf16.mxu0 %v4897
    %5021 = vmatpush1.bf16.msra.mxu0 %v4896
    %5022 = vmatprep.subr.bf16.mxu0 %v4901
    %5023 = vmatpush1.bf16.msra.mxu0 %v4900
    %5024 = vmatprep.subr.bf16.mxu0 %v4905
    %5025 = vmatpush1.bf16.msra.mxu0 %v4904
    %5026 = vmatprep.subr.bf16.mxu0 %v4909
    %5027 = vmatpush1.bf16.msra.mxu0 %v4908
    %5028 = vmatprep.subr.bf16.mxu0 %v4913
    %5029 = vmatpush1.bf16.msra.mxu0 %v4912
    %5030 = vmatprep.subr.bf16.mxu0 %v4917
    %5031 = vmatpush1.bf16.msra.mxu0 %v4916
    %5032 = vmatprep.subr.bf16.mxu0 %v4921
    %5033 = vmatpush1.bf16.msra.mxu0 %v4920
    %5034 = vmatprep.subr.bf16.mxu0 %v4925
    %5035 = vmatpush1.bf16.msra.mxu0 %v4924
    %5036 = vmatprep.subr.bf16.mxu0 %v4929
    %5037 = vmatpush1.bf16.msra.mxu0 %v4928
    %5038 = vmatprep.subr.bf16.mxu0 %v4933
    %5039 = vmatpush1.bf16.msra.mxu0 %v4932
    %5040 = vmatprep.subr.bf16.mxu0 %v4937
    %5041 = vmatpush1.bf16.msra.mxu0 %v4936
    %5042 = vmatprep.subr.bf16.mxu0 %v4941
    %5043 = vmatpush1.bf16.msra.mxu0 %v4940
    %5044 = vmatprep.subr.bf16.mxu0 %v4945
    %5045 = vmatpush1.bf16.msra.mxu0 %v4944
    %5046 = vmatprep.subr.bf16.mxu0 %v4949
    %5047 = vmatpush1.bf16.msra.mxu0 %v4948
    %5048 = vmatprep.mubr.bf16.mxu0 %v4695
    %5049 = vmatmul.mubr.bf16.gmra.mrb[0].mxu0 %v4694
    %v5050 = vpop.f32.mrb[0].mxu0
    %v5051 = vadd.f32 0.0, %v5050
    %v5052 = vpop.f32.mrb[0].mxu0
    %v5053 = vadd.f32 0.0, %v5052
    %v5054 = vpop.f32.mrb[0].mxu0
    %v5055 = vpop.f32.mrb[0].mxu0
    %5056 = vdwg.mxu0
    %5057 = vmatprep.subr.bf16.mxu0 %v4891
    %5058 = vmatpush1.bf16.msra.mxu0 %v4890
    %5059 = vmatprep.subr.bf16.mxu0 %v4895
    %5060 = vmatpush1.bf16.msra.mxu0 %v4894
    %5061 = vmatprep.subr.bf16.mxu0 %v4899
    %5062 = vmatpush1.bf16.msra.mxu0 %v4898
    %5063 = vmatprep.subr.bf16.mxu0 %v4903
    %5064 = vmatpush1.bf16.msra.mxu0 %v4902
    %5065 = vmatprep.subr.bf16.mxu0 %v4907
    %5066 = vmatpush1.bf16.msra.mxu0 %v4906
    %5067 = vmatprep.subr.bf16.mxu0 %v4911
    %5068 = vmatpush1.bf16.msra.mxu0 %v4910
    %5069 = vmatprep.subr.bf16.mxu0 %v4915
    %5070 = vmatpush1.bf16.msra.mxu0 %v4914
    %5071 = vmatprep.subr.bf16.mxu0 %v4919
    %5072 = vmatpush1.bf16.msra.mxu0 %v4918
    %5073 = vmatprep.subr.bf16.mxu0 %v4923
    %5074 = vmatpush1.bf16.msra.mxu0 %v4922
    %5075 = vmatprep.subr.bf16.mxu0 %v4927
    %5076 = vmatpush1.bf16.msra.mxu0 %v4926
    %5077 = vmatprep.subr.bf16.mxu0 %v4931
    %5078 = vmatpush1.bf16.msra.mxu0 %v4930
    %5079 = vmatprep.subr.bf16.mxu0 %v4935
    %5080 = vmatpush1.bf16.msra.mxu0 %v4934
    %5081 = vmatprep.subr.bf16.mxu0 %v4939
    %5082 = vmatpush1.bf16.msra.mxu0 %v4938
    %5083 = vmatprep.subr.bf16.mxu0 %v4943
    %5084 = vmatpush1.bf16.msra.mxu0 %v4942
    %5085 = vmatprep.subr.bf16.mxu0 %v4947
    %5086 = vmatpush1.bf16.msra.mxu0 %v4946
    %5087 = vmatprep.subr.bf16.mxu0 %v4951
    %5088 = vmatpush1.bf16.msra.mxu0 %v4950
    %5089 = vmatprep.mubr.bf16.mxu0 %v4695
    %5090 = vmatmul.mubr.bf16.gmra.mrb[0].mxu0 %v4694
    %v5091 = vpop.f32.mrb[0].mxu0
    %v5092 = vadd.f32 0.0, %v5091
    %v5093 = vpop.f32.mrb[0].mxu0
    %v5094 = vadd.f32 0.0, %v5093
    %v5095 = vpop.f32.mrb[0].mxu0
    %v5096 = vpop.f32.mrb[0].mxu0
    %5097 = vdwg.mxu0
    %v5098 = vrot.slane %v5051, 4
    %v5099 = vadd.f32 %v5051, %v5098
    %v5100 = vrot.slane %v5099, 2
    %v5101 = vadd.f32 %v5099, %v5100
    %v5102 = vrot.slane %v5101, 1
    %v5103 = vadd.f32 %v5101, %v5102
    %v5104 = vrot.slane %v5053, 4
    %v5105 = vadd.f32 %v5053, %v5104
    %v5106 = vrot.slane %v5105, 2
    %v5107 = vadd.f32 %v5105, %v5106
    %v5108 = vrot.slane %v5107, 1
    %v5109 = vadd.f32 %v5107, %v5108
    %v5110 = vrot.slane %v5092, 4
    %v5111 = vadd.f32 %v5092, %v5110
    %v5112 = vrot.slane %v5111, 2
    %v5113 = vadd.f32 %v5111, %v5112
    %v5114 = vrot.slane %v5113, 1
    %v5115 = vadd.f32 %v5113, %v5114
    %v5116 = vrot.slane %v5094, 4
    %v5117 = vadd.f32 %v5094, %v5116
    %v5118 = vrot.slane %v5117, 2
    %v5119 = vadd.f32 %v5117, %v5118
    %v5120 = vrot.slane %v5119, 1
    %v5121 = vadd.f32 %v5119, %v5120
    %v5122 = vmul.f32 %v5103, 0.125
    %v5123 = vmul.f32 %v5109, 0.125
    %v5124 = vmul.f32 %v5115, 0.125
    %v5125 = vmul.f32 %v5121, 0.125
    %v5126 = vmul.f32 %v5051, %v5051
    %v5127 = vmul.f32 %v5053, %v5053
    %v5128 = vmul.f32 %v5092, %v5092
    %v5129 = vmul.f32 %v5094, %v5094
    %v5130 = vrot.slane %v5126, 4
    %v5131 = vadd.f32 %v5126, %v5130
    %v5132 = vrot.slane %v5131, 2
    %v5133 = vadd.f32 %v5131, %v5132
    %v5134 = vrot.slane %v5133, 1
    %v5135 = vadd.f32 %v5133, %v5134
    %v5136 = vrot.slane %v5127, 4
    %v5137 = vadd.f32 %v5127, %v5136
    %v5138 = vrot.slane %v5137, 2
    %v5139 = vadd.f32 %v5137, %v5138
    %v5140 = vrot.slane %v5139, 1
    %v5141 = vadd.f32 %v5139, %v5140
    %v5142 = vrot.slane %v5128, 4
    %v5143 = vadd.f32 %v5128, %v5142
    %v5144 = vrot.slane %v5143, 2
    %v5145 = vadd.f32 %v5143, %v5144
    %v5146 = vrot.slane %v5145, 1
    %v5147 = vadd.f32 %v5145, %v5146
    %v5148 = vrot.slane %v5129, 4
    %v5149 = vadd.f32 %v5129, %v5148
    %v5150 = vrot.slane %v5149, 2
    %v5151 = vadd.f32 %v5149, %v5150
    %v5152 = vrot.slane %v5151, 1
    %v5153 = vadd.f32 %v5151, %v5152
    %v5154 = vmul.f32 %v5135, 0.125
    %v5155 = vmul.f32 %v5141, 0.125
    %v5156 = vmul.f32 %v5147, 0.125
    %v5157 = vmul.f32 %v5153, 0.125
    %v5158 = vmul.f32 %v5122, %v5122
    %v5159 = vmul.f32 %v5123, %v5123
    %v5160 = vmul.f32 %v5124, %v5124
    %v5161 = vmul.f32 %v5125, %v5125
    %v5162 = vsub.f32 %v5154, %v5158
    %v5163 = vsub.f32 %v5155, %v5159
    %v5164 = vsub.f32 %v5156, %v5160
    %v5165 = vsub.f32 %v5157, %v5161
    %v5166 = vmax.f32 %v5162, 0.0
    %v5167 = vmax.f32 %v5163, 0.0
    %v5168 = vmax.f32 %v5164, 0.0
    %v5169 = vmax.f32 %v5165, 0.0
    %v5170 = vadd.f32 %v5166, 0.8
    %v5171 = vadd.f32 %v5167, 0.8
    %v5172 = vadd.f32 %v5168, 0.8
    %v5173 = vadd.f32 %v5169, 0.8
    %v5174 = vrsqrt.pop %v5170
    %v5175 = vrsqrt.pop %v5171
    %v5176 = vrsqrt.pop %v5172
    %v5177 = vrsqrt.pop %v5173
    %v5182 = vcombine.low %v5174, %v5175
    %v5183 = vcombine.low %v5176, %v5177
    %v5185 = vunpack.c.l.s4 1966171168
    %v5186 = vunpack.c.0.s8 %v5185
    %v5187 = vlaneseq
    %v5188 = vshrl.u32 %v5187, 7
    %v5189 = vsub.s32 %v5186, %v5188
    %v5190 = vrot.slane %v5182, %v5189
    %v5192 = vunpack.c.l.s4 1966171168
    %v5193 = vunpack.c.0.s8 %v5192
    %v5194 = vlaneseq
    %v5195 = vshrl.u32 %v5194, 7
    %v5196 = vsub.s32 %v5193, %v5195
    %v5197 = vrot.slane %v5183, %v5196
    %v5198 = vcombine.low %v5190, %v5197
    %v5200 = vunpack.c.l.s4 1966171168
    %v5201 = vunpack.c.0.s8 %v5200
    %v5202 = vlaneseq
    %v5203 = vshrl.u32 %v5202, 7
    %v5204 = vsub.s32 %v5201, %v5203
    %v5205 = vrot.slane %v5198, %v5204
    %v5207 = vmul.f32 %v4371, %v5205
    %v5212 = vcombine.low %v5122, %v5123
    %v5213 = vcombine.low %v5124, %v5125
    %v5215 = vunpack.c.l.s4 1966171168
    %v5216 = vunpack.c.0.s8 %v5215
    %v5217 = vlaneseq
    %v5218 = vshrl.u32 %v5217, 7
    %v5219 = vsub.s32 %v5216, %v5218
    %v5220 = vrot.slane %v5212, %v5219
    %v5222 = vunpack.c.l.s4 1966171168
    %v5223 = vunpack.c.0.s8 %v5222
    %v5224 = vlaneseq
    %v5225 = vshrl.u32 %v5224, 7
    %v5226 = vsub.s32 %v5223, %v5225
    %v5227 = vrot.slane %v5213, %v5226
    %v5228 = vcombine.low %v5220, %v5227
    %v5230 = vunpack.c.l.s4 1966171168
    %v5231 = vunpack.c.0.s8 %v5230
    %v5232 = vlaneseq
    %v5233 = vshrl.u32 %v5232, 7
    %v5234 = vsub.s32 %v5231, %v5233
    %v5235 = vrot.slane %v5228, %v5234
    %v5237 = vmul.f32 %v5207, %v5235
    %v5238 = vsub.f32 %v4373, %v5237
    %v5240 = vlaneseq
    %v5241 = vshrl.u32 %v5240, 7
    %v5242 = vsub.s32 0, %v5241
    %v5243 = vrot.slane %v5207, %v5242
    %v5244 = vlaneseq
    %v5245 = vshrl.u32 %v5244, 7
    %v5246 = vsub.s32 1, %v5245
    %v5247 = vrot.slane %v5207, %v5246
    %v5248 = vlaneseq
    %v5249 = vshrl.u32 %v5248, 7
    %v5250 = vsub.s32 2, %v5249
    %v5251 = vrot.slane %v5207, %v5250
    %v5252 = vlaneseq
    %v5253 = vshrl.u32 %v5252, 7
    %v5254 = vsub.s32 3, %v5253
    %v5255 = vrot.slane %v5207, %v5254
    %v5260 = vmul.f32 %v5243, %v5051
    %v5261 = vmul.f32 %v5247, %v5053
    %v5262 = vmul.f32 %v5251, %v5092
    %v5263 = vmul.f32 %v5255, %v5094
    %v5265 = vlaneseq
    %v5266 = vshrl.u32 %v5265, 7
    %v5267 = vsub.s32 0, %v5266
    %v5268 = vrot.slane %v5238, %v5267
    %v5269 = vlaneseq
    %v5270 = vshrl.u32 %v5269, 7
    %v5271 = vsub.s32 1, %v5270
    %v5272 = vrot.slane %v5238, %v5271
    %v5273 = vlaneseq
    %v5274 = vshrl.u32 %v5273, 7
    %v5275 = vsub.s32 2, %v5274
    %v5276 = vrot.slane %v5238, %v5275
    %v5277 = vlaneseq
    %v5278 = vshrl.u32 %v5277, 7
    %v5279 = vsub.s32 3, %v5278
    %v5280 = vrot.slane %v5238, %v5279
    %v5285 = vadd.f32 %v5260, %v5268
    %v5286 = vadd.f32 %v5261, %v5272
    %v5287 = vadd.f32 %v5262, %v5276
    %v5288 = vadd.f32 %v5263, %v5280
    %v5289 = vmul.f32 %v5285, 0.2
    %v5290 = vmul.f32 %v5286, 0.2
    %v5291 = vmul.f32 %v5287, 0.2
    %v5292 = vmul.f32 %v5288, 0.2
    %v5293 = vmax.f32 %v5285, %v5289
    %v5294 = vmax.f32 %v5286, %v5290
    %v5295 = vmax.f32 %v5287, %v5291
    %v5296 = vmax.f32 %v5288, %v5292
    %s5297 = smul.u32 4, 64
    %s5298 = smul.u32 %s5297, 8
    %s5299 = sshll.u32 %s5298, 4
    %5300 = dma.done [#allocation4], %s5299
    %v5301 = vld [vmem:[#allocation2] sm:$0xff]
    %v5302 = vld [vmem:[#allocation2 + $0x8] sm:$0xff]
    %v5303 = vld [vmem:[#allocation2 + $0x10] sm:$0xff]
    %v5304 = vld [vmem:[#allocation2 + $0x18] sm:$0xff]
    %v5305 = vld [vmem:[#allocation2 + $0x20] sm:$0xff]
    %v5306 = vld [vmem:[#allocation2 + $0x28] sm:$0xff]
    %v5307 = vld [vmem:[#allocation2 + $0x30] sm:$0xff]
    %v5308 = vld [vmem:[#allocation2 + $0x38] sm:$0xff]
    %v5309 = vld [vmem:[#allocation2 + $0x40] sm:$0xff]
    %v5310 = vld [vmem:[#allocation2 + $0x48] sm:$0xff]
    %v5311 = vld [vmem:[#allocation2 + $0x50] sm:$0xff]
    %v5312 = vld [vmem:[#allocation2 + $0x58] sm:$0xff]
    %v5313 = vld [vmem:[#allocation2 + $0x60] sm:$0xff]
    %v5314 = vld [vmem:[#allocation2 + $0x68] sm:$0xff]
    %v5315 = vld [vmem:[#allocation2 + $0x70] sm:$0xff]
    %v5316 = vld [vmem:[#allocation2 + $0x78] sm:$0xff]
    %v5317 = vld [vmem:[#allocation2 + $0x80] sm:$0xff]
    %v5318 = vld [vmem:[#allocation2 + $0x88] sm:$0xff]
    %v5319 = vld [vmem:[#allocation2 + $0x90] sm:$0xff]
    %v5320 = vld [vmem:[#allocation2 + $0x98] sm:$0xff]
    %v5321 = vld [vmem:[#allocation2 + $0xa0] sm:$0xff]
    %v5322 = vld [vmem:[#allocation2 + $0xa8] sm:$0xff]
    %v5323 = vld [vmem:[#allocation2 + $0xb0] sm:$0xff]
    %v5324 = vld [vmem:[#allocation2 + $0xb8] sm:$0xff]
    %v5325 = vld [vmem:[#allocation2 + $0xc0] sm:$0xff]
    %v5326 = vld [vmem:[#allocation2 + $0xc8] sm:$0xff]
    %v5327 = vld [vmem:[#allocation2 + $0xd0] sm:$0xff]
    %v5328 = vld [vmem:[#allocation2 + $0xd8] sm:$0xff]
    %v5329 = vld [vmem:[#allocation2 + $0xe0] sm:$0xff]
    %v5330 = vld [vmem:[#allocation2 + $0xe8] sm:$0xff]
    %v5331 = vld [vmem:[#allocation2 + $0xf0] sm:$0xff]
    %v5332 = vld [vmem:[#allocation2 + $0xf8] sm:$0xff]
    %v5333 = vld [vmem:[#allocation2 + $0x100] sm:$0xff]
    %v5334 = vld [vmem:[#allocation2 + $0x108] sm:$0xff]
    %v5335 = vld [vmem:[#allocation2 + $0x110] sm:$0xff]
    %v5336 = vld [vmem:[#allocation2 + $0x118] sm:$0xff]
    %v5337 = vld [vmem:[#allocation2 + $0x120] sm:$0xff]
    %v5338 = vld [vmem:[#allocation2 + $0x128] sm:$0xff]
    %v5339 = vld [vmem:[#allocation2 + $0x130] sm:$0xff]
    %v5340 = vld [vmem:[#allocation2 + $0x138] sm:$0xff]
    %v5341 = vld [vmem:[#allocation2 + $0x140] sm:$0xff]
    %v5342 = vld [vmem:[#allocation2 + $0x148] sm:$0xff]
    %v5343 = vld [vmem:[#allocation2 + $0x150] sm:$0xff]
    %v5344 = vld [vmem:[#allocation2 + $0x158] sm:$0xff]
    %v5345 = vld [vmem:[#allocation2 + $0x160] sm:$0xff]
    %v5346 = vld [vmem:[#allocation2 + $0x168] sm:$0xff]
    %v5347 = vld [vmem:[#allocation2 + $0x170] sm:$0xff]
    %v5348 = vld [vmem:[#allocation2 + $0x178] sm:$0xff]
    %v5349 = vld [vmem:[#allocation2 + $0x180] sm:$0xff]
    %v5350 = vld [vmem:[#allocation2 + $0x188] sm:$0xff]
    %v5351 = vld [vmem:[#allocation2 + $0x190] sm:$0xff]
    %v5352 = vld [vmem:[#allocation2 + $0x198] sm:$0xff]
    %v5353 = vld [vmem:[#allocation2 + $0x1a0] sm:$0xff]
    %v5354 = vld [vmem:[#allocation2 + $0x1a8] sm:$0xff]
    %v5355 = vld [vmem:[#allocation2 + $0x1b0] sm:$0xff]
    %v5356 = vld [vmem:[#allocation2 + $0x1b8] sm:$0xff]
    %v5357 = vld [vmem:[#allocation2 + $0x1c0] sm:$0xff]
    %v5358 = vld [vmem:[#allocation2 + $0x1c8] sm:$0xff]
    %v5359 = vld [vmem:[#allocation2 + $0x1d0] sm:$0xff]
    %v5360 = vld [vmem:[#allocation2 + $0x1d8] sm:$0xff]
    %v5361 = vld [vmem:[#allocation2 + $0x1e0] sm:$0xff]
    %v5362 = vld [vmem:[#allocation2 + $0x1e8] sm:$0xff]
    %v5363 = vld [vmem:[#allocation2 + $0x1f0] sm:$0xff]
    %v5364 = vld [vmem:[#allocation2 + $0x1f8] sm:$0xff]
    %v5365 = vld [vmem:[#allocation2 + $0x200] sm:$0xff]
    %v5366 = vld [vmem:[#allocation2 + $0x208] sm:$0xff]
    %v5367 = vld [vmem:[#allocation2 + $0x210] sm:$0xff]
    %v5368 = vld [vmem:[#allocation2 + $0x218] sm:$0xff]
    %v5369 = vld [vmem:[#allocation2 + $0x220] sm:$0xff]
    %v5370 = vld [vmem:[#allocation2 + $0x228] sm:$0xff]
    %v5371 = vld [vmem:[#allocation2 + $0x230] sm:$0xff]
    %v5372 = vld [vmem:[#allocation2 + $0x238] sm:$0xff]
    %v5373 = vld [vmem:[#allocation2 + $0x240] sm:$0xff]
    %v5374 = vld [vmem:[#allocation2 + $0x248] sm:$0xff]
    %v5375 = vld [vmem:[#allocation2 + $0x250] sm:$0xff]
    %v5376 = vld [vmem:[#allocation2 + $0x258] sm:$0xff]
    %v5377 = vld [vmem:[#allocation2 + $0x260] sm:$0xff]
    %v5378 = vld [vmem:[#allocation2 + $0x268] sm:$0xff]
    %v5379 = vld [vmem:[#allocation2 + $0x270] sm:$0xff]
    %v5380 = vld [vmem:[#allocation2 + $0x278] sm:$0xff]
    %v5381 = vld [vmem:[#allocation2 + $0x280] sm:$0xff]
    %v5382 = vld [vmem:[#allocation2 + $0x288] sm:$0xff]
    %v5383 = vld [vmem:[#allocation2 + $0x290] sm:$0xff]
    %v5384 = vld [vmem:[#allocation2 + $0x298] sm:$0xff]
    %v5385 = vld [vmem:[#allocation2 + $0x2a0] sm:$0xff]
    %v5386 = vld [vmem:[#allocation2 + $0x2a8] sm:$0xff]
    %v5387 = vld [vmem:[#allocation2 + $0x2b0] sm:$0xff]
    %v5388 = vld [vmem:[#allocation2 + $0x2b8] sm:$0xff]
    %v5389 = vld [vmem:[#allocation2 + $0x2c0] sm:$0xff]
    %v5390 = vld [vmem:[#allocation2 + $0x2c8] sm:$0xff]
    %v5391 = vld [vmem:[#allocation2 + $0x2d0] sm:$0xff]
    %v5392 = vld [vmem:[#allocation2 + $0x2d8] sm:$0xff]
    %v5393 = vld [vmem:[#allocation2 + $0x2e0] sm:$0xff]
    %v5394 = vld [vmem:[#allocation2 + $0x2e8] sm:$0xff]
    %v5395 = vld [vmem:[#allocation2 + $0x2f0] sm:$0xff]
    %v5396 = vld [vmem:[#allocation2 + $0x2f8] sm:$0xff]
    %v5397 = vld [vmem:[#allocation2 + $0x300] sm:$0xff]
    %v5398 = vld [vmem:[#allocation2 + $0x308] sm:$0xff]
    %v5399 = vld [vmem:[#allocation2 + $0x310] sm:$0xff]
    %v5400 = vld [vmem:[#allocation2 + $0x318] sm:$0xff]
    %v5401 = vld [vmem:[#allocation2 + $0x320] sm:$0xff]
    %v5402 = vld [vmem:[#allocation2 + $0x328] sm:$0xff]
    %v5403 = vld [vmem:[#allocation2 + $0x330] sm:$0xff]
    %v5404 = vld [vmem:[#allocation2 + $0x338] sm:$0xff]
    %v5405 = vld [vmem:[#allocation2 + $0x340] sm:$0xff]
    %v5406 = vld [vmem:[#allocation2 + $0x348] sm:$0xff]
    %v5407 = vld [vmem:[#allocation2 + $0x350] sm:$0xff]
    %v5408 = vld [vmem:[#allocation2 + $0x358] sm:$0xff]
    %v5409 = vld [vmem:[#allocation2 + $0x360] sm:$0xff]
    %v5410 = vld [vmem:[#allocation2 + $0x368] sm:$0xff]
    %v5411 = vld [vmem:[#allocation2 + $0x370] sm:$0xff]
    %v5412 = vld [vmem:[#allocation2 + $0x378] sm:$0xff]
    %v5413 = vld [vmem:[#allocation2 + $0x380] sm:$0xff]
    %v5414 = vld [vmem:[#allocation2 + $0x388] sm:$0xff]
    %v5415 = vld [vmem:[#allocation2 + $0x390] sm:$0xff]
    %v5416 = vld [vmem:[#allocation2 + $0x398] sm:$0xff]
    %v5417 = vld [vmem:[#allocation2 + $0x3a0] sm:$0xff]
    %v5418 = vld [vmem:[#allocation2 + $0x3a8] sm:$0xff]
    %v5419 = vld [vmem:[#allocation2 + $0x3b0] sm:$0xff]
    %v5420 = vld [vmem:[#allocation2 + $0x3b8] sm:$0xff]
    %v5421 = vld [vmem:[#allocation2 + $0x3c0] sm:$0xff]
    %v5422 = vld [vmem:[#allocation2 + $0x3c8] sm:$0xff]
    %v5423 = vld [vmem:[#allocation2 + $0x3d0] sm:$0xff]
    %v5424 = vld [vmem:[#allocation2 + $0x3d8] sm:$0xff]
    %v5425 = vld [vmem:[#allocation2 + $0x3e0] sm:$0xff]
    %v5426 = vld [vmem:[#allocation2 + $0x3e8] sm:$0xff]
    %v5427 = vld [vmem:[#allocation2 + $0x3f0] sm:$0xff]
    %v5428 = vld [vmem:[#allocation2 + $0x3f8] sm:$0xff]
    %v5429 = vld [vmem:[#allocation2 + $0x400] sm:$0xff]
    %v5430 = vld [vmem:[#allocation2 + $0x408] sm:$0xff]
    %v5431 = vld [vmem:[#allocation2 + $0x410] sm:$0xff]
    %v5432 = vld [vmem:[#allocation2 + $0x418] sm:$0xff]
    %v5433 = vld [vmem:[#allocation2 + $0x420] sm:$0xff]
    %v5434 = vld [vmem:[#allocation2 + $0x428] sm:$0xff]
    %v5435 = vld [vmem:[#allocation2 + $0x430] sm:$0xff]
    %v5436 = vld [vmem:[#allocation2 + $0x438] sm:$0xff]
    %v5437 = vld [vmem:[#allocation2 + $0x440] sm:$0xff]
    %v5438 = vld [vmem:[#allocation2 + $0x448] sm:$0xff]
    %v5439 = vld [vmem:[#allocation2 + $0x450] sm:$0xff]
    %v5440 = vld [vmem:[#allocation2 + $0x458] sm:$0xff]
    %v5441 = vld [vmem:[#allocation2 + $0x460] sm:$0xff]
    %v5442 = vld [vmem:[#allocation2 + $0x468] sm:$0xff]
    %v5443 = vld [vmem:[#allocation2 + $0x470] sm:$0xff]
    %v5444 = vld [vmem:[#allocation2 + $0x478] sm:$0xff]
    %v5445 = vld [vmem:[#allocation2 + $0x480] sm:$0xff]
    %v5446 = vld [vmem:[#allocation2 + $0x488] sm:$0xff]
    %v5447 = vld [vmem:[#allocation2 + $0x490] sm:$0xff]
    %v5448 = vld [vmem:[#allocation2 + $0x498] sm:$0xff]
    %v5449 = vld [vmem:[#allocation2 + $0x4a0] sm:$0xff]
    %v5450 = vld [vmem:[#allocation2 + $0x4a8] sm:$0xff]
    %v5451 = vld [vmem:[#allocation2 + $0x4b0] sm:$0xff]
    %v5452 = vld [vmem:[#allocation2 + $0x4b8] sm:$0xff]
    %v5453 = vld [vmem:[#allocation2 + $0x4c0] sm:$0xff]
    %v5454 = vld [vmem:[#allocation2 + $0x4c8] sm:$0xff]
    %v5455 = vld [vmem:[#allocation2 + $0x4d0] sm:$0xff]
    %v5456 = vld [vmem:[#allocation2 + $0x4d8] sm:$0xff]
    %v5457 = vld [vmem:[#allocation2 + $0x4e0] sm:$0xff]
    %v5458 = vld [vmem:[#allocation2 + $0x4e8] sm:$0xff]
    %v5459 = vld [vmem:[#allocation2 + $0x4f0] sm:$0xff]
    %v5460 = vld [vmem:[#allocation2 + $0x4f8] sm:$0xff]
    %v5461 = vld [vmem:[#allocation2 + $0x500] sm:$0xff]
    %v5462 = vld [vmem:[#allocation2 + $0x508] sm:$0xff]
    %v5463 = vld [vmem:[#allocation2 + $0x510] sm:$0xff]
    %v5464 = vld [vmem:[#allocation2 + $0x518] sm:$0xff]
    %v5465 = vld [vmem:[#allocation2 + $0x520] sm:$0xff]
    %v5466 = vld [vmem:[#allocation2 + $0x528] sm:$0xff]
    %v5467 = vld [vmem:[#allocation2 + $0x530] sm:$0xff]
    %v5468 = vld [vmem:[#allocation2 + $0x538] sm:$0xff]
    %v5469 = vld [vmem:[#allocation2 + $0x540] sm:$0xff]
    %v5470 = vld [vmem:[#allocation2 + $0x548] sm:$0xff]
    %v5471 = vld [vmem:[#allocation2 + $0x550] sm:$0xff]
    %v5472 = vld [vmem:[#allocation2 + $0x558] sm:$0xff]
    %v5473 = vld [vmem:[#allocation2 + $0x560] sm:$0xff]
    %v5474 = vld [vmem:[#allocation2 + $0x568] sm:$0xff]
    %v5475 = vld [vmem:[#allocation2 + $0x570] sm:$0xff]
    %v5476 = vld [vmem:[#allocation2 + $0x578] sm:$0xff]
    %v5477 = vld [vmem:[#allocation2 + $0x580] sm:$0xff]
    %v5478 = vld [vmem:[#allocation2 + $0x588] sm:$0xff]
    %v5479 = vld [vmem:[#allocation2 + $0x590] sm:$0xff]
    %v5480 = vld [vmem:[#allocation2 + $0x598] sm:$0xff]
    %v5481 = vld [vmem:[#allocation2 + $0x5a0] sm:$0xff]
    %v5482 = vld [vmem:[#allocation2 + $0x5a8] sm:$0xff]
    %v5483 = vld [vmem:[#allocation2 + $0x5b0] sm:$0xff]
    %v5484 = vld [vmem:[#allocation2 + $0x5b8] sm:$0xff]
    %v5485 = vld [vmem:[#allocation2 + $0x5c0] sm:$0xff]
    %v5486 = vld [vmem:[#allocation2 + $0x5c8] sm:$0xff]
    %v5487 = vld [vmem:[#allocation2 + $0x5d0] sm:$0xff]
    %v5488 = vld [vmem:[#allocation2 + $0x5d8] sm:$0xff]
    %v5489 = vld [vmem:[#allocation2 + $0x5e0] sm:$0xff]
    %v5490 = vld [vmem:[#allocation2 + $0x5e8] sm:$0xff]
    %v5491 = vld [vmem:[#allocation2 + $0x5f0] sm:$0xff]
    %v5492 = vld [vmem:[#allocation2 + $0x5f8] sm:$0xff]
    %v5493 = vld [vmem:[#allocation2 + $0x600] sm:$0xff]
    %v5494 = vld [vmem:[#allocation2 + $0x608] sm:$0xff]
    %v5495 = vld [vmem:[#allocation2 + $0x610] sm:$0xff]
    %v5496 = vld [vmem:[#allocation2 + $0x618] sm:$0xff]
    %v5497 = vld [vmem:[#allocation2 + $0x620] sm:$0xff]
    %v5498 = vld [vmem:[#allocation2 + $0x628] sm:$0xff]
    %v5499 = vld [vmem:[#allocation2 + $0x630] sm:$0xff]
    %v5500 = vld [vmem:[#allocation2 + $0x638] sm:$0xff]
    %v5501 = vld [vmem:[#allocation2 + $0x640] sm:$0xff]
    %v5502 = vld [vmem:[#allocation2 + $0x648] sm:$0xff]
    %v5503 = vld [vmem:[#allocation2 + $0x650] sm:$0xff]
    %v5504 = vld [vmem:[#allocation2 + $0x658] sm:$0xff]
    %v5505 = vld [vmem:[#allocation2 + $0x660] sm:$0xff]
    %v5506 = vld [vmem:[#allocation2 + $0x668] sm:$0xff]
    %v5507 = vld [vmem:[#allocation2 + $0x670] sm:$0xff]
    %v5508 = vld [vmem:[#allocation2 + $0x678] sm:$0xff]
    %v5509 = vld [vmem:[#allocation2 + $0x680] sm:$0xff]
    %v5510 = vld [vmem:[#allocation2 + $0x688] sm:$0xff]
    %v5511 = vld [vmem:[#allocation2 + $0x690] sm:$0xff]
    %v5512 = vld [vmem:[#allocation2 + $0x698] sm:$0xff]
    %v5513 = vld [vmem:[#allocation2 + $0x6a0] sm:$0xff]
    %v5514 = vld [vmem:[#allocation2 + $0x6a8] sm:$0xff]
    %v5515 = vld [vmem:[#allocation2 + $0x6b0] sm:$0xff]
    %v5516 = vld [vmem:[#allocation2 + $0x6b8] sm:$0xff]
    %v5517 = vld [vmem:[#allocation2 + $0x6c0] sm:$0xff]
    %v5518 = vld [vmem:[#allocation2 + $0x6c8] sm:$0xff]
    %v5519 = vld [vmem:[#allocation2 + $0x6d0] sm:$0xff]
    %v5520 = vld [vmem:[#allocation2 + $0x6d8] sm:$0xff]
    %v5521 = vld [vmem:[#allocation2 + $0x6e0] sm:$0xff]
    %v5522 = vld [vmem:[#allocation2 + $0x6e8] sm:$0xff]
    %v5523 = vld [vmem:[#allocation2 + $0x6f0] sm:$0xff]
    %v5524 = vld [vmem:[#allocation2 + $0x6f8] sm:$0xff]
    %v5525 = vld [vmem:[#allocation2 + $0x700] sm:$0xff]
    %v5526 = vld [vmem:[#allocation2 + $0x708] sm:$0xff]
    %v5527 = vld [vmem:[#allocation2 + $0x710] sm:$0xff]
    %v5528 = vld [vmem:[#allocation2 + $0x718] sm:$0xff]
    %v5529 = vld [vmem:[#allocation2 + $0x720] sm:$0xff]
    %v5530 = vld [vmem:[#allocation2 + $0x728] sm:$0xff]
    %v5531 = vld [vmem:[#allocation2 + $0x730] sm:$0xff]
    %v5532 = vld [vmem:[#allocation2 + $0x738] sm:$0xff]
    %v5533 = vld [vmem:[#allocation2 + $0x740] sm:$0xff]
    %v5534 = vld [vmem:[#allocation2 + $0x748] sm:$0xff]
    %v5535 = vld [vmem:[#allocation2 + $0x750] sm:$0xff]
    %v5536 = vld [vmem:[#allocation2 + $0x758] sm:$0xff]
    %v5537 = vld [vmem:[#allocation2 + $0x760] sm:$0xff]
    %v5538 = vld [vmem:[#allocation2 + $0x768] sm:$0xff]
    %v5539 = vld [vmem:[#allocation2 + $0x770] sm:$0xff]
    %v5540 = vld [vmem:[#allocation2 + $0x778] sm:$0xff]
    %v5541 = vld [vmem:[#allocation2 + $0x780] sm:$0xff]
    %v5542 = vld [vmem:[#allocation2 + $0x788] sm:$0xff]
    %v5543 = vld [vmem:[#allocation2 + $0x790] sm:$0xff]
    %v5544 = vld [vmem:[#allocation2 + $0x798] sm:$0xff]
    %v5545 = vld [vmem:[#allocation2 + $0x7a0] sm:$0xff]
    %v5546 = vld [vmem:[#allocation2 + $0x7a8] sm:$0xff]
    %v5547 = vld [vmem:[#allocation2 + $0x7b0] sm:$0xff]
    %v5548 = vld [vmem:[#allocation2 + $0x7b8] sm:$0xff]
    %v5549 = vld [vmem:[#allocation2 + $0x7c0] sm:$0xff]
    %v5550 = vld [vmem:[#allocation2 + $0x7c8] sm:$0xff]
    %v5551 = vld [vmem:[#allocation2 + $0x7d0] sm:$0xff]
    %v5552 = vld [vmem:[#allocation2 + $0x7d8] sm:$0xff]
    %v5553 = vld [vmem:[#allocation2 + $0x7e0] sm:$0xff]
    %v5554 = vld [vmem:[#allocation2 + $0x7e8] sm:$0xff]
    %v5555 = vld [vmem:[#allocation2 + $0x7f0] sm:$0xff]
    %v5556 = vld [vmem:[#allocation2 + $0x7f8] sm:$0xff]
    %v5557 = vpack.c.bf16 %v5293, %v5293
    %v5558 = vpack.c.bf16 %v5294, %v5294
    %v5559 = vpack.c.bf16 %v5295, %v5295
    %v5560 = vpack.c.bf16 %v5296, %v5296
    %5561 = vmatprep.subr.bf16.mxu0 %v5302
    %5562 = vmatpush1.bf16.msra.mxu0 %v5301
    %5563 = vmatprep.subr.bf16.mxu0 %v5310
    %5564 = vmatpush1.bf16.msra.mxu0 %v5309
    %5565 = vmatprep.subr.bf16.mxu0 %v5318
    %5566 = vmatpush1.bf16.msra.mxu0 %v5317
    %5567 = vmatprep.subr.bf16.mxu0 %v5326
    %5568 = vmatpush1.bf16.msra.mxu0 %v5325
    %5569 = vmatprep.subr.bf16.mxu0 %v5334
    %5570 = vmatpush1.bf16.msra.mxu0 %v5333
    %5571 = vmatprep.subr.bf16.mxu0 %v5342
    %5572 = vmatpush1.bf16.msra.mxu0 %v5341
    %5573 = vmatprep.subr.bf16.mxu0 %v5350
    %5574 = vmatpush1.bf16.msra.mxu0 %v5349
    %5575 = vmatprep.subr.bf16.mxu0 %v5358
    %5576 = vmatpush1.bf16.msra.mxu0 %v5357
    %5577 = vmatprep.subr.bf16.mxu0 %v5366
    %5578 = vmatpush1.bf16.msra.mxu0 %v5365
    %5579 = vmatprep.subr.bf16.mxu0 %v5374
    %5580 = vmatpush1.bf16.msra.mxu0 %v5373
    %5581 = vmatprep.subr.bf16.mxu0 %v5382
    %5582 = vmatpush1.bf16.msra.mxu0 %v5381
    %5583 = vmatprep.subr.bf16.mxu0 %v5390
    %5584 = vmatpush1.bf16.msra.mxu0 %v5389
    %5585 = vmatprep.subr.bf16.mxu0 %v5398
    %5586 = vmatpush1.bf16.msra.mxu0 %v5397
    %5587 = vmatprep.subr.bf16.mxu0 %v5406
    %5588 = vmatpush1.bf16.msra.mxu0 %v5405
    %5589 = vmatprep.subr.bf16.mxu0 %v5414
    %5590 = vmatpush1.bf16.msra.mxu0 %v5413
    %5591 = vmatprep.subr.bf16.mxu0 %v5422
    %5592 = vmatpush1.bf16.msra.mxu0 %v5421
    %5593 = vmatprep.mubr.bf16.mxu0 %v5558
    %5594 = vmatmul.mubr.bf16.gmra.mrb[0].mxu0 %v5557
    %v5595 = vpop.f32.mrb[0].mxu0
    %v5596 = vadd.f32 0.0, %v5595
    %v5597 = vpop.f32.mrb[0].mxu0
    %v5598 = vadd.f32 0.0, %v5597
    %v5599 = vpop.f32.mrb[0].mxu0
    %v5600 = vpop.f32.mrb[0].mxu0
    %5601 = vdwg.mxu0
    %5602 = vmatprep.subr.bf16.mxu0 %v5430
    %5603 = vmatpush1.bf16.msra.mxu0 %v5429
    %5604 = vmatprep.subr.bf16.mxu0 %v5438
    %5605 = vmatpush1.bf16.msra.mxu0 %v5437
    %5606 = vmatprep.subr.bf16.mxu0 %v5446
    %5607 = vmatpush1.bf16.msra.mxu0 %v5445
    %5608 = vmatprep.subr.bf16.mxu0 %v5454
    %5609 = vmatpush1.bf16.msra.mxu0 %v5453
    %5610 = vmatprep.subr.bf16.mxu0 %v5462
    %5611 = vmatpush1.bf16.msra.mxu0 %v5461
    %5612 = vmatprep.subr.bf16.mxu0 %v5470
    %5613 = vmatpush1.bf16.msra.mxu0 %v5469
    %5614 = vmatprep.subr.bf16.mxu0 %v5478
    %5615 = vmatpush1.bf16.msra.mxu0 %v5477
    %5616 = vmatprep.subr.bf16.mxu0 %v5486
    %5617 = vmatpush1.bf16.msra.mxu0 %v5485
    %5618 = vmatprep.subr.bf16.mxu0 %v5494
    %5619 = vmatpush1.bf16.msra.mxu0 %v5493
    %5620 = vmatprep.subr.bf16.mxu0 %v5502
    %5621 = vmatpush1.bf16.msra.mxu0 %v5501
    %5622 = vmatprep.subr.bf16.mxu0 %v5510
    %5623 = vmatpush1.bf16.msra.mxu0 %v5509
    %5624 = vmatprep.subr.bf16.mxu0 %v5518
    %5625 = vmatpush1.bf16.msra.mxu0 %v5517
    %5626 = vmatprep.subr.bf16.mxu0 %v5526
    %5627 = vmatpush1.bf16.msra.mxu0 %v5525
    %5628 = vmatprep.subr.bf16.mxu0 %v5534
    %5629 = vmatpush1.bf16.msra.mxu0 %v5533
    %5630 = vmatprep.subr.bf16.mxu0 %v5542
    %5631 = vmatpush1.bf16.msra.mxu0 %v5541
    %5632 = vmatprep.subr.bf16.mxu0 %v5550
    %5633 = vmatpush1.bf16.msra.mxu0 %v5549
    %5634 = vmatprep.mubr.bf16.mxu0 %v5560
    %5635 = vmatmul.mubr.bf16.gmra.mrb[0].mxu0 %v5559
    %v5636 = vpop.f32.mrb[0].mxu0
    %v5637 = vadd.f32 %v5596, %v5636
    %v5638 = vpop.f32.mrb[0].mxu0
    %v5639 = vadd.f32 %v5598, %v5638
    %v5640 = vpop.f32.mrb[0].mxu0
    %v5641 = vpop.f32.mrb[0].mxu0
    %5642 = vdwg.mxu0
    %5643 = vmatprep.subr.bf16.mxu0 %v5304
    %5644 = vmatpush1.bf16.msra.mxu0 %v5303
    %5645 = vmatprep.subr.bf16.mxu0 %v5312
    %5646 = vmatpush1.bf16.msra.mxu0 %v5311
    %5647 = vmatprep.subr.bf16.mxu0 %v5320
    %5648 = vmatpush1.bf16.msra.mxu0 %v5319
    %5649 = vmatprep.subr.bf16.mxu0 %v5328
    %5650 = vmatpush1.bf16.msra.mxu0 %v5327
    %5651 = vmatprep.subr.bf16.mxu0 %v5336
    %5652 = vmatpush1.bf16.msra.mxu0 %v5335
    %5653 = vmatprep.subr.bf16.mxu0 %v5344
    %5654 = vmatpush1.bf16.msra.mxu0 %v5343
    %5655 = vmatprep.subr.bf16.mxu0 %v5352
    %5656 = vmatpush1.bf16.msra.mxu0 %v5351
    %5657 = vmatprep.subr.bf16.mxu0 %v5360
    %5658 = vmatpush1.bf16.msra.mxu0 %v5359
    %5659 = vmatprep.subr.bf16.mxu0 %v5368
    %5660 = vmatpush1.bf16.msra.mxu0 %v5367
    %5661 = vmatprep.subr.bf16.mxu0 %v5376
    %5662 = vmatpush1.bf16.msra.mxu0 %v5375
    %5663 = vmatprep.subr.bf16.mxu0 %v5384
    %5664 = vmatpush1.bf16.msra.mxu0 %v5383
    %5665 = vmatprep.subr.bf16.mxu0 %v5392
    %5666 = vmatpush1.bf16.msra.mxu0 %v5391
    %5667 = vmatprep.subr.bf16.mxu0 %v5400
    %5668 = vmatpush1.bf16.msra.mxu0 %v5399
    %5669 = vmatprep.subr.bf16.mxu0 %v5408
    %5670 = vmatpush1.bf16.msra.mxu0 %v5407
    %5671 = vmatprep.subr.bf16.mxu0 %v5416
    %5672 = vmatpush1.bf16.msra.mxu0 %v5415
    %5673 = vmatprep.subr.bf16.mxu0 %v5424
    %5674 = vmatpush1.bf16.msra.mxu0 %v5423
    %5675 = vmatprep.mubr.bf16.mxu0 %v5558
    %5676 = vmatmul.mubr.bf16.gmra.mrb[0].mxu0 %v5557
    %v5677 = vpop.f32.mrb[0].mxu0
    %v5678 = vadd.f32 0.0, %v5677
    %v5679 = vpop.f32.mrb[0].mxu0
    %v5680 = vadd.f32 0.0, %v5679
    %v5681 = vpop.f32.mrb[0].mxu0
    %v5682 = vpop.f32.mrb[0].mxu0
    %5683 = vdwg.mxu0
    %5684 = vmatprep.subr.bf16.mxu0 %v5432
    %5685 = vmatpush1.bf16.msra.mxu0 %v5431
    %5686 = vmatprep.subr.bf16.mxu0 %v5440
    %5687 = vmatpush1.bf16.msra.mxu0 %v5439
    %5688 = vmatprep.subr.bf16.mxu0 %v5448
    %5689 = vmatpush1.bf16.msra.mxu0 %v5447
    %5690 = vmatprep.subr.bf16.mxu0 %v5456
    %5691 = vmatpush1.bf16.msra.mxu0 %v5455
    %5692 = vmatprep.subr.bf16.mxu0 %v5464
    %5693 = vmatpush1.bf16.msra.mxu0 %v5463
    %5694 = vmatprep.subr.bf16.mxu0 %v5472
    %5695 = vmatpush1.bf16.msra.mxu0 %v5471
    %5696 = vmatprep.subr.bf16.mxu0 %v5480
    %5697 = vmatpush1.bf16.msra.mxu0 %v5479
    %5698 = vmatprep.subr.bf16.mxu0 %v5488
    %5699 = vmatpush1.bf16.msra.mxu0 %v5487
    %5700 = vmatprep.subr.bf16.mxu0 %v5496
    %5701 = vmatpush1.bf16.msra.mxu0 %v5495
    %5702 = vmatprep.subr.bf16.mxu0 %v5504
    %5703 = vmatpush1.bf16.msra.mxu0 %v5503
    %5704 = vmatprep.subr.bf16.mxu0 %v5512
    %5705 = vmatpush1.bf16.msra.mxu0 %v5511
    %5706 = vmatprep.subr.bf16.mxu0 %v5520
    %5707 = vmatpush1.bf16.msra.mxu0 %v5519
    %5708 = vmatprep.subr.bf16.mxu0 %v5528
    %5709 = vmatpush1.bf16.msra.mxu0 %v5527
    %5710 = vmatprep.subr.bf16.mxu0 %v5536
    %5711 = vmatpush1.bf16.msra.mxu0 %v5535
    %5712 = vmatprep.subr.bf16.mxu0 %v5544
    %5713 = vmatpush1.bf16.msra.mxu0 %v5543
    %5714 = vmatprep.subr.bf16.mxu0 %v5552
    %5715 = vmatpush1.bf16.msra.mxu0 %v5551
    %5716 = vmatprep.mubr.bf16.mxu0 %v5560
    %5717 = vmatmul.mubr.bf16.gmra.mrb[0].mxu0 %v5559
    %v5718 = vpop.f32.mrb[0].mxu0
    %v5719 = vadd.f32 %v5678, %v5718
    %v5720 = vpop.f32.mrb[0].mxu0
    %v5721 = vadd.f32 %v5680, %v5720
    %v5722 = vpop.f32.mrb[0].mxu0
    %v5723 = vpop.f32.mrb[0].mxu0
    %5724 = vdwg.mxu0
    %5725 = vmatprep.subr.bf16.mxu0 %v5306
    %5726 = vmatpush1.bf16.msra.mxu0 %v5305
    %5727 = vmatprep.subr.bf16.mxu0 %v5314
    %5728 = vmatpush1.bf16.msra.mxu0 %v5313
    %5729 = vmatprep.subr.bf16.mxu0 %v5322
    %5730 = vmatpush1.bf16.msra.mxu0 %v5321
    %5731 = vmatprep.subr.bf16.mxu0 %v5330
    %5732 = vmatpush1.bf16.msra.mxu0 %v5329
    %5733 = vmatprep.subr.bf16.mxu0 %v5338
    %5734 = vmatpush1.bf16.msra.mxu0 %v5337
    %5735 = vmatprep.subr.bf16.mxu0 %v5346
    %5736 = vmatpush1.bf16.msra.mxu0 %v5345
    %5737 = vmatprep.subr.bf16.mxu0 %v5354
    %5738 = vmatpush1.bf16.msra.mxu0 %v5353
    %5739 = vmatprep.subr.bf16.mxu0 %v5362
    %5740 = vmatpush1.bf16.msra.mxu0 %v5361
    %5741 = vmatprep.subr.bf16.mxu0 %v5370
    %5742 = vmatpush1.bf16.msra.mxu0 %v5369
    %5743 = vmatprep.subr.bf16.mxu0 %v5378
    %5744 = vmatpush1.bf16.msra.mxu0 %v5377
    %5745 = vmatprep.subr.bf16.mxu0 %v5386
    %5746 = vmatpush1.bf16.msra.mxu0 %v5385
    %5747 = vmatprep.subr.bf16.mxu0 %v5394
    %5748 = vmatpush1.bf16.msra.mxu0 %v5393
    %5749 = vmatprep.subr.bf16.mxu0 %v5402
    %5750 = vmatpush1.bf16.msra.mxu0 %v5401
    %5751 = vmatprep.subr.bf16.mxu0 %v5410
    %5752 = vmatpush1.bf16.msra.mxu0 %v5409
    %5753 = vmatprep.subr.bf16.mxu0 %v5418
    %5754 = vmatpush1.bf16.msra.mxu0 %v5417
    %5755 = vmatprep.subr.bf16.mxu0 %v5426
    %5756 = vmatpush1.bf16.msra.mxu0 %v5425
    %5757 = vmatprep.mubr.bf16.mxu0 %v5558
    %5758 = vmatmul.mubr.bf16.gmra.mrb[0].mxu0 %v5557
    %v5759 = vpop.f32.mrb[0].mxu0
    %v5760 = vadd.f32 0.0, %v5759
    %v5761 = vpop.f32.mrb[0].mxu0
    %v5762 = vadd.f32 0.0, %v5761
    %v5763 = vpop.f32.mrb[0].mxu0
    %v5764 = vpop.f32.mrb[0].mxu0
    %5765 = vdwg.mxu0
    %5766 = vmatprep.subr.bf16.mxu0 %v5434
    %5767 = vmatpush1.bf16.msra.mxu0 %v5433
    %5768 = vmatprep.subr.bf16.mxu0 %v5442
    %5769 = vmatpush1.bf16.msra.mxu0 %v5441
    %5770 = vmatprep.subr.bf16.mxu0 %v5450
    %5771 = vmatpush1.bf16.msra.mxu0 %v5449
    %5772 = vmatprep.subr.bf16.mxu0 %v5458
    %5773 = vmatpush1.bf16.msra.mxu0 %v5457
    %5774 = vmatprep.subr.bf16.mxu0 %v5466
    %5775 = vmatpush1.bf16.msra.mxu0 %v5465
    %5776 = vmatprep.subr.bf16.mxu0 %v5474
    %5777 = vmatpush1.bf16.msra.mxu0 %v5473
    %5778 = vmatprep.subr.bf16.mxu0 %v5482
    %5779 = vmatpush1.bf16.msra.mxu0 %v5481
    %5780 = vmatprep.subr.bf16.mxu0 %v5490
    %5781 = vmatpush1.bf16.msra.mxu0 %v5489
    %5782 = vmatprep.subr.bf16.mxu0 %v5498
    %5783 = vmatpush1.bf16.msra.mxu0 %v5497
    %5784 = vmatprep.subr.bf16.mxu0 %v5506
    %5785 = vmatpush1.bf16.msra.mxu0 %v5505
    %5786 = vmatprep.subr.bf16.mxu0 %v5514
    %5787 = vmatpush1.bf16.msra.mxu0 %v5513
    %5788 = vmatprep.subr.bf16.mxu0 %v5522
    %5789 = vmatpush1.bf16.msra.mxu0 %v5521
    %5790 = vmatprep.subr.bf16.mxu0 %v5530
    %5791 = vmatpush1.bf16.msra.mxu0 %v5529
    %5792 = vmatprep.subr.bf16.mxu0 %v5538
    %5793 = vmatpush1.bf16.msra.mxu0 %v5537
    %5794 = vmatprep.subr.bf16.mxu0 %v5546
    %5795 = vmatpush1.bf16.msra.mxu0 %v5545
    %5796 = vmatprep.subr.bf16.mxu0 %v5554
    %5797 = vmatpush1.bf16.msra.mxu0 %v5553
    %5798 = vmatprep.mubr.bf16.mxu0 %v5560
    %5799 = vmatmul.mubr.bf16.gmra.mrb[0].mxu0 %v5559
    %v5800 = vpop.f32.mrb[0].mxu0
    %v5801 = vadd.f32 %v5760, %v5800
    %v5802 = vpop.f32.mrb[0].mxu0
    %v5803 = vadd.f32 %v5762, %v5802
    %v5804 = vpop.f32.mrb[0].mxu0
    %v5805 = vpop.f32.mrb[0].mxu0
    %5806 = vdwg.mxu0
    %5807 = vmatprep.subr.bf16.mxu0 %v5308
    %5808 = vmatpush1.bf16.msra.mxu0 %v5307
    %5809 = vmatprep.subr.bf16.mxu0 %v5316
    %5810 = vmatpush1.bf16.msra.mxu0 %v5315
    %5811 = vmatprep.subr.bf16.mxu0 %v5324
    %5812 = vmatpush1.bf16.msra.mxu0 %v5323
    %5813 = vmatprep.subr.bf16.mxu0 %v5332
    %5814 = vmatpush1.bf16.msra.mxu0 %v5331
    %5815 = vmatprep.subr.bf16.mxu0 %v5340
    %5816 = vmatpush1.bf16.msra.mxu0 %v5339
    %5817 = vmatprep.subr.bf16.mxu0 %v5348
    %5818 = vmatpush1.bf16.msra.mxu0 %v5347
    %5819 = vmatprep.subr.bf16.mxu0 %v5356
    %5820 = vmatpush1.bf16.msra.mxu0 %v5355
    %5821 = vmatprep.subr.bf16.mxu0 %v5364
    %5822 = vmatpush1.bf16.msra.mxu0 %v5363
    %5823 = vmatprep.subr.bf16.mxu0 %v5372
    %5824 = vmatpush1.bf16.msra.mxu0 %v5371
    %5825 = vmatprep.subr.bf16.mxu0 %v5380
    %5826 = vmatpush1.bf16.msra.mxu0 %v5379
    %5827 = vmatprep.subr.bf16.mxu0 %v5388
    %5828 = vmatpush1.bf16.msra.mxu0 %v5387
    %5829 = vmatprep.subr.bf16.mxu0 %v5396
    %5830 = vmatpush1.bf16.msra.mxu0 %v5395
    %5831 = vmatprep.subr.bf16.mxu0 %v5404
    %5832 = vmatpush1.bf16.msra.mxu0 %v5403
    %5833 = vmatprep.subr.bf16.mxu0 %v5412
    %5834 = vmatpush1.bf16.msra.mxu0 %v5411
    %5835 = vmatprep.subr.bf16.mxu0 %v5420
    %5836 = vmatpush1.bf16.msra.mxu0 %v5419
    %5837 = vmatprep.subr.bf16.mxu0 %v5428
    %5838 = vmatpush1.bf16.msra.mxu0 %v5427
    %5839 = vmatprep.mubr.bf16.mxu0 %v5558
    %5840 = vmatmul.mubr.bf16.gmra.mrb[0].mxu0 %v5557
    %v5841 = vpop.f32.mrb[0].mxu0
    %v5842 = vadd.f32 0.0, %v5841
    %v5843 = vpop.f32.mrb[0].mxu0
    %v5844 = vadd.f32 0.0, %v5843
    %v5845 = vpop.f32.mrb[0].mxu0
    %v5846 = vpop.f32.mrb[0].mxu0
    %5847 = vdwg.mxu0
    %5848 = vmatprep.subr.bf16.mxu0 %v5436
    %5849 = vmatpush1.bf16.msra.mxu0 %v5435
    %5850 = vmatprep.subr.bf16.mxu0 %v5444
    %5851 = vmatpush1.bf16.msra.mxu0 %v5443
    %5852 = vmatprep.subr.bf16.mxu0 %v5452
    %5853 = vmatpush1.bf16.msra.mxu0 %v5451
    %5854 = vmatprep.subr.bf16.mxu0 %v5460
    %5855 = vmatpush1.bf16.msra.mxu0 %v5459
    %5856 = vmatprep.subr.bf16.mxu0 %v5468
    %5857 = vmatpush1.bf16.msra.mxu0 %v5467
    %5858 = vmatprep.subr.bf16.mxu0 %v5476
    %5859 = vmatpush1.bf16.msra.mxu0 %v5475
    %5860 = vmatprep.subr.bf16.mxu0 %v5484
    %5861 = vmatpush1.bf16.msra.mxu0 %v5483
    %5862 = vmatprep.subr.bf16.mxu0 %v5492
    %5863 = vmatpush1.bf16.msra.mxu0 %v5491
    %5864 = vmatprep.subr.bf16.mxu0 %v5500
    %5865 = vmatpush1.bf16.msra.mxu0 %v5499
    %5866 = vmatprep.subr.bf16.mxu0 %v5508
    %5867 = vmatpush1.bf16.msra.mxu0 %v5507
    %5868 = vmatprep.subr.bf16.mxu0 %v5516
    %5869 = vmatpush1.bf16.msra.mxu0 %v5515
    %5870 = vmatprep.subr.bf16.mxu0 %v5524
    %5871 = vmatpush1.bf16.msra.mxu0 %v5523
    %5872 = vmatprep.subr.bf16.mxu0 %v5532
    %5873 = vmatpush1.bf16.msra.mxu0 %v5531
    %5874 = vmatprep.subr.bf16.mxu0 %v5540
    %5875 = vmatpush1.bf16.msra.mxu0 %v5539
    %5876 = vmatprep.subr.bf16.mxu0 %v5548
    %5877 = vmatpush1.bf16.msra.mxu0 %v5547
    %5878 = vmatprep.subr.bf16.mxu0 %v5556
    %5879 = vmatpush1.bf16.msra.mxu0 %v5555
    %5880 = vmatprep.mubr.bf16.mxu0 %v5560
    %5881 = vmatmul.mubr.bf16.gmra.mrb[0].mxu0 %v5559
    %v5882 = vpop.f32.mrb[0].mxu0
    %v5883 = vadd.f32 %v5842, %v5882
    %v5884 = vpop.f32.mrb[0].mxu0
    %v5885 = vadd.f32 %v5844, %v5884
    %v5886 = vpop.f32.mrb[0].mxu0
    %v5887 = vpop.f32.mrb[0].mxu0
    %5888 = vdwg.mxu0
    %v5889 = vrot.slane %v5637, 4
    %v5890 = vadd.f32 %v5637, %v5889
    %v5891 = vrot.slane %v5890, 2
    %v5892 = vadd.f32 %v5890, %v5891
    %v5893 = vrot.slane %v5892, 1
    %v5894 = vadd.f32 %v5892, %v5893
    %v5895 = vrot.slane %v5639, 4
    %v5896 = vadd.f32 %v5639, %v5895
    %v5897 = vrot.slane %v5896, 2
    %v5898 = vadd.f32 %v5896, %v5897
    %v5899 = vrot.slane %v5898, 1
    %v5900 = vadd.f32 %v5898, %v5899
    %v5901 = vrot.slane %v5719, 4
    %v5902 = vadd.f32 %v5719, %v5901
    %v5903 = vrot.slane %v5902, 2
    %v5904 = vadd.f32 %v5902, %v5903
    %v5905 = vrot.slane %v5904, 1
    %v5906 = vadd.f32 %v5904, %v5905
    %v5907 = vrot.slane %v5721, 4
    %v5908 = vadd.f32 %v5721, %v5907
    %v5909 = vrot.slane %v5908, 2
    %v5910 = vadd.f32 %v5908, %v5909
    %v5911 = vrot.slane %v5910, 1
    %v5912 = vadd.f32 %v5910, %v5911
    %v5913 = vrot.slane %v5801, 4
    %v5914 = vadd.f32 %v5801, %v5913
    %v5915 = vrot.slane %v5914, 2
    %v5916 = vadd.f32 %v5914, %v5915
    %v5917 = vrot.slane %v5916, 1
    %v5918 = vadd.f32 %v5916, %v5917
    %v5919 = vrot.slane %v5803, 4
    %v5920 = vadd.f32 %v5803, %v5919
    %v5921 = vrot.slane %v5920, 2
    %v5922 = vadd.f32 %v5920, %v5921
    %v5923 = vrot.slane %v5922, 1
    %v5924 = vadd.f32 %v5922, %v5923
    %v5925 = vrot.slane %v5883, 4
    %v5926 = vadd.f32 %v5883, %v5925
    %v5927 = vrot.slane %v5926, 2
    %v5928 = vadd.f32 %v5926, %v5927
    %v5929 = vrot.slane %v5928, 1
    %v5930 = vadd.f32 %v5928, %v5929
    %v5931 = vrot.slane %v5885, 4
    %v5932 = vadd.f32 %v5885, %v5931
    %v5933 = vrot.slane %v5932, 2
    %v5934 = vadd.f32 %v5932, %v5933
    %v5935 = vrot.slane %v5934, 1
    %v5936 = vadd.f32 %v5934, %v5935
    %v5937 = vmul.f32 %v5894, 0.125
    %v5938 = vmul.f32 %v5900, 0.125
    %v5939 = vmul.f32 %v5906, 0.125
    %v5940 = vmul.f32 %v5912, 0.125
    %v5941 = vmul.f32 %v5918, 0.125
    %v5942 = vmul.f32 %v5924, 0.125
    %v5943 = vmul.f32 %v5930, 0.125
    %v5944 = vmul.f32 %v5936, 0.125
    %v5945 = vmul.f32 %v5637, %v5637
    %v5946 = vmul.f32 %v5639, %v5639
    %v5947 = vmul.f32 %v5719, %v5719
    %v5948 = vmul.f32 %v5721, %v5721
    %v5949 = vmul.f32 %v5801, %v5801
    %v5950 = vmul.f32 %v5803, %v5803
    %v5951 = vmul.f32 %v5883, %v5883
    %v5952 = vmul.f32 %v5885, %v5885
    %v5953 = vrot.slane %v5945, 4
    %v5954 = vadd.f32 %v5945, %v5953
    %v5955 = vrot.slane %v5954, 2
    %v5956 = vadd.f32 %v5954, %v5955
    %v5957 = vrot.slane %v5956, 1
    %v5958 = vadd.f32 %v5956, %v5957
    %v5959 = vrot.slane %v5946, 4
    %v5960 = vadd.f32 %v5946, %v5959
    %v5961 = vrot.slane %v5960, 2
    %v5962 = vadd.f32 %v5960, %v5961
    %v5963 = vrot.slane %v5962, 1
    %v5964 = vadd.f32 %v5962, %v5963
    %v5965 = vrot.slane %v5947, 4
    %v5966 = vadd.f32 %v5947, %v5965
    %v5967 = vrot.slane %v5966, 2
    %v5968 = vadd.f32 %v5966, %v5967
    %v5969 = vrot.slane %v5968, 1
    %v5970 = vadd.f32 %v5968, %v5969
    %v5971 = vrot.slane %v5948, 4
    %v5972 = vadd.f32 %v5948, %v5971
    %v5973 = vrot.slane %v5972, 2
    %v5974 = vadd.f32 %v5972, %v5973
    %v5975 = vrot.slane %v5974, 1
    %v5976 = vadd.f32 %v5974, %v5975
    %v5977 = vrot.slane %v5949, 4
    %v5978 = vadd.f32 %v5949, %v5977
    %v5979 = vrot.slane %v5978, 2
    %v5980 = vadd.f32 %v5978, %v5979
    %v5981 = vrot.slane %v5980, 1
    %v5982 = vadd.f32 %v5980, %v5981
    %v5983 = vrot.slane %v5950, 4
    %v5984 = vadd.f32 %v5950, %v5983
    %v5985 = vrot.slane %v5984, 2
    %v5986 = vadd.f32 %v5984, %v5985
    %v5987 = vrot.slane %v5986, 1
    %v5988 = vadd.f32 %v5986, %v5987
    %v5989 = vrot.slane %v5951, 4
    %v5990 = vadd.f32 %v5951, %v5989
    %v5991 = vrot.slane %v5990, 2
    %v5992 = vadd.f32 %v5990, %v5991
    %v5993 = vrot.slane %v5992, 1
    %v5994 = vadd.f32 %v5992, %v5993
    %v5995 = vrot.slane %v5952, 4
    %v5996 = vadd.f32 %v5952, %v5995
    %v5997 = vrot.slane %v5996, 2
    %v5998 = vadd.f32 %v5996, %v5997
    %v5999 = vrot.slane %v5998, 1
    %v6000 = vadd.f32 %v5998, %v5999
    %v6001 = vmul.f32 %v5958, 0.125
    %v6002 = vmul.f32 %v5964, 0.125
    %v6003 = vmul.f32 %v5970, 0.125
    %v6004 = vmul.f32 %v5976, 0.125
    %v6005 = vmul.f32 %v5982, 0.125
    %v6006 = vmul.f32 %v5988, 0.125
    %v6007 = vmul.f32 %v5994, 0.125
    %v6008 = vmul.f32 %v6000, 0.125
    %v6009 = vmul.f32 %v5937, %v5937
    %v6010 = vmul.f32 %v5938, %v5938
    %v6011 = vmul.f32 %v5939, %v5939
    %v6012 = vmul.f32 %v5940, %v5940
    %v6013 = vmul.f32 %v5941, %v5941
    %v6014 = vmul.f32 %v5942, %v5942
    %v6015 = vmul.f32 %v5943, %v5943
    %v6016 = vmul.f32 %v5944, %v5944
    %v6017 = vsub.f32 %v6001, %v6009
    %v6018 = vsub.f32 %v6002, %v6010
    %v6019 = vsub.f32 %v6003, %v6011
    %v6020 = vsub.f32 %v6004, %v6012
    %v6021 = vsub.f32 %v6005, %v6013
    %v6022 = vsub.f32 %v6006, %v6014
    %v6023 = vsub.f32 %v6007, %v6015
    %v6024 = vsub.f32 %v6008, %v6016
    %v6025 = vmax.f32 %v6017, 0.0
    %v6026 = vmax.f32 %v6018, 0.0
    %v6027 = vmax.f32 %v6019, 0.0
    %v6028 = vmax.f32 %v6020, 0.0
    %v6029 = vmax.f32 %v6021, 0.0
    %v6030 = vmax.f32 %v6022, 0.0
    %v6031 = vmax.f32 %v6023, 0.0
    %v6032 = vmax.f32 %v6024, 0.0
    %v6033 = vadd.f32 %v6025, 0.8
    %v6034 = vadd.f32 %v6026, 0.8
    %v6035 = vadd.f32 %v6027, 0.8
    %v6036 = vadd.f32 %v6028, 0.8
    %v6037 = vadd.f32 %v6029, 0.8
    %v6038 = vadd.f32 %v6030, 0.8
    %v6039 = vadd.f32 %v6031, 0.8
    %v6040 = vadd.f32 %v6032, 0.8
    %v6041 = vrsqrt.pop %v6033
    %v6042 = vrsqrt.pop %v6034
    %v6043 = vrsqrt.pop %v6035
    %v6044 = vrsqrt.pop %v6036
    %v6045 = vrsqrt.pop %v6037
    %v6046 = vrsqrt.pop %v6038
    %v6047 = vrsqrt.pop %v6039
    %v6048 = vrsqrt.pop %v6040
    %v6057 = vcombine.low %v6041, %v6042
    %v6058 = vcombine.low %v6043, %v6044
    %v6059 = vcombine.low %v6045, %v6046
    %v6060 = vcombine.low %v6047, %v6048
    %v6062 = vunpack.c.l.s4 1966171168
    %v6063 = vunpack.c.0.s8 %v6062
    %v6064 = vlaneseq
    %v6065 = vshrl.u32 %v6064, 7
    %v6066 = vsub.s32 %v6063, %v6065
    %v6067 = vrot.slane %v6057, %v6066
    %v6069 = vunpack.c.l.s4 1966171168
    %v6070 = vunpack.c.0.s8 %v6069
    %v6071 = vlaneseq
    %v6072 = vshrl.u32 %v6071, 7
    %v6073 = vsub.s32 %v6070, %v6072
    %v6074 = vrot.slane %v6058, %v6073
    %v6076 = vunpack.c.l.s4 1966171168
    %v6077 = vunpack.c.0.s8 %v6076
    %v6078 = vlaneseq
    %v6079 = vshrl.u32 %v6078, 7
    %v6080 = vsub.s32 %v6077, %v6079
    %v6081 = vrot.slane %v6059, %v6080
    %v6083 = vunpack.c.l.s4 1966171168
    %v6084 = vunpack.c.0.s8 %v6083
    %v6085 = vlaneseq
    %v6086 = vshrl.u32 %v6085, 7
    %v6087 = vsub.s32 %v6084, %v6086
    %v6088 = vrot.slane %v6060, %v6087
    %v6089 = vcombine.low %v6067, %v6074
    %v6090 = vcombine.low %v6081, %v6088
    %v6092 = vunpack.c.l.s4 1966171168
    %v6093 = vunpack.c.0.s8 %v6092
    %v6094 = vlaneseq
    %v6095 = vshrl.u32 %v6094, 7
    %v6096 = vsub.s32 %v6093, %v6095
    %v6097 = vrot.slane %v6089, %v6096
    %v6099 = vunpack.c.l.s4 1966171168
    %v6100 = vunpack.c.0.s8 %v6099
    %v6101 = vlaneseq
    %v6102 = vshrl.u32 %v6101, 7
    %v6103 = vsub.s32 %v6100, %v6102
    %v6104 = vrot.slane %v6090, %v6103
    %v6105 = vcombine.low %v6097, %v6104
    %v6107 = vmul.f32 %v4377, %v6105
    %v6116 = vcombine.low %v5937, %v5938
    %v6117 = vcombine.low %v5939, %v5940
    %v6118 = vcombine.low %v5941, %v5942
    %v6119 = vcombine.low %v5943, %v5944
    %v6121 = vunpack.c.l.s4 1966171168
    %v6122 = vunpack.c.0.s8 %v6121
    %v6123 = vlaneseq
    %v6124 = vshrl.u32 %v6123, 7
    %v6125 = vsub.s32 %v6122, %v6124
    %v6126 = vrot.slane %v6116, %v6125
    %v6128 = vunpack.c.l.s4 1966171168
    %v6129 = vunpack.c.0.s8 %v6128
    %v6130 = vlaneseq
    %v6131 = vshrl.u32 %v6130, 7
    %v6132 = vsub.s32 %v6129, %v6131
    %v6133 = vrot.slane %v6117, %v6132
    %v6135 = vunpack.c.l.s4 1966171168
    %v6136 = vunpack.c.0.s8 %v6135
    %v6137 = vlaneseq
    %v6138 = vshrl.u32 %v6137, 7
    %v6139 = vsub.s32 %v6136, %v6138
    %v6140 = vrot.slane %v6118, %v6139
    %v6142 = vunpack.c.l.s4 1966171168
    %v6143 = vunpack.c.0.s8 %v6142
    %v6144 = vlaneseq
    %v6145 = vshrl.u32 %v6144, 7
    %v6146 = vsub.s32 %v6143, %v6145
    %v6147 = vrot.slane %v6119, %v6146
    %v6148 = vcombine.low %v6126, %v6133
    %v6149 = vcombine.low %v6140, %v6147
    %v6151 = vunpack.c.l.s4 1966171168
    %v6152 = vunpack.c.0.s8 %v6151
    %v6153 = vlaneseq
    %v6154 = vshrl.u32 %v6153, 7
    %v6155 = vsub.s32 %v6152, %v6154
    %v6156 = vrot.slane %v6148, %v6155
    %v6158 = vunpack.c.l.s4 1966171168
    %v6159 = vunpack.c.0.s8 %v6158
    %v6160 = vlaneseq
    %v6161 = vshrl.u32 %v6160, 7
    %v6162 = vsub.s32 %v6159, %v6161
    %v6163 = vrot.slane %v6149, %v6162
    %v6164 = vcombine.low %v6156, %v6163
    %v6166 = vmul.f32 %v6107, %v6164
    %v6167 = vsub.f32 %v4381, %v6166
    %v6169 = vlaneseq
    %v6170 = vshrl.u32 %v6169, 7
    %v6171 = vsub.s32 0, %v6170
    %v6172 = vrot.slane %v6107, %v6171
    %v6173 = vlaneseq
    %v6174 = vshrl.u32 %v6173, 7
    %v6175 = vsub.s32 1, %v6174
    %v6176 = vrot.slane %v6107, %v6175
    %v6177 = vlaneseq
    %v6178 = vshrl.u32 %v6177, 7
    %v6179 = vsub.s32 2, %v6178
    %v6180 = vrot.slane %v6107, %v6179
    %v6181 = vlaneseq
    %v6182 = vshrl.u32 %v6181, 7
    %v6183 = vsub.s32 3, %v6182
    %v6184 = vrot.slane %v6107, %v6183
    %v6185 = vlaneseq
    %v6186 = vshrl.u32 %v6185, 7
    %v6187 = vsub.s32 4, %v6186
    %v6188 = vrot.slane %v6107, %v6187
    %v6189 = vlaneseq
    %v6190 = vshrl.u32 %v6189, 7
    %v6191 = vsub.s32 5, %v6190
    %v6192 = vrot.slane %v6107, %v6191
    %v6193 = vlaneseq
    %v6194 = vshrl.u32 %v6193, 7
    %v6195 = vsub.s32 6, %v6194
    %v6196 = vrot.slane %v6107, %v6195
    %v6197 = vlaneseq
    %v6198 = vshrl.u32 %v6197, 7
    %v6199 = vsub.s32 7, %v6198
    %v6200 = vrot.slane %v6107, %v6199
    %v6209 = vmul.f32 %v6172, %v5637
    %v6210 = vmul.f32 %v6176, %v5639
    %v6211 = vmul.f32 %v6180, %v5719
    %v6212 = vmul.f32 %v6184, %v5721
    %v6213 = vmul.f32 %v6188, %v5801
    %v6214 = vmul.f32 %v6192, %v5803
    %v6215 = vmul.f32 %v6196, %v5883
    %v6216 = vmul.f32 %v6200, %v5885
    %v6218 = vlaneseq
    %v6219 = vshrl.u32 %v6218, 7
    %v6220 = vsub.s32 0, %v6219
    %v6221 = vrot.slane %v6167, %v6220
    %v6222 = vlaneseq
    %v6223 = vshrl.u32 %v6222, 7
    %v6224 = vsub.s32 1, %v6223
    %v6225 = vrot.slane %v6167, %v6224
    %v6226 = vlaneseq
    %v6227 = vshrl.u32 %v6226, 7
    %v6228 = vsub.s32 2, %v6227
    %v6229 = vrot.slane %v6167, %v6228
    %v6230 = vlaneseq
    %v6231 = vshrl.u32 %v6230, 7
    %v6232 = vsub.s32 3, %v6231
    %v6233 = vrot.slane %v6167, %v6232
    %v6234 = vlaneseq
    %v6235 = vshrl.u32 %v6234, 7
    %v6236 = vsub.s32 4, %v6235
    %v6237 = vrot.slane %v6167, %v6236
    %v6238 = vlaneseq
    %v6239 = vshrl.u32 %v6238, 7
    %v6240 = vsub.s32 5, %v6239
    %v6241 = vrot.slane %v6167, %v6240
    %v6242 = vlaneseq
    %v6243 = vshrl.u32 %v6242, 7
    %v6244 = vsub.s32 6, %v6243
    %v6245 = vrot.slane %v6167, %v6244
    %v6246 = vlaneseq
    %v6247 = vshrl.u32 %v6246, 7
    %v6248 = vsub.s32 7, %v6247
    %v6249 = vrot.slane %v6167, %v6248
    %v6258 = vadd.f32 %v6209, %v6221
    %v6259 = vadd.f32 %v6210, %v6225
    %v6260 = vadd.f32 %v6211, %v6229
    %v6261 = vadd.f32 %v6212, %v6233
    %v6262 = vadd.f32 %v6213, %v6237
    %v6263 = vadd.f32 %v6214, %v6241
    %v6264 = vadd.f32 %v6215, %v6245
    %v6265 = vadd.f32 %v6216, %v6249
    %v6266 = vmul.f32 %v6258, 0.2
    %v6267 = vmul.f32 %v6259, 0.2
    %v6268 = vmul.f32 %v6260, 0.2
    %v6269 = vmul.f32 %v6261, 0.2
    %v6270 = vmul.f32 %v6262, 0.2
    %v6271 = vmul.f32 %v6263, 0.2
    %v6272 = vmul.f32 %v6264, 0.2
    %v6273 = vmul.f32 %v6265, 0.2
    %v6274 = vmax.f32 %v6258, %v6266
    %v6275 = vmax.f32 %v6259, %v6267
    %v6276 = vmax.f32 %v6260, %v6268
    %v6277 = vmax.f32 %v6261, %v6269
    %v6278 = vmax.f32 %v6262, %v6270
    %v6279 = vmax.f32 %v6263, %v6271
    %v6280 = vmax.f32 %v6264, %v6272
    %v6281 = vmax.f32 %v6265, %v6273
    %s6282 = smul.u32 4, 128
    %s6283 = smul.u32 %s6282, 1
    %s6284 = sshll.u32 %s6283, 4
    %6285 = dma.done %s4198, %s6284
    %v6286 = vld [vmem:[#allocation3] sm:$0xff]
    %v6287 = vld [vmem:[#allocation3 + $0x8] sm:$0xff]
    %v6288 = vld [vmem:[#allocation3 + $0x10] sm:$0xff]
    %v6289 = vld [vmem:[#allocation3 + $0x18] sm:$0xff]
    %v6290 = vld [vmem:[#allocation3 + $0x20] sm:$0xff]
    %v6291 = vld [vmem:[#allocation3 + $0x28] sm:$0xff]
    %v6292 = vld [vmem:[#allocation3 + $0x30] sm:$0xff]
    %v6293 = vld [vmem:[#allocation3 + $0x38] sm:$0xff]
    %v6294 = vld [vmem:[#allocation3 + $0x40] sm:$0xff]
    %v6295 = vld [vmem:[#allocation3 + $0x48] sm:$0xff]
    %v6296 = vld [vmem:[#allocation3 + $0x50] sm:$0xff]
    %v6297 = vld [vmem:[#allocation3 + $0x58] sm:$0xff]
    %v6298 = vld [vmem:[#allocation3 + $0x60] sm:$0xff]
    %v6299 = vld [vmem:[#allocation3 + $0x68] sm:$0xff]
    %v6300 = vld [vmem:[#allocation3 + $0x70] sm:$0xff]
    %v6301 = vld [vmem:[#allocation3 + $0x78] sm:$0xff]
    %v6302 = vld [vmem:[#allocation3 + $0x80] sm:$0xff]
    %v6303 = vld [vmem:[#allocation3 + $0x88] sm:$0xff]
    %v6304 = vld [vmem:[#allocation3 + $0x90] sm:$0xff]
    %v6305 = vld [vmem:[#allocation3 + $0x98] sm:$0xff]
    %v6306 = vld [vmem:[#allocation3 + $0xa0] sm:$0xff]
    %v6307 = vld [vmem:[#allocation3 + $0xa8] sm:$0xff]
    %v6308 = vld [vmem:[#allocation3 + $0xb0] sm:$0xff]
    %v6309 = vld [vmem:[#allocation3 + $0xb8] sm:$0xff]
    %v6310 = vld [vmem:[#allocation3 + $0xc0] sm:$0xff]
    %v6311 = vld [vmem:[#allocation3 + $0xc8] sm:$0xff]
    %v6312 = vld [vmem:[#allocation3 + $0xd0] sm:$0xff]
    %v6313 = vld [vmem:[#allocation3 + $0xd8] sm:$0xff]
    %v6314 = vld [vmem:[#allocation3 + $0xe0] sm:$0xff]
    %v6315 = vld [vmem:[#allocation3 + $0xe8] sm:$0xff]
    %v6316 = vld [vmem:[#allocation3 + $0xf0] sm:$0xff]
    %v6317 = vld [vmem:[#allocation3 + $0xf8] sm:$0xff]
    %v6318 = vld [vmem:[#allocation3 + $0x100] sm:$0xff]
    %v6319 = vld [vmem:[#allocation3 + $0x108] sm:$0xff]
    %v6320 = vld [vmem:[#allocation3 + $0x110] sm:$0xff]
    %v6321 = vld [vmem:[#allocation3 + $0x118] sm:$0xff]
    %v6322 = vld [vmem:[#allocation3 + $0x120] sm:$0xff]
    %v6323 = vld [vmem:[#allocation3 + $0x128] sm:$0xff]
    %v6324 = vld [vmem:[#allocation3 + $0x130] sm:$0xff]
    %v6325 = vld [vmem:[#allocation3 + $0x138] sm:$0xff]
    %v6326 = vld [vmem:[#allocation3 + $0x140] sm:$0xff]
    %v6327 = vld [vmem:[#allocation3 + $0x148] sm:$0xff]
    %v6328 = vld [vmem:[#allocation3 + $0x150] sm:$0xff]
    %v6329 = vld [vmem:[#allocation3 + $0x158] sm:$0xff]
    %v6330 = vld [vmem:[#allocation3 + $0x160] sm:$0xff]
    %v6331 = vld [vmem:[#allocation3 + $0x168] sm:$0xff]
    %v6332 = vld [vmem:[#allocation3 + $0x170] sm:$0xff]
    %v6333 = vld [vmem:[#allocation3 + $0x178] sm:$0xff]
    %v6334 = vld [vmem:[#allocation3 + $0x180] sm:$0xff]
    %v6335 = vld [vmem:[#allocation3 + $0x188] sm:$0xff]
    %v6336 = vld [vmem:[#allocation3 + $0x190] sm:$0xff]
    %v6337 = vld [vmem:[#allocation3 + $0x198] sm:$0xff]
    %v6338 = vld [vmem:[#allocation3 + $0x1a0] sm:$0xff]
    %v6339 = vld [vmem:[#allocation3 + $0x1a8] sm:$0xff]
    %v6340 = vld [vmem:[#allocation3 + $0x1b0] sm:$0xff]
    %v6341 = vld [vmem:[#allocation3 + $0x1b8] sm:$0xff]
    %v6342 = vld [vmem:[#allocation3 + $0x1c0] sm:$0xff]
    %v6343 = vld [vmem:[#allocation3 + $0x1c8] sm:$0xff]
    %v6344 = vld [vmem:[#allocation3 + $0x1d0] sm:$0xff]
    %v6345 = vld [vmem:[#allocation3 + $0x1d8] sm:$0xff]
    %v6346 = vld [vmem:[#allocation3 + $0x1e0] sm:$0xff]
    %v6347 = vld [vmem:[#allocation3 + $0x1e8] sm:$0xff]
    %v6348 = vld [vmem:[#allocation3 + $0x1f0] sm:$0xff]
    %v6349 = vld [vmem:[#allocation3 + $0x1f8] sm:$0xff]
    %v6350 = vpack.c.bf16 %v6274, %v6274
    %v6351 = vpack.c.bf16 %v6275, %v6275
    %v6352 = vpack.c.bf16 %v6276, %v6276
    %v6353 = vpack.c.bf16 %v6277, %v6277
    %v6354 = vpack.c.bf16 %v6278, %v6278
    %v6355 = vpack.c.bf16 %v6279, %v6279
    %v6356 = vpack.c.bf16 %v6280, %v6280
    %v6357 = vpack.c.bf16 %v6281, %v6281
    %6358 = vmatprep.subr.bf16.mxu0 0
    %6359 = vmatpush1.bf16.msra.mxu0 %v6286
    %6360 = vmatprep.subr.bf16.mxu0 0
    %6361 = vmatpush1.bf16.msra.mxu0 %v6287
    %6362 = vmatprep.subr.bf16.mxu0 0
    %6363 = vmatpush1.bf16.msra.mxu0 %v6288
    %6364 = vmatprep.subr.bf16.mxu0 0
    %6365 = vmatpush1.bf16.msra.mxu0 %v6289
    %6366 = vmatprep.subr.bf16.mxu0 0
    %6367 = vmatpush1.bf16.msra.mxu0 %v6290
    %6368 = vmatprep.subr.bf16.mxu0 0
    %6369 = vmatpush1.bf16.msra.mxu0 %v6291
    %6370 = vmatprep.subr.bf16.mxu0 0
    %6371 = vmatpush1.bf16.msra.mxu0 %v6292
    %6372 = vmatprep.subr.bf16.mxu0 0
    %6373 = vmatpush1.bf16.msra.mxu0 %v6293
    %6374 = vmatprep.subr.bf16.mxu0 0
    %6375 = vmatpush1.bf16.msra.mxu0 %v6294
    %6376 = vmatprep.subr.bf16.mxu0 0
    %6377 = vmatpush1.bf16.msra.mxu0 %v6295
    %6378 = vmatprep.subr.bf16.mxu0 0
    %6379 = vmatpush1.bf16.msra.mxu0 %v6296
    %6380 = vmatprep.subr.bf16.mxu0 0
    %6381 = vmatpush1.bf16.msra.mxu0 %v6297
    %6382 = vmatprep.subr.bf16.mxu0 0
    %6383 = vmatpush1.bf16.msra.mxu0 %v6298
    %6384 = vmatprep.subr.bf16.mxu0 0
    %6385 = vmatpush1.bf16.msra.mxu0 %v6299
    %6386 = vmatprep.subr.bf16.mxu0 0
    %6387 = vmatpush1.bf16.msra.mxu0 %v6300
    %6388 = vmatprep.subr.bf16.mxu0 0
    %6389 = vmatpush1.bf16.msra.mxu0 %v6301
    %6390 = vmatprep.mubr.bf16.mxu0 %v6351
    %6391 = vmatmul.mubr.bf16.gmra.mrb[0].mxu0 %v6350
    %v6392 = vpop.f32.mrb[0].mxu0
    %v6393 = vadd.f32 %v4382, %v6392
    %v6394 = vpop.f32.mrb[0].mxu0
    %v6395 = vpop.f32.mrb[0].mxu0
    %v6396 = vpop.f32.mrb[0].mxu0
    %6397 = vdwg.mxu0
    %6398 = vmatprep.subr.bf16.mxu0 0
    %6399 = vmatpush1.bf16.msra.mxu0 %v6302
    %6400 = vmatprep.subr.bf16.mxu0 0
    %6401 = vmatpush1.bf16.msra.mxu0 %v6303
    %6402 = vmatprep.subr.bf16.mxu0 0
    %6403 = vmatpush1.bf16.msra.mxu0 %v6304
    %6404 = vmatprep.subr.bf16.mxu0 0
    %6405 = vmatpush1.bf16.msra.mxu0 %v6305
    %6406 = vmatprep.subr.bf16.mxu0 0
    %6407 = vmatpush1.bf16.msra.mxu0 %v6306
    %6408 = vmatprep.subr.bf16.mxu0 0
    %6409 = vmatpush1.bf16.msra.mxu0 %v6307
    %6410 = vmatprep.subr.bf16.mxu0 0
    %6411 = vmatpush1.bf16.msra.mxu0 %v6308
    %6412 = vmatprep.subr.bf16.mxu0 0
    %6413 = vmatpush1.bf16.msra.mxu0 %v6309
    %6414 = vmatprep.subr.bf16.mxu0 0
    %6415 = vmatpush1.bf16.msra.mxu0 %v6310
    %6416 = vmatprep.subr.bf16.mxu0 0
    %6417 = vmatpush1.bf16.msra.mxu0 %v6311
    %6418 = vmatprep.subr.bf16.mxu0 0
    %6419 = vmatpush1.bf16.msra.mxu0 %v6312
    %6420 = vmatprep.subr.bf16.mxu0 0
    %6421 = vmatpush1.bf16.msra.mxu0 %v6313
    %6422 = vmatprep.subr.bf16.mxu0 0
    %6423 = vmatpush1.bf16.msra.mxu0 %v6314
    %6424 = vmatprep.subr.bf16.mxu0 0
    %6425 = vmatpush1.bf16.msra.mxu0 %v6315
    %6426 = vmatprep.subr.bf16.mxu0 0
    %6427 = vmatpush1.bf16.msra.mxu0 %v6316
    %6428 = vmatprep.subr.bf16.mxu0 0
    %6429 = vmatpush1.bf16.msra.mxu0 %v6317
    %6430 = vmatprep.mubr.bf16.mxu0 %v6353
    %6431 = vmatmul.mubr.bf16.gmra.mrb[0].mxu0 %v6352
    %v6432 = vpop.f32.mrb[0].mxu0
    %v6433 = vadd.f32 %v6393, %v6432
    %v6434 = vpop.f32.mrb[0].mxu0
    %v6435 = vpop.f32.mrb[0].mxu0
    %v6436 = vpop.f32.mrb[0].mxu0
    %6437 = vdwg.mxu0
    %6438 = vmatprep.subr.bf16.mxu0 0
    %6439 = vmatpush1.bf16.msra.mxu0 %v6318
    %6440 = vmatprep.subr.bf16.mxu0 0
    %6441 = vmatpush1.bf16.msra.mxu0 %v6319
    %6442 = vmatprep.subr.bf16.mxu0 0
    %6443 = vmatpush1.bf16.msra.mxu0 %v6320
    %6444 = vmatprep.subr.bf16.mxu0 0
    %6445 = vmatpush1.bf16.msra.mxu0 %v6321
    %6446 = vmatprep.subr.bf16.mxu0 0
    %6447 = vmatpush1.bf16.msra.mxu0 %v6322
    %6448 = vmatprep.subr.bf16.mxu0 0
    %6449 = vmatpush1.bf16.msra.mxu0 %v6323
    %6450 = vmatprep.subr.bf16.mxu0 0
    %6451 = vmatpush1.bf16.msra.mxu0 %v6324
    %6452 = vmatprep.subr.bf16.mxu0 0
    %6453 = vmatpush1.bf16.msra.mxu0 %v6325
    %6454 = vmatprep.subr.bf16.mxu0 0
    %6455 = vmatpush1.bf16.msra.mxu0 %v6326
    %6456 = vmatprep.subr.bf16.mxu0 0
    %6457 = vmatpush1.bf16.msra.mxu0 %v6327
    %6458 = vmatprep.subr.bf16.mxu0 0
    %6459 = vmatpush1.bf16.msra.mxu0 %v6328
    %6460 = vmatprep.subr.bf16.mxu0 0
    %6461 = vmatpush1.bf16.msra.mxu0 %v6329
    %6462 = vmatprep.subr.bf16.mxu0 0
    %6463 = vmatpush1.bf16.msra.mxu0 %v6330
    %6464 = vmatprep.subr.bf16.mxu0 0
    %6465 = vmatpush1.bf16.msra.mxu0 %v6331
    %6466 = vmatprep.subr.bf16.mxu0 0
    %6467 = vmatpush1.bf16.msra.mxu0 %v6332
    %6468 = vmatprep.subr.bf16.mxu0 0
    %6469 = vmatpush1.bf16.msra.mxu0 %v6333
    %6470 = vmatprep.mubr.bf16.mxu0 %v6355
    %6471 = vmatmul.mubr.bf16.gmra.mrb[0].mxu0 %v6354
    %v6472 = vpop.f32.mrb[0].mxu0
    %v6473 = vadd.f32 %v6433, %v6472
    %v6474 = vpop.f32.mrb[0].mxu0
    %v6475 = vpop.f32.mrb[0].mxu0
    %v6476 = vpop.f32.mrb[0].mxu0
    %6477 = vdwg.mxu0
    %6478 = vmatprep.subr.bf16.mxu0 0
    %6479 = vmatpush1.bf16.msra.mxu0 %v6334
    %6480 = vmatprep.subr.bf16.mxu0 0
    %6481 = vmatpush1.bf16.msra.mxu0 %v6335
    %6482 = vmatprep.subr.bf16.mxu0 0
    %6483 = vmatpush1.bf16.msra.mxu0 %v6336
    %6484 = vmatprep.subr.bf16.mxu0 0
    %6485 = vmatpush1.bf16.msra.mxu0 %v6337
    %6486 = vmatprep.subr.bf16.mxu0 0
    %6487 = vmatpush1.bf16.msra.mxu0 %v6338
    %6488 = vmatprep.subr.bf16.mxu0 0
    %6489 = vmatpush1.bf16.msra.mxu0 %v6339
    %6490 = vmatprep.subr.bf16.mxu0 0
    %6491 = vmatpush1.bf16.msra.mxu0 %v6340
    %6492 = vmatprep.subr.bf16.mxu0 0
    %6493 = vmatpush1.bf16.msra.mxu0 %v6341
    %6494 = vmatprep.subr.bf16.mxu0 0
    %6495 = vmatpush1.bf16.msra.mxu0 %v6342
    %6496 = vmatprep.subr.bf16.mxu0 0
    %6497 = vmatpush1.bf16.msra.mxu0 %v6343
    %6498 = vmatprep.subr.bf16.mxu0 0
    %6499 = vmatpush1.bf16.msra.mxu0 %v6344
    %6500 = vmatprep.subr.bf16.mxu0 0
    %6501 = vmatpush1.bf16.msra.mxu0 %v6345
    %6502 = vmatprep.subr.bf16.mxu0 0
    %6503 = vmatpush1.bf16.msra.mxu0 %v6346
    %6504 = vmatprep.subr.bf16.mxu0 0
    %6505 = vmatpush1.bf16.msra.mxu0 %v6347
    %6506 = vmatprep.subr.bf16.mxu0 0
    %6507 = vmatpush1.bf16.msra.mxu0 %v6348
    %6508 = vmatprep.subr.bf16.mxu0 0
    %6509 = vmatpush1.bf16.msra.mxu0 %v6349
    %6510 = vmatprep.mubr.bf16.mxu0 %v6357
    %6511 = vmatmul.mubr.bf16.gmra.mrb[0].mxu0 %v6356
    %v6512 = vpop.f32.mrb[0].mxu0
    %v6513 = vadd.f32 %v6473, %v6512
    %v6514 = vpop.f32.mrb[0].mxu0
    %v6515 = vpop.f32.mrb[0].mxu0
    %v6516 = vpop.f32.mrb[0].mxu0
    %6517 = vdwg.mxu0
    %v6518 = vtanh.pop %v6513
    %6519 = vst [vmem:[#allocation5] sm:$0xff] %v6518
    // Predicated region
    $region100: #{generator_bn_forward.1} parent=1 // pred_check
      _
    $region101: #{generator_bn_forward.1} parent=1 // pred_check_branch
      %6521 = sbr.rel (0) target = $region103
    $region102: #{generator_bn_forward.1} parent=1 // pred_region
      %s6523 = ssub.s32 128, 128
      %6524 = vsyncadd [#allocation6], %s6523
      %s6526 = sshll.u32 [#allocation5], 4
      %s6527 = int_to_ptr.vmem [resolvable:$true] %s6526
      %6529 = dma.vmem_to_hbm [thread:$0]  %s6527, 128, %s6, [#allocation6]
    $region103: #{generator_bn_forward.1} parent=1 // pred_fallthru
      _
    // Predicated region
    $region104: #{generator_bn_forward.1} parent=1 // pred_check
      _
    $region105: #{generator_bn_forward.1} parent=1 // pred_check_branch
      %6531 = sbr.rel (0) target = $region107
    $region106: #{generator_bn_forward.1} parent=1 // pred_region
      %6532 = dma.done [#allocation6], 128
    $region107: #{generator_bn_forward.1} parent=1 // pred_fallthru
      _
    %6533 = vsyncpa [#allocation6], 1
  %6534 = vsyncmov [#allocation4]
  %s6535 = vpop.sfrf %6534
  %p6536 = scmp.eq.s32.totalorder %s6535, 0
  %p6537 = pneg %p6536
  %6539 = shalt.err (%p6537)
  %s6540 = scalar_lea.sflag [#allocation4], 1
  %6541 = vsyncmov %s6540
  %s6542 = vpop.sfrf %6541
  %p6543 = scmp.eq.s32.totalorder %s6542, 0
  %p6544 = pneg %p6543
  %6546 = shalt.err (%p6544)

</llo_original>
